<compile_context>
chip_gen: v7x
topology: tpu7x:2x2x1
jax: 0.10.0
libtpu: 0.0.40
codegen_flags: <defaults>
</compile_context>

<pallas_src>
import functools

import jax
import jax.numpy as jnp
from jax import lax
from jax.experimental import pallas as pl
from jax.experimental.pallas import tpu as pltpu


def _round_up(x, m):
    return (x + m - 1) // m * m


def _basic_block_kernel(x_ref, w1_ref, w2_ref, b1_ref, b2_ref, out_ref, pf1, pf2,
                        *, TH, Wp, PRE):
    """One (batch, row-strip) grid step.

    x_ref:  (H, W, C)      full input image (VMEM resident; also the residual)
    w*_ref: (9, C, C)      conv taps (tap = ky*3+kx), BN scale pre-folded
    b*_ref: (1, C)         folded BN biases
    out_ref:(TH, W, C)     output strip, rows [s*TH, (s+1)*TH)
    pf1:    (L1, C) VMEM   flat zero-padded x strip; physical row j (stride Wp,
                           8-aligned) holds x row s*TH-2+j in columns [0, W),
                           zeros in columns [W, Wp); flat (j, w) = PRE + j*Wp + w.
    pf2:    (L2, C) VMEM   same layout for conv1 output rows [s*TH-1, s*TH+TH+1).
    """
    H, W, C = x_ref.shape
    f32 = jnp.float32
    s = pl.program_id(1)
    S = pl.num_programs(1)
    r0 = s * TH                       # first output row of this strip
    Q1 = (TH + 2) * Wp                # conv1 compute grid (rows r0-1 .. r0+TH)
    Q2 = TH * Wp                      # conv2 compute grid (rows r0 .. r0+TH-1)
    L1 = pf1.shape[0]
    L2 = pf2.shape[0]
    gap = Wp - W
    zero_row = jnp.zeros((W, C), f32)
    zero_gap = jnp.zeros((gap, C), f32)

    # ---- stage x rows [r0-2, r0+TH+2) into the flat zero-padded pf1 --------------
    pf1[pl.ds(0, PRE), :] = jnp.zeros((PRE, C), f32)                     # prefix
    tail1 = PRE + (TH + 4) * Wp
    pf1[pl.ds(tail1, L1 - tail1), :] = jnp.zeros((L1 - tail1, C), f32)   # tail slack

    # top halo rows (x rows r0-2, r0-1): zero on the first strip.
    for j in (0, 1):
        base = PRE + j * Wp
        pf1[pl.ds(base + W, gap), :] = zero_gap
        xr = r0 - 2 + j

        @pl.when(s == 0)
        def _():
            pf1[pl.ds(base, W), :] = zero_row

        @pl.when(s > 0)
        def _():
            pf1[pl.ds(base, W), :] = x_ref[xr, :, :].astype(f32)

    # interior rows (always valid): aligned (W, C) slab copies.
    for i in range(TH):
        base = PRE + (i + 2) * Wp
        pf1[pl.ds(base + W, gap), :] = zero_gap
        pf1[pl.ds(base, W), :] = x_ref[r0 + i, :, :].astype(f32)

    # bottom halo rows (x rows r0+TH, r0+TH+1): zero on the last strip.
    for j in (TH + 2, TH + 3):
        base = PRE + j * Wp
        pf1[pl.ds(base + W, gap), :] = zero_gap
        xr = r0 - 2 + j

        @pl.when(s == S - 1)
        def _():
            pf1[pl.ds(base, W), :] = zero_row

        @pl.when(s < S - 1)
        def _():
            pf1[pl.ds(base, W), :] = x_ref[xr, :, :].astype(f32)

    # ---- conv1 (BN1 scale folded into w1) + bias + ReLU over TH+2 rows ------------
    # Output position q = oj*Wp + w'; columns w' >= W are junk and are overwritten
    # by the pad-cell zeroing below.  Tap (ky, kx) is a contiguous slice of pf1.
    acc1 = jnp.zeros((Q1, C), f32)
    for ky in range(3):
        for kx in range(3):
            acc1 = acc1 + jnp.dot(pf1[pl.ds(ky * Wp + kx + PRE - 1, Q1), :],
                                  w1_ref[ky * 3 + kx],
                                  preferred_element_type=f32)
    out1 = jnp.maximum(acc1 + b1_ref[0], 0.0)

    # ---- stage conv1 output into pf2 (same flat layout, TH+2 physical rows) -------
    pf2[pl.ds(0, PRE), :] = jnp.zeros((PRE, C), f32)
    pf2[pl.ds(PRE, Q1), :] = out1
    tail2 = PRE + Q1
    pf2[pl.ds(tail2, L2 - tail2), :] = jnp.zeros((L2 - tail2, C), f32)
    # Zero the pad cells (junk columns of each physical row) with TH+2 tiny stores
    # -- replaces the old full-image iota+where mask.
    for r in range(TH + 2):
        pf2[pl.ds(PRE + r * Wp + W, gap), :] = zero_gap
    # conv2's zero padding at the image top/bottom must be zeros, not conv1(pad).
    @pl.when(s == 0)
    def _():
        pf2[pl.ds(PRE, W), :] = zero_row

    @pl.when(s == S - 1)
    def _():
        pf2[pl.ds(PRE + (TH + 1) * Wp, W), :] = zero_row

    # ---- conv2 (BN2 scale folded into w2) + bias + residual + ReLU ----------------
    acc2 = jnp.zeros((Q2, C), f32)
    for ky in range(3):
        for kx in range(3):
            acc2 = acc2 + jnp.dot(pf2[pl.ds(ky * Wp + kx + PRE - 1, Q2), :],
                                  w2_ref[ky * 3 + kx],
                                  preferred_element_type=f32)
    residual = pf1[pl.ds(PRE + 2 * Wp, Q2), :]        # x rows [r0, r0+TH), same grid
    out2 = jnp.maximum(acc2 + b2_ref[0] + residual, 0.0)

    # ---- per-row aligned slab stores (no reshape/column-slice relayout) -----------
    for i in range(TH):
        out_ref[i, :, :] = out2[i * Wp:i * Wp + W, :].astype(out_ref.dtype)


@functools.partial(jax.jit, static_argnames=("tile_h",))
def basic_block(x_nhwc, w1_taps, w2_taps, bias1, bias2, tile_h=8):
    """x_nhwc: (N, H, W, C) f32.  w*_taps: (9, C, C) with BN scale folded in
    (tap = ky*3 + kx).  bias*: (1, C) folded BN bias."""
    N, H, W, C = x_nhwc.shape
    assert w1_taps.shape == (9, C, C) and w2_taps.shape == (9, C, C)

    # Largest strip height <= tile_h that divides H (>= 2 for the halo logic).
    TH = min(tile_h, H)
    while H % TH != 0:
        TH -= 1
    assert TH >= 2, "need a row-strip height >= 2 that divides H"
    S = H // TH

    PRE = 8                                   # 8-aligned slack before the first row
    Wp = _round_up(W + 2, 8)                  # 8-aligned padded row stride
    L1 = PRE + (TH + 4) * Wp + 8              # x strip + 2-row halo each side
    L2 = PRE + (TH + 2) * Wp + 8              # conv1-output strip + 1-row halo

    kernel = functools.partial(_basic_block_kernel, TH=TH, Wp=Wp, PRE=PRE)

    grid_spec = pltpu.PrefetchScalarGridSpec(
        num_scalar_prefetch=0,
        grid=(N, S),
        in_specs=[
            # Full image per batch element; block index constant across the strip
            # axis so x is fetched from HBM once per image and reused by every
            # strip (single HBM stream; also provides the residual).
            pl.BlockSpec((None, H, W, C), lambda n, s: (n, 0, 0, 0)),
            # TODO(synk): pipeline_mode=pl.Buffered(1) on these constant streams.
            pl.BlockSpec((9, C, C), lambda n, s: (0, 0, 0)),
            pl.BlockSpec((9, C, C), lambda n, s: (0, 0, 0)),
            pl.BlockSpec((1, C), lambda n, s: (0, 0)),
            pl.BlockSpec((1, C), lambda n, s: (0, 0)),
        ],
        out_specs=pl.BlockSpec((None, TH, W, C), lambda n, s: (n, s, 0, 0)),
        scratch_shapes=[pltpu.VMEM((L1, C), jnp.float32),
                        pltpu.VMEM((L2, C), jnp.float32)],
    )

    flops = N * 2 * (2 * 9 * H * W * C * C)            # two 3x3 convs (MAC = 2 flops)
    bytes_accessed = (2 * x_nhwc.size + 2 * 9 * C * C + 2 * C) * 4
    cost = pl.CostEstimate(flops=flops, transcendentals=0,
                           bytes_accessed=bytes_accessed)

    return pl.pallas_call(
        kernel,
        out_shape=jax.ShapeDtypeStruct((N, H, W, C), jnp.float32),
        grid_spec=grid_spec,
        cost_estimate=cost,
        compiler_params=pltpu.CompilerParams(
            dimension_semantics=("parallel", "parallel"),
            vmem_limit_bytes=48 * 1024 * 1024),
    )(x_nhwc, w1_taps, w2_taps, bias1, bias2)


def _reference(x_nhwc, w1_hwio, w2_hwio, scale1, bias1, scale2, bias2):
    """Pure-JAX reference (lax.conv, unfolded BN) for the correctness check."""
    dn = ('NHWC', 'HWIO', 'NHWC')
    out = lax.conv_general_dilated(x_nhwc, w1_hwio, (1, 1), 'SAME',
                                   dimension_numbers=dn)
    out = jnp.maximum(out * scale1 + bias1, 0.0)
    out = lax.conv_general_dilated(out, w2_hwio, (1, 1), 'SAME',
                                   dimension_numbers=dn)
    out = out * scale2 + bias2 + x_nhwc
    return jnp.maximum(out, 0.0)


if __name__ == "__main__":
    # Small shapes consistent with the module: stride=1, downsample=None => inplanes==planes.
    N, H, W = 2, 16, 16
    inplanes = planes = 8
    eps = 1e-5

    key = jax.random.PRNGKey(0)
    ks = jax.random.split(key, 11)

    # Input in PyTorch NCHW convention, converted to NHWC for the kernel.
    x_nchw = jax.random.normal(ks[0], (N, inplanes, H, W), jnp.float32)
    x_nhwc = jnp.transpose(x_nchw, (0, 2, 3, 1))

    # Conv weights in PyTorch OIHW layout; OIHW -> HWIO for NHWC.
    w1_oihw = 0.1 * jax.random.normal(ks[1], (planes, inplanes, 3, 3), jnp.float32)
    w2_oihw = 0.1 * jax.random.normal(ks[2], (planes, planes, 3, 3), jnp.float32)
    w1_hwio = jnp.transpose(w1_oihw, (2, 3, 1, 0))
    w2_hwio = jnp.transpose(w2_oihw, (2, 3, 1, 0))

    # BatchNorm (eval mode) params, folded into per-channel scale/bias.
    gamma1 = 1.0 + 0.1 * jax.random.normal(ks[3], (planes,), jnp.float32)
    beta1 = 0.1 * jax.random.normal(ks[4], (planes,), jnp.float32)
    mean1 = 0.1 * jax.random.normal(ks[5], (planes,), jnp.float32)
    var1 = jnp.abs(jax.random.normal(ks[6], (planes,), jnp.float32)) + 0.5
    gamma2 = 1.0 + 0.1 * jax.random.normal(ks[7], (planes,), jnp.float32)
    beta2 = 0.1 * jax.random.normal(ks[8], (planes,), jnp.float32)
    mean2 = 0.1 * jax.random.normal(ks[9], (planes,), jnp.float32)
    var2 = jnp.abs(jax.random.normal(ks[10], (planes,), jnp.float32)) + 0.5

    scale1 = gamma1 / jnp.sqrt(var1 + eps)
    bias1 = beta1 - mean1 * scale1
    scale2 = gamma2 / jnp.sqrt(var2 + eps)
    bias2 = beta2 - mean2 * scale2

    # Fold BN scale into the conv weights (per output channel) on the host,
    # flatten taps: (3,3,Cin,Cout) -> (9,Cin,Cout), tap index = ky*3+kx.
    w1_taps = (w1_hwio * scale1[None, None, None, :]).reshape(9, inplanes, planes)
    w2_taps = (w2_hwio * scale2[None, None, None, :]).reshape(9, planes, planes)

    out = basic_block(x_nhwc, w1_taps, w2_taps,
                      bias1.reshape(1, planes), bias2.reshape(1, planes))
    out = jax.block_until_ready(out)

    ref = _reference(x_nhwc, w1_hwio, w2_hwio, scale1, bias1, scale2, bias2)
    ref = jax.block_until_ready(ref)

    assert out.shape == (N, H, W, planes)
    import numpy as np
    np.testing.assert_allclose(np.asarray(out), np.asarray(ref), atol=1e-5, rtol=1e-5)

    print("KERNEL_OK")
</pallas_src>

<mosaic_0001>
module attributes {stable_mosaic.version = 11 : i64} {
  func.func @_basic_block_kernel(%arg0: i32, %arg1: i32, %arg2: memref<1x16x16x8xf32, #tpu.memory_space<vmem>>, %arg3: memref<9x8x8xf32, #tpu.memory_space<vmem>>, %arg4: memref<9x8x8xf32, #tpu.memory_space<vmem>>, %arg5: memref<1x8xf32, #tpu.memory_space<vmem>>, %arg6: memref<1x8xf32, #tpu.memory_space<vmem>>, %arg7: memref<1x8x16x8xf32, #tpu.memory_space<vmem>>, %arg8: memref<304x8xf32, #tpu.memory_space<vmem>>, %arg9: memref<256x8xf32, #tpu.memory_space<vmem>>) attributes {dimension_semantics = [#tpu.dimension_semantics<parallel>, #tpu.dimension_semantics<parallel>], iteration_bounds = array<i64: 2, 2>, scalar_prefetch = 0 : i64, scratch_operands = 2 : i64, tpu.core_type = #tpu.core_type<tc>, window_params = [{transform_indices = @transform_0, window_bounds = array<i64: 1, 16, 16, 8>}, {pipeline_mode = #tpu.pipeline_mode<synchronous>, transform_indices = @transform_1, window_bounds = array<i64: 9, 8, 8>}, {pipeline_mode = #tpu.pipeline_mode<synchronous>, transform_indices = @transform_2, window_bounds = array<i64: 9, 8, 8>}, {pipeline_mode = #tpu.pipeline_mode<synchronous>, transform_indices = @transform_3, window_bounds = array<i64: 1, 8>}, {pipeline_mode = #tpu.pipeline_mode<synchronous>, transform_indices = @transform_4, window_bounds = array<i64: 1, 8>}, {transform_indices = @transform_5, window_bounds = array<i64: 1, 8, 16, 8>}]} {
    %c8_i32 = arith.constant 8 : i32
    %0 = arith.muli %arg1, %c8_i32 : i32
    %cst = arith.constant 0.000000e+00 : f32
    %1 = vector.broadcast %cst : f32 to vector<16x8xf32>
    %cst_0 = arith.constant 0.000000e+00 : f32
    %2 = vector.broadcast %cst_0 : f32 to vector<8x8xf32>
    %cst_1 = arith.constant 0.000000e+00 : f32
    %3 = vector.broadcast %cst_1 : f32 to vector<8x8xf32>
    %c0 = arith.constant 0 : index
    %c0_2 = arith.constant 0 : index
    %4 = vector.load %arg8[%c0, %c0_2] : memref<304x8xf32, #tpu.memory_space<vmem>>, vector<8x8xf32>
    tpu.vector_store %arg8[%c0, %c0_2], %3 {strides = array<i32>} : memref<304x8xf32, #tpu.memory_space<vmem>>, vector<8x8xf32>,
    %cst_3 = arith.constant 0.000000e+00 : f32
    %5 = vector.broadcast %cst_3 : f32 to vector<8x8xf32>
    %c296 = arith.constant 296 : index
    %c0_4 = arith.constant 0 : index
    %6 = vector.load %arg8[%c296, %c0_4] : memref<304x8xf32, #tpu.memory_space<vmem>>, vector<8x8xf32>
    tpu.vector_store %arg8[%c296, %c0_4], %5 {strides = array<i32>} : memref<304x8xf32, #tpu.memory_space<vmem>>, vector<8x8xf32>,
    %c24 = arith.constant 24 : index
    %c0_5 = arith.constant 0 : index
    %7 = vector.load %arg8[%c24, %c0_5] : memref<304x8xf32, #tpu.memory_space<vmem>>, vector<8x8xf32>
    tpu.vector_store %arg8[%c24, %c0_5], %2 {strides = array<i32>} : memref<304x8xf32, #tpu.memory_space<vmem>>, vector<8x8xf32>,
    %c2_i32 = arith.constant 2 : i32
    %8 = arith.subi %0, %c2_i32 : i32
    %c0_i32 = arith.constant 0 : i32
    %9 = arith.addi %8, %c0_i32 : i32
    %c0_i32_6 = arith.constant 0 : i32
    %10 = arith.cmpi eq, %arg1, %c0_i32_6 : i32
    %11 = arith.extui %10 : i1 to i32
    %c0_i32_7 = arith.constant 0 : i32
    %12 = arith.cmpi ne, %11, %c0_i32_7 : i32
    scf.if %12 {
      %c8_238 = arith.constant 8 : index
      %c0_239 = arith.constant 0 : index
      %252 = vector.load %arg8[%c8_238, %c0_239] : memref<304x8xf32, #tpu.memory_space<vmem>>, vector<16x8xf32>
      tpu.vector_store %arg8[%c8_238, %c0_239], %1 {strides = array<i32>} : memref<304x8xf32, #tpu.memory_space<vmem>>, vector<16x8xf32>,
    } else {
    }
    %c0_i32_8 = arith.constant 0 : i32
    %13 = arith.cmpi sgt, %arg1, %c0_i32_8 : i32
    %14 = arith.extui %13 : i1 to i32
    %c0_i32_9 = arith.constant 0 : i32
    %15 = arith.cmpi ne, %14, %c0_i32_9 : i32
    scf.if %15 {
      %c0_238 = arith.constant 0 : index
      %252 = arith.index_cast %9 : i32 to index
      %c0_239 = arith.constant 0 : index
      %c0_240 = arith.constant 0 : index
      %253 = vector.load %arg2[%c0_238, %252, %c0_239, %c0_240] : memref<1x16x16x8xf32, #tpu.memory_space<vmem>>, vector<1x1x16x8xf32>
      %254 = vector.shape_cast %253 : vector<1x1x16x8xf32> to vector<16x8xf32>
      %c8_241 = arith.constant 8 : index
      %c0_242 = arith.constant 0 : index
      %255 = vector.load %arg8[%c8_241, %c0_242] : memref<304x8xf32, #tpu.memory_space<vmem>>, vector<16x8xf32>
      tpu.vector_store %arg8[%c8_241, %c0_242], %254 {strides = array<i32>} : memref<304x8xf32, #tpu.memory_space<vmem>>, vector<16x8xf32>,
    } else {
    }
    %c48 = arith.constant 48 : index
    %c0_10 = arith.constant 0 : index
    %16 = vector.load %arg8[%c48, %c0_10] : memref<304x8xf32, #tpu.memory_space<vmem>>, vector<8x8xf32>
    tpu.vector_store %arg8[%c48, %c0_10], %2 {strides = array<i32>} : memref<304x8xf32, #tpu.memory_space<vmem>>, vector<8x8xf32>,
    %c2_i32_11 = arith.constant 2 : i32
    %17 = arith.subi %0, %c2_i32_11 : i32
    %c1_i32 = arith.constant 1 : i32
    %18 = arith.addi %17, %c1_i32 : i32
    %c0_i32_12 = arith.constant 0 : i32
    %19 = arith.cmpi eq, %arg1, %c0_i32_12 : i32
    %20 = arith.extui %19 : i1 to i32
    %c0_i32_13 = arith.constant 0 : i32
    %21 = arith.cmpi ne, %20, %c0_i32_13 : i32
    scf.if %21 {
      %c32_238 = arith.constant 32 : index
      %c0_239 = arith.constant 0 : index
      %252 = vector.load %arg8[%c32_238, %c0_239] : memref<304x8xf32, #tpu.memory_space<vmem>>, vector<16x8xf32>
      tpu.vector_store %arg8[%c32_238, %c0_239], %1 {strides = array<i32>} : memref<304x8xf32, #tpu.memory_space<vmem>>, vector<16x8xf32>,
    } else {
    }
    %c0_i32_14 = arith.constant 0 : i32
    %22 = arith.cmpi sgt, %arg1, %c0_i32_14 : i32
    %23 = arith.extui %22 : i1 to i32
    %c0_i32_15 = arith.constant 0 : i32
    %24 = arith.cmpi ne, %23, %c0_i32_15 : i32
    scf.if %24 {
      %c0_238 = arith.constant 0 : index
      %252 = arith.index_cast %18 : i32 to index
      %c0_239 = arith.constant 0 : index
      %c0_240 = arith.constant 0 : index
      %253 = vector.load %arg2[%c0_238, %252, %c0_239, %c0_240] : memref<1x16x16x8xf32, #tpu.memory_space<vmem>>, vector<1x1x16x8xf32>
      %254 = vector.shape_cast %253 : vector<1x1x16x8xf32> to vector<16x8xf32>
      %c32_241 = arith.constant 32 : index
      %c0_242 = arith.constant 0 : index
      %255 = vector.load %arg8[%c32_241, %c0_242] : memref<304x8xf32, #tpu.memory_space<vmem>>, vector<16x8xf32>
      tpu.vector_store %arg8[%c32_241, %c0_242], %254 {strides = array<i32>} : memref<304x8xf32, #tpu.memory_space<vmem>>, vector<16x8xf32>,
    } else {
    }
    %c72 = arith.constant 72 : index
    %c0_16 = arith.constant 0 : index
    %25 = vector.load %arg8[%c72, %c0_16] : memref<304x8xf32, #tpu.memory_space<vmem>>, vector<8x8xf32>
    tpu.vector_store %arg8[%c72, %c0_16], %2 {strides = array<i32>} : memref<304x8xf32, #tpu.memory_space<vmem>>, vector<8x8xf32>,
    %c0_i32_17 = arith.constant 0 : i32
    %26 = arith.addi %0, %c0_i32_17 : i32
    %c0_18 = arith.constant 0 : index
    %27 = arith.index_cast %26 : i32 to index
    %c0_19 = arith.constant 0 : index
    %c0_20 = arith.constant 0 : index
    %28 = vector.load %arg2[%c0_18, %27, %c0_19, %c0_20] : memref<1x16x16x8xf32, #tpu.memory_space<vmem>>, vector<1x1x16x8xf32>
    %29 = vector.shape_cast %28 : vector<1x1x16x8xf32> to vector<16x8xf32>
    %c56 = arith.constant 56 : index
    %c0_21 = arith.constant 0 : index
    %30 = vector.load %arg8[%c56, %c0_21] : memref<304x8xf32, #tpu.memory_space<vmem>>, vector<16x8xf32>
    tpu.vector_store %arg8[%c56, %c0_21], %29 {strides = array<i32>} : memref<304x8xf32, #tpu.memory_space<vmem>>, vector<16x8xf32>,
    %c96 = arith.constant 96 : index
    %c0_22 = arith.constant 0 : index
    %31 = vector.load %arg8[%c96, %c0_22] : memref<304x8xf32, #tpu.memory_space<vmem>>, vector<8x8xf32>
    tpu.vector_store %arg8[%c96, %c0_22], %2 {strides = array<i32>} : memref<304x8xf32, #tpu.memory_space<vmem>>, vector<8x8xf32>,
    %c1_i32_23 = arith.constant 1 : i32
    %32 = arith.addi %0, %c1_i32_23 : i32
    %c0_24 = arith.constant 0 : index
    %33 = arith.index_cast %32 : i32 to index
    %c0_25 = arith.constant 0 : index
    %c0_26 = arith.constant 0 : index
    %34 = vector.load %arg2[%c0_24, %33, %c0_25, %c0_26] : memref<1x16x16x8xf32, #tpu.memory_space<vmem>>, vector<1x1x16x8xf32>
    %35 = vector.shape_cast %34 : vector<1x1x16x8xf32> to vector<16x8xf32>
    %c80 = arith.constant 80 : index
    %c0_27 = arith.constant 0 : index
    %36 = vector.load %arg8[%c80, %c0_27] : memref<304x8xf32, #tpu.memory_space<vmem>>, vector<16x8xf32>
    tpu.vector_store %arg8[%c80, %c0_27], %35 {strides = array<i32>} : memref<304x8xf32, #tpu.memory_space<vmem>>, vector<16x8xf32>,
    %c120 = arith.constant 120 : index
    %c0_28 = arith.constant 0 : index
    %37 = vector.load %arg8[%c120, %c0_28] : memref<304x8xf32, #tpu.memory_space<vmem>>, vector<8x8xf32>
    tpu.vector_store %arg8[%c120, %c0_28], %2 {strides = array<i32>} : memref<304x8xf32, #tpu.memory_space<vmem>>, vector<8x8xf32>,
    %c2_i32_29 = arith.constant 2 : i32
    %38 = arith.addi %0, %c2_i32_29 : i32
    %c0_30 = arith.constant 0 : index
    %39 = arith.index_cast %38 : i32 to index
    %c0_31 = arith.constant 0 : index
    %c0_32 = arith.constant 0 : index
    %40 = vector.load %arg2[%c0_30, %39, %c0_31, %c0_32] : memref<1x16x16x8xf32, #tpu.memory_space<vmem>>, vector<1x1x16x8xf32>
    %41 = vector.shape_cast %40 : vector<1x1x16x8xf32> to vector<16x8xf32>
    %c104 = arith.constant 104 : index
    %c0_33 = arith.constant 0 : index
    %42 = vector.load %arg8[%c104, %c0_33] : memref<304x8xf32, #tpu.memory_space<vmem>>, vector<16x8xf32>
    tpu.vector_store %arg8[%c104, %c0_33], %41 {strides = array<i32>} : memref<304x8xf32, #tpu.memory_space<vmem>>, vector<16x8xf32>,
    %c144 = arith.constant 144 : index
    %c0_34 = arith.constant 0 : index
    %43 = vector.load %arg8[%c144, %c0_34] : memref<304x8xf32, #tpu.memory_space<vmem>>, vector<8x8xf32>
    tpu.vector_store %arg8[%c144, %c0_34], %2 {strides = array<i32>} : memref<304x8xf32, #tpu.memory_space<vmem>>, vector<8x8xf32>,
    %c3_i32 = arith.constant 3 : i32
    %44 = arith.addi %0, %c3_i32 : i32
    %c0_35 = arith.constant 0 : index
    %45 = arith.index_cast %44 : i32 to index
    %c0_36 = arith.constant 0 : index
    %c0_37 = arith.constant 0 : index
    %46 = vector.load %arg2[%c0_35, %45, %c0_36, %c0_37] : memref<1x16x16x8xf32, #tpu.memory_space<vmem>>, vector<1x1x16x8xf32>
    %47 = vector.shape_cast %46 : vector<1x1x16x8xf32> to vector<16x8xf32>
    %c128 = arith.constant 128 : index
    %c0_38 = arith.constant 0 : index
    %48 = vector.load %arg8[%c128, %c0_38] : memref<304x8xf32, #tpu.memory_space<vmem>>, vector<16x8xf32>
    tpu.vector_store %arg8[%c128, %c0_38], %47 {strides = array<i32>} : memref<304x8xf32, #tpu.memory_space<vmem>>, vector<16x8xf32>,
    %c168 = arith.constant 168 : index
    %c0_39 = arith.constant 0 : index
    %49 = vector.load %arg8[%c168, %c0_39] : memref<304x8xf32, #tpu.memory_space<vmem>>, vector<8x8xf32>
    tpu.vector_store %arg8[%c168, %c0_39], %2 {strides = array<i32>} : memref<304x8xf32, #tpu.memory_space<vmem>>, vector<8x8xf32>,
    %c4_i32 = arith.constant 4 : i32
    %50 = arith.addi %0, %c4_i32 : i32
    %c0_40 = arith.constant 0 : index
    %51 = arith.index_cast %50 : i32 to index
    %c0_41 = arith.constant 0 : index
    %c0_42 = arith.constant 0 : index
    %52 = vector.load %arg2[%c0_40, %51, %c0_41, %c0_42] : memref<1x16x16x8xf32, #tpu.memory_space<vmem>>, vector<1x1x16x8xf32>
    %53 = vector.shape_cast %52 : vector<1x1x16x8xf32> to vector<16x8xf32>
    %c152 = arith.constant 152 : index
    %c0_43 = arith.constant 0 : index
    %54 = vector.load %arg8[%c152, %c0_43] : memref<304x8xf32, #tpu.memory_space<vmem>>, vector<16x8xf32>
    tpu.vector_store %arg8[%c152, %c0_43], %53 {strides = array<i32>} : memref<304x8xf32, #tpu.memory_space<vmem>>, vector<16x8xf32>,
    %c192 = arith.constant 192 : index
    %c0_44 = arith.constant 0 : index
    %55 = vector.load %arg8[%c192, %c0_44] : memref<304x8xf32, #tpu.memory_space<vmem>>, vector<8x8xf32>
    tpu.vector_store %arg8[%c192, %c0_44], %2 {strides = array<i32>} : memref<304x8xf32, #tpu.memory_space<vmem>>, vector<8x8xf32>,
    %c5_i32 = arith.constant 5 : i32
    %56 = arith.addi %0, %c5_i32 : i32
    %c0_45 = arith.constant 0 : index
    %57 = arith.index_cast %56 : i32 to index
    %c0_46 = arith.constant 0 : index
    %c0_47 = arith.constant 0 : index
    %58 = vector.load %arg2[%c0_45, %57, %c0_46, %c0_47] : memref<1x16x16x8xf32, #tpu.memory_space<vmem>>, vector<1x1x16x8xf32>
    %59 = vector.shape_cast %58 : vector<1x1x16x8xf32> to vector<16x8xf32>
    %c176 = arith.constant 176 : index
    %c0_48 = arith.constant 0 : index
    %60 = vector.load %arg8[%c176, %c0_48] : memref<304x8xf32, #tpu.memory_space<vmem>>, vector<16x8xf32>
    tpu.vector_store %arg8[%c176, %c0_48], %59 {strides = array<i32>} : memref<304x8xf32, #tpu.memory_space<vmem>>, vector<16x8xf32>,
    %c216 = arith.constant 216 : index
    %c0_49 = arith.constant 0 : index
    %61 = vector.load %arg8[%c216, %c0_49] : memref<304x8xf32, #tpu.memory_space<vmem>>, vector<8x8xf32>
    tpu.vector_store %arg8[%c216, %c0_49], %2 {strides = array<i32>} : memref<304x8xf32, #tpu.memory_space<vmem>>, vector<8x8xf32>,
    %c6_i32 = arith.constant 6 : i32
    %62 = arith.addi %0, %c6_i32 : i32
    %c0_50 = arith.constant 0 : index
    %63 = arith.index_cast %62 : i32 to index
    %c0_51 = arith.constant 0 : index
    %c0_52 = arith.constant 0 : index
    %64 = vector.load %arg2[%c0_50, %63, %c0_51, %c0_52] : memref<1x16x16x8xf32, #tpu.memory_space<vmem>>, vector<1x1x16x8xf32>
    %65 = vector.shape_cast %64 : vector<1x1x16x8xf32> to vector<16x8xf32>
    %c200 = arith.constant 200 : index
    %c0_53 = arith.constant 0 : index
    %66 = vector.load %arg8[%c200, %c0_53] : memref<304x8xf32, #tpu.memory_space<vmem>>, vector<16x8xf32>
    tpu.vector_store %arg8[%c200, %c0_53], %65 {strides = array<i32>} : memref<304x8xf32, #tpu.memory_space<vmem>>, vector<16x8xf32>,
    %c240 = arith.constant 240 : index
    %c0_54 = arith.constant 0 : index
    %67 = vector.load %arg8[%c240, %c0_54] : memref<304x8xf32, #tpu.memory_space<vmem>>, vector<8x8xf32>
    tpu.vector_store %arg8[%c240, %c0_54], %2 {strides = array<i32>} : memref<304x8xf32, #tpu.memory_space<vmem>>, vector<8x8xf32>,
    %c7_i32 = arith.constant 7 : i32
    %68 = arith.addi %0, %c7_i32 : i32
    %c0_55 = arith.constant 0 : index
    %69 = arith.index_cast %68 : i32 to index
    %c0_56 = arith.constant 0 : index
    %c0_57 = arith.constant 0 : index
    %70 = vector.load %arg2[%c0_55, %69, %c0_56, %c0_57] : memref<1x16x16x8xf32, #tpu.memory_space<vmem>>, vector<1x1x16x8xf32>
    %71 = vector.shape_cast %70 : vector<1x1x16x8xf32> to vector<16x8xf32>
    %c224 = arith.constant 224 : index
    %c0_58 = arith.constant 0 : index
    %72 = vector.load %arg8[%c224, %c0_58] : memref<304x8xf32, #tpu.memory_space<vmem>>, vector<16x8xf32>
    tpu.vector_store %arg8[%c224, %c0_58], %71 {strides = array<i32>} : memref<304x8xf32, #tpu.memory_space<vmem>>, vector<16x8xf32>,
    %c264 = arith.constant 264 : index
    %c0_59 = arith.constant 0 : index
    %73 = vector.load %arg8[%c264, %c0_59] : memref<304x8xf32, #tpu.memory_space<vmem>>, vector<8x8xf32>
    tpu.vector_store %arg8[%c264, %c0_59], %2 {strides = array<i32>} : memref<304x8xf32, #tpu.memory_space<vmem>>, vector<8x8xf32>,
    %c2_i32_60 = arith.constant 2 : i32
    %74 = arith.subi %0, %c2_i32_60 : i32
    %c10_i32 = arith.constant 10 : i32
    %75 = arith.addi %74, %c10_i32 : i32
    %c1_i32_61 = arith.constant 1 : i32
    %76 = arith.cmpi eq, %arg1, %c1_i32_61 : i32
    %77 = arith.extui %76 : i1 to i32
    %c0_i32_62 = arith.constant 0 : i32
    %78 = arith.cmpi ne, %77, %c0_i32_62 : i32
    scf.if %78 {
      %c248_238 = arith.constant 248 : index
      %c0_239 = arith.constant 0 : index
      %252 = vector.load %arg8[%c248_238, %c0_239] : memref<304x8xf32, #tpu.memory_space<vmem>>, vector<16x8xf32>
      tpu.vector_store %arg8[%c248_238, %c0_239], %1 {strides = array<i32>} : memref<304x8xf32, #tpu.memory_space<vmem>>, vector<16x8xf32>,
    } else {
    }
    %c1_i32_63 = arith.constant 1 : i32
    %79 = arith.cmpi slt, %arg1, %c1_i32_63 : i32
    %80 = arith.extui %79 : i1 to i32
    %c0_i32_64 = arith.constant 0 : i32
    %81 = arith.cmpi ne, %80, %c0_i32_64 : i32
    scf.if %81 {
      %c0_238 = arith.constant 0 : index
      %252 = arith.index_cast %75 : i32 to index
      %c0_239 = arith.constant 0 : index
      %c0_240 = arith.constant 0 : index
      %253 = vector.load %arg2[%c0_238, %252, %c0_239, %c0_240] : memref<1x16x16x8xf32, #tpu.memory_space<vmem>>, vector<1x1x16x8xf32>
      %254 = vector.shape_cast %253 : vector<1x1x16x8xf32> to vector<16x8xf32>
      %c248_241 = arith.constant 248 : index
      %c0_242 = arith.constant 0 : index
      %255 = vector.load %arg8[%c248_241, %c0_242] : memref<304x8xf32, #tpu.memory_space<vmem>>, vector<16x8xf32>
      tpu.vector_store %arg8[%c248_241, %c0_242], %254 {strides = array<i32>} : memref<304x8xf32, #tpu.memory_space<vmem>>, vector<16x8xf32>,
    } else {
    }
    %c288 = arith.constant 288 : index
    %c0_65 = arith.constant 0 : index
    %82 = vector.load %arg8[%c288, %c0_65] : memref<304x8xf32, #tpu.memory_space<vmem>>, vector<8x8xf32>
    tpu.vector_store %arg8[%c288, %c0_65], %2 {strides = array<i32>} : memref<304x8xf32, #tpu.memory_space<vmem>>, vector<8x8xf32>,
    %c2_i32_66 = arith.constant 2 : i32
    %83 = arith.subi %0, %c2_i32_66 : i32
    %c11_i32 = arith.constant 11 : i32
    %84 = arith.addi %83, %c11_i32 : i32
    %c1_i32_67 = arith.constant 1 : i32
    %85 = arith.cmpi eq, %arg1, %c1_i32_67 : i32
    %86 = arith.extui %85 : i1 to i32
    %c0_i32_68 = arith.constant 0 : i32
    %87 = arith.cmpi ne, %86, %c0_i32_68 : i32
    scf.if %87 {
      %c272 = arith.constant 272 : index
      %c0_238 = arith.constant 0 : index
      %252 = vector.load %arg8[%c272, %c0_238] : memref<304x8xf32, #tpu.memory_space<vmem>>, vector<16x8xf32>
      tpu.vector_store %arg8[%c272, %c0_238], %1 {strides = array<i32>} : memref<304x8xf32, #tpu.memory_space<vmem>>, vector<16x8xf32>,
    } else {
    }
    %c1_i32_69 = arith.constant 1 : i32
    %88 = arith.cmpi slt, %arg1, %c1_i32_69 : i32
    %89 = arith.extui %88 : i1 to i32
    %c0_i32_70 = arith.constant 0 : i32
    %90 = arith.cmpi ne, %89, %c0_i32_70 : i32
    scf.if %90 {
      %c0_238 = arith.constant 0 : index
      %252 = arith.index_cast %84 : i32 to index
      %c0_239 = arith.constant 0 : index
      %c0_240 = arith.constant 0 : index
      %253 = vector.load %arg2[%c0_238, %252, %c0_239, %c0_240] : memref<1x16x16x8xf32, #tpu.memory_space<vmem>>, vector<1x1x16x8xf32>
      %254 = vector.shape_cast %253 : vector<1x1x16x8xf32> to vector<16x8xf32>
      %c272 = arith.constant 272 : index
      %c0_241 = arith.constant 0 : index
      %255 = vector.load %arg8[%c272, %c0_241] : memref<304x8xf32, #tpu.memory_space<vmem>>, vector<16x8xf32>
      tpu.vector_store %arg8[%c272, %c0_241], %254 {strides = array<i32>} : memref<304x8xf32, #tpu.memory_space<vmem>>, vector<16x8xf32>,
    } else {
    }
    %cst_71 = arith.constant 0.000000e+00 : f32
    %91 = vector.broadcast %cst_71 : f32 to vector<240x8xf32>
    %c7 = arith.constant 7 : index
    %c0_72 = arith.constant 0 : index
    %92 = vector.load %arg8[%c7, %c0_72] : memref<304x8xf32, #tpu.memory_space<vmem>>, vector<240x8xf32>
    %c0_73 = arith.constant 0 : index
    %c0_74 = arith.constant 0 : index
    %c0_75 = arith.constant 0 : index
    %93 = vector.load %arg3[%c0_73, %c0_74, %c0_75] : memref<9x8x8xf32, #tpu.memory_space<vmem>>, vector<1x8x8xf32>
    %94 = vector.shape_cast %93 : vector<1x8x8xf32> to vector<8x8xf32>
    %cst_76 = arith.constant dense<0.000000e+00> : vector<240x8xf32>
    %95 = tpu.matmul %92, %94, %cst_76 {dimension_numbers = #tpu.dot_dimension_numbers<[1], [0], [0], [1], [0, 0, 1, 1], [], []>} : vector<240x8xf32>, vector<8x8xf32>, vector<240x8xf32> -> vector<240x8xf32>
    %96 = arith.addf %91, %95 : vector<240x8xf32>
    %c8 = arith.constant 8 : index
    %c0_77 = arith.constant 0 : index
    %97 = vector.load %arg8[%c8, %c0_77] : memref<304x8xf32, #tpu.memory_space<vmem>>, vector<240x8xf32>
    %c1 = arith.constant 1 : index
    %c0_78 = arith.constant 0 : index
    %c0_79 = arith.constant 0 : index
    %98 = vector.load %arg3[%c1, %c0_78, %c0_79] : memref<9x8x8xf32, #tpu.memory_space<vmem>>, vector<1x8x8xf32>
    %99 = vector.shape_cast %98 : vector<1x8x8xf32> to vector<8x8xf32>
    %cst_80 = arith.constant dense<0.000000e+00> : vector<240x8xf32>
    %100 = tpu.matmul %97, %99, %cst_80 {dimension_numbers = #tpu.dot_dimension_numbers<[1], [0], [0], [1], [0, 0, 1, 1], [], []>} : vector<240x8xf32>, vector<8x8xf32>, vector<240x8xf32> -> vector<240x8xf32>
    %101 = arith.addf %96, %100 : vector<240x8xf32>
    %c9 = arith.constant 9 : index
    %c0_81 = arith.constant 0 : index
    %102 = vector.load %arg8[%c9, %c0_81] : memref<304x8xf32, #tpu.memory_space<vmem>>, vector<240x8xf32>
    %c2 = arith.constant 2 : index
    %c0_82 = arith.constant 0 : index
    %c0_83 = arith.constant 0 : index
    %103 = vector.load %arg3[%c2, %c0_82, %c0_83] : memref<9x8x8xf32, #tpu.memory_space<vmem>>, vector<1x8x8xf32>
    %104 = vector.shape_cast %103 : vector<1x8x8xf32> to vector<8x8xf32>
    %cst_84 = arith.constant dense<0.000000e+00> : vector<240x8xf32>
    %105 = tpu.matmul %102, %104, %cst_84 {dimension_numbers = #tpu.dot_dimension_numbers<[1], [0], [0], [1], [0, 0, 1, 1], [], []>} : vector<240x8xf32>, vector<8x8xf32>, vector<240x8xf32> -> vector<240x8xf32>
    %106 = arith.addf %101, %105 : vector<240x8xf32>
    %c31 = arith.constant 31 : index
    %c0_85 = arith.constant 0 : index
    %107 = vector.load %arg8[%c31, %c0_85] : memref<304x8xf32, #tpu.memory_space<vmem>>, vector<240x8xf32>
    %c3 = arith.constant 3 : index
    %c0_86 = arith.constant 0 : index
    %c0_87 = arith.constant 0 : index
    %108 = vector.load %arg3[%c3, %c0_86, %c0_87] : memref<9x8x8xf32, #tpu.memory_space<vmem>>, vector<1x8x8xf32>
    %109 = vector.shape_cast %108 : vector<1x8x8xf32> to vector<8x8xf32>
    %cst_88 = arith.constant dense<0.000000e+00> : vector<240x8xf32>
    %110 = tpu.matmul %107, %109, %cst_88 {dimension_numbers = #tpu.dot_dimension_numbers<[1], [0], [0], [1], [0, 0, 1, 1], [], []>} : vector<240x8xf32>, vector<8x8xf32>, vector<240x8xf32> -> vector<240x8xf32>
    %111 = arith.addf %106, %110 : vector<240x8xf32>
    %c32 = arith.constant 32 : index
    %c0_89 = arith.constant 0 : index
    %112 = vector.load %arg8[%c32, %c0_89] : memref<304x8xf32, #tpu.memory_space<vmem>>, vector<240x8xf32>
    %c4 = arith.constant 4 : index
    %c0_90 = arith.constant 0 : index
    %c0_91 = arith.constant 0 : index
    %113 = vector.load %arg3[%c4, %c0_90, %c0_91] : memref<9x8x8xf32, #tpu.memory_space<vmem>>, vector<1x8x8xf32>
    %114 = vector.shape_cast %113 : vector<1x8x8xf32> to vector<8x8xf32>
    %cst_92 = arith.constant dense<0.000000e+00> : vector<240x8xf32>
    %115 = tpu.matmul %112, %114, %cst_92 {dimension_numbers = #tpu.dot_dimension_numbers<[1], [0], [0], [1], [0, 0, 1, 1], [], []>} : vector<240x8xf32>, vector<8x8xf32>, vector<240x8xf32> -> vector<240x8xf32>
    %116 = arith.addf %111, %115 : vector<240x8xf32>
    %c33 = arith.constant 33 : index
    %c0_93 = arith.constant 0 : index
    %117 = vector.load %arg8[%c33, %c0_93] : memref<304x8xf32, #tpu.memory_space<vmem>>, vector<240x8xf32>
    %c5 = arith.constant 5 : index
    %c0_94 = arith.constant 0 : index
    %c0_95 = arith.constant 0 : index
    %118 = vector.load %arg3[%c5, %c0_94, %c0_95] : memref<9x8x8xf32, #tpu.memory_space<vmem>>, vector<1x8x8xf32>
    %119 = vector.shape_cast %118 : vector<1x8x8xf32> to vector<8x8xf32>
    %cst_96 = arith.constant dense<0.000000e+00> : vector<240x8xf32>
    %120 = tpu.matmul %117, %119, %cst_96 {dimension_numbers = #tpu.dot_dimension_numbers<[1], [0], [0], [1], [0, 0, 1, 1], [], []>} : vector<240x8xf32>, vector<8x8xf32>, vector<240x8xf32> -> vector<240x8xf32>
    %121 = arith.addf %116, %120 : vector<240x8xf32>
    %c55 = arith.constant 55 : index
    %c0_97 = arith.constant 0 : index
    %122 = vector.load %arg8[%c55, %c0_97] : memref<304x8xf32, #tpu.memory_space<vmem>>, vector<240x8xf32>
    %c6 = arith.constant 6 : index
    %c0_98 = arith.constant 0 : index
    %c0_99 = arith.constant 0 : index
    %123 = vector.load %arg3[%c6, %c0_98, %c0_99] : memref<9x8x8xf32, #tpu.memory_space<vmem>>, vector<1x8x8xf32>
    %124 = vector.shape_cast %123 : vector<1x8x8xf32> to vector<8x8xf32>
    %cst_100 = arith.constant dense<0.000000e+00> : vector<240x8xf32>
    %125 = tpu.matmul %122, %124, %cst_100 {dimension_numbers = #tpu.dot_dimension_numbers<[1], [0], [0], [1], [0, 0, 1, 1], [], []>} : vector<240x8xf32>, vector<8x8xf32>, vector<240x8xf32> -> vector<240x8xf32>
    %126 = arith.addf %121, %125 : vector<240x8xf32>
    %c56_101 = arith.constant 56 : index
    %c0_102 = arith.constant 0 : index
    %127 = vector.load %arg8[%c56_101, %c0_102] : memref<304x8xf32, #tpu.memory_space<vmem>>, vector<240x8xf32>
    %c7_103 = arith.constant 7 : index
    %c0_104 = arith.constant 0 : index
    %c0_105 = arith.constant 0 : index
    %128 = vector.load %arg3[%c7_103, %c0_104, %c0_105] : memref<9x8x8xf32, #tpu.memory_space<vmem>>, vector<1x8x8xf32>
    %129 = vector.shape_cast %128 : vector<1x8x8xf32> to vector<8x8xf32>
    %cst_106 = arith.constant dense<0.000000e+00> : vector<240x8xf32>
    %130 = tpu.matmul %127, %129, %cst_106 {dimension_numbers = #tpu.dot_dimension_numbers<[1], [0], [0], [1], [0, 0, 1, 1], [], []>} : vector<240x8xf32>, vector<8x8xf32>, vector<240x8xf32> -> vector<240x8xf32>
    %131 = arith.addf %126, %130 : vector<240x8xf32>
    %c57 = arith.constant 57 : index
    %c0_107 = arith.constant 0 : index
    %132 = vector.load %arg8[%c57, %c0_107] : memref<304x8xf32, #tpu.memory_space<vmem>>, vector<240x8xf32>
    %c8_108 = arith.constant 8 : index
    %c0_109 = arith.constant 0 : index
    %c0_110 = arith.constant 0 : index
    %133 = vector.load %arg3[%c8_108, %c0_109, %c0_110] : memref<9x8x8xf32, #tpu.memory_space<vmem>>, vector<1x8x8xf32>
    %134 = vector.shape_cast %133 : vector<1x8x8xf32> to vector<8x8xf32>
    %cst_111 = arith.constant dense<0.000000e+00> : vector<240x8xf32>
    %135 = tpu.matmul %132, %134, %cst_111 {dimension_numbers = #tpu.dot_dimension_numbers<[1], [0], [0], [1], [0, 0, 1, 1], [], []>} : vector<240x8xf32>, vector<8x8xf32>, vector<240x8xf32> -> vector<240x8xf32>
    %136 = arith.addf %131, %135 : vector<240x8xf32>
    %c0_112 = arith.constant 0 : index
    %c0_113 = arith.constant 0 : index
    %137 = vector.load %arg5[%c0_112, %c0_113] : memref<1x8xf32, #tpu.memory_space<vmem>>, vector<1x8xf32>
    %138 = vector.shape_cast %137 : vector<1x8xf32> to vector<8xf32>
    %139 = vector.shape_cast %138 : vector<8xf32> to vector<1x8xf32>
    %140 = vector.broadcast %139 : vector<1x8xf32> to vector<240x8xf32>
    %141 = arith.addf %136, %140 : vector<240x8xf32>
    %cst_114 = arith.constant 0.000000e+00 : f32
    %142 = vector.broadcast %cst_114 : f32 to vector<240x8xf32>
    %143 = arith.maximumf %141, %142 : vector<240x8xf32>
    %cst_115 = arith.constant 0.000000e+00 : f32
    %144 = vector.broadcast %cst_115 : f32 to vector<8x8xf32>
    %c0_116 = arith.constant 0 : index
    %c0_117 = arith.constant 0 : index
    %145 = vector.load %arg9[%c0_116, %c0_117] : memref<256x8xf32, #tpu.memory_space<vmem>>, vector<8x8xf32>
    tpu.vector_store %arg9[%c0_116, %c0_117], %144 {strides = array<i32>} : memref<256x8xf32, #tpu.memory_space<vmem>>, vector<8x8xf32>,
    %c8_118 = arith.constant 8 : index
    %c0_119 = arith.constant 0 : index
    %146 = vector.load %arg9[%c8_118, %c0_119] : memref<256x8xf32, #tpu.memory_space<vmem>>, vector<240x8xf32>
    tpu.vector_store %arg9[%c8_118, %c0_119], %143 {strides = array<i32>} : memref<256x8xf32, #tpu.memory_space<vmem>>, vector<240x8xf32>,
    %cst_120 = arith.constant 0.000000e+00 : f32
    %147 = vector.broadcast %cst_120 : f32 to vector<8x8xf32>
    %c248 = arith.constant 248 : index
    %c0_121 = arith.constant 0 : index
    %148 = vector.load %arg9[%c248, %c0_121] : memref<256x8xf32, #tpu.memory_space<vmem>>, vector<8x8xf32>
    tpu.vector_store %arg9[%c248, %c0_121], %147 {strides = array<i32>} : memref<256x8xf32, #tpu.memory_space<vmem>>, vector<8x8xf32>,
    %c24_122 = arith.constant 24 : index
    %c0_123 = arith.constant 0 : index
    %149 = vector.load %arg9[%c24_122, %c0_123] : memref<256x8xf32, #tpu.memory_space<vmem>>, vector<8x8xf32>
    tpu.vector_store %arg9[%c24_122, %c0_123], %2 {strides = array<i32>} : memref<256x8xf32, #tpu.memory_space<vmem>>, vector<8x8xf32>,
    %c48_124 = arith.constant 48 : index
    %c0_125 = arith.constant 0 : index
    %150 = vector.load %arg9[%c48_124, %c0_125] : memref<256x8xf32, #tpu.memory_space<vmem>>, vector<8x8xf32>
    tpu.vector_store %arg9[%c48_124, %c0_125], %2 {strides = array<i32>} : memref<256x8xf32, #tpu.memory_space<vmem>>, vector<8x8xf32>,
    %c72_126 = arith.constant 72 : index
    %c0_127 = arith.constant 0 : index
    %151 = vector.load %arg9[%c72_126, %c0_127] : memref<256x8xf32, #tpu.memory_space<vmem>>, vector<8x8xf32>
    tpu.vector_store %arg9[%c72_126, %c0_127], %2 {strides = array<i32>} : memref<256x8xf32, #tpu.memory_space<vmem>>, vector<8x8xf32>,
    %c96_128 = arith.constant 96 : index
    %c0_129 = arith.constant 0 : index
    %152 = vector.load %arg9[%c96_128, %c0_129] : memref<256x8xf32, #tpu.memory_space<vmem>>, vector<8x8xf32>
    tpu.vector_store %arg9[%c96_128, %c0_129], %2 {strides = array<i32>} : memref<256x8xf32, #tpu.memory_space<vmem>>, vector<8x8xf32>,
    %c120_130 = arith.constant 120 : index
    %c0_131 = arith.constant 0 : index
    %153 = vector.load %arg9[%c120_130, %c0_131] : memref<256x8xf32, #tpu.memory_space<vmem>>, vector<8x8xf32>
    tpu.vector_store %arg9[%c120_130, %c0_131], %2 {strides = array<i32>} : memref<256x8xf32, #tpu.memory_space<vmem>>, vector<8x8xf32>,
    %c144_132 = arith.constant 144 : index
    %c0_133 = arith.constant 0 : index
    %154 = vector.load %arg9[%c144_132, %c0_133] : memref<256x8xf32, #tpu.memory_space<vmem>>, vector<8x8xf32>
    tpu.vector_store %arg9[%c144_132, %c0_133], %2 {strides = array<i32>} : memref<256x8xf32, #tpu.memory_space<vmem>>, vector<8x8xf32>,
    %c168_134 = arith.constant 168 : index
    %c0_135 = arith.constant 0 : index
    %155 = vector.load %arg9[%c168_134, %c0_135] : memref<256x8xf32, #tpu.memory_space<vmem>>, vector<8x8xf32>
    tpu.vector_store %arg9[%c168_134, %c0_135], %2 {strides = array<i32>} : memref<256x8xf32, #tpu.memory_space<vmem>>, vector<8x8xf32>,
    %c192_136 = arith.constant 192 : index
    %c0_137 = arith.constant 0 : index
    %156 = vector.load %arg9[%c192_136, %c0_137] : memref<256x8xf32, #tpu.memory_space<vmem>>, vector<8x8xf32>
    tpu.vector_store %arg9[%c192_136, %c0_137], %2 {strides = array<i32>} : memref<256x8xf32, #tpu.memory_space<vmem>>, vector<8x8xf32>,
    %c216_138 = arith.constant 216 : index
    %c0_139 = arith.constant 0 : index
    %157 = vector.load %arg9[%c216_138, %c0_139] : memref<256x8xf32, #tpu.memory_space<vmem>>, vector<8x8xf32>
    tpu.vector_store %arg9[%c216_138, %c0_139], %2 {strides = array<i32>} : memref<256x8xf32, #tpu.memory_space<vmem>>, vector<8x8xf32>,
    %c240_140 = arith.constant 240 : index
    %c0_141 = arith.constant 0 : index
    %158 = vector.load %arg9[%c240_140, %c0_141] : memref<256x8xf32, #tpu.memory_space<vmem>>, vector<8x8xf32>
    tpu.vector_store %arg9[%c240_140, %c0_141], %2 {strides = array<i32>} : memref<256x8xf32, #tpu.memory_space<vmem>>, vector<8x8xf32>,
    %c0_i32_142 = arith.constant 0 : i32
    %159 = arith.cmpi eq, %arg1, %c0_i32_142 : i32
    %160 = arith.extui %159 : i1 to i32
    %c0_i32_143 = arith.constant 0 : i32
    %161 = arith.cmpi ne, %160, %c0_i32_143 : i32
    scf.if %161 {
      %c8_238 = arith.constant 8 : index
      %c0_239 = arith.constant 0 : index
      %252 = vector.load %arg9[%c8_238, %c0_239] : memref<256x8xf32, #tpu.memory_space<vmem>>, vector<16x8xf32>
      tpu.vector_store %arg9[%c8_238, %c0_239], %1 {strides = array<i32>} : memref<256x8xf32, #tpu.memory_space<vmem>>, vector<16x8xf32>,
    } else {
    }
    %c1_i32_144 = arith.constant 1 : i32
    %162 = arith.cmpi eq, %arg1, %c1_i32_144 : i32
    %163 = arith.extui %162 : i1 to i32
    %c0_i32_145 = arith.constant 0 : i32
    %164 = arith.cmpi ne, %163, %c0_i32_145 : i32
    scf.if %164 {
      %c224_238 = arith.constant 224 : index
      %c0_239 = arith.constant 0 : index
      %252 = vector.load %arg9[%c224_238, %c0_239] : memref<256x8xf32, #tpu.memory_space<vmem>>, vector<16x8xf32>
      tpu.vector_store %arg9[%c224_238, %c0_239], %1 {strides = array<i32>} : memref<256x8xf32, #tpu.memory_space<vmem>>, vector<16x8xf32>,
    } else {
    }
    %cst_146 = arith.constant 0.000000e+00 : f32
    %165 = vector.broadcast %cst_146 : f32 to vector<192x8xf32>
    %c7_147 = arith.constant 7 : index
    %c0_148 = arith.constant 0 : index
    %166 = vector.load %arg9[%c7_147, %c0_148] : memref<256x8xf32, #tpu.memory_space<vmem>>, vector<192x8xf32>
    %c0_149 = arith.constant 0 : index
    %c0_150 = arith.constant 0 : index
    %c0_151 = arith.constant 0 : index
    %167 = vector.load %arg4[%c0_149, %c0_150, %c0_151] : memref<9x8x8xf32, #tpu.memory_space<vmem>>, vector<1x8x8xf32>
    %168 = vector.shape_cast %167 : vector<1x8x8xf32> to vector<8x8xf32>
    %cst_152 = arith.constant dense<0.000000e+00> : vector<192x8xf32>
    %169 = tpu.matmul %166, %168, %cst_152 {dimension_numbers = #tpu.dot_dimension_numbers<[1], [0], [0], [1], [0, 0, 1, 1], [], []>} : vector<192x8xf32>, vector<8x8xf32>, vector<192x8xf32> -> vector<192x8xf32>
    %170 = arith.addf %165, %169 : vector<192x8xf32>
    %c8_153 = arith.constant 8 : index
    %c0_154 = arith.constant 0 : index
    %171 = vector.load %arg9[%c8_153, %c0_154] : memref<256x8xf32, #tpu.memory_space<vmem>>, vector<192x8xf32>
    %c1_155 = arith.constant 1 : index
    %c0_156 = arith.constant 0 : index
    %c0_157 = arith.constant 0 : index
    %172 = vector.load %arg4[%c1_155, %c0_156, %c0_157] : memref<9x8x8xf32, #tpu.memory_space<vmem>>, vector<1x8x8xf32>
    %173 = vector.shape_cast %172 : vector<1x8x8xf32> to vector<8x8xf32>
    %cst_158 = arith.constant dense<0.000000e+00> : vector<192x8xf32>
    %174 = tpu.matmul %171, %173, %cst_158 {dimension_numbers = #tpu.dot_dimension_numbers<[1], [0], [0], [1], [0, 0, 1, 1], [], []>} : vector<192x8xf32>, vector<8x8xf32>, vector<192x8xf32> -> vector<192x8xf32>
    %175 = arith.addf %170, %174 : vector<192x8xf32>
    %c9_159 = arith.constant 9 : index
    %c0_160 = arith.constant 0 : index
    %176 = vector.load %arg9[%c9_159, %c0_160] : memref<256x8xf32, #tpu.memory_space<vmem>>, vector<192x8xf32>
    %c2_161 = arith.constant 2 : index
    %c0_162 = arith.constant 0 : index
    %c0_163 = arith.constant 0 : index
    %177 = vector.load %arg4[%c2_161, %c0_162, %c0_163] : memref<9x8x8xf32, #tpu.memory_space<vmem>>, vector<1x8x8xf32>
    %178 = vector.shape_cast %177 : vector<1x8x8xf32> to vector<8x8xf32>
    %cst_164 = arith.constant dense<0.000000e+00> : vector<192x8xf32>
    %179 = tpu.matmul %176, %178, %cst_164 {dimension_numbers = #tpu.dot_dimension_numbers<[1], [0], [0], [1], [0, 0, 1, 1], [], []>} : vector<192x8xf32>, vector<8x8xf32>, vector<192x8xf32> -> vector<192x8xf32>
    %180 = arith.addf %175, %179 : vector<192x8xf32>
    %c31_165 = arith.constant 31 : index
    %c0_166 = arith.constant 0 : index
    %181 = vector.load %arg9[%c31_165, %c0_166] : memref<256x8xf32, #tpu.memory_space<vmem>>, vector<192x8xf32>
    %c3_167 = arith.constant 3 : index
    %c0_168 = arith.constant 0 : index
    %c0_169 = arith.constant 0 : index
    %182 = vector.load %arg4[%c3_167, %c0_168, %c0_169] : memref<9x8x8xf32, #tpu.memory_space<vmem>>, vector<1x8x8xf32>
    %183 = vector.shape_cast %182 : vector<1x8x8xf32> to vector<8x8xf32>
    %cst_170 = arith.constant dense<0.000000e+00> : vector<192x8xf32>
    %184 = tpu.matmul %181, %183, %cst_170 {dimension_numbers = #tpu.dot_dimension_numbers<[1], [0], [0], [1], [0, 0, 1, 1], [], []>} : vector<192x8xf32>, vector<8x8xf32>, vector<192x8xf32> -> vector<192x8xf32>
    %185 = arith.addf %180, %184 : vector<192x8xf32>
    %c32_171 = arith.constant 32 : index
    %c0_172 = arith.constant 0 : index
    %186 = vector.load %arg9[%c32_171, %c0_172] : memref<256x8xf32, #tpu.memory_space<vmem>>, vector<192x8xf32>
    %c4_173 = arith.constant 4 : index
    %c0_174 = arith.constant 0 : index
    %c0_175 = arith.constant 0 : index
    %187 = vector.load %arg4[%c4_173, %c0_174, %c0_175] : memref<9x8x8xf32, #tpu.memory_space<vmem>>, vector<1x8x8xf32>
    %188 = vector.shape_cast %187 : vector<1x8x8xf32> to vector<8x8xf32>
    %cst_176 = arith.constant dense<0.000000e+00> : vector<192x8xf32>
    %189 = tpu.matmul %186, %188, %cst_176 {dimension_numbers = #tpu.dot_dimension_numbers<[1], [0], [0], [1], [0, 0, 1, 1], [], []>} : vector<192x8xf32>, vector<8x8xf32>, vector<192x8xf32> -> vector<192x8xf32>
    %190 = arith.addf %185, %189 : vector<192x8xf32>
    %c33_177 = arith.constant 33 : index
    %c0_178 = arith.constant 0 : index
    %191 = vector.load %arg9[%c33_177, %c0_178] : memref<256x8xf32, #tpu.memory_space<vmem>>, vector<192x8xf32>
    %c5_179 = arith.constant 5 : index
    %c0_180 = arith.constant 0 : index
    %c0_181 = arith.constant 0 : index
    %192 = vector.load %arg4[%c5_179, %c0_180, %c0_181] : memref<9x8x8xf32, #tpu.memory_space<vmem>>, vector<1x8x8xf32>
    %193 = vector.shape_cast %192 : vector<1x8x8xf32> to vector<8x8xf32>
    %cst_182 = arith.constant dense<0.000000e+00> : vector<192x8xf32>
    %194 = tpu.matmul %191, %193, %cst_182 {dimension_numbers = #tpu.dot_dimension_numbers<[1], [0], [0], [1], [0, 0, 1, 1], [], []>} : vector<192x8xf32>, vector<8x8xf32>, vector<192x8xf32> -> vector<192x8xf32>
    %195 = arith.addf %190, %194 : vector<192x8xf32>
    %c55_183 = arith.constant 55 : index
    %c0_184 = arith.constant 0 : index
    %196 = vector.load %arg9[%c55_183, %c0_184] : memref<256x8xf32, #tpu.memory_space<vmem>>, vector<192x8xf32>
    %c6_185 = arith.constant 6 : index
    %c0_186 = arith.constant 0 : index
    %c0_187 = arith.constant 0 : index
    %197 = vector.load %arg4[%c6_185, %c0_186, %c0_187] : memref<9x8x8xf32, #tpu.memory_space<vmem>>, vector<1x8x8xf32>
    %198 = vector.shape_cast %197 : vector<1x8x8xf32> to vector<8x8xf32>
    %cst_188 = arith.constant dense<0.000000e+00> : vector<192x8xf32>
    %199 = tpu.matmul %196, %198, %cst_188 {dimension_numbers = #tpu.dot_dimension_numbers<[1], [0], [0], [1], [0, 0, 1, 1], [], []>} : vector<192x8xf32>, vector<8x8xf32>, vector<192x8xf32> -> vector<192x8xf32>
    %200 = arith.addf %195, %199 : vector<192x8xf32>
    %c56_189 = arith.constant 56 : index
    %c0_190 = arith.constant 0 : index
    %201 = vector.load %arg9[%c56_189, %c0_190] : memref<256x8xf32, #tpu.memory_space<vmem>>, vector<192x8xf32>
    %c7_191 = arith.constant 7 : index
    %c0_192 = arith.constant 0 : index
    %c0_193 = arith.constant 0 : index
    %202 = vector.load %arg4[%c7_191, %c0_192, %c0_193] : memref<9x8x8xf32, #tpu.memory_space<vmem>>, vector<1x8x8xf32>
    %203 = vector.shape_cast %202 : vector<1x8x8xf32> to vector<8x8xf32>
    %cst_194 = arith.constant dense<0.000000e+00> : vector<192x8xf32>
    %204 = tpu.matmul %201, %203, %cst_194 {dimension_numbers = #tpu.dot_dimension_numbers<[1], [0], [0], [1], [0, 0, 1, 1], [], []>} : vector<192x8xf32>, vector<8x8xf32>, vector<192x8xf32> -> vector<192x8xf32>
    %205 = arith.addf %200, %204 : vector<192x8xf32>
    %c57_195 = arith.constant 57 : index
    %c0_196 = arith.constant 0 : index
    %206 = vector.load %arg9[%c57_195, %c0_196] : memref<256x8xf32, #tpu.memory_space<vmem>>, vector<192x8xf32>
    %c8_197 = arith.constant 8 : index
    %c0_198 = arith.constant 0 : index
    %c0_199 = arith.constant 0 : index
    %207 = vector.load %arg4[%c8_197, %c0_198, %c0_199] : memref<9x8x8xf32, #tpu.memory_space<vmem>>, vector<1x8x8xf32>
    %208 = vector.shape_cast %207 : vector<1x8x8xf32> to vector<8x8xf32>
    %cst_200 = arith.constant dense<0.000000e+00> : vector<192x8xf32>
    %209 = tpu.matmul %206, %208, %cst_200 {dimension_numbers = #tpu.dot_dimension_numbers<[1], [0], [0], [1], [0, 0, 1, 1], [], []>} : vector<192x8xf32>, vector<8x8xf32>, vector<192x8xf32> -> vector<192x8xf32>
    %210 = arith.addf %205, %209 : vector<192x8xf32>
    %c56_201 = arith.constant 56 : index
    %c0_202 = arith.constant 0 : index
    %211 = vector.load %arg8[%c56_201, %c0_202] : memref<304x8xf32, #tpu.memory_space<vmem>>, vector<192x8xf32>
    %c0_203 = arith.constant 0 : index
    %c0_204 = arith.constant 0 : index
    %212 = vector.load %arg6[%c0_203, %c0_204] : memref<1x8xf32, #tpu.memory_space<vmem>>, vector<1x8xf32>
    %213 = vector.shape_cast %212 : vector<1x8xf32> to vector<8xf32>
    %214 = vector.shape_cast %213 : vector<8xf32> to vector<1x8xf32>
    %215 = vector.broadcast %214 : vector<1x8xf32> to vector<192x8xf32>
    %216 = arith.addf %210, %215 : vector<192x8xf32>
    %217 = arith.addf %216, %211 : vector<192x8xf32>
    %cst_205 = arith.constant 0.000000e+00 : f32
    %218 = vector.broadcast %cst_205 : f32 to vector<192x8xf32>
    %219 = arith.maximumf %217, %218 : vector<192x8xf32>
    %220 = vector.extract_strided_slice %219 {offsets = [0, 0], sizes = [16, 8], strides = [1, 1]} : vector<192x8xf32> to vector<16x8xf32>
    %c0_206 = arith.constant 0 : index
    %c0_207 = arith.constant 0 : index
    %c0_208 = arith.constant 0 : index
    %c0_209 = arith.constant 0 : index
    %221 = vector.load %arg7[%c0_206, %c0_207, %c0_208, %c0_209] : memref<1x8x16x8xf32, #tpu.memory_space<vmem>>, vector<1x1x16x8xf32>
    %222 = vector.shape_cast %221 : vector<1x1x16x8xf32> to vector<16x8xf32>
    %223 = vector.shape_cast %220 : vector<16x8xf32> to vector<1x1x16x8xf32>
    tpu.vector_store %arg7[%c0_206, %c0_207, %c0_208, %c0_209], %223 {strides = array<i32>} : memref<1x8x16x8xf32, #tpu.memory_space<vmem>>, vector<1x1x16x8xf32>,
    %224 = vector.extract_strided_slice %219 {offsets = [24, 0], sizes = [16, 8], strides = [1, 1]} : vector<192x8xf32> to vector<16x8xf32>
    %c0_210 = arith.constant 0 : index
    %c1_211 = arith.constant 1 : index
    %c0_212 = arith.constant 0 : index
    %c0_213 = arith.constant 0 : index
    %225 = vector.load %arg7[%c0_210, %c1_211, %c0_212, %c0_213] : memref<1x8x16x8xf32, #tpu.memory_space<vmem>>, vector<1x1x16x8xf32>
    %226 = vector.shape_cast %225 : vector<1x1x16x8xf32> to vector<16x8xf32>
    %227 = vector.shape_cast %224 : vector<16x8xf32> to vector<1x1x16x8xf32>
    tpu.vector_store %arg7[%c0_210, %c1_211, %c0_212, %c0_213], %227 {strides = array<i32>} : memref<1x8x16x8xf32, #tpu.memory_space<vmem>>, vector<1x1x16x8xf32>,
    %228 = vector.extract_strided_slice %219 {offsets = [48, 0], sizes = [16, 8], strides = [1, 1]} : vector<192x8xf32> to vector<16x8xf32>
    %c0_214 = arith.constant 0 : index
    %c2_215 = arith.constant 2 : index
    %c0_216 = arith.constant 0 : index
    %c0_217 = arith.constant 0 : index
    %229 = vector.load %arg7[%c0_214, %c2_215, %c0_216, %c0_217] : memref<1x8x16x8xf32, #tpu.memory_space<vmem>>, vector<1x1x16x8xf32>
    %230 = vector.shape_cast %229 : vector<1x1x16x8xf32> to vector<16x8xf32>
    %231 = vector.shape_cast %228 : vector<16x8xf32> to vector<1x1x16x8xf32>
    tpu.vector_store %arg7[%c0_214, %c2_215, %c0_216, %c0_217], %231 {strides = array<i32>} : memref<1x8x16x8xf32, #tpu.memory_space<vmem>>, vector<1x1x16x8xf32>,
    %232 = vector.extract_strided_slice %219 {offsets = [72, 0], sizes = [16, 8], strides = [1, 1]} : vector<192x8xf32> to vector<16x8xf32>
    %c0_218 = arith.constant 0 : index
    %c3_219 = arith.constant 3 : index
    %c0_220 = arith.constant 0 : index
    %c0_221 = arith.constant 0 : index
    %233 = vector.load %arg7[%c0_218, %c3_219, %c0_220, %c0_221] : memref<1x8x16x8xf32, #tpu.memory_space<vmem>>, vector<1x1x16x8xf32>
    %234 = vector.shape_cast %233 : vector<1x1x16x8xf32> to vector<16x8xf32>
    %235 = vector.shape_cast %232 : vector<16x8xf32> to vector<1x1x16x8xf32>
    tpu.vector_store %arg7[%c0_218, %c3_219, %c0_220, %c0_221], %235 {strides = array<i32>} : memref<1x8x16x8xf32, #tpu.memory_space<vmem>>, vector<1x1x16x8xf32>,
    %236 = vector.extract_strided_slice %219 {offsets = [96, 0], sizes = [16, 8], strides = [1, 1]} : vector<192x8xf32> to vector<16x8xf32>
    %c0_222 = arith.constant 0 : index
    %c4_223 = arith.constant 4 : index
    %c0_224 = arith.constant 0 : index
    %c0_225 = arith.constant 0 : index
    %237 = vector.load %arg7[%c0_222, %c4_223, %c0_224, %c0_225] : memref<1x8x16x8xf32, #tpu.memory_space<vmem>>, vector<1x1x16x8xf32>
    %238 = vector.shape_cast %237 : vector<1x1x16x8xf32> to vector<16x8xf32>
    %239 = vector.shape_cast %236 : vector<16x8xf32> to vector<1x1x16x8xf32>
    tpu.vector_store %arg7[%c0_222, %c4_223, %c0_224, %c0_225], %239 {strides = array<i32>} : memref<1x8x16x8xf32, #tpu.memory_space<vmem>>, vector<1x1x16x8xf32>,
    %240 = vector.extract_strided_slice %219 {offsets = [120, 0], sizes = [16, 8], strides = [1, 1]} : vector<192x8xf32> to vector<16x8xf32>
    %c0_226 = arith.constant 0 : index
    %c5_227 = arith.constant 5 : index
    %c0_228 = arith.constant 0 : index
    %c0_229 = arith.constant 0 : index
    %241 = vector.load %arg7[%c0_226, %c5_227, %c0_228, %c0_229] : memref<1x8x16x8xf32, #tpu.memory_space<vmem>>, vector<1x1x16x8xf32>
    %242 = vector.shape_cast %241 : vector<1x1x16x8xf32> to vector<16x8xf32>
    %243 = vector.shape_cast %240 : vector<16x8xf32> to vector<1x1x16x8xf32>
    tpu.vector_store %arg7[%c0_226, %c5_227, %c0_228, %c0_229], %243 {strides = array<i32>} : memref<1x8x16x8xf32, #tpu.memory_space<vmem>>, vector<1x1x16x8xf32>,
    %244 = vector.extract_strided_slice %219 {offsets = [144, 0], sizes = [16, 8], strides = [1, 1]} : vector<192x8xf32> to vector<16x8xf32>
    %c0_230 = arith.constant 0 : index
    %c6_231 = arith.constant 6 : index
    %c0_232 = arith.constant 0 : index
    %c0_233 = arith.constant 0 : index
    %245 = vector.load %arg7[%c0_230, %c6_231, %c0_232, %c0_233] : memref<1x8x16x8xf32, #tpu.memory_space<vmem>>, vector<1x1x16x8xf32>
    %246 = vector.shape_cast %245 : vector<1x1x16x8xf32> to vector<16x8xf32>
    %247 = vector.shape_cast %244 : vector<16x8xf32> to vector<1x1x16x8xf32>
    tpu.vector_store %arg7[%c0_230, %c6_231, %c0_232, %c0_233], %247 {strides = array<i32>} : memref<1x8x16x8xf32, #tpu.memory_space<vmem>>, vector<1x1x16x8xf32>,
    %248 = vector.extract_strided_slice %219 {offsets = [168, 0], sizes = [16, 8], strides = [1, 1]} : vector<192x8xf32> to vector<16x8xf32>
    %c0_234 = arith.constant 0 : index
    %c7_235 = arith.constant 7 : index
    %c0_236 = arith.constant 0 : index
    %c0_237 = arith.constant 0 : index
    %249 = vector.load %arg7[%c0_234, %c7_235, %c0_236, %c0_237] : memref<1x8x16x8xf32, #tpu.memory_space<vmem>>, vector<1x1x16x8xf32>
    %250 = vector.shape_cast %249 : vector<1x1x16x8xf32> to vector<16x8xf32>
    %251 = vector.shape_cast %248 : vector<16x8xf32> to vector<1x1x16x8xf32>
    tpu.vector_store %arg7[%c0_234, %c7_235, %c0_236, %c0_237], %251 {strides = array<i32>} : memref<1x8x16x8xf32, #tpu.memory_space<vmem>>, vector<1x1x16x8xf32>,
    return
  }
  func.func @transform_0(%arg0: i32, %arg1: i32) -> (i32, i32, i32, i32) {
    %c0_i32 = arith.constant 0 : i32
    %c0_i32_0 = arith.constant 0 : i32
    %c0_i32_1 = arith.constant 0 : i32
    %c0_i32_2 = arith.constant 0 : i32
    return %arg0, %c0_i32, %c0_i32_0, %c0_i32_1 : i32, i32, i32, i32
  }
  func.func @transform_1(%arg0: i32, %arg1: i32) -> (i32, i32, i32) {
    %c0_i32 = arith.constant 0 : i32
    %c0_i32_0 = arith.constant 0 : i32
    %c0_i32_1 = arith.constant 0 : i32
    %c0_i32_2 = arith.constant 0 : i32
    return %c0_i32, %c0_i32_0, %c0_i32_1 : i32, i32, i32
  }
  func.func @transform_2(%arg0: i32, %arg1: i32) -> (i32, i32, i32) {
    %c0_i32 = arith.constant 0 : i32
    %c0_i32_0 = arith.constant 0 : i32
    %c0_i32_1 = arith.constant 0 : i32
    %c0_i32_2 = arith.constant 0 : i32
    return %c0_i32, %c0_i32_0, %c0_i32_1 : i32, i32, i32
  }
  func.func @transform_3(%arg0: i32, %arg1: i32) -> (i32, i32) {
    %c0_i32 = arith.constant 0 : i32
    %c0_i32_0 = arith.constant 0 : i32
    %c0_i32_1 = arith.constant 0 : i32
    return %c0_i32, %c0_i32_0 : i32, i32
  }
  func.func @transform_4(%arg0: i32, %arg1: i32) -> (i32, i32) {
    %c0_i32 = arith.constant 0 : i32
    %c0_i32_0 = arith.constant 0 : i32
    %c0_i32_1 = arith.constant 0 : i32
    return %c0_i32, %c0_i32_0 : i32, i32
  }
  func.func @transform_5(%arg0: i32, %arg1: i32) -> (i32, i32, i32, i32) {
    %c0_i32 = arith.constant 0 : i32
    %c0_i32_0 = arith.constant 0 : i32
    %c0_i32_1 = arith.constant 0 : i32
    return %arg0, %arg1, %c0_i32, %c0_i32_0 : i32, i32, i32, i32
  }
}

</mosaic_0001>

<llo_original>
// kernel: basic_block.1
$region0: #{basic_block.1}
  #allocation0 [shape = 'u32[]', space=smem, size = 0x4, offset = 0x4, fixed_abs, tag = 'smem constant byte address 0x4 - core index']
  #allocation1 [shape = 'u32[144,128]{1,0:T(1,128)}', space=vmem, size = 0x12000, scoped, tag = 'internal scratch']
  #allocation2 [shape = 'f32[304,8]{1,0:T(8,128)}', space=vmem, size = 0x26000, scoped, tag = 'scratch operand']
  #allocation3 [shape = 'f32[256,8]{1,0:T(8,128)}', space=vmem, size = 0x20000, scoped, tag = 'scratch operand']
  %s0 = inlined_call_operand.vmem [shape: f32[2,16,16,8], index: 0, kind: input, shape index: {}]
  %s1 = inlined_call_operand.vmem [shape: f32[9,8,8], index: 1, kind: input, shape index: {}]
  %s2 = inlined_call_operand.vmem [shape: f32[9,8,8], index: 2, kind: input, shape index: {}]
  %s3 = inlined_call_operand.vmem [shape: f32[1,8], index: 3, kind: input, shape index: {}]
  %s4 = inlined_call_operand.vmem [shape: f32[1,8], index: 4, kind: input, shape index: {}]
  %s5 = inlined_call_operand.vmem [shape: f32[2,16,16,8], index: 5, kind: output, shape index: {}]
  %s6 = sld [smem:[#allocation0]]
  $region93: #{basic_block.1} parent=0
    _
  %s8 = ssub.s32 1, %s6
  %s9 = scalar_select 0, %s8, %s6
  loop: start=0, step=1, limit=6
  $region2: #{basic_block.1} parent=0 // loop_pre_header
    _
  $region3: #{basic_block.1} parent=0 // loop_header
    %s11 = sphi 0, %s15
    %p12 = scmp.ge.s32.totalorder %s11, 6
    %s18 = sphi 0, %s30
    %s19 = sphi 0, %s26
    %s20 = sphi 0, %s18
    %s21 = sphi 0, %s19
    %s22 = sphi 0, %s20
    %s23 = sphi 0, %s21
    %s33 = sphi 0, %s35
    %s36 = sphi 0, %s33
    %s37 = sphi 0, %s36
    %s53 = sphi 0, %s37
    %s57 = sphi 0, %s57
    %s59 = sphi 0, %s57
    %s60 = sphi 0, %s59
    %s74 = sphi 0, %s60
    %s78 = sphi 0, %s78
    %s80 = sphi 0, %s78
    %s81 = sphi 0, %s80
    %s95 = sphi 0, %s81
    %s99 = sphi 0, %s99
    %s101 = sphi 0, %s99
    %s102 = sphi 0, %s101
    %s116 = sphi 0, %s102
    %s120 = sphi 0, %s120
    %s122 = sphi 0, %s120
    %s123 = sphi 0, %s122
    %s137 = sphi 0, %s123
    %s145 = sphi 0, %s147
    %s148 = sphi 0, %s145
    %s149 = sphi 0, %s148
    %s165 = sphi 0, %s149
  $region4: #{basic_block.1} parent=0 // loop_header_branch
    %14 = sbr.rel (%p12) target = $region8
  $region5: #{basic_block.1} parent=0 // loop_body
    %s16 = ssub.s32 %s11, 1
    %s17 = ssub.s32 %s11, 2
    %s24 = sadd.s32 1, %s19
    %p25 = scmp.ge.s32.totalorder %s24, 2
    %s26 = scalar_select %p25, 0, %s24
    %s27 = sadd.s32 1, %s18
    %s28 = scalar_select %p25, %s27, %s18
    %p29 = scmp.ge.s32.totalorder %s28, 2
    %s30 = scalar_select %p29, 0, %s28
    %s31 = ssub.s32 %s18, %s30
    %p32 = scmp.eq.s32.totalorder %s31, 0
    %s34 = sadd.s32 %s33, 1
    %s35 = scalar_select %p32, %s33, %s34
    %p38 = pneg %p32
    %p39 = scmp.eq.s32.totalorder %s11, 3
    %p40 = por %p38, %p39
    %p41 = scmp.ne.s32.totalorder %s33, %s36
    %p42 = scmp.eq.s32.totalorder %s11, 0
    %p43 = por %p41, %p42
    %p44 = scmp.ne.s32.totalorder %s33, %s36
    %p45 = scmp.eq.s32.totalorder %s16, 3
    %p46 = por %p44, %p45
    %p47 = scmp.ne.s32.totalorder %s36, %s37
    %p48 = scmp.eq.s32.totalorder %s16, 0
    %p49 = por %p47, %p48
    %p50 = scmp.ne.s32.totalorder %s36, %s37
    %p51 = scmp.eq.s32.totalorder %s17, 3
    %p52 = por %p50, %p51
    %p54 = scmp.ne.s32.totalorder %s37, %s53
    %p55 = scmp.eq.s32.totalorder %s17, 0
    %p56 = por %p54, %p55
    %s58 = sadd.s32 %s57, 1
    %p61 = scmp.eq.s32.totalorder %s11, 3
    %p62 = scmp.ne.s32.totalorder %s57, %s59
    %p63 = scmp.eq.s32.totalorder %s11, 0
    %p64 = por %p62, %p63
    %p65 = scmp.ne.s32.totalorder %s57, %s59
    %p66 = scmp.eq.s32.totalorder %s16, 3
    %p67 = por %p65, %p66
    %p68 = scmp.ne.s32.totalorder %s59, %s60
    %p69 = scmp.eq.s32.totalorder %s16, 0
    %p70 = por %p68, %p69
    %p71 = scmp.ne.s32.totalorder %s59, %s60
    %p72 = scmp.eq.s32.totalorder %s17, 3
    %p73 = por %p71, %p72
    %p75 = scmp.ne.s32.totalorder %s60, %s74
    %p76 = scmp.eq.s32.totalorder %s17, 0
    %p77 = por %p75, %p76
    %s79 = sadd.s32 %s78, 1
    %p82 = scmp.eq.s32.totalorder %s11, 3
    %p83 = scmp.ne.s32.totalorder %s78, %s80
    %p84 = scmp.eq.s32.totalorder %s11, 0
    %p85 = por %p83, %p84
    %p86 = scmp.ne.s32.totalorder %s78, %s80
    %p87 = scmp.eq.s32.totalorder %s16, 3
    %p88 = por %p86, %p87
    %p89 = scmp.ne.s32.totalorder %s80, %s81
    %p90 = scmp.eq.s32.totalorder %s16, 0
    %p91 = por %p89, %p90
    %p92 = scmp.ne.s32.totalorder %s80, %s81
    %p93 = scmp.eq.s32.totalorder %s17, 3
    %p94 = por %p92, %p93
    %p96 = scmp.ne.s32.totalorder %s81, %s95
    %p97 = scmp.eq.s32.totalorder %s17, 0
    %p98 = por %p96, %p97
    %s100 = sadd.s32 %s99, 1
    %p103 = scmp.eq.s32.totalorder %s11, 3
    %p104 = scmp.ne.s32.totalorder %s99, %s101
    %p105 = scmp.eq.s32.totalorder %s11, 0
    %p106 = por %p104, %p105
    %p107 = scmp.ne.s32.totalorder %s99, %s101
    %p108 = scmp.eq.s32.totalorder %s16, 3
    %p109 = por %p107, %p108
    %p110 = scmp.ne.s32.totalorder %s101, %s102
    %p111 = scmp.eq.s32.totalorder %s16, 0
    %p112 = por %p110, %p111
    %p113 = scmp.ne.s32.totalorder %s101, %s102
    %p114 = scmp.eq.s32.totalorder %s17, 3
    %p115 = por %p113, %p114
    %p117 = scmp.ne.s32.totalorder %s102, %s116
    %p118 = scmp.eq.s32.totalorder %s17, 0
    %p119 = por %p117, %p118
    %s121 = sadd.s32 %s120, 1
    %p124 = scmp.eq.s32.totalorder %s11, 3
    %p125 = scmp.ne.s32.totalorder %s120, %s122
    %p126 = scmp.eq.s32.totalorder %s11, 0
    %p127 = por %p125, %p126
    %p128 = scmp.ne.s32.totalorder %s120, %s122
    %p129 = scmp.eq.s32.totalorder %s16, 3
    %p130 = por %p128, %p129
    %p131 = scmp.ne.s32.totalorder %s122, %s123
    %p132 = scmp.eq.s32.totalorder %s16, 0
    %p133 = por %p131, %p132
    %p134 = scmp.ne.s32.totalorder %s122, %s123
    %p135 = scmp.eq.s32.totalorder %s17, 3
    %p136 = por %p134, %p135
    %p138 = scmp.ne.s32.totalorder %s123, %s137
    %p139 = scmp.eq.s32.totalorder %s17, 0
    %p140 = por %p138, %p139
    %s141 = ssub.s32 %s18, %s30
    %s142 = ssub.s32 %s19, %s26
    %s143 = sor.u32 %s141, %s142
    %p144 = scmp.eq.s32.totalorder %s143, 0
    %s146 = sadd.s32 %s145, 1
    %s147 = scalar_select %p144, %s145, %s146
    %p150 = pneg %p144
    %p151 = scmp.eq.s32.totalorder %s11, 3
    %p152 = por %p150, %p151
    %p153 = scmp.ne.s32.totalorder %s145, %s148
    %p154 = scmp.eq.s32.totalorder %s11, 0
    %p155 = por %p153, %p154
    %p156 = scmp.ne.s32.totalorder %s145, %s148
    %p157 = scmp.eq.s32.totalorder %s16, 3
    %p158 = por %p156, %p157
    %p159 = scmp.ne.s32.totalorder %s148, %s149
    %p160 = scmp.eq.s32.totalorder %s16, 0
    %p161 = por %p159, %p160
    %p162 = scmp.ne.s32.totalorder %s148, %s149
    %p163 = scmp.eq.s32.totalorder %s17, 3
    %p164 = por %p162, %p163
    %p166 = scmp.ne.s32.totalorder %s149, %s165
    %p167 = scmp.eq.s32.totalorder %s17, 0
    %p168 = por %p166, %p167
    %p169 = scmp.le.s32.totalorder 1, %s11
    %p170 = scmp.lt.s32.totalorder %s11, 5
    %p171 = pnand %p169, %p170
    %p172 = pneg %p171
    // Predicated region
    $region9: #{basic_block.1} parent=5 // pred_check
      _
    $region10: #{basic_block.1} parent=5 // pred_check_branch
      %174 = sbr.rel (%p171) target = $region12
    $region11: #{basic_block.1} parent=5 // pred_region
      %s175 = ssub.s32 %s11, 1
      // Predicated region
      $region13: #{basic_block.1} parent=11 // pred_check
        %p176 = pneg %p70
      $region14: #{basic_block.1} parent=11 // pred_check_branch
        %178 = sbr.rel (%p176) target = $region16
      $region15: #{basic_block.1} parent=11 // pred_region
        _
      $region16: #{basic_block.1} parent=11 // pred_fallthru
        _
      // Predicated region
      $region17: #{basic_block.1} parent=11 // pred_check
        %p179 = pneg %p91
      $region18: #{basic_block.1} parent=11 // pred_check_branch
        %181 = sbr.rel (%p179) target = $region20
      $region19: #{basic_block.1} parent=11 // pred_region
        _
      $region20: #{basic_block.1} parent=11 // pred_fallthru
        _
      // Predicated region
      $region21: #{basic_block.1} parent=11 // pred_check
        %p182 = pneg %p112
      $region22: #{basic_block.1} parent=11 // pred_check_branch
        %184 = sbr.rel (%p182) target = $region24
      $region23: #{basic_block.1} parent=11 // pred_region
        _
      $region24: #{basic_block.1} parent=11 // pred_fallthru
        _
      // Predicated region
      $region25: #{basic_block.1} parent=11 // pred_check
        %p185 = pneg %p133
      $region26: #{basic_block.1} parent=11 // pred_check_branch
        %187 = sbr.rel (%p185) target = $region28
      $region27: #{basic_block.1} parent=11 // pred_region
        _
      $region28: #{basic_block.1} parent=11 // pred_fallthru
        _
    $region12: #{basic_block.1} parent=5 // pred_fallthru
      _
    %p188 = scmp.lt.s32.totalorder %s11, 4
    // Predicated region
    $region29: #{basic_block.1} parent=5 // pred_check
      %p189 = pneg %p188
    $region30: #{basic_block.1} parent=5 // pred_check_branch
      %191 = sbr.rel (%p189) target = $region32
    $region31: #{basic_block.1} parent=5 // pred_region
      // Predicated region
      $region33: #{basic_block.1} parent=31 // pred_check
        %p192 = pneg %p43
      $region34: #{basic_block.1} parent=31 // pred_check_branch
        %194 = sbr.rel (%p192) target = $region36
      $region35: #{basic_block.1} parent=31 // pred_region
        %p195 = scmp.lt.s32.totalorder %s18, 1
        %s196 = scalar_select %p195, %s18, 1
        %s197 = smul.addr %s196, 32
        %s198 = smul.addr %s197, 8
        %s199 = scalar_lea.vmem %s0, %s198
      $region36: #{basic_block.1} parent=31 // pred_fallthru
        _
    $region32: #{basic_block.1} parent=5 // pred_fallthru
      _
    %p200 = scmp.le.s32.totalorder 1, %s11
    %p201 = scmp.lt.s32.totalorder %s11, 5
    %p202 = pnand %p200, %p201
    %p203 = pneg %p202
    // Predicated region
    $region37: #{basic_block.1} parent=5 // pred_check
      _
    $region38: #{basic_block.1} parent=5 // pred_check_branch
      %205 = sbr.rel (%p202) target = $region40
    $region39: #{basic_block.1} parent=5 // pred_region
      %s206 = ssub.s32 %s11, 1
      %p207 = scmp.lt.s32.totalorder %s20, 1
      %s208 = scalar_select %p207, %s20, 1
      %s209 = smul.addr %s208, 32
      %s210 = smul.addr %s209, 8
      %s211 = scalar_lea.vmem %s0, %s210
      %p212 = pneg %p49
      %p213 = pneg %p46
      %p214 = pneg %p70
      %p215 = pneg %p67
      %p216 = pneg %p91
      %p217 = pneg %p88
      %p218 = pneg %p112
      %p219 = pneg %p109
      %p220 = pneg %p133
      %p221 = pneg %p130
      %p222 = pneg %p161
      %p223 = pneg %p158
      %s224 = smul.u32 8, %s21
      %p225 = scmp.lt.s32.totalorder %s20, 1
      %s226 = scalar_select %p225, %s20, 1
      %p227 = scmp.lt.s32.totalorder %s224, 15
      %s228 = scalar_select %p227, %s224, 15
      %s229 = smul.addr %s228, 2
      %s230 = smul.addr %s226, 32
      %s231 = sadd.s32 %s229, %s230
      %s232 = smul.addr %s231, 8
      %s233 = scalar_lea.vmem %s5, %s232
      %p234 = scmp.lt.s32.totalorder %s20, 1
      %s235 = scalar_select %p234, %s20, 1
      %s236 = smul.addr %s235, 32
      %s237 = smul.addr %s236, 8
      %s238 = scalar_lea.vmem %s0, %s237
      %s239 = smul.u32 8, %s21
      %p240 = scmp.lt.s32.totalorder %s20, 1
      %s241 = scalar_select %p240, %s20, 1
      %p242 = scmp.lt.s32.totalorder %s239, 15
      %s243 = scalar_select %p242, %s239, 15
      %s244 = smul.addr %s243, 2
      %s245 = smul.addr %s241, 32
      %s246 = sadd.s32 %s244, %s245
      %s247 = smul.addr %s246, 8
      %s248 = scalar_lea.vmem %s5, %s247
      %s249 = smul.u32 8, %s21
      %s250 = smul.u32 %s21, 8
      %vm251 = vcmask 64512
      %252 = vst.msk [vmem:[#allocation2] sm:$0xff] %vm251, 0.0
      %253 = vst.msk [vmem:[#allocation2 + $0x128] sm:$0xff] %vm251, 0.0
      %254 = vst.msk [vmem:[#allocation2 + $0x18] sm:$0xff] %vm251, 0.0
      %s255 = ssub.s32 %s250, 2
      %p256 = scmp.eq.s32.totalorder %s21, 0
      // Predicated region
      $region41: #{basic_block.1} parent=39 // pred_check
        %p257 = pneg %p256
      $region42: #{basic_block.1} parent=39 // pred_check_branch
        %259 = sbr.rel (%p257) target = $region44
      $region43: #{basic_block.1} parent=39 // pred_region
        %260 = vst.msk [vmem:[#allocation2 + $0x8] sm:$0xff] %vm251, 0.0
        %261 = vst.msk [vmem:[#allocation2 + $0x10] sm:$0xff] %vm251, 0.0
      $region44: #{basic_block.1} parent=39 // pred_fallthru
        _
      %p262 = scmp.gt.s32.totalorder %s21, 0
      // Predicated region
      $region45: #{basic_block.1} parent=39 // pred_check
        %p263 = pneg %p262
      $region46: #{basic_block.1} parent=39 // pred_check_branch
        %265 = sbr.rel (%p263) target = $region48
      $region47: #{basic_block.1} parent=39 // pred_region
        %s266 = smul.u32 %s255, 16
        %s267 = scalar_lea.vmem %s238, %s266
        %v268 = vld [vmem:[%s267] sm:$0xff]
        %v269 = vld [vmem:[%s267 + $0x8] sm:$0xff]
        %270 = vst.msk [vmem:[#allocation2 + $0x8] sm:$0xff] %vm251, %v268
        %271 = vst.msk [vmem:[#allocation2 + $0x10] sm:$0xff] %vm251, %v269
      $region48: #{basic_block.1} parent=39 // pred_fallthru
        _
      %272 = vst.msk [vmem:[#allocation2 + $0x30] sm:$0xff] %vm251, 0.0
      %s273 = sadd.s32 %s250, 4294967295
      // Predicated region
      $region49: #{basic_block.1} parent=39 // pred_check
        %p274 = pneg %p256
      $region50: #{basic_block.1} parent=39 // pred_check_branch
        %276 = sbr.rel (%p274) target = $region52
      $region51: #{basic_block.1} parent=39 // pred_region
        %277 = vst.msk [vmem:[#allocation2 + $0x20] sm:$0xff] %vm251, 0.0
        %278 = vst.msk [vmem:[#allocation2 + $0x28] sm:$0xff] %vm251, 0.0
      $region52: #{basic_block.1} parent=39 // pred_fallthru
        _
      // Predicated region
      $region53: #{basic_block.1} parent=39 // pred_check
        %p279 = pneg %p262
      $region54: #{basic_block.1} parent=39 // pred_check_branch
        %281 = sbr.rel (%p279) target = $region56
      $region55: #{basic_block.1} parent=39 // pred_region
        %s282 = smul.u32 %s273, 16
        %s283 = scalar_lea.vmem %s238, %s282
        %v284 = vld [vmem:[%s283] sm:$0xff]
        %v285 = vld [vmem:[%s283 + $0x8] sm:$0xff]
        %286 = vst.msk [vmem:[#allocation2 + $0x20] sm:$0xff] %vm251, %v284
        %287 = vst.msk [vmem:[#allocation2 + $0x28] sm:$0xff] %vm251, %v285
      $region56: #{basic_block.1} parent=39 // pred_fallthru
        _
      %288 = vst.msk [vmem:[#allocation2 + $0x48] sm:$0xff] %vm251, 0.0
      %s289 = smul.u32 %s250, 16
      %s290 = scalar_lea.vmem %s238, %s289
      %v291 = vld [vmem:[%s290] sm:$0xff]
      %v292 = vld [vmem:[%s290 + $0x8] sm:$0xff]
      %293 = vst.msk [vmem:[#allocation2 + $0x38] sm:$0xff] %vm251, %v291
      %294 = vst.msk [vmem:[#allocation2 + $0x40] sm:$0xff] %vm251, %v292
      %295 = vst.msk [vmem:[#allocation2 + $0x60] sm:$0xff] %vm251, 0.0
      %s296 = sadd.s32 %s250, 1
      %s297 = smul.u32 %s296, 16
      %s298 = scalar_lea.vmem %s238, %s297
      %v299 = vld [vmem:[%s298] sm:$0xff]
      %v300 = vld [vmem:[%s298 + $0x8] sm:$0xff]
      %301 = vst.msk [vmem:[#allocation2 + $0x50] sm:$0xff] %vm251, %v299
      %302 = vst.msk [vmem:[#allocation2 + $0x58] sm:$0xff] %vm251, %v300
      %303 = vst.msk [vmem:[#allocation2 + $0x78] sm:$0xff] %vm251, 0.0
      %s304 = sadd.s32 %s250, 2
      %s305 = smul.u32 %s304, 16
      %s306 = scalar_lea.vmem %s238, %s305
      %v307 = vld [vmem:[%s306] sm:$0xff]
      %v308 = vld [vmem:[%s306 + $0x8] sm:$0xff]
      %309 = vst.msk [vmem:[#allocation2 + $0x68] sm:$0xff] %vm251, %v307
      %310 = vst.msk [vmem:[#allocation2 + $0x70] sm:$0xff] %vm251, %v308
      %311 = vst.msk [vmem:[#allocation2 + $0x90] sm:$0xff] %vm251, 0.0
      %s312 = sadd.s32 %s250, 3
      %s313 = smul.u32 %s312, 16
      %s314 = scalar_lea.vmem %s238, %s313
      %v315 = vld [vmem:[%s314] sm:$0xff]
      %v316 = vld [vmem:[%s314 + $0x8] sm:$0xff]
      %317 = vst.msk [vmem:[#allocation2 + $0x80] sm:$0xff] %vm251, %v315
      %318 = vst.msk [vmem:[#allocation2 + $0x88] sm:$0xff] %vm251, %v316
      %319 = vst.msk [vmem:[#allocation2 + $0xa8] sm:$0xff] %vm251, 0.0
      %s320 = sadd.s32 %s250, 4
      %s321 = smul.u32 %s320, 16
      %s322 = scalar_lea.vmem %s238, %s321
      %v323 = vld [vmem:[%s322] sm:$0xff]
      %v324 = vld [vmem:[%s322 + $0x8] sm:$0xff]
      %325 = vst.msk [vmem:[#allocation2 + $0x98] sm:$0xff] %vm251, %v323
      %326 = vst.msk [vmem:[#allocation2 + $0xa0] sm:$0xff] %vm251, %v324
      %327 = vst.msk [vmem:[#allocation2 + $0xc0] sm:$0xff] %vm251, 0.0
      %s328 = sadd.s32 %s250, 5
      %s329 = smul.u32 %s328, 16
      %s330 = scalar_lea.vmem %s238, %s329
      %v331 = vld [vmem:[%s330] sm:$0xff]
      %v332 = vld [vmem:[%s330 + $0x8] sm:$0xff]
      %333 = vst.msk [vmem:[#allocation2 + $0xb0] sm:$0xff] %vm251, %v331
      %334 = vst.msk [vmem:[#allocation2 + $0xb8] sm:$0xff] %vm251, %v332
      %335 = vst.msk [vmem:[#allocation2 + $0xd8] sm:$0xff] %vm251, 0.0
      %s336 = sadd.s32 %s250, 6
      %s337 = smul.u32 %s336, 16
      %s338 = scalar_lea.vmem %s238, %s337
      %v339 = vld [vmem:[%s338] sm:$0xff]
      %v340 = vld [vmem:[%s338 + $0x8] sm:$0xff]
      %341 = vst.msk [vmem:[#allocation2 + $0xc8] sm:$0xff] %vm251, %v339
      %342 = vst.msk [vmem:[#allocation2 + $0xd0] sm:$0xff] %vm251, %v340
      %343 = vst.msk [vmem:[#allocation2 + $0xf0] sm:$0xff] %vm251, 0.0
      %s344 = sadd.s32 %s250, 7
      %s345 = smul.u32 %s344, 16
      %s346 = scalar_lea.vmem %s238, %s345
      %v347 = vld [vmem:[%s346] sm:$0xff]
      %v348 = vld [vmem:[%s346 + $0x8] sm:$0xff]
      %349 = vst.msk [vmem:[#allocation2 + $0xe0] sm:$0xff] %vm251, %v347
      %350 = vst.msk [vmem:[#allocation2 + $0xe8] sm:$0xff] %vm251, %v348
      %351 = vst.msk [vmem:[#allocation2 + $0x108] sm:$0xff] %vm251, 0.0
      %s352 = sadd.s32 %s250, 8
      %p353 = scmp.eq.s32.totalorder %s21, 1
      // Predicated region
      $region57: #{basic_block.1} parent=39 // pred_check
        %p354 = pneg %p353
      $region58: #{basic_block.1} parent=39 // pred_check_branch
        %356 = sbr.rel (%p354) target = $region60
      $region59: #{basic_block.1} parent=39 // pred_region
        %357 = vst.msk [vmem:[#allocation2 + $0xf8] sm:$0xff] %vm251, 0.0
        %358 = vst.msk [vmem:[#allocation2 + $0x100] sm:$0xff] %vm251, 0.0
      $region60: #{basic_block.1} parent=39 // pred_fallthru
        _
      %p359 = scmp.lt.s32.totalorder %s21, 1
      // Predicated region
      $region61: #{basic_block.1} parent=39 // pred_check
        %p360 = pneg %p359
      $region62: #{basic_block.1} parent=39 // pred_check_branch
        %362 = sbr.rel (%p360) target = $region64
      $region63: #{basic_block.1} parent=39 // pred_region
        %s363 = smul.u32 %s352, 16
        %s364 = scalar_lea.vmem %s238, %s363
        %v365 = vld [vmem:[%s364] sm:$0xff]
        %v366 = vld [vmem:[%s364 + $0x8] sm:$0xff]
        %367 = vst.msk [vmem:[#allocation2 + $0xf8] sm:$0xff] %vm251, %v365
        %368 = vst.msk [vmem:[#allocation2 + $0x100] sm:$0xff] %vm251, %v366
      $region64: #{basic_block.1} parent=39 // pred_fallthru
        _
      %369 = vst.msk [vmem:[#allocation2 + $0x120] sm:$0xff] %vm251, 0.0
      %s370 = sadd.s32 %s250, 9
      // Predicated region
      $region65: #{basic_block.1} parent=39 // pred_check
        %p371 = pneg %p353
      $region66: #{basic_block.1} parent=39 // pred_check_branch
        %373 = sbr.rel (%p371) target = $region68
      $region67: #{basic_block.1} parent=39 // pred_region
        %374 = vst.msk [vmem:[#allocation2 + $0x110] sm:$0xff] %vm251, 0.0
        %375 = vst.msk [vmem:[#allocation2 + $0x118] sm:$0xff] %vm251, 0.0
      $region68: #{basic_block.1} parent=39 // pred_fallthru
        _
      // Predicated region
      $region69: #{basic_block.1} parent=39 // pred_check
        %p376 = pneg %p359
      $region70: #{basic_block.1} parent=39 // pred_check_branch
        %378 = sbr.rel (%p376) target = $region72
      $region71: #{basic_block.1} parent=39 // pred_region
        %s379 = smul.u32 %s370, 16
        %s380 = scalar_lea.vmem %s238, %s379
        %v381 = vld [vmem:[%s380] sm:$0xff]
        %v382 = vld [vmem:[%s380 + $0x8] sm:$0xff]
        %383 = vst.msk [vmem:[#allocation2 + $0x110] sm:$0xff] %vm251, %v381
        %384 = vst.msk [vmem:[#allocation2 + $0x118] sm:$0xff] %vm251, %v382
      $region72: #{basic_block.1} parent=39 // pred_fallthru
        _
      %v385 = vld [vmem:[#allocation2 + $0x7] sm:$0xff]
      %v386 = vld [vmem:[#allocation2 + $0xf] sm:$0xff]
      %v387 = vld [vmem:[#allocation2 + $0x17] sm:$0xff]
      %v388 = vld [vmem:[#allocation2 + $0x1f] sm:$0xff]
      %v389 = vld [vmem:[#allocation2 + $0x27] sm:$0xff]
      %v390 = vld [vmem:[#allocation2 + $0x2f] sm:$0xff]
      %v391 = vld [vmem:[#allocation2 + $0x37] sm:$0xff]
      %v392 = vld [vmem:[#allocation2 + $0x3f] sm:$0xff]
      %v393 = vld [vmem:[#allocation2 + $0x47] sm:$0xff]
      %v394 = vld [vmem:[#allocation2 + $0x4f] sm:$0xff]
      %v395 = vld [vmem:[#allocation2 + $0x57] sm:$0xff]
      %v396 = vld [vmem:[#allocation2 + $0x5f] sm:$0xff]
      %v397 = vld [vmem:[#allocation2 + $0x67] sm:$0xff]
      %v398 = vld [vmem:[#allocation2 + $0x6f] sm:$0xff]
      %v399 = vld [vmem:[#allocation2 + $0x77] sm:$0xff]
      %v400 = vld [vmem:[#allocation2 + $0x7f] sm:$0xff]
      %v401 = vld [vmem:[#allocation2 + $0x87] sm:$0xff]
      %v402 = vld [vmem:[#allocation2 + $0x8f] sm:$0xff]
      %v403 = vld [vmem:[#allocation2 + $0x97] sm:$0xff]
      %v404 = vld [vmem:[#allocation2 + $0x9f] sm:$0xff]
      %v405 = vld [vmem:[#allocation2 + $0xa7] sm:$0xff]
      %v406 = vld [vmem:[#allocation2 + $0xaf] sm:$0xff]
      %v407 = vld [vmem:[#allocation2 + $0xb7] sm:$0xff]
      %v408 = vld [vmem:[#allocation2 + $0xbf] sm:$0xff]
      %v409 = vld [vmem:[#allocation2 + $0xc7] sm:$0xff]
      %v410 = vld [vmem:[#allocation2 + $0xcf] sm:$0xff]
      %v411 = vld [vmem:[#allocation2 + $0xd7] sm:$0xff]
      %v412 = vld [vmem:[#allocation2 + $0xdf] sm:$0xff]
      %v413 = vld [vmem:[#allocation2 + $0xe7] sm:$0xff]
      %v414 = vld [vmem:[#allocation2 + $0xef] sm:$0xff]
      %v415 = vld [vmem:[%s1] sm:$0xff]
      %v416 = vld [vmem:[#allocation2 + $0x8] sm:$0xff]
      %v417 = vld [vmem:[#allocation2 + $0x10] sm:$0xff]
      %v418 = vld [vmem:[#allocation2 + $0x18] sm:$0xff]
      %v419 = vld [vmem:[#allocation2 + $0x20] sm:$0xff]
      %v420 = vld [vmem:[#allocation2 + $0x28] sm:$0xff]
      %v421 = vld [vmem:[#allocation2 + $0x30] sm:$0xff]
      %v422 = vld [vmem:[#allocation2 + $0x38] sm:$0xff]
      %v423 = vld [vmem:[#allocation2 + $0x40] sm:$0xff]
      %v424 = vld [vmem:[#allocation2 + $0x48] sm:$0xff]
      %v425 = vld [vmem:[#allocation2 + $0x50] sm:$0xff]
      %v426 = vld [vmem:[#allocation2 + $0x58] sm:$0xff]
      %v427 = vld [vmem:[#allocation2 + $0x60] sm:$0xff]
      %v428 = vld [vmem:[#allocation2 + $0x68] sm:$0xff]
      %v429 = vld [vmem:[#allocation2 + $0x70] sm:$0xff]
      %v430 = vld [vmem:[#allocation2 + $0x78] sm:$0xff]
      %v431 = vld [vmem:[#allocation2 + $0x80] sm:$0xff]
      %v432 = vld [vmem:[#allocation2 + $0x88] sm:$0xff]
      %v433 = vld [vmem:[#allocation2 + $0x90] sm:$0xff]
      %v434 = vld [vmem:[#allocation2 + $0x98] sm:$0xff]
      %v435 = vld [vmem:[#allocation2 + $0xa0] sm:$0xff]
      %v436 = vld [vmem:[#allocation2 + $0xa8] sm:$0xff]
      %v437 = vld [vmem:[#allocation2 + $0xb0] sm:$0xff]
      %v438 = vld [vmem:[#allocation2 + $0xb8] sm:$0xff]
      %v439 = vld [vmem:[#allocation2 + $0xc0] sm:$0xff]
      %v440 = vld [vmem:[#allocation2 + $0xc8] sm:$0xff]
      %v441 = vld [vmem:[#allocation2 + $0xd0] sm:$0xff]
      %v442 = vld [vmem:[#allocation2 + $0xd8] sm:$0xff]
      %v443 = vld [vmem:[#allocation2 + $0xe0] sm:$0xff]
      %v444 = vld [vmem:[#allocation2 + $0xe8] sm:$0xff]
      %v445 = vld [vmem:[#allocation2 + $0xf0] sm:$0xff]
      %s446 = scalar_lea.vmem %s1, 8
      %v447 = vld [vmem:[%s446] sm:$0xff]
      %v449 = vsel %vm251, %v416, 0
      %v452 = vsel %vm251, %v417, 0
      %v455 = vsel %vm251, %v418, 0
      %v458 = vsel %vm251, %v419, 0
      %v461 = vsel %vm251, %v420, 0
      %v464 = vsel %vm251, %v421, 0
      %v467 = vsel %vm251, %v422, 0
      %v470 = vsel %vm251, %v423, 0
      %v473 = vsel %vm251, %v424, 0
      %v476 = vsel %vm251, %v425, 0
      %v479 = vsel %vm251, %v426, 0
      %v482 = vsel %vm251, %v427, 0
      %v485 = vsel %vm251, %v428, 0
      %v488 = vsel %vm251, %v429, 0
      %v491 = vsel %vm251, %v430, 0
      %v494 = vsel %vm251, %v431, 0
      %v497 = vsel %vm251, %v432, 0
      %v500 = vsel %vm251, %v433, 0
      %v503 = vsel %vm251, %v434, 0
      %v506 = vsel %vm251, %v435, 0
      %v509 = vsel %vm251, %v436, 0
      %v512 = vsel %vm251, %v437, 0
      %v515 = vsel %vm251, %v438, 0
      %v518 = vsel %vm251, %v439, 0
      %v521 = vsel %vm251, %v440, 0
      %v524 = vsel %vm251, %v441, 0
      %v527 = vsel %vm251, %v442, 0
      %v530 = vsel %vm251, %v443, 0
      %v533 = vsel %vm251, %v444, 0
      %v536 = vsel %vm251, %v445, 0
      %538 = vmatprep.subr.mxu0 0.0
      %539 = vmatpush1.msra.mxu0 %v447
      %540 = vmatprep.subr.mxu0 0.0
      %541 = vmatpush1.msra.mxu0 0.0
      %542 = vmatprep.subr.mxu0 0.0
      %543 = vmatpush1.msra.mxu0 0.0
      %544 = vmatprep.subr.mxu0 0.0
      %545 = vmatpush1.msra.mxu0 0.0
      %546 = vmatprep.subr.mxu0 0.0
      %547 = vmatpush1.msra.mxu0 0.0
      %548 = vmatprep.subr.mxu0 0.0
      %549 = vmatpush1.msra.mxu0 0.0
      %550 = vmatprep.subr.mxu0 0.0
      %551 = vmatpush1.msra.mxu0 0.0
      %552 = vmatprep.subr.mxu0 0.0
      %553 = vmatpush1.msra.mxu0 0.0
      %554 = vmatprep.subr.mxu0 0.0
      %555 = vmatpush1.msra.mxu0 0.0
      %556 = vmatprep.subr.mxu0 0.0
      %557 = vmatpush1.msra.mxu0 0.0
      %558 = vmatprep.subr.mxu0 0.0
      %559 = vmatpush1.msra.mxu0 0.0
      %560 = vmatprep.subr.mxu0 0.0
      %561 = vmatpush1.msra.mxu0 0.0
      %562 = vmatprep.subr.mxu0 0.0
      %563 = vmatpush1.msra.mxu0 0.0
      %564 = vmatprep.subr.mxu0 0.0
      %565 = vmatpush1.msra.mxu0 0.0
      %566 = vmatprep.subr.mxu0 0.0
      %567 = vmatpush1.msra.mxu0 0.0
      %568 = vmatprep.subr.mxu0 0.0
      %569 = vmatpush1.msra.mxu0 0.0
      %570 = vmatprep.subr.mxu0 0.0
      %571 = vmatpush1.msra.mxu0 0.0
      %572 = vmatprep.subr.mxu0 0.0
      %573 = vmatpush1.msra.mxu0 0.0
      %574 = vmatprep.subr.mxu0 0.0
      %575 = vmatpush1.msra.mxu0 0.0
      %576 = vmatprep.subr.mxu0 0.0
      %577 = vmatpush1.msra.mxu0 0.0
      %578 = vmatprep.subr.mxu0 0.0
      %579 = vmatpush1.msra.mxu0 0.0
      %580 = vmatprep.subr.mxu0 0.0
      %581 = vmatpush1.msra.mxu0 0.0
      %582 = vmatprep.subr.mxu0 0.0
      %583 = vmatpush1.msra.mxu0 0.0
      %584 = vmatprep.subr.mxu0 0.0
      %585 = vmatpush1.msra.mxu0 0.0
      %586 = vmatprep.subr.mxu0 0.0
      %587 = vmatpush1.msra.mxu0 0.0
      %588 = vmatprep.subr.mxu0 0.0
      %589 = vmatpush1.msra.mxu0 0.0
      %590 = vmatprep.subr.mxu0 0.0
      %591 = vmatpush1.msra.mxu0 0.0
      %592 = vmatprep.subr.mxu0 0.0
      %593 = vmatpush1.msra.mxu0 0.0
      %594 = vmatprep.subr.mxu0 0.0
      %595 = vmatpush1.msra.mxu0 0.0
      %596 = vmatprep.subr.mxu0 0.0
      %597 = vmatpush1.msra.mxu0 0.0
      %598 = vmatprep.subr.mxu0 0.0
      %599 = vmatpush1.msra.mxu0 0.0
      %600 = vmatprep.subr.mxu0 0.0
      %601 = vmatpush1.msra.mxu0 0.0
      %602 = vmatprep.mubr.f32.mxu0 0.0
      %603 = vmatmul.mubr.f32.gmra.mrb[0].mxu0 %v449
      %v604 = vpop.f32.mrb[0].mxu0
      %v605 = vadd.f32 0.0, %v604
      %v606 = vpop.f32.mrb[0].mxu0
      %607 = vmatprep.mubr.f32.mxu0 0.0
      %608 = vmatmul.mubr.f32.gmra.mrb[0].mxu0 %v452
      %v609 = vpop.f32.mrb[0].mxu0
      %v610 = vadd.f32 0.0, %v609
      %v611 = vpop.f32.mrb[0].mxu0
      %612 = vmatprep.mubr.f32.mxu0 0.0
      %613 = vmatmul.mubr.f32.gmra.mrb[0].mxu0 %v455
      %v614 = vpop.f32.mrb[0].mxu0
      %v615 = vadd.f32 0.0, %v614
      %v616 = vpop.f32.mrb[0].mxu0
      %617 = vmatprep.mubr.f32.mxu0 0.0
      %618 = vmatmul.mubr.f32.gmra.mrb[0].mxu0 %v458
      %v619 = vpop.f32.mrb[0].mxu0
      %v620 = vadd.f32 0.0, %v619
      %v621 = vpop.f32.mrb[0].mxu0
      %622 = vmatprep.mubr.f32.mxu0 0.0
      %623 = vmatmul.mubr.f32.gmra.mrb[0].mxu0 %v461
      %v624 = vpop.f32.mrb[0].mxu0
      %v625 = vadd.f32 0.0, %v624
      %v626 = vpop.f32.mrb[0].mxu0
      %627 = vmatprep.mubr.f32.mxu0 0.0
      %628 = vmatmul.mubr.f32.gmra.mrb[0].mxu0 %v464
      %v629 = vpop.f32.mrb[0].mxu0
      %v630 = vadd.f32 0.0, %v629
      %v631 = vpop.f32.mrb[0].mxu0
      %632 = vmatprep.mubr.f32.mxu0 0.0
      %633 = vmatmul.mubr.f32.gmra.mrb[0].mxu0 %v467
      %v634 = vpop.f32.mrb[0].mxu0
      %v635 = vadd.f32 0.0, %v634
      %v636 = vpop.f32.mrb[0].mxu0
      %637 = vmatprep.mubr.f32.mxu0 0.0
      %638 = vmatmul.mubr.f32.gmra.mrb[0].mxu0 %v470
      %v639 = vpop.f32.mrb[0].mxu0
      %v640 = vadd.f32 0.0, %v639
      %v641 = vpop.f32.mrb[0].mxu0
      %642 = vmatprep.mubr.f32.mxu0 0.0
      %643 = vmatmul.mubr.f32.gmra.mrb[0].mxu0 %v473
      %v644 = vpop.f32.mrb[0].mxu0
      %v645 = vadd.f32 0.0, %v644
      %v646 = vpop.f32.mrb[0].mxu0
      %647 = vmatprep.mubr.f32.mxu0 0.0
      %648 = vmatmul.mubr.f32.gmra.mrb[0].mxu0 %v476
      %v649 = vpop.f32.mrb[0].mxu0
      %v650 = vadd.f32 0.0, %v649
      %v651 = vpop.f32.mrb[0].mxu0
      %652 = vmatprep.mubr.f32.mxu0 0.0
      %653 = vmatmul.mubr.f32.gmra.mrb[0].mxu0 %v479
      %v654 = vpop.f32.mrb[0].mxu0
      %v655 = vadd.f32 0.0, %v654
      %v656 = vpop.f32.mrb[0].mxu0
      %657 = vmatprep.mubr.f32.mxu0 0.0
      %658 = vmatmul.mubr.f32.gmra.mrb[0].mxu0 %v482
      %v659 = vpop.f32.mrb[0].mxu0
      %v660 = vadd.f32 0.0, %v659
      %v661 = vpop.f32.mrb[0].mxu0
      %662 = vmatprep.mubr.f32.mxu0 0.0
      %663 = vmatmul.mubr.f32.gmra.mrb[0].mxu0 %v485
      %v664 = vpop.f32.mrb[0].mxu0
      %v665 = vadd.f32 0.0, %v664
      %v666 = vpop.f32.mrb[0].mxu0
      %667 = vmatprep.mubr.f32.mxu0 0.0
      %668 = vmatmul.mubr.f32.gmra.mrb[0].mxu0 %v488
      %v669 = vpop.f32.mrb[0].mxu0
      %v670 = vadd.f32 0.0, %v669
      %v671 = vpop.f32.mrb[0].mxu0
      %672 = vmatprep.mubr.f32.mxu0 0.0
      %673 = vmatmul.mubr.f32.gmra.mrb[0].mxu0 %v491
      %v674 = vpop.f32.mrb[0].mxu0
      %v675 = vadd.f32 0.0, %v674
      %v676 = vpop.f32.mrb[0].mxu0
      %677 = vmatprep.mubr.f32.mxu0 0.0
      %678 = vmatmul.mubr.f32.gmra.mrb[0].mxu0 %v494
      %v679 = vpop.f32.mrb[0].mxu0
      %v680 = vadd.f32 0.0, %v679
      %v681 = vpop.f32.mrb[0].mxu0
      %682 = vmatprep.mubr.f32.mxu0 0.0
      %683 = vmatmul.mubr.f32.gmra.mrb[0].mxu0 %v497
      %v684 = vpop.f32.mrb[0].mxu0
      %v685 = vadd.f32 0.0, %v684
      %v686 = vpop.f32.mrb[0].mxu0
      %687 = vmatprep.mubr.f32.mxu0 0.0
      %688 = vmatmul.mubr.f32.gmra.mrb[0].mxu0 %v500
      %v689 = vpop.f32.mrb[0].mxu0
      %v690 = vadd.f32 0.0, %v689
      %v691 = vpop.f32.mrb[0].mxu0
      %692 = vmatprep.mubr.f32.mxu0 0.0
      %693 = vmatmul.mubr.f32.gmra.mrb[0].mxu0 %v503
      %v694 = vpop.f32.mrb[0].mxu0
      %v695 = vadd.f32 0.0, %v694
      %v696 = vpop.f32.mrb[0].mxu0
      %697 = vmatprep.mubr.f32.mxu0 0.0
      %698 = vmatmul.mubr.f32.gmra.mrb[0].mxu0 %v506
      %v699 = vpop.f32.mrb[0].mxu0
      %v700 = vadd.f32 0.0, %v699
      %v701 = vpop.f32.mrb[0].mxu0
      %702 = vmatprep.mubr.f32.mxu0 0.0
      %703 = vmatmul.mubr.f32.gmra.mrb[0].mxu0 %v509
      %v704 = vpop.f32.mrb[0].mxu0
      %v705 = vadd.f32 0.0, %v704
      %v706 = vpop.f32.mrb[0].mxu0
      %707 = vmatprep.mubr.f32.mxu0 0.0
      %708 = vmatmul.mubr.f32.gmra.mrb[0].mxu0 %v512
      %v709 = vpop.f32.mrb[0].mxu0
      %v710 = vadd.f32 0.0, %v709
      %v711 = vpop.f32.mrb[0].mxu0
      %712 = vmatprep.mubr.f32.mxu0 0.0
      %713 = vmatmul.mubr.f32.gmra.mrb[0].mxu0 %v515
      %v714 = vpop.f32.mrb[0].mxu0
      %v715 = vadd.f32 0.0, %v714
      %v716 = vpop.f32.mrb[0].mxu0
      %717 = vmatprep.mubr.f32.mxu0 0.0
      %718 = vmatmul.mubr.f32.gmra.mrb[0].mxu0 %v518
      %v719 = vpop.f32.mrb[0].mxu0
      %v720 = vadd.f32 0.0, %v719
      %v721 = vpop.f32.mrb[0].mxu0
      %722 = vmatprep.mubr.f32.mxu0 0.0
      %723 = vmatmul.mubr.f32.gmra.mrb[0].mxu0 %v521
      %v724 = vpop.f32.mrb[0].mxu0
      %v725 = vadd.f32 0.0, %v724
      %v726 = vpop.f32.mrb[0].mxu0
      %727 = vmatprep.mubr.f32.mxu0 0.0
      %728 = vmatmul.mubr.f32.gmra.mrb[0].mxu0 %v524
      %v729 = vpop.f32.mrb[0].mxu0
      %v730 = vadd.f32 0.0, %v729
      %v731 = vpop.f32.mrb[0].mxu0
      %732 = vmatprep.mubr.f32.mxu0 0.0
      %733 = vmatmul.mubr.f32.gmra.mrb[0].mxu0 %v527
      %v734 = vpop.f32.mrb[0].mxu0
      %v735 = vadd.f32 0.0, %v734
      %v736 = vpop.f32.mrb[0].mxu0
      %737 = vmatprep.mubr.f32.mxu0 0.0
      %738 = vmatmul.mubr.f32.gmra.mrb[0].mxu0 %v530
      %v739 = vpop.f32.mrb[0].mxu0
      %v740 = vadd.f32 0.0, %v739
      %v741 = vpop.f32.mrb[0].mxu0
      %742 = vmatprep.mubr.f32.mxu0 0.0
      %743 = vmatmul.mubr.f32.gmra.mrb[0].mxu0 %v533
      %v744 = vpop.f32.mrb[0].mxu0
      %v745 = vadd.f32 0.0, %v744
      %v746 = vpop.f32.mrb[0].mxu0
      %747 = vmatprep.mubr.f32.mxu0 0.0
      %748 = vmatmul.mubr.f32.gmra.mrb[0].mxu0 %v536
      %v749 = vpop.f32.mrb[0].mxu0
      %v750 = vadd.f32 0.0, %v749
      %v751 = vpop.f32.mrb[0].mxu0
      %752 = vdwg.mxu0
      %v754 = vsel %vm251, %v385, 0
      %v757 = vsel %vm251, %v386, 0
      %v760 = vsel %vm251, %v387, 0
      %v763 = vsel %vm251, %v388, 0
      %v766 = vsel %vm251, %v389, 0
      %v769 = vsel %vm251, %v390, 0
      %v772 = vsel %vm251, %v391, 0
      %v775 = vsel %vm251, %v392, 0
      %v778 = vsel %vm251, %v393, 0
      %v781 = vsel %vm251, %v394, 0
      %v784 = vsel %vm251, %v395, 0
      %v787 = vsel %vm251, %v396, 0
      %v790 = vsel %vm251, %v397, 0
      %v793 = vsel %vm251, %v398, 0
      %v796 = vsel %vm251, %v399, 0
      %v799 = vsel %vm251, %v400, 0
      %v802 = vsel %vm251, %v401, 0
      %v805 = vsel %vm251, %v402, 0
      %v808 = vsel %vm251, %v403, 0
      %v811 = vsel %vm251, %v404, 0
      %v814 = vsel %vm251, %v405, 0
      %v817 = vsel %vm251, %v406, 0
      %v820 = vsel %vm251, %v407, 0
      %v823 = vsel %vm251, %v408, 0
      %v826 = vsel %vm251, %v409, 0
      %v829 = vsel %vm251, %v410, 0
      %v832 = vsel %vm251, %v411, 0
      %v835 = vsel %vm251, %v412, 0
      %v838 = vsel %vm251, %v413, 0
      %v841 = vsel %vm251, %v414, 0
      %843 = vmatprep.subr.mxu0 0.0
      %844 = vmatpush1.msra.mxu0 %v415
      %845 = vmatprep.subr.mxu0 0.0
      %846 = vmatpush1.msra.mxu0 0.0
      %847 = vmatprep.subr.mxu0 0.0
      %848 = vmatpush1.msra.mxu0 0.0
      %849 = vmatprep.subr.mxu0 0.0
      %850 = vmatpush1.msra.mxu0 0.0
      %851 = vmatprep.subr.mxu0 0.0
      %852 = vmatpush1.msra.mxu0 0.0
      %853 = vmatprep.subr.mxu0 0.0
      %854 = vmatpush1.msra.mxu0 0.0
      %855 = vmatprep.subr.mxu0 0.0
      %856 = vmatpush1.msra.mxu0 0.0
      %857 = vmatprep.subr.mxu0 0.0
      %858 = vmatpush1.msra.mxu0 0.0
      %859 = vmatprep.subr.mxu0 0.0
      %860 = vmatpush1.msra.mxu0 0.0
      %861 = vmatprep.subr.mxu0 0.0
      %862 = vmatpush1.msra.mxu0 0.0
      %863 = vmatprep.subr.mxu0 0.0
      %864 = vmatpush1.msra.mxu0 0.0
      %865 = vmatprep.subr.mxu0 0.0
      %866 = vmatpush1.msra.mxu0 0.0
      %867 = vmatprep.subr.mxu0 0.0
      %868 = vmatpush1.msra.mxu0 0.0
      %869 = vmatprep.subr.mxu0 0.0
      %870 = vmatpush1.msra.mxu0 0.0
      %871 = vmatprep.subr.mxu0 0.0
      %872 = vmatpush1.msra.mxu0 0.0
      %873 = vmatprep.subr.mxu0 0.0
      %874 = vmatpush1.msra.mxu0 0.0
      %875 = vmatprep.subr.mxu0 0.0
      %876 = vmatpush1.msra.mxu0 0.0
      %877 = vmatprep.subr.mxu0 0.0
      %878 = vmatpush1.msra.mxu0 0.0
      %879 = vmatprep.subr.mxu0 0.0
      %880 = vmatpush1.msra.mxu0 0.0
      %881 = vmatprep.subr.mxu0 0.0
      %882 = vmatpush1.msra.mxu0 0.0
      %883 = vmatprep.subr.mxu0 0.0
      %884 = vmatpush1.msra.mxu0 0.0
      %885 = vmatprep.subr.mxu0 0.0
      %886 = vmatpush1.msra.mxu0 0.0
      %887 = vmatprep.subr.mxu0 0.0
      %888 = vmatpush1.msra.mxu0 0.0
      %889 = vmatprep.subr.mxu0 0.0
      %890 = vmatpush1.msra.mxu0 0.0
      %891 = vmatprep.subr.mxu0 0.0
      %892 = vmatpush1.msra.mxu0 0.0
      %893 = vmatprep.subr.mxu0 0.0
      %894 = vmatpush1.msra.mxu0 0.0
      %895 = vmatprep.subr.mxu0 0.0
      %896 = vmatpush1.msra.mxu0 0.0
      %897 = vmatprep.subr.mxu0 0.0
      %898 = vmatpush1.msra.mxu0 0.0
      %899 = vmatprep.subr.mxu0 0.0
      %900 = vmatpush1.msra.mxu0 0.0
      %901 = vmatprep.subr.mxu0 0.0
      %902 = vmatpush1.msra.mxu0 0.0
      %903 = vmatprep.subr.mxu0 0.0
      %904 = vmatpush1.msra.mxu0 0.0
      %905 = vmatprep.subr.mxu0 0.0
      %906 = vmatpush1.msra.mxu0 0.0
      %907 = vmatprep.mubr.f32.mxu0 0.0
      %908 = vmatmul.mubr.f32.gmra.mrb[0].mxu0 %v754
      %v909 = vpop.f32.mrb[0].mxu0
      %v910 = vadd.f32 %v605, %v909
      %v911 = vpop.f32.mrb[0].mxu0
      %912 = vmatprep.mubr.f32.mxu0 0.0
      %913 = vmatmul.mubr.f32.gmra.mrb[0].mxu0 %v757
      %v914 = vpop.f32.mrb[0].mxu0
      %v915 = vadd.f32 %v610, %v914
      %v916 = vpop.f32.mrb[0].mxu0
      %917 = vmatprep.mubr.f32.mxu0 0.0
      %918 = vmatmul.mubr.f32.gmra.mrb[0].mxu0 %v760
      %v919 = vpop.f32.mrb[0].mxu0
      %v920 = vadd.f32 %v615, %v919
      %v921 = vpop.f32.mrb[0].mxu0
      %922 = vmatprep.mubr.f32.mxu0 0.0
      %923 = vmatmul.mubr.f32.gmra.mrb[0].mxu0 %v763
      %v924 = vpop.f32.mrb[0].mxu0
      %v925 = vadd.f32 %v620, %v924
      %v926 = vpop.f32.mrb[0].mxu0
      %927 = vmatprep.mubr.f32.mxu0 0.0
      %928 = vmatmul.mubr.f32.gmra.mrb[0].mxu0 %v766
      %v929 = vpop.f32.mrb[0].mxu0
      %v930 = vadd.f32 %v625, %v929
      %v931 = vpop.f32.mrb[0].mxu0
      %932 = vmatprep.mubr.f32.mxu0 0.0
      %933 = vmatmul.mubr.f32.gmra.mrb[0].mxu0 %v769
      %v934 = vpop.f32.mrb[0].mxu0
      %v935 = vadd.f32 %v630, %v934
      %v936 = vpop.f32.mrb[0].mxu0
      %937 = vmatprep.mubr.f32.mxu0 0.0
      %938 = vmatmul.mubr.f32.gmra.mrb[0].mxu0 %v772
      %v939 = vpop.f32.mrb[0].mxu0
      %v940 = vadd.f32 %v635, %v939
      %v941 = vpop.f32.mrb[0].mxu0
      %942 = vmatprep.mubr.f32.mxu0 0.0
      %943 = vmatmul.mubr.f32.gmra.mrb[0].mxu0 %v775
      %v944 = vpop.f32.mrb[0].mxu0
      %v945 = vadd.f32 %v640, %v944
      %v946 = vpop.f32.mrb[0].mxu0
      %947 = vmatprep.mubr.f32.mxu0 0.0
      %948 = vmatmul.mubr.f32.gmra.mrb[0].mxu0 %v778
      %v949 = vpop.f32.mrb[0].mxu0
      %v950 = vadd.f32 %v645, %v949
      %v951 = vpop.f32.mrb[0].mxu0
      %952 = vmatprep.mubr.f32.mxu0 0.0
      %953 = vmatmul.mubr.f32.gmra.mrb[0].mxu0 %v781
      %v954 = vpop.f32.mrb[0].mxu0
      %v955 = vadd.f32 %v650, %v954
      %v956 = vpop.f32.mrb[0].mxu0
      %957 = vmatprep.mubr.f32.mxu0 0.0
      %958 = vmatmul.mubr.f32.gmra.mrb[0].mxu0 %v784
      %v959 = vpop.f32.mrb[0].mxu0
      %v960 = vadd.f32 %v655, %v959
      %v961 = vpop.f32.mrb[0].mxu0
      %962 = vmatprep.mubr.f32.mxu0 0.0
      %963 = vmatmul.mubr.f32.gmra.mrb[0].mxu0 %v787
      %v964 = vpop.f32.mrb[0].mxu0
      %v965 = vadd.f32 %v660, %v964
      %v966 = vpop.f32.mrb[0].mxu0
      %967 = vmatprep.mubr.f32.mxu0 0.0
      %968 = vmatmul.mubr.f32.gmra.mrb[0].mxu0 %v790
      %v969 = vpop.f32.mrb[0].mxu0
      %v970 = vadd.f32 %v665, %v969
      %v971 = vpop.f32.mrb[0].mxu0
      %972 = vmatprep.mubr.f32.mxu0 0.0
      %973 = vmatmul.mubr.f32.gmra.mrb[0].mxu0 %v793
      %v974 = vpop.f32.mrb[0].mxu0
      %v975 = vadd.f32 %v670, %v974
      %v976 = vpop.f32.mrb[0].mxu0
      %977 = vmatprep.mubr.f32.mxu0 0.0
      %978 = vmatmul.mubr.f32.gmra.mrb[0].mxu0 %v796
      %v979 = vpop.f32.mrb[0].mxu0
      %v980 = vadd.f32 %v675, %v979
      %v981 = vpop.f32.mrb[0].mxu0
      %982 = vmatprep.mubr.f32.mxu0 0.0
      %983 = vmatmul.mubr.f32.gmra.mrb[0].mxu0 %v799
      %v984 = vpop.f32.mrb[0].mxu0
      %v985 = vadd.f32 %v680, %v984
      %v986 = vpop.f32.mrb[0].mxu0
      %987 = vmatprep.mubr.f32.mxu0 0.0
      %988 = vmatmul.mubr.f32.gmra.mrb[0].mxu0 %v802
      %v989 = vpop.f32.mrb[0].mxu0
      %v990 = vadd.f32 %v685, %v989
      %v991 = vpop.f32.mrb[0].mxu0
      %992 = vmatprep.mubr.f32.mxu0 0.0
      %993 = vmatmul.mubr.f32.gmra.mrb[0].mxu0 %v805
      %v994 = vpop.f32.mrb[0].mxu0
      %v995 = vadd.f32 %v690, %v994
      %v996 = vpop.f32.mrb[0].mxu0
      %997 = vmatprep.mubr.f32.mxu0 0.0
      %998 = vmatmul.mubr.f32.gmra.mrb[0].mxu0 %v808
      %v999 = vpop.f32.mrb[0].mxu0
      %v1000 = vadd.f32 %v695, %v999
      %v1001 = vpop.f32.mrb[0].mxu0
      %1002 = vmatprep.mubr.f32.mxu0 0.0
      %1003 = vmatmul.mubr.f32.gmra.mrb[0].mxu0 %v811
      %v1004 = vpop.f32.mrb[0].mxu0
      %v1005 = vadd.f32 %v700, %v1004
      %v1006 = vpop.f32.mrb[0].mxu0
      %1007 = vmatprep.mubr.f32.mxu0 0.0
      %1008 = vmatmul.mubr.f32.gmra.mrb[0].mxu0 %v814
      %v1009 = vpop.f32.mrb[0].mxu0
      %v1010 = vadd.f32 %v705, %v1009
      %v1011 = vpop.f32.mrb[0].mxu0
      %1012 = vmatprep.mubr.f32.mxu0 0.0
      %1013 = vmatmul.mubr.f32.gmra.mrb[0].mxu0 %v817
      %v1014 = vpop.f32.mrb[0].mxu0
      %v1015 = vadd.f32 %v710, %v1014
      %v1016 = vpop.f32.mrb[0].mxu0
      %1017 = vmatprep.mubr.f32.mxu0 0.0
      %1018 = vmatmul.mubr.f32.gmra.mrb[0].mxu0 %v820
      %v1019 = vpop.f32.mrb[0].mxu0
      %v1020 = vadd.f32 %v715, %v1019
      %v1021 = vpop.f32.mrb[0].mxu0
      %1022 = vmatprep.mubr.f32.mxu0 0.0
      %1023 = vmatmul.mubr.f32.gmra.mrb[0].mxu0 %v823
      %v1024 = vpop.f32.mrb[0].mxu0
      %v1025 = vadd.f32 %v720, %v1024
      %v1026 = vpop.f32.mrb[0].mxu0
      %1027 = vmatprep.mubr.f32.mxu0 0.0
      %1028 = vmatmul.mubr.f32.gmra.mrb[0].mxu0 %v826
      %v1029 = vpop.f32.mrb[0].mxu0
      %v1030 = vadd.f32 %v725, %v1029
      %v1031 = vpop.f32.mrb[0].mxu0
      %1032 = vmatprep.mubr.f32.mxu0 0.0
      %1033 = vmatmul.mubr.f32.gmra.mrb[0].mxu0 %v829
      %v1034 = vpop.f32.mrb[0].mxu0
      %v1035 = vadd.f32 %v730, %v1034
      %v1036 = vpop.f32.mrb[0].mxu0
      %1037 = vmatprep.mubr.f32.mxu0 0.0
      %1038 = vmatmul.mubr.f32.gmra.mrb[0].mxu0 %v832
      %v1039 = vpop.f32.mrb[0].mxu0
      %v1040 = vadd.f32 %v735, %v1039
      %v1041 = vpop.f32.mrb[0].mxu0
      %1042 = vmatprep.mubr.f32.mxu0 0.0
      %1043 = vmatmul.mubr.f32.gmra.mrb[0].mxu0 %v835
      %v1044 = vpop.f32.mrb[0].mxu0
      %v1045 = vadd.f32 %v740, %v1044
      %v1046 = vpop.f32.mrb[0].mxu0
      %1047 = vmatprep.mubr.f32.mxu0 0.0
      %1048 = vmatmul.mubr.f32.gmra.mrb[0].mxu0 %v838
      %v1049 = vpop.f32.mrb[0].mxu0
      %v1050 = vadd.f32 %v745, %v1049
      %v1051 = vpop.f32.mrb[0].mxu0
      %1052 = vmatprep.mubr.f32.mxu0 0.0
      %1053 = vmatmul.mubr.f32.gmra.mrb[0].mxu0 %v841
      %v1054 = vpop.f32.mrb[0].mxu0
      %v1055 = vadd.f32 %v750, %v1054
      %v1056 = vpop.f32.mrb[0].mxu0
      %1057 = vdwg.mxu0
      %v1058 = vld [vmem:[#allocation2 + $0x9] sm:$0xff]
      %v1059 = vld [vmem:[#allocation2 + $0x11] sm:$0xff]
      %v1060 = vld [vmem:[#allocation2 + $0x19] sm:$0xff]
      %v1061 = vld [vmem:[#allocation2 + $0x21] sm:$0xff]
      %v1062 = vld [vmem:[#allocation2 + $0x29] sm:$0xff]
      %v1063 = vld [vmem:[#allocation2 + $0x31] sm:$0xff]
      %v1064 = vld [vmem:[#allocation2 + $0x39] sm:$0xff]
      %v1065 = vld [vmem:[#allocation2 + $0x41] sm:$0xff]
      %v1066 = vld [vmem:[#allocation2 + $0x49] sm:$0xff]
      %v1067 = vld [vmem:[#allocation2 + $0x51] sm:$0xff]
      %v1068 = vld [vmem:[#allocation2 + $0x59] sm:$0xff]
      %v1069 = vld [vmem:[#allocation2 + $0x61] sm:$0xff]
      %v1070 = vld [vmem:[#allocation2 + $0x69] sm:$0xff]
      %v1071 = vld [vmem:[#allocation2 + $0x71] sm:$0xff]
      %v1072 = vld [vmem:[#allocation2 + $0x79] sm:$0xff]
      %v1073 = vld [vmem:[#allocation2 + $0x81] sm:$0xff]
      %v1074 = vld [vmem:[#allocation2 + $0x89] sm:$0xff]
      %v1075 = vld [vmem:[#allocation2 + $0x91] sm:$0xff]
      %v1076 = vld [vmem:[#allocation2 + $0x99] sm:$0xff]
      %v1077 = vld [vmem:[#allocation2 + $0xa1] sm:$0xff]
      %v1078 = vld [vmem:[#allocation2 + $0xa9] sm:$0xff]
      %v1079 = vld [vmem:[#allocation2 + $0xb1] sm:$0xff]
      %v1080 = vld [vmem:[#allocation2 + $0xb9] sm:$0xff]
      %v1081 = vld [vmem:[#allocation2 + $0xc1] sm:$0xff]
      %v1082 = vld [vmem:[#allocation2 + $0xc9] sm:$0xff]
      %v1083 = vld [vmem:[#allocation2 + $0xd1] sm:$0xff]
      %v1084 = vld [vmem:[#allocation2 + $0xd9] sm:$0xff]
      %v1085 = vld [vmem:[#allocation2 + $0xe1] sm:$0xff]
      %v1086 = vld [vmem:[#allocation2 + $0xe9] sm:$0xff]
      %v1087 = vld [vmem:[#allocation2 + $0xf1] sm:$0xff]
      %s1088 = scalar_lea.vmem %s1, 16
      %v1089 = vld [vmem:[%s1088] sm:$0xff]
      %v1091 = vsel %vm251, %v1058, 0
      %v1094 = vsel %vm251, %v1059, 0
      %v1097 = vsel %vm251, %v1060, 0
      %v1100 = vsel %vm251, %v1061, 0
      %v1103 = vsel %vm251, %v1062, 0
      %v1106 = vsel %vm251, %v1063, 0
      %v1109 = vsel %vm251, %v1064, 0
      %v1112 = vsel %vm251, %v1065, 0
      %v1115 = vsel %vm251, %v1066, 0
      %v1118 = vsel %vm251, %v1067, 0
      %v1121 = vsel %vm251, %v1068, 0
      %v1124 = vsel %vm251, %v1069, 0
      %v1127 = vsel %vm251, %v1070, 0
      %v1130 = vsel %vm251, %v1071, 0
      %v1133 = vsel %vm251, %v1072, 0
      %v1136 = vsel %vm251, %v1073, 0
      %v1139 = vsel %vm251, %v1074, 0
      %v1142 = vsel %vm251, %v1075, 0
      %v1145 = vsel %vm251, %v1076, 0
      %v1148 = vsel %vm251, %v1077, 0
      %v1151 = vsel %vm251, %v1078, 0
      %v1154 = vsel %vm251, %v1079, 0
      %v1157 = vsel %vm251, %v1080, 0
      %v1160 = vsel %vm251, %v1081, 0
      %v1163 = vsel %vm251, %v1082, 0
      %v1166 = vsel %vm251, %v1083, 0
      %v1169 = vsel %vm251, %v1084, 0
      %v1172 = vsel %vm251, %v1085, 0
      %v1175 = vsel %vm251, %v1086, 0
      %v1178 = vsel %vm251, %v1087, 0
      %1180 = vmatprep.subr.mxu0 0.0
      %1181 = vmatpush1.msra.mxu0 %v1089
      %1182 = vmatprep.subr.mxu0 0.0
      %1183 = vmatpush1.msra.mxu0 0.0
      %1184 = vmatprep.subr.mxu0 0.0
      %1185 = vmatpush1.msra.mxu0 0.0
      %1186 = vmatprep.subr.mxu0 0.0
      %1187 = vmatpush1.msra.mxu0 0.0
      %1188 = vmatprep.subr.mxu0 0.0
      %1189 = vmatpush1.msra.mxu0 0.0
      %1190 = vmatprep.subr.mxu0 0.0
      %1191 = vmatpush1.msra.mxu0 0.0
      %1192 = vmatprep.subr.mxu0 0.0
      %1193 = vmatpush1.msra.mxu0 0.0
      %1194 = vmatprep.subr.mxu0 0.0
      %1195 = vmatpush1.msra.mxu0 0.0
      %1196 = vmatprep.subr.mxu0 0.0
      %1197 = vmatpush1.msra.mxu0 0.0
      %1198 = vmatprep.subr.mxu0 0.0
      %1199 = vmatpush1.msra.mxu0 0.0
      %1200 = vmatprep.subr.mxu0 0.0
      %1201 = vmatpush1.msra.mxu0 0.0
      %1202 = vmatprep.subr.mxu0 0.0
      %1203 = vmatpush1.msra.mxu0 0.0
      %1204 = vmatprep.subr.mxu0 0.0
      %1205 = vmatpush1.msra.mxu0 0.0
      %1206 = vmatprep.subr.mxu0 0.0
      %1207 = vmatpush1.msra.mxu0 0.0
      %1208 = vmatprep.subr.mxu0 0.0
      %1209 = vmatpush1.msra.mxu0 0.0
      %1210 = vmatprep.subr.mxu0 0.0
      %1211 = vmatpush1.msra.mxu0 0.0
      %1212 = vmatprep.subr.mxu0 0.0
      %1213 = vmatpush1.msra.mxu0 0.0
      %1214 = vmatprep.subr.mxu0 0.0
      %1215 = vmatpush1.msra.mxu0 0.0
      %1216 = vmatprep.subr.mxu0 0.0
      %1217 = vmatpush1.msra.mxu0 0.0
      %1218 = vmatprep.subr.mxu0 0.0
      %1219 = vmatpush1.msra.mxu0 0.0
      %1220 = vmatprep.subr.mxu0 0.0
      %1221 = vmatpush1.msra.mxu0 0.0
      %1222 = vmatprep.subr.mxu0 0.0
      %1223 = vmatpush1.msra.mxu0 0.0
      %1224 = vmatprep.subr.mxu0 0.0
      %1225 = vmatpush1.msra.mxu0 0.0
      %1226 = vmatprep.subr.mxu0 0.0
      %1227 = vmatpush1.msra.mxu0 0.0
      %1228 = vmatprep.subr.mxu0 0.0
      %1229 = vmatpush1.msra.mxu0 0.0
      %1230 = vmatprep.subr.mxu0 0.0
      %1231 = vmatpush1.msra.mxu0 0.0
      %1232 = vmatprep.subr.mxu0 0.0
      %1233 = vmatpush1.msra.mxu0 0.0
      %1234 = vmatprep.subr.mxu0 0.0
      %1235 = vmatpush1.msra.mxu0 0.0
      %1236 = vmatprep.subr.mxu0 0.0
      %1237 = vmatpush1.msra.mxu0 0.0
      %1238 = vmatprep.subr.mxu0 0.0
      %1239 = vmatpush1.msra.mxu0 0.0
      %1240 = vmatprep.subr.mxu0 0.0
      %1241 = vmatpush1.msra.mxu0 0.0
      %1242 = vmatprep.subr.mxu0 0.0
      %1243 = vmatpush1.msra.mxu0 0.0
      %1244 = vmatprep.mubr.f32.mxu0 0.0
      %1245 = vmatmul.mubr.f32.gmra.mrb[0].mxu0 %v1091
      %v1246 = vpop.f32.mrb[0].mxu0
      %v1247 = vadd.f32 0.0, %v1246
      %v1248 = vpop.f32.mrb[0].mxu0
      %1249 = vmatprep.mubr.f32.mxu0 0.0
      %1250 = vmatmul.mubr.f32.gmra.mrb[0].mxu0 %v1094
      %v1251 = vpop.f32.mrb[0].mxu0
      %v1252 = vadd.f32 0.0, %v1251
      %v1253 = vpop.f32.mrb[0].mxu0
      %1254 = vmatprep.mubr.f32.mxu0 0.0
      %1255 = vmatmul.mubr.f32.gmra.mrb[0].mxu0 %v1097
      %v1256 = vpop.f32.mrb[0].mxu0
      %v1257 = vadd.f32 0.0, %v1256
      %v1258 = vpop.f32.mrb[0].mxu0
      %1259 = vmatprep.mubr.f32.mxu0 0.0
      %1260 = vmatmul.mubr.f32.gmra.mrb[0].mxu0 %v1100
      %v1261 = vpop.f32.mrb[0].mxu0
      %v1262 = vadd.f32 0.0, %v1261
      %v1263 = vpop.f32.mrb[0].mxu0
      %1264 = vmatprep.mubr.f32.mxu0 0.0
      %1265 = vmatmul.mubr.f32.gmra.mrb[0].mxu0 %v1103
      %v1266 = vpop.f32.mrb[0].mxu0
      %v1267 = vadd.f32 0.0, %v1266
      %v1268 = vpop.f32.mrb[0].mxu0
      %1269 = vmatprep.mubr.f32.mxu0 0.0
      %1270 = vmatmul.mubr.f32.gmra.mrb[0].mxu0 %v1106
      %v1271 = vpop.f32.mrb[0].mxu0
      %v1272 = vadd.f32 0.0, %v1271
      %v1273 = vpop.f32.mrb[0].mxu0
      %1274 = vmatprep.mubr.f32.mxu0 0.0
      %1275 = vmatmul.mubr.f32.gmra.mrb[0].mxu0 %v1109
      %v1276 = vpop.f32.mrb[0].mxu0
      %v1277 = vadd.f32 0.0, %v1276
      %v1278 = vpop.f32.mrb[0].mxu0
      %1279 = vmatprep.mubr.f32.mxu0 0.0
      %1280 = vmatmul.mubr.f32.gmra.mrb[0].mxu0 %v1112
      %v1281 = vpop.f32.mrb[0].mxu0
      %v1282 = vadd.f32 0.0, %v1281
      %v1283 = vpop.f32.mrb[0].mxu0
      %1284 = vmatprep.mubr.f32.mxu0 0.0
      %1285 = vmatmul.mubr.f32.gmra.mrb[0].mxu0 %v1115
      %v1286 = vpop.f32.mrb[0].mxu0
      %v1287 = vadd.f32 0.0, %v1286
      %v1288 = vpop.f32.mrb[0].mxu0
      %1289 = vmatprep.mubr.f32.mxu0 0.0
      %1290 = vmatmul.mubr.f32.gmra.mrb[0].mxu0 %v1118
      %v1291 = vpop.f32.mrb[0].mxu0
      %v1292 = vadd.f32 0.0, %v1291
      %v1293 = vpop.f32.mrb[0].mxu0
      %1294 = vmatprep.mubr.f32.mxu0 0.0
      %1295 = vmatmul.mubr.f32.gmra.mrb[0].mxu0 %v1121
      %v1296 = vpop.f32.mrb[0].mxu0
      %v1297 = vadd.f32 0.0, %v1296
      %v1298 = vpop.f32.mrb[0].mxu0
      %1299 = vmatprep.mubr.f32.mxu0 0.0
      %1300 = vmatmul.mubr.f32.gmra.mrb[0].mxu0 %v1124
      %v1301 = vpop.f32.mrb[0].mxu0
      %v1302 = vadd.f32 0.0, %v1301
      %v1303 = vpop.f32.mrb[0].mxu0
      %1304 = vmatprep.mubr.f32.mxu0 0.0
      %1305 = vmatmul.mubr.f32.gmra.mrb[0].mxu0 %v1127
      %v1306 = vpop.f32.mrb[0].mxu0
      %v1307 = vadd.f32 0.0, %v1306
      %v1308 = vpop.f32.mrb[0].mxu0
      %1309 = vmatprep.mubr.f32.mxu0 0.0
      %1310 = vmatmul.mubr.f32.gmra.mrb[0].mxu0 %v1130
      %v1311 = vpop.f32.mrb[0].mxu0
      %v1312 = vadd.f32 0.0, %v1311
      %v1313 = vpop.f32.mrb[0].mxu0
      %1314 = vmatprep.mubr.f32.mxu0 0.0
      %1315 = vmatmul.mubr.f32.gmra.mrb[0].mxu0 %v1133
      %v1316 = vpop.f32.mrb[0].mxu0
      %v1317 = vadd.f32 0.0, %v1316
      %v1318 = vpop.f32.mrb[0].mxu0
      %1319 = vmatprep.mubr.f32.mxu0 0.0
      %1320 = vmatmul.mubr.f32.gmra.mrb[0].mxu0 %v1136
      %v1321 = vpop.f32.mrb[0].mxu0
      %v1322 = vadd.f32 0.0, %v1321
      %v1323 = vpop.f32.mrb[0].mxu0
      %1324 = vmatprep.mubr.f32.mxu0 0.0
      %1325 = vmatmul.mubr.f32.gmra.mrb[0].mxu0 %v1139
      %v1326 = vpop.f32.mrb[0].mxu0
      %v1327 = vadd.f32 0.0, %v1326
      %v1328 = vpop.f32.mrb[0].mxu0
      %1329 = vmatprep.mubr.f32.mxu0 0.0
      %1330 = vmatmul.mubr.f32.gmra.mrb[0].mxu0 %v1142
      %v1331 = vpop.f32.mrb[0].mxu0
      %v1332 = vadd.f32 0.0, %v1331
      %v1333 = vpop.f32.mrb[0].mxu0
      %1334 = vmatprep.mubr.f32.mxu0 0.0
      %1335 = vmatmul.mubr.f32.gmra.mrb[0].mxu0 %v1145
      %v1336 = vpop.f32.mrb[0].mxu0
      %v1337 = vadd.f32 0.0, %v1336
      %v1338 = vpop.f32.mrb[0].mxu0
      %1339 = vmatprep.mubr.f32.mxu0 0.0
      %1340 = vmatmul.mubr.f32.gmra.mrb[0].mxu0 %v1148
      %v1341 = vpop.f32.mrb[0].mxu0
      %v1342 = vadd.f32 0.0, %v1341
      %v1343 = vpop.f32.mrb[0].mxu0
      %1344 = vmatprep.mubr.f32.mxu0 0.0
      %1345 = vmatmul.mubr.f32.gmra.mrb[0].mxu0 %v1151
      %v1346 = vpop.f32.mrb[0].mxu0
      %v1347 = vadd.f32 0.0, %v1346
      %v1348 = vpop.f32.mrb[0].mxu0
      %1349 = vmatprep.mubr.f32.mxu0 0.0
      %1350 = vmatmul.mubr.f32.gmra.mrb[0].mxu0 %v1154
      %v1351 = vpop.f32.mrb[0].mxu0
      %v1352 = vadd.f32 0.0, %v1351
      %v1353 = vpop.f32.mrb[0].mxu0
      %1354 = vmatprep.mubr.f32.mxu0 0.0
      %1355 = vmatmul.mubr.f32.gmra.mrb[0].mxu0 %v1157
      %v1356 = vpop.f32.mrb[0].mxu0
      %v1357 = vadd.f32 0.0, %v1356
      %v1358 = vpop.f32.mrb[0].mxu0
      %1359 = vmatprep.mubr.f32.mxu0 0.0
      %1360 = vmatmul.mubr.f32.gmra.mrb[0].mxu0 %v1160
      %v1361 = vpop.f32.mrb[0].mxu0
      %v1362 = vadd.f32 0.0, %v1361
      %v1363 = vpop.f32.mrb[0].mxu0
      %1364 = vmatprep.mubr.f32.mxu0 0.0
      %1365 = vmatmul.mubr.f32.gmra.mrb[0].mxu0 %v1163
      %v1366 = vpop.f32.mrb[0].mxu0
      %v1367 = vadd.f32 0.0, %v1366
      %v1368 = vpop.f32.mrb[0].mxu0
      %1369 = vmatprep.mubr.f32.mxu0 0.0
      %1370 = vmatmul.mubr.f32.gmra.mrb[0].mxu0 %v1166
      %v1371 = vpop.f32.mrb[0].mxu0
      %v1372 = vadd.f32 0.0, %v1371
      %v1373 = vpop.f32.mrb[0].mxu0
      %1374 = vmatprep.mubr.f32.mxu0 0.0
      %1375 = vmatmul.mubr.f32.gmra.mrb[0].mxu0 %v1169
      %v1376 = vpop.f32.mrb[0].mxu0
      %v1377 = vadd.f32 0.0, %v1376
      %v1378 = vpop.f32.mrb[0].mxu0
      %1379 = vmatprep.mubr.f32.mxu0 0.0
      %1380 = vmatmul.mubr.f32.gmra.mrb[0].mxu0 %v1172
      %v1381 = vpop.f32.mrb[0].mxu0
      %v1382 = vadd.f32 0.0, %v1381
      %v1383 = vpop.f32.mrb[0].mxu0
      %1384 = vmatprep.mubr.f32.mxu0 0.0
      %1385 = vmatmul.mubr.f32.gmra.mrb[0].mxu0 %v1175
      %v1386 = vpop.f32.mrb[0].mxu0
      %v1387 = vadd.f32 0.0, %v1386
      %v1388 = vpop.f32.mrb[0].mxu0
      %1389 = vmatprep.mubr.f32.mxu0 0.0
      %1390 = vmatmul.mubr.f32.gmra.mrb[0].mxu0 %v1178
      %v1391 = vpop.f32.mrb[0].mxu0
      %v1392 = vadd.f32 0.0, %v1391
      %v1393 = vpop.f32.mrb[0].mxu0
      %1394 = vdwg.mxu0
      %v1395 = vadd.f32 %v910, %v1247
      %v1396 = vadd.f32 %v915, %v1252
      %v1397 = vadd.f32 %v920, %v1257
      %v1398 = vadd.f32 %v925, %v1262
      %v1399 = vadd.f32 %v930, %v1267
      %v1400 = vadd.f32 %v935, %v1272
      %v1401 = vadd.f32 %v940, %v1277
      %v1402 = vadd.f32 %v945, %v1282
      %v1403 = vadd.f32 %v950, %v1287
      %v1404 = vadd.f32 %v955, %v1292
      %v1405 = vadd.f32 %v960, %v1297
      %v1406 = vadd.f32 %v965, %v1302
      %v1407 = vadd.f32 %v970, %v1307
      %v1408 = vadd.f32 %v975, %v1312
      %v1409 = vadd.f32 %v980, %v1317
      %v1410 = vadd.f32 %v985, %v1322
      %v1411 = vadd.f32 %v990, %v1327
      %v1412 = vadd.f32 %v995, %v1332
      %v1413 = vadd.f32 %v1000, %v1337
      %v1414 = vadd.f32 %v1005, %v1342
      %v1415 = vadd.f32 %v1010, %v1347
      %v1416 = vadd.f32 %v1015, %v1352
      %v1417 = vadd.f32 %v1020, %v1357
      %v1418 = vadd.f32 %v1025, %v1362
      %v1419 = vadd.f32 %v1030, %v1367
      %v1420 = vadd.f32 %v1035, %v1372
      %v1421 = vadd.f32 %v1040, %v1377
      %v1422 = vadd.f32 %v1045, %v1382
      %v1423 = vadd.f32 %v1050, %v1387
      %v1424 = vadd.f32 %v1055, %v1392
      %v1425 = vld [vmem:[#allocation2 + $0x1f] sm:$0xff]
      %v1426 = vld [vmem:[#allocation2 + $0x27] sm:$0xff]
      %v1427 = vld [vmem:[#allocation2 + $0x2f] sm:$0xff]
      %v1428 = vld [vmem:[#allocation2 + $0x37] sm:$0xff]
      %v1429 = vld [vmem:[#allocation2 + $0x3f] sm:$0xff]
      %v1430 = vld [vmem:[#allocation2 + $0x47] sm:$0xff]
      %v1431 = vld [vmem:[#allocation2 + $0x4f] sm:$0xff]
      %v1432 = vld [vmem:[#allocation2 + $0x57] sm:$0xff]
      %v1433 = vld [vmem:[#allocation2 + $0x5f] sm:$0xff]
      %v1434 = vld [vmem:[#allocation2 + $0x67] sm:$0xff]
      %v1435 = vld [vmem:[#allocation2 + $0x6f] sm:$0xff]
      %v1436 = vld [vmem:[#allocation2 + $0x77] sm:$0xff]
      %v1437 = vld [vmem:[#allocation2 + $0x7f] sm:$0xff]
      %v1438 = vld [vmem:[#allocation2 + $0x87] sm:$0xff]
      %v1439 = vld [vmem:[#allocation2 + $0x8f] sm:$0xff]
      %v1440 = vld [vmem:[#allocation2 + $0x97] sm:$0xff]
      %v1441 = vld [vmem:[#allocation2 + $0x9f] sm:$0xff]
      %v1442 = vld [vmem:[#allocation2 + $0xa7] sm:$0xff]
      %v1443 = vld [vmem:[#allocation2 + $0xaf] sm:$0xff]
      %v1444 = vld [vmem:[#allocation2 + $0xb7] sm:$0xff]
      %v1445 = vld [vmem:[#allocation2 + $0xbf] sm:$0xff]
      %v1446 = vld [vmem:[#allocation2 + $0xc7] sm:$0xff]
      %v1447 = vld [vmem:[#allocation2 + $0xcf] sm:$0xff]
      %v1448 = vld [vmem:[#allocation2 + $0xd7] sm:$0xff]
      %v1449 = vld [vmem:[#allocation2 + $0xdf] sm:$0xff]
      %v1450 = vld [vmem:[#allocation2 + $0xe7] sm:$0xff]
      %v1451 = vld [vmem:[#allocation2 + $0xef] sm:$0xff]
      %v1452 = vld [vmem:[#allocation2 + $0xf7] sm:$0xff]
      %v1453 = vld [vmem:[#allocation2 + $0xff] sm:$0xff]
      %v1454 = vld [vmem:[#allocation2 + $0x107] sm:$0xff]
      %s1455 = scalar_lea.vmem %s1, 24
      %v1456 = vld [vmem:[%s1455] sm:$0xff]
      %v1458 = vsel %vm251, %v1425, 0
      %v1461 = vsel %vm251, %v1426, 0
      %v1464 = vsel %vm251, %v1427, 0
      %v1467 = vsel %vm251, %v1428, 0
      %v1470 = vsel %vm251, %v1429, 0
      %v1473 = vsel %vm251, %v1430, 0
      %v1476 = vsel %vm251, %v1431, 0
      %v1479 = vsel %vm251, %v1432, 0
      %v1482 = vsel %vm251, %v1433, 0
      %v1485 = vsel %vm251, %v1434, 0
      %v1488 = vsel %vm251, %v1435, 0
      %v1491 = vsel %vm251, %v1436, 0
      %v1494 = vsel %vm251, %v1437, 0
      %v1497 = vsel %vm251, %v1438, 0
      %v1500 = vsel %vm251, %v1439, 0
      %v1503 = vsel %vm251, %v1440, 0
      %v1506 = vsel %vm251, %v1441, 0
      %v1509 = vsel %vm251, %v1442, 0
      %v1512 = vsel %vm251, %v1443, 0
      %v1515 = vsel %vm251, %v1444, 0
      %v1518 = vsel %vm251, %v1445, 0
      %v1521 = vsel %vm251, %v1446, 0
      %v1524 = vsel %vm251, %v1447, 0
      %v1527 = vsel %vm251, %v1448, 0
      %v1530 = vsel %vm251, %v1449, 0
      %v1533 = vsel %vm251, %v1450, 0
      %v1536 = vsel %vm251, %v1451, 0
      %v1539 = vsel %vm251, %v1452, 0
      %v1542 = vsel %vm251, %v1453, 0
      %v1545 = vsel %vm251, %v1454, 0
      %1547 = vmatprep.subr.mxu0 0.0
      %1548 = vmatpush1.msra.mxu0 %v1456
      %1549 = vmatprep.subr.mxu0 0.0
      %1550 = vmatpush1.msra.mxu0 0.0
      %1551 = vmatprep.subr.mxu0 0.0
      %1552 = vmatpush1.msra.mxu0 0.0
      %1553 = vmatprep.subr.mxu0 0.0
      %1554 = vmatpush1.msra.mxu0 0.0
      %1555 = vmatprep.subr.mxu0 0.0
      %1556 = vmatpush1.msra.mxu0 0.0
      %1557 = vmatprep.subr.mxu0 0.0
      %1558 = vmatpush1.msra.mxu0 0.0
      %1559 = vmatprep.subr.mxu0 0.0
      %1560 = vmatpush1.msra.mxu0 0.0
      %1561 = vmatprep.subr.mxu0 0.0
      %1562 = vmatpush1.msra.mxu0 0.0
      %1563 = vmatprep.subr.mxu0 0.0
      %1564 = vmatpush1.msra.mxu0 0.0
      %1565 = vmatprep.subr.mxu0 0.0
      %1566 = vmatpush1.msra.mxu0 0.0
      %1567 = vmatprep.subr.mxu0 0.0
      %1568 = vmatpush1.msra.mxu0 0.0
      %1569 = vmatprep.subr.mxu0 0.0
      %1570 = vmatpush1.msra.mxu0 0.0
      %1571 = vmatprep.subr.mxu0 0.0
      %1572 = vmatpush1.msra.mxu0 0.0
      %1573 = vmatprep.subr.mxu0 0.0
      %1574 = vmatpush1.msra.mxu0 0.0
      %1575 = vmatprep.subr.mxu0 0.0
      %1576 = vmatpush1.msra.mxu0 0.0
      %1577 = vmatprep.subr.mxu0 0.0
      %1578 = vmatpush1.msra.mxu0 0.0
      %1579 = vmatprep.subr.mxu0 0.0
      %1580 = vmatpush1.msra.mxu0 0.0
      %1581 = vmatprep.subr.mxu0 0.0
      %1582 = vmatpush1.msra.mxu0 0.0
      %1583 = vmatprep.subr.mxu0 0.0
      %1584 = vmatpush1.msra.mxu0 0.0
      %1585 = vmatprep.subr.mxu0 0.0
      %1586 = vmatpush1.msra.mxu0 0.0
      %1587 = vmatprep.subr.mxu0 0.0
      %1588 = vmatpush1.msra.mxu0 0.0
      %1589 = vmatprep.subr.mxu0 0.0
      %1590 = vmatpush1.msra.mxu0 0.0
      %1591 = vmatprep.subr.mxu0 0.0
      %1592 = vmatpush1.msra.mxu0 0.0
      %1593 = vmatprep.subr.mxu0 0.0
      %1594 = vmatpush1.msra.mxu0 0.0
      %1595 = vmatprep.subr.mxu0 0.0
      %1596 = vmatpush1.msra.mxu0 0.0
      %1597 = vmatprep.subr.mxu0 0.0
      %1598 = vmatpush1.msra.mxu0 0.0
      %1599 = vmatprep.subr.mxu0 0.0
      %1600 = vmatpush1.msra.mxu0 0.0
      %1601 = vmatprep.subr.mxu0 0.0
      %1602 = vmatpush1.msra.mxu0 0.0
      %1603 = vmatprep.subr.mxu0 0.0
      %1604 = vmatpush1.msra.mxu0 0.0
      %1605 = vmatprep.subr.mxu0 0.0
      %1606 = vmatpush1.msra.mxu0 0.0
      %1607 = vmatprep.subr.mxu0 0.0
      %1608 = vmatpush1.msra.mxu0 0.0
      %1609 = vmatprep.subr.mxu0 0.0
      %1610 = vmatpush1.msra.mxu0 0.0
      %1611 = vmatprep.mubr.f32.mxu0 0.0
      %1612 = vmatmul.mubr.f32.gmra.mrb[0].mxu0 %v1458
      %v1613 = vpop.f32.mrb[0].mxu0
      %v1614 = vadd.f32 0.0, %v1613
      %v1615 = vpop.f32.mrb[0].mxu0
      %1616 = vmatprep.mubr.f32.mxu0 0.0
      %1617 = vmatmul.mubr.f32.gmra.mrb[0].mxu0 %v1461
      %v1618 = vpop.f32.mrb[0].mxu0
      %v1619 = vadd.f32 0.0, %v1618
      %v1620 = vpop.f32.mrb[0].mxu0
      %1621 = vmatprep.mubr.f32.mxu0 0.0
      %1622 = vmatmul.mubr.f32.gmra.mrb[0].mxu0 %v1464
      %v1623 = vpop.f32.mrb[0].mxu0
      %v1624 = vadd.f32 0.0, %v1623
      %v1625 = vpop.f32.mrb[0].mxu0
      %1626 = vmatprep.mubr.f32.mxu0 0.0
      %1627 = vmatmul.mubr.f32.gmra.mrb[0].mxu0 %v1467
      %v1628 = vpop.f32.mrb[0].mxu0
      %v1629 = vadd.f32 0.0, %v1628
      %v1630 = vpop.f32.mrb[0].mxu0
      %1631 = vmatprep.mubr.f32.mxu0 0.0
      %1632 = vmatmul.mubr.f32.gmra.mrb[0].mxu0 %v1470
      %v1633 = vpop.f32.mrb[0].mxu0
      %v1634 = vadd.f32 0.0, %v1633
      %v1635 = vpop.f32.mrb[0].mxu0
      %1636 = vmatprep.mubr.f32.mxu0 0.0
      %1637 = vmatmul.mubr.f32.gmra.mrb[0].mxu0 %v1473
      %v1638 = vpop.f32.mrb[0].mxu0
      %v1639 = vadd.f32 0.0, %v1638
      %v1640 = vpop.f32.mrb[0].mxu0
      %1641 = vmatprep.mubr.f32.mxu0 0.0
      %1642 = vmatmul.mubr.f32.gmra.mrb[0].mxu0 %v1476
      %v1643 = vpop.f32.mrb[0].mxu0
      %v1644 = vadd.f32 0.0, %v1643
      %v1645 = vpop.f32.mrb[0].mxu0
      %1646 = vmatprep.mubr.f32.mxu0 0.0
      %1647 = vmatmul.mubr.f32.gmra.mrb[0].mxu0 %v1479
      %v1648 = vpop.f32.mrb[0].mxu0
      %v1649 = vadd.f32 0.0, %v1648
      %v1650 = vpop.f32.mrb[0].mxu0
      %1651 = vmatprep.mubr.f32.mxu0 0.0
      %1652 = vmatmul.mubr.f32.gmra.mrb[0].mxu0 %v1482
      %v1653 = vpop.f32.mrb[0].mxu0
      %v1654 = vadd.f32 0.0, %v1653
      %v1655 = vpop.f32.mrb[0].mxu0
      %1656 = vmatprep.mubr.f32.mxu0 0.0
      %1657 = vmatmul.mubr.f32.gmra.mrb[0].mxu0 %v1485
      %v1658 = vpop.f32.mrb[0].mxu0
      %v1659 = vadd.f32 0.0, %v1658
      %v1660 = vpop.f32.mrb[0].mxu0
      %1661 = vmatprep.mubr.f32.mxu0 0.0
      %1662 = vmatmul.mubr.f32.gmra.mrb[0].mxu0 %v1488
      %v1663 = vpop.f32.mrb[0].mxu0
      %v1664 = vadd.f32 0.0, %v1663
      %v1665 = vpop.f32.mrb[0].mxu0
      %1666 = vmatprep.mubr.f32.mxu0 0.0
      %1667 = vmatmul.mubr.f32.gmra.mrb[0].mxu0 %v1491
      %v1668 = vpop.f32.mrb[0].mxu0
      %v1669 = vadd.f32 0.0, %v1668
      %v1670 = vpop.f32.mrb[0].mxu0
      %1671 = vmatprep.mubr.f32.mxu0 0.0
      %1672 = vmatmul.mubr.f32.gmra.mrb[0].mxu0 %v1494
      %v1673 = vpop.f32.mrb[0].mxu0
      %v1674 = vadd.f32 0.0, %v1673
      %v1675 = vpop.f32.mrb[0].mxu0
      %1676 = vmatprep.mubr.f32.mxu0 0.0
      %1677 = vmatmul.mubr.f32.gmra.mrb[0].mxu0 %v1497
      %v1678 = vpop.f32.mrb[0].mxu0
      %v1679 = vadd.f32 0.0, %v1678
      %v1680 = vpop.f32.mrb[0].mxu0
      %1681 = vmatprep.mubr.f32.mxu0 0.0
      %1682 = vmatmul.mubr.f32.gmra.mrb[0].mxu0 %v1500
      %v1683 = vpop.f32.mrb[0].mxu0
      %v1684 = vadd.f32 0.0, %v1683
      %v1685 = vpop.f32.mrb[0].mxu0
      %1686 = vmatprep.mubr.f32.mxu0 0.0
      %1687 = vmatmul.mubr.f32.gmra.mrb[0].mxu0 %v1503
      %v1688 = vpop.f32.mrb[0].mxu0
      %v1689 = vadd.f32 0.0, %v1688
      %v1690 = vpop.f32.mrb[0].mxu0
      %1691 = vmatprep.mubr.f32.mxu0 0.0
      %1692 = vmatmul.mubr.f32.gmra.mrb[0].mxu0 %v1506
      %v1693 = vpop.f32.mrb[0].mxu0
      %v1694 = vadd.f32 0.0, %v1693
      %v1695 = vpop.f32.mrb[0].mxu0
      %1696 = vmatprep.mubr.f32.mxu0 0.0
      %1697 = vmatmul.mubr.f32.gmra.mrb[0].mxu0 %v1509
      %v1698 = vpop.f32.mrb[0].mxu0
      %v1699 = vadd.f32 0.0, %v1698
      %v1700 = vpop.f32.mrb[0].mxu0
      %1701 = vmatprep.mubr.f32.mxu0 0.0
      %1702 = vmatmul.mubr.f32.gmra.mrb[0].mxu0 %v1512
      %v1703 = vpop.f32.mrb[0].mxu0
      %v1704 = vadd.f32 0.0, %v1703
      %v1705 = vpop.f32.mrb[0].mxu0
      %1706 = vmatprep.mubr.f32.mxu0 0.0
      %1707 = vmatmul.mubr.f32.gmra.mrb[0].mxu0 %v1515
      %v1708 = vpop.f32.mrb[0].mxu0
      %v1709 = vadd.f32 0.0, %v1708
      %v1710 = vpop.f32.mrb[0].mxu0
      %1711 = vmatprep.mubr.f32.mxu0 0.0
      %1712 = vmatmul.mubr.f32.gmra.mrb[0].mxu0 %v1518
      %v1713 = vpop.f32.mrb[0].mxu0
      %v1714 = vadd.f32 0.0, %v1713
      %v1715 = vpop.f32.mrb[0].mxu0
      %1716 = vmatprep.mubr.f32.mxu0 0.0
      %1717 = vmatmul.mubr.f32.gmra.mrb[0].mxu0 %v1521
      %v1718 = vpop.f32.mrb[0].mxu0
      %v1719 = vadd.f32 0.0, %v1718
      %v1720 = vpop.f32.mrb[0].mxu0
      %1721 = vmatprep.mubr.f32.mxu0 0.0
      %1722 = vmatmul.mubr.f32.gmra.mrb[0].mxu0 %v1524
      %v1723 = vpop.f32.mrb[0].mxu0
      %v1724 = vadd.f32 0.0, %v1723
      %v1725 = vpop.f32.mrb[0].mxu0
      %1726 = vmatprep.mubr.f32.mxu0 0.0
      %1727 = vmatmul.mubr.f32.gmra.mrb[0].mxu0 %v1527
      %v1728 = vpop.f32.mrb[0].mxu0
      %v1729 = vadd.f32 0.0, %v1728
      %v1730 = vpop.f32.mrb[0].mxu0
      %1731 = vmatprep.mubr.f32.mxu0 0.0
      %1732 = vmatmul.mubr.f32.gmra.mrb[0].mxu0 %v1530
      %v1733 = vpop.f32.mrb[0].mxu0
      %v1734 = vadd.f32 0.0, %v1733
      %v1735 = vpop.f32.mrb[0].mxu0
      %1736 = vmatprep.mubr.f32.mxu0 0.0
      %1737 = vmatmul.mubr.f32.gmra.mrb[0].mxu0 %v1533
      %v1738 = vpop.f32.mrb[0].mxu0
      %v1739 = vadd.f32 0.0, %v1738
      %v1740 = vpop.f32.mrb[0].mxu0
      %1741 = vmatprep.mubr.f32.mxu0 0.0
      %1742 = vmatmul.mubr.f32.gmra.mrb[0].mxu0 %v1536
      %v1743 = vpop.f32.mrb[0].mxu0
      %v1744 = vadd.f32 0.0, %v1743
      %v1745 = vpop.f32.mrb[0].mxu0
      %1746 = vmatprep.mubr.f32.mxu0 0.0
      %1747 = vmatmul.mubr.f32.gmra.mrb[0].mxu0 %v1539
      %v1748 = vpop.f32.mrb[0].mxu0
      %v1749 = vadd.f32 0.0, %v1748
      %v1750 = vpop.f32.mrb[0].mxu0
      %1751 = vmatprep.mubr.f32.mxu0 0.0
      %1752 = vmatmul.mubr.f32.gmra.mrb[0].mxu0 %v1542
      %v1753 = vpop.f32.mrb[0].mxu0
      %v1754 = vadd.f32 0.0, %v1753
      %v1755 = vpop.f32.mrb[0].mxu0
      %1756 = vmatprep.mubr.f32.mxu0 0.0
      %1757 = vmatmul.mubr.f32.gmra.mrb[0].mxu0 %v1545
      %v1758 = vpop.f32.mrb[0].mxu0
      %v1759 = vadd.f32 0.0, %v1758
      %v1760 = vpop.f32.mrb[0].mxu0
      %1761 = vdwg.mxu0
      %v1762 = vadd.f32 %v1395, %v1614
      %v1763 = vadd.f32 %v1396, %v1619
      %v1764 = vadd.f32 %v1397, %v1624
      %v1765 = vadd.f32 %v1398, %v1629
      %v1766 = vadd.f32 %v1399, %v1634
      %v1767 = vadd.f32 %v1400, %v1639
      %v1768 = vadd.f32 %v1401, %v1644
      %v1769 = vadd.f32 %v1402, %v1649
      %v1770 = vadd.f32 %v1403, %v1654
      %v1771 = vadd.f32 %v1404, %v1659
      %v1772 = vadd.f32 %v1405, %v1664
      %v1773 = vadd.f32 %v1406, %v1669
      %v1774 = vadd.f32 %v1407, %v1674
      %v1775 = vadd.f32 %v1408, %v1679
      %v1776 = vadd.f32 %v1409, %v1684
      %v1777 = vadd.f32 %v1410, %v1689
      %v1778 = vadd.f32 %v1411, %v1694
      %v1779 = vadd.f32 %v1412, %v1699
      %v1780 = vadd.f32 %v1413, %v1704
      %v1781 = vadd.f32 %v1414, %v1709
      %v1782 = vadd.f32 %v1415, %v1714
      %v1783 = vadd.f32 %v1416, %v1719
      %v1784 = vadd.f32 %v1417, %v1724
      %v1785 = vadd.f32 %v1418, %v1729
      %v1786 = vadd.f32 %v1419, %v1734
      %v1787 = vadd.f32 %v1420, %v1739
      %v1788 = vadd.f32 %v1421, %v1744
      %v1789 = vadd.f32 %v1422, %v1749
      %v1790 = vadd.f32 %v1423, %v1754
      %v1791 = vadd.f32 %v1424, %v1759
      %v1792 = vld [vmem:[#allocation2 + $0x20] sm:$0xff]
      %v1793 = vld [vmem:[#allocation2 + $0x28] sm:$0xff]
      %v1794 = vld [vmem:[#allocation2 + $0x30] sm:$0xff]
      %v1795 = vld [vmem:[#allocation2 + $0x38] sm:$0xff]
      %v1796 = vld [vmem:[#allocation2 + $0x40] sm:$0xff]
      %v1797 = vld [vmem:[#allocation2 + $0x48] sm:$0xff]
      %v1798 = vld [vmem:[#allocation2 + $0x50] sm:$0xff]
      %v1799 = vld [vmem:[#allocation2 + $0x58] sm:$0xff]
      %v1800 = vld [vmem:[#allocation2 + $0x60] sm:$0xff]
      %v1801 = vld [vmem:[#allocation2 + $0x68] sm:$0xff]
      %v1802 = vld [vmem:[#allocation2 + $0x70] sm:$0xff]
      %v1803 = vld [vmem:[#allocation2 + $0x78] sm:$0xff]
      %v1804 = vld [vmem:[#allocation2 + $0x80] sm:$0xff]
      %v1805 = vld [vmem:[#allocation2 + $0x88] sm:$0xff]
      %v1806 = vld [vmem:[#allocation2 + $0x90] sm:$0xff]
      %v1807 = vld [vmem:[#allocation2 + $0x98] sm:$0xff]
      %v1808 = vld [vmem:[#allocation2 + $0xa0] sm:$0xff]
      %v1809 = vld [vmem:[#allocation2 + $0xa8] sm:$0xff]
      %v1810 = vld [vmem:[#allocation2 + $0xb0] sm:$0xff]
      %v1811 = vld [vmem:[#allocation2 + $0xb8] sm:$0xff]
      %v1812 = vld [vmem:[#allocation2 + $0xc0] sm:$0xff]
      %v1813 = vld [vmem:[#allocation2 + $0xc8] sm:$0xff]
      %v1814 = vld [vmem:[#allocation2 + $0xd0] sm:$0xff]
      %v1815 = vld [vmem:[#allocation2 + $0xd8] sm:$0xff]
      %v1816 = vld [vmem:[#allocation2 + $0xe0] sm:$0xff]
      %v1817 = vld [vmem:[#allocation2 + $0xe8] sm:$0xff]
      %v1818 = vld [vmem:[#allocation2 + $0xf0] sm:$0xff]
      %v1819 = vld [vmem:[#allocation2 + $0xf8] sm:$0xff]
      %v1820 = vld [vmem:[#allocation2 + $0x100] sm:$0xff]
      %v1821 = vld [vmem:[#allocation2 + $0x108] sm:$0xff]
      %s1822 = scalar_lea.vmem %s1, 32
      %v1823 = vld [vmem:[%s1822] sm:$0xff]
      %v1825 = vsel %vm251, %v1792, 0
      %v1828 = vsel %vm251, %v1793, 0
      %v1831 = vsel %vm251, %v1794, 0
      %v1834 = vsel %vm251, %v1795, 0
      %v1837 = vsel %vm251, %v1796, 0
      %v1840 = vsel %vm251, %v1797, 0
      %v1843 = vsel %vm251, %v1798, 0
      %v1846 = vsel %vm251, %v1799, 0
      %v1849 = vsel %vm251, %v1800, 0
      %v1852 = vsel %vm251, %v1801, 0
      %v1855 = vsel %vm251, %v1802, 0
      %v1858 = vsel %vm251, %v1803, 0
      %v1861 = vsel %vm251, %v1804, 0
      %v1864 = vsel %vm251, %v1805, 0
      %v1867 = vsel %vm251, %v1806, 0
      %v1870 = vsel %vm251, %v1807, 0
      %v1873 = vsel %vm251, %v1808, 0
      %v1876 = vsel %vm251, %v1809, 0
      %v1879 = vsel %vm251, %v1810, 0
      %v1882 = vsel %vm251, %v1811, 0
      %v1885 = vsel %vm251, %v1812, 0
      %v1888 = vsel %vm251, %v1813, 0
      %v1891 = vsel %vm251, %v1814, 0
      %v1894 = vsel %vm251, %v1815, 0
      %v1897 = vsel %vm251, %v1816, 0
      %v1900 = vsel %vm251, %v1817, 0
      %v1903 = vsel %vm251, %v1818, 0
      %v1906 = vsel %vm251, %v1819, 0
      %v1909 = vsel %vm251, %v1820, 0
      %v1912 = vsel %vm251, %v1821, 0
      %1914 = vmatprep.subr.mxu0 0.0
      %1915 = vmatpush1.msra.mxu0 %v1823
      %1916 = vmatprep.subr.mxu0 0.0
      %1917 = vmatpush1.msra.mxu0 0.0
      %1918 = vmatprep.subr.mxu0 0.0
      %1919 = vmatpush1.msra.mxu0 0.0
      %1920 = vmatprep.subr.mxu0 0.0
      %1921 = vmatpush1.msra.mxu0 0.0
      %1922 = vmatprep.subr.mxu0 0.0
      %1923 = vmatpush1.msra.mxu0 0.0
      %1924 = vmatprep.subr.mxu0 0.0
      %1925 = vmatpush1.msra.mxu0 0.0
      %1926 = vmatprep.subr.mxu0 0.0
      %1927 = vmatpush1.msra.mxu0 0.0
      %1928 = vmatprep.subr.mxu0 0.0
      %1929 = vmatpush1.msra.mxu0 0.0
      %1930 = vmatprep.subr.mxu0 0.0
      %1931 = vmatpush1.msra.mxu0 0.0
      %1932 = vmatprep.subr.mxu0 0.0
      %1933 = vmatpush1.msra.mxu0 0.0
      %1934 = vmatprep.subr.mxu0 0.0
      %1935 = vmatpush1.msra.mxu0 0.0
      %1936 = vmatprep.subr.mxu0 0.0
      %1937 = vmatpush1.msra.mxu0 0.0
      %1938 = vmatprep.subr.mxu0 0.0
      %1939 = vmatpush1.msra.mxu0 0.0
      %1940 = vmatprep.subr.mxu0 0.0
      %1941 = vmatpush1.msra.mxu0 0.0
      %1942 = vmatprep.subr.mxu0 0.0
      %1943 = vmatpush1.msra.mxu0 0.0
      %1944 = vmatprep.subr.mxu0 0.0
      %1945 = vmatpush1.msra.mxu0 0.0
      %1946 = vmatprep.subr.mxu0 0.0
      %1947 = vmatpush1.msra.mxu0 0.0
      %1948 = vmatprep.subr.mxu0 0.0
      %1949 = vmatpush1.msra.mxu0 0.0
      %1950 = vmatprep.subr.mxu0 0.0
      %1951 = vmatpush1.msra.mxu0 0.0
      %1952 = vmatprep.subr.mxu0 0.0
      %1953 = vmatpush1.msra.mxu0 0.0
      %1954 = vmatprep.subr.mxu0 0.0
      %1955 = vmatpush1.msra.mxu0 0.0
      %1956 = vmatprep.subr.mxu0 0.0
      %1957 = vmatpush1.msra.mxu0 0.0
      %1958 = vmatprep.subr.mxu0 0.0
      %1959 = vmatpush1.msra.mxu0 0.0
      %1960 = vmatprep.subr.mxu0 0.0
      %1961 = vmatpush1.msra.mxu0 0.0
      %1962 = vmatprep.subr.mxu0 0.0
      %1963 = vmatpush1.msra.mxu0 0.0
      %1964 = vmatprep.subr.mxu0 0.0
      %1965 = vmatpush1.msra.mxu0 0.0
      %1966 = vmatprep.subr.mxu0 0.0
      %1967 = vmatpush1.msra.mxu0 0.0
      %1968 = vmatprep.subr.mxu0 0.0
      %1969 = vmatpush1.msra.mxu0 0.0
      %1970 = vmatprep.subr.mxu0 0.0
      %1971 = vmatpush1.msra.mxu0 0.0
      %1972 = vmatprep.subr.mxu0 0.0
      %1973 = vmatpush1.msra.mxu0 0.0
      %1974 = vmatprep.subr.mxu0 0.0
      %1975 = vmatpush1.msra.mxu0 0.0
      %1976 = vmatprep.subr.mxu0 0.0
      %1977 = vmatpush1.msra.mxu0 0.0
      %1978 = vmatprep.mubr.f32.mxu0 0.0
      %1979 = vmatmul.mubr.f32.gmra.mrb[0].mxu0 %v1825
      %v1980 = vpop.f32.mrb[0].mxu0
      %v1981 = vadd.f32 0.0, %v1980
      %v1982 = vpop.f32.mrb[0].mxu0
      %1983 = vmatprep.mubr.f32.mxu0 0.0
      %1984 = vmatmul.mubr.f32.gmra.mrb[0].mxu0 %v1828
      %v1985 = vpop.f32.mrb[0].mxu0
      %v1986 = vadd.f32 0.0, %v1985
      %v1987 = vpop.f32.mrb[0].mxu0
      %1988 = vmatprep.mubr.f32.mxu0 0.0
      %1989 = vmatmul.mubr.f32.gmra.mrb[0].mxu0 %v1831
      %v1990 = vpop.f32.mrb[0].mxu0
      %v1991 = vadd.f32 0.0, %v1990
      %v1992 = vpop.f32.mrb[0].mxu0
      %1993 = vmatprep.mubr.f32.mxu0 0.0
      %1994 = vmatmul.mubr.f32.gmra.mrb[0].mxu0 %v1834
      %v1995 = vpop.f32.mrb[0].mxu0
      %v1996 = vadd.f32 0.0, %v1995
      %v1997 = vpop.f32.mrb[0].mxu0
      %1998 = vmatprep.mubr.f32.mxu0 0.0
      %1999 = vmatmul.mubr.f32.gmra.mrb[0].mxu0 %v1837
      %v2000 = vpop.f32.mrb[0].mxu0
      %v2001 = vadd.f32 0.0, %v2000
      %v2002 = vpop.f32.mrb[0].mxu0
      %2003 = vmatprep.mubr.f32.mxu0 0.0
      %2004 = vmatmul.mubr.f32.gmra.mrb[0].mxu0 %v1840
      %v2005 = vpop.f32.mrb[0].mxu0
      %v2006 = vadd.f32 0.0, %v2005
      %v2007 = vpop.f32.mrb[0].mxu0
      %2008 = vmatprep.mubr.f32.mxu0 0.0
      %2009 = vmatmul.mubr.f32.gmra.mrb[0].mxu0 %v1843
      %v2010 = vpop.f32.mrb[0].mxu0
      %v2011 = vadd.f32 0.0, %v2010
      %v2012 = vpop.f32.mrb[0].mxu0
      %2013 = vmatprep.mubr.f32.mxu0 0.0
      %2014 = vmatmul.mubr.f32.gmra.mrb[0].mxu0 %v1846
      %v2015 = vpop.f32.mrb[0].mxu0
      %v2016 = vadd.f32 0.0, %v2015
      %v2017 = vpop.f32.mrb[0].mxu0
      %2018 = vmatprep.mubr.f32.mxu0 0.0
      %2019 = vmatmul.mubr.f32.gmra.mrb[0].mxu0 %v1849
      %v2020 = vpop.f32.mrb[0].mxu0
      %v2021 = vadd.f32 0.0, %v2020
      %v2022 = vpop.f32.mrb[0].mxu0
      %2023 = vmatprep.mubr.f32.mxu0 0.0
      %2024 = vmatmul.mubr.f32.gmra.mrb[0].mxu0 %v1852
      %v2025 = vpop.f32.mrb[0].mxu0
      %v2026 = vadd.f32 0.0, %v2025
      %v2027 = vpop.f32.mrb[0].mxu0
      %2028 = vmatprep.mubr.f32.mxu0 0.0
      %2029 = vmatmul.mubr.f32.gmra.mrb[0].mxu0 %v1855
      %v2030 = vpop.f32.mrb[0].mxu0
      %v2031 = vadd.f32 0.0, %v2030
      %v2032 = vpop.f32.mrb[0].mxu0
      %2033 = vmatprep.mubr.f32.mxu0 0.0
      %2034 = vmatmul.mubr.f32.gmra.mrb[0].mxu0 %v1858
      %v2035 = vpop.f32.mrb[0].mxu0
      %v2036 = vadd.f32 0.0, %v2035
      %v2037 = vpop.f32.mrb[0].mxu0
      %2038 = vmatprep.mubr.f32.mxu0 0.0
      %2039 = vmatmul.mubr.f32.gmra.mrb[0].mxu0 %v1861
      %v2040 = vpop.f32.mrb[0].mxu0
      %v2041 = vadd.f32 0.0, %v2040
      %v2042 = vpop.f32.mrb[0].mxu0
      %2043 = vmatprep.mubr.f32.mxu0 0.0
      %2044 = vmatmul.mubr.f32.gmra.mrb[0].mxu0 %v1864
      %v2045 = vpop.f32.mrb[0].mxu0
      %v2046 = vadd.f32 0.0, %v2045
      %v2047 = vpop.f32.mrb[0].mxu0
      %2048 = vmatprep.mubr.f32.mxu0 0.0
      %2049 = vmatmul.mubr.f32.gmra.mrb[0].mxu0 %v1867
      %v2050 = vpop.f32.mrb[0].mxu0
      %v2051 = vadd.f32 0.0, %v2050
      %v2052 = vpop.f32.mrb[0].mxu0
      %2053 = vmatprep.mubr.f32.mxu0 0.0
      %2054 = vmatmul.mubr.f32.gmra.mrb[0].mxu0 %v1870
      %v2055 = vpop.f32.mrb[0].mxu0
      %v2056 = vadd.f32 0.0, %v2055
      %v2057 = vpop.f32.mrb[0].mxu0
      %2058 = vmatprep.mubr.f32.mxu0 0.0
      %2059 = vmatmul.mubr.f32.gmra.mrb[0].mxu0 %v1873
      %v2060 = vpop.f32.mrb[0].mxu0
      %v2061 = vadd.f32 0.0, %v2060
      %v2062 = vpop.f32.mrb[0].mxu0
      %2063 = vmatprep.mubr.f32.mxu0 0.0
      %2064 = vmatmul.mubr.f32.gmra.mrb[0].mxu0 %v1876
      %v2065 = vpop.f32.mrb[0].mxu0
      %v2066 = vadd.f32 0.0, %v2065
      %v2067 = vpop.f32.mrb[0].mxu0
      %2068 = vmatprep.mubr.f32.mxu0 0.0
      %2069 = vmatmul.mubr.f32.gmra.mrb[0].mxu0 %v1879
      %v2070 = vpop.f32.mrb[0].mxu0
      %v2071 = vadd.f32 0.0, %v2070
      %v2072 = vpop.f32.mrb[0].mxu0
      %2073 = vmatprep.mubr.f32.mxu0 0.0
      %2074 = vmatmul.mubr.f32.gmra.mrb[0].mxu0 %v1882
      %v2075 = vpop.f32.mrb[0].mxu0
      %v2076 = vadd.f32 0.0, %v2075
      %v2077 = vpop.f32.mrb[0].mxu0
      %2078 = vmatprep.mubr.f32.mxu0 0.0
      %2079 = vmatmul.mubr.f32.gmra.mrb[0].mxu0 %v1885
      %v2080 = vpop.f32.mrb[0].mxu0
      %v2081 = vadd.f32 0.0, %v2080
      %v2082 = vpop.f32.mrb[0].mxu0
      %2083 = vmatprep.mubr.f32.mxu0 0.0
      %2084 = vmatmul.mubr.f32.gmra.mrb[0].mxu0 %v1888
      %v2085 = vpop.f32.mrb[0].mxu0
      %v2086 = vadd.f32 0.0, %v2085
      %v2087 = vpop.f32.mrb[0].mxu0
      %2088 = vmatprep.mubr.f32.mxu0 0.0
      %2089 = vmatmul.mubr.f32.gmra.mrb[0].mxu0 %v1891
      %v2090 = vpop.f32.mrb[0].mxu0
      %v2091 = vadd.f32 0.0, %v2090
      %v2092 = vpop.f32.mrb[0].mxu0
      %2093 = vmatprep.mubr.f32.mxu0 0.0
      %2094 = vmatmul.mubr.f32.gmra.mrb[0].mxu0 %v1894
      %v2095 = vpop.f32.mrb[0].mxu0
      %v2096 = vadd.f32 0.0, %v2095
      %v2097 = vpop.f32.mrb[0].mxu0
      %2098 = vmatprep.mubr.f32.mxu0 0.0
      %2099 = vmatmul.mubr.f32.gmra.mrb[0].mxu0 %v1897
      %v2100 = vpop.f32.mrb[0].mxu0
      %v2101 = vadd.f32 0.0, %v2100
      %v2102 = vpop.f32.mrb[0].mxu0
      %2103 = vmatprep.mubr.f32.mxu0 0.0
      %2104 = vmatmul.mubr.f32.gmra.mrb[0].mxu0 %v1900
      %v2105 = vpop.f32.mrb[0].mxu0
      %v2106 = vadd.f32 0.0, %v2105
      %v2107 = vpop.f32.mrb[0].mxu0
      %2108 = vmatprep.mubr.f32.mxu0 0.0
      %2109 = vmatmul.mubr.f32.gmra.mrb[0].mxu0 %v1903
      %v2110 = vpop.f32.mrb[0].mxu0
      %v2111 = vadd.f32 0.0, %v2110
      %v2112 = vpop.f32.mrb[0].mxu0
      %2113 = vmatprep.mubr.f32.mxu0 0.0
      %2114 = vmatmul.mubr.f32.gmra.mrb[0].mxu0 %v1906
      %v2115 = vpop.f32.mrb[0].mxu0
      %v2116 = vadd.f32 0.0, %v2115
      %v2117 = vpop.f32.mrb[0].mxu0
      %2118 = vmatprep.mubr.f32.mxu0 0.0
      %2119 = vmatmul.mubr.f32.gmra.mrb[0].mxu0 %v1909
      %v2120 = vpop.f32.mrb[0].mxu0
      %v2121 = vadd.f32 0.0, %v2120
      %v2122 = vpop.f32.mrb[0].mxu0
      %2123 = vmatprep.mubr.f32.mxu0 0.0
      %2124 = vmatmul.mubr.f32.gmra.mrb[0].mxu0 %v1912
      %v2125 = vpop.f32.mrb[0].mxu0
      %v2126 = vadd.f32 0.0, %v2125
      %v2127 = vpop.f32.mrb[0].mxu0
      %2128 = vdwg.mxu0
      %v2129 = vadd.f32 %v1762, %v1981
      %v2130 = vadd.f32 %v1763, %v1986
      %v2131 = vadd.f32 %v1764, %v1991
      %v2132 = vadd.f32 %v1765, %v1996
      %v2133 = vadd.f32 %v1766, %v2001
      %v2134 = vadd.f32 %v1767, %v2006
      %v2135 = vadd.f32 %v1768, %v2011
      %v2136 = vadd.f32 %v1769, %v2016
      %v2137 = vadd.f32 %v1770, %v2021
      %v2138 = vadd.f32 %v1771, %v2026
      %v2139 = vadd.f32 %v1772, %v2031
      %v2140 = vadd.f32 %v1773, %v2036
      %v2141 = vadd.f32 %v1774, %v2041
      %v2142 = vadd.f32 %v1775, %v2046
      %v2143 = vadd.f32 %v1776, %v2051
      %v2144 = vadd.f32 %v1777, %v2056
      %v2145 = vadd.f32 %v1778, %v2061
      %v2146 = vadd.f32 %v1779, %v2066
      %v2147 = vadd.f32 %v1780, %v2071
      %v2148 = vadd.f32 %v1781, %v2076
      %v2149 = vadd.f32 %v1782, %v2081
      %v2150 = vadd.f32 %v1783, %v2086
      %v2151 = vadd.f32 %v1784, %v2091
      %v2152 = vadd.f32 %v1785, %v2096
      %v2153 = vadd.f32 %v1786, %v2101
      %v2154 = vadd.f32 %v1787, %v2106
      %v2155 = vadd.f32 %v1788, %v2111
      %v2156 = vadd.f32 %v1789, %v2116
      %v2157 = vadd.f32 %v1790, %v2121
      %v2158 = vadd.f32 %v1791, %v2126
      %v2159 = vld [vmem:[#allocation2 + $0x21] sm:$0xff]
      %v2160 = vld [vmem:[#allocation2 + $0x29] sm:$0xff]
      %v2161 = vld [vmem:[#allocation2 + $0x31] sm:$0xff]
      %v2162 = vld [vmem:[#allocation2 + $0x39] sm:$0xff]
      %v2163 = vld [vmem:[#allocation2 + $0x41] sm:$0xff]
      %v2164 = vld [vmem:[#allocation2 + $0x49] sm:$0xff]
      %v2165 = vld [vmem:[#allocation2 + $0x51] sm:$0xff]
      %v2166 = vld [vmem:[#allocation2 + $0x59] sm:$0xff]
      %v2167 = vld [vmem:[#allocation2 + $0x61] sm:$0xff]
      %v2168 = vld [vmem:[#allocation2 + $0x69] sm:$0xff]
      %v2169 = vld [vmem:[#allocation2 + $0x71] sm:$0xff]
      %v2170 = vld [vmem:[#allocation2 + $0x79] sm:$0xff]
      %v2171 = vld [vmem:[#allocation2 + $0x81] sm:$0xff]
      %v2172 = vld [vmem:[#allocation2 + $0x89] sm:$0xff]
      %v2173 = vld [vmem:[#allocation2 + $0x91] sm:$0xff]
      %v2174 = vld [vmem:[#allocation2 + $0x99] sm:$0xff]
      %v2175 = vld [vmem:[#allocation2 + $0xa1] sm:$0xff]
      %v2176 = vld [vmem:[#allocation2 + $0xa9] sm:$0xff]
      %v2177 = vld [vmem:[#allocation2 + $0xb1] sm:$0xff]
      %v2178 = vld [vmem:[#allocation2 + $0xb9] sm:$0xff]
      %v2179 = vld [vmem:[#allocation2 + $0xc1] sm:$0xff]
      %v2180 = vld [vmem:[#allocation2 + $0xc9] sm:$0xff]
      %v2181 = vld [vmem:[#allocation2 + $0xd1] sm:$0xff]
      %v2182 = vld [vmem:[#allocation2 + $0xd9] sm:$0xff]
      %v2183 = vld [vmem:[#allocation2 + $0xe1] sm:$0xff]
      %v2184 = vld [vmem:[#allocation2 + $0xe9] sm:$0xff]
      %v2185 = vld [vmem:[#allocation2 + $0xf1] sm:$0xff]
      %v2186 = vld [vmem:[#allocation2 + $0xf9] sm:$0xff]
      %v2187 = vld [vmem:[#allocation2 + $0x101] sm:$0xff]
      %v2188 = vld [vmem:[#allocation2 + $0x109] sm:$0xff]
      %s2189 = scalar_lea.vmem %s1, 40
      %v2190 = vld [vmem:[%s2189] sm:$0xff]
      %v2192 = vsel %vm251, %v2159, 0
      %v2195 = vsel %vm251, %v2160, 0
      %v2198 = vsel %vm251, %v2161, 0
      %v2201 = vsel %vm251, %v2162, 0
      %v2204 = vsel %vm251, %v2163, 0
      %v2207 = vsel %vm251, %v2164, 0
      %v2210 = vsel %vm251, %v2165, 0
      %v2213 = vsel %vm251, %v2166, 0
      %v2216 = vsel %vm251, %v2167, 0
      %v2219 = vsel %vm251, %v2168, 0
      %v2222 = vsel %vm251, %v2169, 0
      %v2225 = vsel %vm251, %v2170, 0
      %v2228 = vsel %vm251, %v2171, 0
      %v2231 = vsel %vm251, %v2172, 0
      %v2234 = vsel %vm251, %v2173, 0
      %v2237 = vsel %vm251, %v2174, 0
      %v2240 = vsel %vm251, %v2175, 0
      %v2243 = vsel %vm251, %v2176, 0
      %v2246 = vsel %vm251, %v2177, 0
      %v2249 = vsel %vm251, %v2178, 0
      %v2252 = vsel %vm251, %v2179, 0
      %v2255 = vsel %vm251, %v2180, 0
      %v2258 = vsel %vm251, %v2181, 0
      %v2261 = vsel %vm251, %v2182, 0
      %v2264 = vsel %vm251, %v2183, 0
      %v2267 = vsel %vm251, %v2184, 0
      %v2270 = vsel %vm251, %v2185, 0
      %v2273 = vsel %vm251, %v2186, 0
      %v2276 = vsel %vm251, %v2187, 0
      %v2279 = vsel %vm251, %v2188, 0
      %2281 = vmatprep.subr.mxu0 0.0
      %2282 = vmatpush1.msra.mxu0 %v2190
      %2283 = vmatprep.subr.mxu0 0.0
      %2284 = vmatpush1.msra.mxu0 0.0
      %2285 = vmatprep.subr.mxu0 0.0
      %2286 = vmatpush1.msra.mxu0 0.0
      %2287 = vmatprep.subr.mxu0 0.0
      %2288 = vmatpush1.msra.mxu0 0.0
      %2289 = vmatprep.subr.mxu0 0.0
      %2290 = vmatpush1.msra.mxu0 0.0
      %2291 = vmatprep.subr.mxu0 0.0
      %2292 = vmatpush1.msra.mxu0 0.0
      %2293 = vmatprep.subr.mxu0 0.0
      %2294 = vmatpush1.msra.mxu0 0.0
      %2295 = vmatprep.subr.mxu0 0.0
      %2296 = vmatpush1.msra.mxu0 0.0
      %2297 = vmatprep.subr.mxu0 0.0
      %2298 = vmatpush1.msra.mxu0 0.0
      %2299 = vmatprep.subr.mxu0 0.0
      %2300 = vmatpush1.msra.mxu0 0.0
      %2301 = vmatprep.subr.mxu0 0.0
      %2302 = vmatpush1.msra.mxu0 0.0
      %2303 = vmatprep.subr.mxu0 0.0
      %2304 = vmatpush1.msra.mxu0 0.0
      %2305 = vmatprep.subr.mxu0 0.0
      %2306 = vmatpush1.msra.mxu0 0.0
      %2307 = vmatprep.subr.mxu0 0.0
      %2308 = vmatpush1.msra.mxu0 0.0
      %2309 = vmatprep.subr.mxu0 0.0
      %2310 = vmatpush1.msra.mxu0 0.0
      %2311 = vmatprep.subr.mxu0 0.0
      %2312 = vmatpush1.msra.mxu0 0.0
      %2313 = vmatprep.subr.mxu0 0.0
      %2314 = vmatpush1.msra.mxu0 0.0
      %2315 = vmatprep.subr.mxu0 0.0
      %2316 = vmatpush1.msra.mxu0 0.0
      %2317 = vmatprep.subr.mxu0 0.0
      %2318 = vmatpush1.msra.mxu0 0.0
      %2319 = vmatprep.subr.mxu0 0.0
      %2320 = vmatpush1.msra.mxu0 0.0
      %2321 = vmatprep.subr.mxu0 0.0
      %2322 = vmatpush1.msra.mxu0 0.0
      %2323 = vmatprep.subr.mxu0 0.0
      %2324 = vmatpush1.msra.mxu0 0.0
      %2325 = vmatprep.subr.mxu0 0.0
      %2326 = vmatpush1.msra.mxu0 0.0
      %2327 = vmatprep.subr.mxu0 0.0
      %2328 = vmatpush1.msra.mxu0 0.0
      %2329 = vmatprep.subr.mxu0 0.0
      %2330 = vmatpush1.msra.mxu0 0.0
      %2331 = vmatprep.subr.mxu0 0.0
      %2332 = vmatpush1.msra.mxu0 0.0
      %2333 = vmatprep.subr.mxu0 0.0
      %2334 = vmatpush1.msra.mxu0 0.0
      %2335 = vmatprep.subr.mxu0 0.0
      %2336 = vmatpush1.msra.mxu0 0.0
      %2337 = vmatprep.subr.mxu0 0.0
      %2338 = vmatpush1.msra.mxu0 0.0
      %2339 = vmatprep.subr.mxu0 0.0
      %2340 = vmatpush1.msra.mxu0 0.0
      %2341 = vmatprep.subr.mxu0 0.0
      %2342 = vmatpush1.msra.mxu0 0.0
      %2343 = vmatprep.subr.mxu0 0.0
      %2344 = vmatpush1.msra.mxu0 0.0
      %2345 = vmatprep.mubr.f32.mxu0 0.0
      %2346 = vmatmul.mubr.f32.gmra.mrb[0].mxu0 %v2192
      %v2347 = vpop.f32.mrb[0].mxu0
      %v2348 = vadd.f32 0.0, %v2347
      %v2349 = vpop.f32.mrb[0].mxu0
      %2350 = vmatprep.mubr.f32.mxu0 0.0
      %2351 = vmatmul.mubr.f32.gmra.mrb[0].mxu0 %v2195
      %v2352 = vpop.f32.mrb[0].mxu0
      %v2353 = vadd.f32 0.0, %v2352
      %v2354 = vpop.f32.mrb[0].mxu0
      %2355 = vmatprep.mubr.f32.mxu0 0.0
      %2356 = vmatmul.mubr.f32.gmra.mrb[0].mxu0 %v2198
      %v2357 = vpop.f32.mrb[0].mxu0
      %v2358 = vadd.f32 0.0, %v2357
      %v2359 = vpop.f32.mrb[0].mxu0
      %2360 = vmatprep.mubr.f32.mxu0 0.0
      %2361 = vmatmul.mubr.f32.gmra.mrb[0].mxu0 %v2201
      %v2362 = vpop.f32.mrb[0].mxu0
      %v2363 = vadd.f32 0.0, %v2362
      %v2364 = vpop.f32.mrb[0].mxu0
      %2365 = vmatprep.mubr.f32.mxu0 0.0
      %2366 = vmatmul.mubr.f32.gmra.mrb[0].mxu0 %v2204
      %v2367 = vpop.f32.mrb[0].mxu0
      %v2368 = vadd.f32 0.0, %v2367
      %v2369 = vpop.f32.mrb[0].mxu0
      %2370 = vmatprep.mubr.f32.mxu0 0.0
      %2371 = vmatmul.mubr.f32.gmra.mrb[0].mxu0 %v2207
      %v2372 = vpop.f32.mrb[0].mxu0
      %v2373 = vadd.f32 0.0, %v2372
      %v2374 = vpop.f32.mrb[0].mxu0
      %2375 = vmatprep.mubr.f32.mxu0 0.0
      %2376 = vmatmul.mubr.f32.gmra.mrb[0].mxu0 %v2210
      %v2377 = vpop.f32.mrb[0].mxu0
      %v2378 = vadd.f32 0.0, %v2377
      %v2379 = vpop.f32.mrb[0].mxu0
      %2380 = vmatprep.mubr.f32.mxu0 0.0
      %2381 = vmatmul.mubr.f32.gmra.mrb[0].mxu0 %v2213
      %v2382 = vpop.f32.mrb[0].mxu0
      %v2383 = vadd.f32 0.0, %v2382
      %v2384 = vpop.f32.mrb[0].mxu0
      %2385 = vmatprep.mubr.f32.mxu0 0.0
      %2386 = vmatmul.mubr.f32.gmra.mrb[0].mxu0 %v2216
      %v2387 = vpop.f32.mrb[0].mxu0
      %v2388 = vadd.f32 0.0, %v2387
      %v2389 = vpop.f32.mrb[0].mxu0
      %2390 = vmatprep.mubr.f32.mxu0 0.0
      %2391 = vmatmul.mubr.f32.gmra.mrb[0].mxu0 %v2219
      %v2392 = vpop.f32.mrb[0].mxu0
      %v2393 = vadd.f32 0.0, %v2392
      %v2394 = vpop.f32.mrb[0].mxu0
      %2395 = vmatprep.mubr.f32.mxu0 0.0
      %2396 = vmatmul.mubr.f32.gmra.mrb[0].mxu0 %v2222
      %v2397 = vpop.f32.mrb[0].mxu0
      %v2398 = vadd.f32 0.0, %v2397
      %v2399 = vpop.f32.mrb[0].mxu0
      %2400 = vmatprep.mubr.f32.mxu0 0.0
      %2401 = vmatmul.mubr.f32.gmra.mrb[0].mxu0 %v2225
      %v2402 = vpop.f32.mrb[0].mxu0
      %v2403 = vadd.f32 0.0, %v2402
      %v2404 = vpop.f32.mrb[0].mxu0
      %2405 = vmatprep.mubr.f32.mxu0 0.0
      %2406 = vmatmul.mubr.f32.gmra.mrb[0].mxu0 %v2228
      %v2407 = vpop.f32.mrb[0].mxu0
      %v2408 = vadd.f32 0.0, %v2407
      %v2409 = vpop.f32.mrb[0].mxu0
      %2410 = vmatprep.mubr.f32.mxu0 0.0
      %2411 = vmatmul.mubr.f32.gmra.mrb[0].mxu0 %v2231
      %v2412 = vpop.f32.mrb[0].mxu0
      %v2413 = vadd.f32 0.0, %v2412
      %v2414 = vpop.f32.mrb[0].mxu0
      %2415 = vmatprep.mubr.f32.mxu0 0.0
      %2416 = vmatmul.mubr.f32.gmra.mrb[0].mxu0 %v2234
      %v2417 = vpop.f32.mrb[0].mxu0
      %v2418 = vadd.f32 0.0, %v2417
      %v2419 = vpop.f32.mrb[0].mxu0
      %2420 = vmatprep.mubr.f32.mxu0 0.0
      %2421 = vmatmul.mubr.f32.gmra.mrb[0].mxu0 %v2237
      %v2422 = vpop.f32.mrb[0].mxu0
      %v2423 = vadd.f32 0.0, %v2422
      %v2424 = vpop.f32.mrb[0].mxu0
      %2425 = vmatprep.mubr.f32.mxu0 0.0
      %2426 = vmatmul.mubr.f32.gmra.mrb[0].mxu0 %v2240
      %v2427 = vpop.f32.mrb[0].mxu0
      %v2428 = vadd.f32 0.0, %v2427
      %v2429 = vpop.f32.mrb[0].mxu0
      %2430 = vmatprep.mubr.f32.mxu0 0.0
      %2431 = vmatmul.mubr.f32.gmra.mrb[0].mxu0 %v2243
      %v2432 = vpop.f32.mrb[0].mxu0
      %v2433 = vadd.f32 0.0, %v2432
      %v2434 = vpop.f32.mrb[0].mxu0
      %2435 = vmatprep.mubr.f32.mxu0 0.0
      %2436 = vmatmul.mubr.f32.gmra.mrb[0].mxu0 %v2246
      %v2437 = vpop.f32.mrb[0].mxu0
      %v2438 = vadd.f32 0.0, %v2437
      %v2439 = vpop.f32.mrb[0].mxu0
      %2440 = vmatprep.mubr.f32.mxu0 0.0
      %2441 = vmatmul.mubr.f32.gmra.mrb[0].mxu0 %v2249
      %v2442 = vpop.f32.mrb[0].mxu0
      %v2443 = vadd.f32 0.0, %v2442
      %v2444 = vpop.f32.mrb[0].mxu0
      %2445 = vmatprep.mubr.f32.mxu0 0.0
      %2446 = vmatmul.mubr.f32.gmra.mrb[0].mxu0 %v2252
      %v2447 = vpop.f32.mrb[0].mxu0
      %v2448 = vadd.f32 0.0, %v2447
      %v2449 = vpop.f32.mrb[0].mxu0
      %2450 = vmatprep.mubr.f32.mxu0 0.0
      %2451 = vmatmul.mubr.f32.gmra.mrb[0].mxu0 %v2255
      %v2452 = vpop.f32.mrb[0].mxu0
      %v2453 = vadd.f32 0.0, %v2452
      %v2454 = vpop.f32.mrb[0].mxu0
      %2455 = vmatprep.mubr.f32.mxu0 0.0
      %2456 = vmatmul.mubr.f32.gmra.mrb[0].mxu0 %v2258
      %v2457 = vpop.f32.mrb[0].mxu0
      %v2458 = vadd.f32 0.0, %v2457
      %v2459 = vpop.f32.mrb[0].mxu0
      %2460 = vmatprep.mubr.f32.mxu0 0.0
      %2461 = vmatmul.mubr.f32.gmra.mrb[0].mxu0 %v2261
      %v2462 = vpop.f32.mrb[0].mxu0
      %v2463 = vadd.f32 0.0, %v2462
      %v2464 = vpop.f32.mrb[0].mxu0
      %2465 = vmatprep.mubr.f32.mxu0 0.0
      %2466 = vmatmul.mubr.f32.gmra.mrb[0].mxu0 %v2264
      %v2467 = vpop.f32.mrb[0].mxu0
      %v2468 = vadd.f32 0.0, %v2467
      %v2469 = vpop.f32.mrb[0].mxu0
      %2470 = vmatprep.mubr.f32.mxu0 0.0
      %2471 = vmatmul.mubr.f32.gmra.mrb[0].mxu0 %v2267
      %v2472 = vpop.f32.mrb[0].mxu0
      %v2473 = vadd.f32 0.0, %v2472
      %v2474 = vpop.f32.mrb[0].mxu0
      %2475 = vmatprep.mubr.f32.mxu0 0.0
      %2476 = vmatmul.mubr.f32.gmra.mrb[0].mxu0 %v2270
      %v2477 = vpop.f32.mrb[0].mxu0
      %v2478 = vadd.f32 0.0, %v2477
      %v2479 = vpop.f32.mrb[0].mxu0
      %2480 = vmatprep.mubr.f32.mxu0 0.0
      %2481 = vmatmul.mubr.f32.gmra.mrb[0].mxu0 %v2273
      %v2482 = vpop.f32.mrb[0].mxu0
      %v2483 = vadd.f32 0.0, %v2482
      %v2484 = vpop.f32.mrb[0].mxu0
      %2485 = vmatprep.mubr.f32.mxu0 0.0
      %2486 = vmatmul.mubr.f32.gmra.mrb[0].mxu0 %v2276
      %v2487 = vpop.f32.mrb[0].mxu0
      %v2488 = vadd.f32 0.0, %v2487
      %v2489 = vpop.f32.mrb[0].mxu0
      %2490 = vmatprep.mubr.f32.mxu0 0.0
      %2491 = vmatmul.mubr.f32.gmra.mrb[0].mxu0 %v2279
      %v2492 = vpop.f32.mrb[0].mxu0
      %v2493 = vadd.f32 0.0, %v2492
      %v2494 = vpop.f32.mrb[0].mxu0
      %2495 = vdwg.mxu0
      %v2496 = vadd.f32 %v2129, %v2348
      %v2497 = vadd.f32 %v2130, %v2353
      %v2498 = vadd.f32 %v2131, %v2358
      %v2499 = vadd.f32 %v2132, %v2363
      %v2500 = vadd.f32 %v2133, %v2368
      %v2501 = vadd.f32 %v2134, %v2373
      %v2502 = vadd.f32 %v2135, %v2378
      %v2503 = vadd.f32 %v2136, %v2383
      %v2504 = vadd.f32 %v2137, %v2388
      %v2505 = vadd.f32 %v2138, %v2393
      %v2506 = vadd.f32 %v2139, %v2398
      %v2507 = vadd.f32 %v2140, %v2403
      %v2508 = vadd.f32 %v2141, %v2408
      %v2509 = vadd.f32 %v2142, %v2413
      %v2510 = vadd.f32 %v2143, %v2418
      %v2511 = vadd.f32 %v2144, %v2423
      %v2512 = vadd.f32 %v2145, %v2428
      %v2513 = vadd.f32 %v2146, %v2433
      %v2514 = vadd.f32 %v2147, %v2438
      %v2515 = vadd.f32 %v2148, %v2443
      %v2516 = vadd.f32 %v2149, %v2448
      %v2517 = vadd.f32 %v2150, %v2453
      %v2518 = vadd.f32 %v2151, %v2458
      %v2519 = vadd.f32 %v2152, %v2463
      %v2520 = vadd.f32 %v2153, %v2468
      %v2521 = vadd.f32 %v2154, %v2473
      %v2522 = vadd.f32 %v2155, %v2478
      %v2523 = vadd.f32 %v2156, %v2483
      %v2524 = vadd.f32 %v2157, %v2488
      %v2525 = vadd.f32 %v2158, %v2493
      %v2526 = vld [vmem:[#allocation2 + $0x37] sm:$0xff]
      %v2527 = vld [vmem:[#allocation2 + $0x3f] sm:$0xff]
      %v2528 = vld [vmem:[#allocation2 + $0x47] sm:$0xff]
      %v2529 = vld [vmem:[#allocation2 + $0x4f] sm:$0xff]
      %v2530 = vld [vmem:[#allocation2 + $0x57] sm:$0xff]
      %v2531 = vld [vmem:[#allocation2 + $0x5f] sm:$0xff]
      %v2532 = vld [vmem:[#allocation2 + $0x67] sm:$0xff]
      %v2533 = vld [vmem:[#allocation2 + $0x6f] sm:$0xff]
      %v2534 = vld [vmem:[#allocation2 + $0x77] sm:$0xff]
      %v2535 = vld [vmem:[#allocation2 + $0x7f] sm:$0xff]
      %v2536 = vld [vmem:[#allocation2 + $0x87] sm:$0xff]
      %v2537 = vld [vmem:[#allocation2 + $0x8f] sm:$0xff]
      %v2538 = vld [vmem:[#allocation2 + $0x97] sm:$0xff]
      %v2539 = vld [vmem:[#allocation2 + $0x9f] sm:$0xff]
      %v2540 = vld [vmem:[#allocation2 + $0xa7] sm:$0xff]
      %v2541 = vld [vmem:[#allocation2 + $0xaf] sm:$0xff]
      %v2542 = vld [vmem:[#allocation2 + $0xb7] sm:$0xff]
      %v2543 = vld [vmem:[#allocation2 + $0xbf] sm:$0xff]
      %v2544 = vld [vmem:[#allocation2 + $0xc7] sm:$0xff]
      %v2545 = vld [vmem:[#allocation2 + $0xcf] sm:$0xff]
      %v2546 = vld [vmem:[#allocation2 + $0xd7] sm:$0xff]
      %v2547 = vld [vmem:[#allocation2 + $0xdf] sm:$0xff]
      %v2548 = vld [vmem:[#allocation2 + $0xe7] sm:$0xff]
      %v2549 = vld [vmem:[#allocation2 + $0xef] sm:$0xff]
      %v2550 = vld [vmem:[#allocation2 + $0xf7] sm:$0xff]
      %v2551 = vld [vmem:[#allocation2 + $0xff] sm:$0xff]
      %v2552 = vld [vmem:[#allocation2 + $0x107] sm:$0xff]
      %v2553 = vld [vmem:[#allocation2 + $0x10f] sm:$0xff]
      %v2554 = vld [vmem:[#allocation2 + $0x117] sm:$0xff]
      %v2555 = vld [vmem:[#allocation2 + $0x11f] sm:$0xff]
      %s2556 = scalar_lea.vmem %s1, 48
      %v2557 = vld [vmem:[%s2556] sm:$0xff]
      %v2559 = vsel %vm251, %v2526, 0
      %v2562 = vsel %vm251, %v2527, 0
      %v2565 = vsel %vm251, %v2528, 0
      %v2568 = vsel %vm251, %v2529, 0
      %v2571 = vsel %vm251, %v2530, 0
      %v2574 = vsel %vm251, %v2531, 0
      %v2577 = vsel %vm251, %v2532, 0
      %v2580 = vsel %vm251, %v2533, 0
      %v2583 = vsel %vm251, %v2534, 0
      %v2586 = vsel %vm251, %v2535, 0
      %v2589 = vsel %vm251, %v2536, 0
      %v2592 = vsel %vm251, %v2537, 0
      %v2595 = vsel %vm251, %v2538, 0
      %v2598 = vsel %vm251, %v2539, 0
      %v2601 = vsel %vm251, %v2540, 0
      %v2604 = vsel %vm251, %v2541, 0
      %v2607 = vsel %vm251, %v2542, 0
      %v2610 = vsel %vm251, %v2543, 0
      %v2613 = vsel %vm251, %v2544, 0
      %v2616 = vsel %vm251, %v2545, 0
      %v2619 = vsel %vm251, %v2546, 0
      %v2622 = vsel %vm251, %v2547, 0
      %v2625 = vsel %vm251, %v2548, 0
      %v2628 = vsel %vm251, %v2549, 0
      %v2631 = vsel %vm251, %v2550, 0
      %v2634 = vsel %vm251, %v2551, 0
      %v2637 = vsel %vm251, %v2552, 0
      %v2640 = vsel %vm251, %v2553, 0
      %v2643 = vsel %vm251, %v2554, 0
      %v2646 = vsel %vm251, %v2555, 0
      %2648 = vmatprep.subr.mxu0 0.0
      %2649 = vmatpush1.msra.mxu0 %v2557
      %2650 = vmatprep.subr.mxu0 0.0
      %2651 = vmatpush1.msra.mxu0 0.0
      %2652 = vmatprep.subr.mxu0 0.0
      %2653 = vmatpush1.msra.mxu0 0.0
      %2654 = vmatprep.subr.mxu0 0.0
      %2655 = vmatpush1.msra.mxu0 0.0
      %2656 = vmatprep.subr.mxu0 0.0
      %2657 = vmatpush1.msra.mxu0 0.0
      %2658 = vmatprep.subr.mxu0 0.0
      %2659 = vmatpush1.msra.mxu0 0.0
      %2660 = vmatprep.subr.mxu0 0.0
      %2661 = vmatpush1.msra.mxu0 0.0
      %2662 = vmatprep.subr.mxu0 0.0
      %2663 = vmatpush1.msra.mxu0 0.0
      %2664 = vmatprep.subr.mxu0 0.0
      %2665 = vmatpush1.msra.mxu0 0.0
      %2666 = vmatprep.subr.mxu0 0.0
      %2667 = vmatpush1.msra.mxu0 0.0
      %2668 = vmatprep.subr.mxu0 0.0
      %2669 = vmatpush1.msra.mxu0 0.0
      %2670 = vmatprep.subr.mxu0 0.0
      %2671 = vmatpush1.msra.mxu0 0.0
      %2672 = vmatprep.subr.mxu0 0.0
      %2673 = vmatpush1.msra.mxu0 0.0
      %2674 = vmatprep.subr.mxu0 0.0
      %2675 = vmatpush1.msra.mxu0 0.0
      %2676 = vmatprep.subr.mxu0 0.0
      %2677 = vmatpush1.msra.mxu0 0.0
      %2678 = vmatprep.subr.mxu0 0.0
      %2679 = vmatpush1.msra.mxu0 0.0
      %2680 = vmatprep.subr.mxu0 0.0
      %2681 = vmatpush1.msra.mxu0 0.0
      %2682 = vmatprep.subr.mxu0 0.0
      %2683 = vmatpush1.msra.mxu0 0.0
      %2684 = vmatprep.subr.mxu0 0.0
      %2685 = vmatpush1.msra.mxu0 0.0
      %2686 = vmatprep.subr.mxu0 0.0
      %2687 = vmatpush1.msra.mxu0 0.0
      %2688 = vmatprep.subr.mxu0 0.0
      %2689 = vmatpush1.msra.mxu0 0.0
      %2690 = vmatprep.subr.mxu0 0.0
      %2691 = vmatpush1.msra.mxu0 0.0
      %2692 = vmatprep.subr.mxu0 0.0
      %2693 = vmatpush1.msra.mxu0 0.0
      %2694 = vmatprep.subr.mxu0 0.0
      %2695 = vmatpush1.msra.mxu0 0.0
      %2696 = vmatprep.subr.mxu0 0.0
      %2697 = vmatpush1.msra.mxu0 0.0
      %2698 = vmatprep.subr.mxu0 0.0
      %2699 = vmatpush1.msra.mxu0 0.0
      %2700 = vmatprep.subr.mxu0 0.0
      %2701 = vmatpush1.msra.mxu0 0.0
      %2702 = vmatprep.subr.mxu0 0.0
      %2703 = vmatpush1.msra.mxu0 0.0
      %2704 = vmatprep.subr.mxu0 0.0
      %2705 = vmatpush1.msra.mxu0 0.0
      %2706 = vmatprep.subr.mxu0 0.0
      %2707 = vmatpush1.msra.mxu0 0.0
      %2708 = vmatprep.subr.mxu0 0.0
      %2709 = vmatpush1.msra.mxu0 0.0
      %2710 = vmatprep.subr.mxu0 0.0
      %2711 = vmatpush1.msra.mxu0 0.0
      %2712 = vmatprep.mubr.f32.mxu0 0.0
      %2713 = vmatmul.mubr.f32.gmra.mrb[0].mxu0 %v2559
      %v2714 = vpop.f32.mrb[0].mxu0
      %v2715 = vadd.f32 0.0, %v2714
      %v2716 = vpop.f32.mrb[0].mxu0
      %2717 = vmatprep.mubr.f32.mxu0 0.0
      %2718 = vmatmul.mubr.f32.gmra.mrb[0].mxu0 %v2562
      %v2719 = vpop.f32.mrb[0].mxu0
      %v2720 = vadd.f32 0.0, %v2719
      %v2721 = vpop.f32.mrb[0].mxu0
      %2722 = vmatprep.mubr.f32.mxu0 0.0
      %2723 = vmatmul.mubr.f32.gmra.mrb[0].mxu0 %v2565
      %v2724 = vpop.f32.mrb[0].mxu0
      %v2725 = vadd.f32 0.0, %v2724
      %v2726 = vpop.f32.mrb[0].mxu0
      %2727 = vmatprep.mubr.f32.mxu0 0.0
      %2728 = vmatmul.mubr.f32.gmra.mrb[0].mxu0 %v2568
      %v2729 = vpop.f32.mrb[0].mxu0
      %v2730 = vadd.f32 0.0, %v2729
      %v2731 = vpop.f32.mrb[0].mxu0
      %2732 = vmatprep.mubr.f32.mxu0 0.0
      %2733 = vmatmul.mubr.f32.gmra.mrb[0].mxu0 %v2571
      %v2734 = vpop.f32.mrb[0].mxu0
      %v2735 = vadd.f32 0.0, %v2734
      %v2736 = vpop.f32.mrb[0].mxu0
      %2737 = vmatprep.mubr.f32.mxu0 0.0
      %2738 = vmatmul.mubr.f32.gmra.mrb[0].mxu0 %v2574
      %v2739 = vpop.f32.mrb[0].mxu0
      %v2740 = vadd.f32 0.0, %v2739
      %v2741 = vpop.f32.mrb[0].mxu0
      %2742 = vmatprep.mubr.f32.mxu0 0.0
      %2743 = vmatmul.mubr.f32.gmra.mrb[0].mxu0 %v2577
      %v2744 = vpop.f32.mrb[0].mxu0
      %v2745 = vadd.f32 0.0, %v2744
      %v2746 = vpop.f32.mrb[0].mxu0
      %2747 = vmatprep.mubr.f32.mxu0 0.0
      %2748 = vmatmul.mubr.f32.gmra.mrb[0].mxu0 %v2580
      %v2749 = vpop.f32.mrb[0].mxu0
      %v2750 = vadd.f32 0.0, %v2749
      %v2751 = vpop.f32.mrb[0].mxu0
      %2752 = vmatprep.mubr.f32.mxu0 0.0
      %2753 = vmatmul.mubr.f32.gmra.mrb[0].mxu0 %v2583
      %v2754 = vpop.f32.mrb[0].mxu0
      %v2755 = vadd.f32 0.0, %v2754
      %v2756 = vpop.f32.mrb[0].mxu0
      %2757 = vmatprep.mubr.f32.mxu0 0.0
      %2758 = vmatmul.mubr.f32.gmra.mrb[0].mxu0 %v2586
      %v2759 = vpop.f32.mrb[0].mxu0
      %v2760 = vadd.f32 0.0, %v2759
      %v2761 = vpop.f32.mrb[0].mxu0
      %2762 = vmatprep.mubr.f32.mxu0 0.0
      %2763 = vmatmul.mubr.f32.gmra.mrb[0].mxu0 %v2589
      %v2764 = vpop.f32.mrb[0].mxu0
      %v2765 = vadd.f32 0.0, %v2764
      %v2766 = vpop.f32.mrb[0].mxu0
      %2767 = vmatprep.mubr.f32.mxu0 0.0
      %2768 = vmatmul.mubr.f32.gmra.mrb[0].mxu0 %v2592
      %v2769 = vpop.f32.mrb[0].mxu0
      %v2770 = vadd.f32 0.0, %v2769
      %v2771 = vpop.f32.mrb[0].mxu0
      %2772 = vmatprep.mubr.f32.mxu0 0.0
      %2773 = vmatmul.mubr.f32.gmra.mrb[0].mxu0 %v2595
      %v2774 = vpop.f32.mrb[0].mxu0
      %v2775 = vadd.f32 0.0, %v2774
      %v2776 = vpop.f32.mrb[0].mxu0
      %2777 = vmatprep.mubr.f32.mxu0 0.0
      %2778 = vmatmul.mubr.f32.gmra.mrb[0].mxu0 %v2598
      %v2779 = vpop.f32.mrb[0].mxu0
      %v2780 = vadd.f32 0.0, %v2779
      %v2781 = vpop.f32.mrb[0].mxu0
      %2782 = vmatprep.mubr.f32.mxu0 0.0
      %2783 = vmatmul.mubr.f32.gmra.mrb[0].mxu0 %v2601
      %v2784 = vpop.f32.mrb[0].mxu0
      %v2785 = vadd.f32 0.0, %v2784
      %v2786 = vpop.f32.mrb[0].mxu0
      %2787 = vmatprep.mubr.f32.mxu0 0.0
      %2788 = vmatmul.mubr.f32.gmra.mrb[0].mxu0 %v2604
      %v2789 = vpop.f32.mrb[0].mxu0
      %v2790 = vadd.f32 0.0, %v2789
      %v2791 = vpop.f32.mrb[0].mxu0
      %2792 = vmatprep.mubr.f32.mxu0 0.0
      %2793 = vmatmul.mubr.f32.gmra.mrb[0].mxu0 %v2607
      %v2794 = vpop.f32.mrb[0].mxu0
      %v2795 = vadd.f32 0.0, %v2794
      %v2796 = vpop.f32.mrb[0].mxu0
      %2797 = vmatprep.mubr.f32.mxu0 0.0
      %2798 = vmatmul.mubr.f32.gmra.mrb[0].mxu0 %v2610
      %v2799 = vpop.f32.mrb[0].mxu0
      %v2800 = vadd.f32 0.0, %v2799
      %v2801 = vpop.f32.mrb[0].mxu0
      %2802 = vmatprep.mubr.f32.mxu0 0.0
      %2803 = vmatmul.mubr.f32.gmra.mrb[0].mxu0 %v2613
      %v2804 = vpop.f32.mrb[0].mxu0
      %v2805 = vadd.f32 0.0, %v2804
      %v2806 = vpop.f32.mrb[0].mxu0
      %2807 = vmatprep.mubr.f32.mxu0 0.0
      %2808 = vmatmul.mubr.f32.gmra.mrb[0].mxu0 %v2616
      %v2809 = vpop.f32.mrb[0].mxu0
      %v2810 = vadd.f32 0.0, %v2809
      %v2811 = vpop.f32.mrb[0].mxu0
      %2812 = vmatprep.mubr.f32.mxu0 0.0
      %2813 = vmatmul.mubr.f32.gmra.mrb[0].mxu0 %v2619
      %v2814 = vpop.f32.mrb[0].mxu0
      %v2815 = vadd.f32 0.0, %v2814
      %v2816 = vpop.f32.mrb[0].mxu0
      %2817 = vmatprep.mubr.f32.mxu0 0.0
      %2818 = vmatmul.mubr.f32.gmra.mrb[0].mxu0 %v2622
      %v2819 = vpop.f32.mrb[0].mxu0
      %v2820 = vadd.f32 0.0, %v2819
      %v2821 = vpop.f32.mrb[0].mxu0
      %2822 = vmatprep.mubr.f32.mxu0 0.0
      %2823 = vmatmul.mubr.f32.gmra.mrb[0].mxu0 %v2625
      %v2824 = vpop.f32.mrb[0].mxu0
      %v2825 = vadd.f32 0.0, %v2824
      %v2826 = vpop.f32.mrb[0].mxu0
      %2827 = vmatprep.mubr.f32.mxu0 0.0
      %2828 = vmatmul.mubr.f32.gmra.mrb[0].mxu0 %v2628
      %v2829 = vpop.f32.mrb[0].mxu0
      %v2830 = vadd.f32 0.0, %v2829
      %v2831 = vpop.f32.mrb[0].mxu0
      %2832 = vmatprep.mubr.f32.mxu0 0.0
      %2833 = vmatmul.mubr.f32.gmra.mrb[0].mxu0 %v2631
      %v2834 = vpop.f32.mrb[0].mxu0
      %v2835 = vadd.f32 0.0, %v2834
      %v2836 = vpop.f32.mrb[0].mxu0
      %2837 = vmatprep.mubr.f32.mxu0 0.0
      %2838 = vmatmul.mubr.f32.gmra.mrb[0].mxu0 %v2634
      %v2839 = vpop.f32.mrb[0].mxu0
      %v2840 = vadd.f32 0.0, %v2839
      %v2841 = vpop.f32.mrb[0].mxu0
      %2842 = vmatprep.mubr.f32.mxu0 0.0
      %2843 = vmatmul.mubr.f32.gmra.mrb[0].mxu0 %v2637
      %v2844 = vpop.f32.mrb[0].mxu0
      %v2845 = vadd.f32 0.0, %v2844
      %v2846 = vpop.f32.mrb[0].mxu0
      %2847 = vmatprep.mubr.f32.mxu0 0.0
      %2848 = vmatmul.mubr.f32.gmra.mrb[0].mxu0 %v2640
      %v2849 = vpop.f32.mrb[0].mxu0
      %v2850 = vadd.f32 0.0, %v2849
      %v2851 = vpop.f32.mrb[0].mxu0
      %2852 = vmatprep.mubr.f32.mxu0 0.0
      %2853 = vmatmul.mubr.f32.gmra.mrb[0].mxu0 %v2643
      %v2854 = vpop.f32.mrb[0].mxu0
      %v2855 = vadd.f32 0.0, %v2854
      %v2856 = vpop.f32.mrb[0].mxu0
      %2857 = vmatprep.mubr.f32.mxu0 0.0
      %2858 = vmatmul.mubr.f32.gmra.mrb[0].mxu0 %v2646
      %v2859 = vpop.f32.mrb[0].mxu0
      %v2860 = vadd.f32 0.0, %v2859
      %v2861 = vpop.f32.mrb[0].mxu0
      %2862 = vdwg.mxu0
      %v2863 = vadd.f32 %v2496, %v2715
      %v2864 = vadd.f32 %v2497, %v2720
      %v2865 = vadd.f32 %v2498, %v2725
      %v2866 = vadd.f32 %v2499, %v2730
      %v2867 = vadd.f32 %v2500, %v2735
      %v2868 = vadd.f32 %v2501, %v2740
      %v2869 = vadd.f32 %v2502, %v2745
      %v2870 = vadd.f32 %v2503, %v2750
      %v2871 = vadd.f32 %v2504, %v2755
      %v2872 = vadd.f32 %v2505, %v2760
      %v2873 = vadd.f32 %v2506, %v2765
      %v2874 = vadd.f32 %v2507, %v2770
      %v2875 = vadd.f32 %v2508, %v2775
      %v2876 = vadd.f32 %v2509, %v2780
      %v2877 = vadd.f32 %v2510, %v2785
      %v2878 = vadd.f32 %v2511, %v2790
      %v2879 = vadd.f32 %v2512, %v2795
      %v2880 = vadd.f32 %v2513, %v2800
      %v2881 = vadd.f32 %v2514, %v2805
      %v2882 = vadd.f32 %v2515, %v2810
      %v2883 = vadd.f32 %v2516, %v2815
      %v2884 = vadd.f32 %v2517, %v2820
      %v2885 = vadd.f32 %v2518, %v2825
      %v2886 = vadd.f32 %v2519, %v2830
      %v2887 = vadd.f32 %v2520, %v2835
      %v2888 = vadd.f32 %v2521, %v2840
      %v2889 = vadd.f32 %v2522, %v2845
      %v2890 = vadd.f32 %v2523, %v2850
      %v2891 = vadd.f32 %v2524, %v2855
      %v2892 = vadd.f32 %v2525, %v2860
      %v2893 = vld [vmem:[#allocation2 + $0x38] sm:$0xff]
      %v2894 = vld [vmem:[#allocation2 + $0x40] sm:$0xff]
      %v2895 = vld [vmem:[#allocation2 + $0x48] sm:$0xff]
      %v2896 = vld [vmem:[#allocation2 + $0x50] sm:$0xff]
      %v2897 = vld [vmem:[#allocation2 + $0x58] sm:$0xff]
      %v2898 = vld [vmem:[#allocation2 + $0x60] sm:$0xff]
      %v2899 = vld [vmem:[#allocation2 + $0x68] sm:$0xff]
      %v2900 = vld [vmem:[#allocation2 + $0x70] sm:$0xff]
      %v2901 = vld [vmem:[#allocation2 + $0x78] sm:$0xff]
      %v2902 = vld [vmem:[#allocation2 + $0x80] sm:$0xff]
      %v2903 = vld [vmem:[#allocation2 + $0x88] sm:$0xff]
      %v2904 = vld [vmem:[#allocation2 + $0x90] sm:$0xff]
      %v2905 = vld [vmem:[#allocation2 + $0x98] sm:$0xff]
      %v2906 = vld [vmem:[#allocation2 + $0xa0] sm:$0xff]
      %v2907 = vld [vmem:[#allocation2 + $0xa8] sm:$0xff]
      %v2908 = vld [vmem:[#allocation2 + $0xb0] sm:$0xff]
      %v2909 = vld [vmem:[#allocation2 + $0xb8] sm:$0xff]
      %v2910 = vld [vmem:[#allocation2 + $0xc0] sm:$0xff]
      %v2911 = vld [vmem:[#allocation2 + $0xc8] sm:$0xff]
      %v2912 = vld [vmem:[#allocation2 + $0xd0] sm:$0xff]
      %v2913 = vld [vmem:[#allocation2 + $0xd8] sm:$0xff]
      %v2914 = vld [vmem:[#allocation2 + $0xe0] sm:$0xff]
      %v2915 = vld [vmem:[#allocation2 + $0xe8] sm:$0xff]
      %v2916 = vld [vmem:[#allocation2 + $0xf0] sm:$0xff]
      %v2917 = vld [vmem:[#allocation2 + $0xf8] sm:$0xff]
      %v2918 = vld [vmem:[#allocation2 + $0x100] sm:$0xff]
      %v2919 = vld [vmem:[#allocation2 + $0x108] sm:$0xff]
      %v2920 = vld [vmem:[#allocation2 + $0x110] sm:$0xff]
      %v2921 = vld [vmem:[#allocation2 + $0x118] sm:$0xff]
      %v2922 = vld [vmem:[#allocation2 + $0x120] sm:$0xff]
      %s2923 = scalar_lea.vmem %s1, 56
      %v2924 = vld [vmem:[%s2923] sm:$0xff]
      %v2926 = vsel %vm251, %v2893, 0
      %v2929 = vsel %vm251, %v2894, 0
      %v2932 = vsel %vm251, %v2895, 0
      %v2935 = vsel %vm251, %v2896, 0
      %v2938 = vsel %vm251, %v2897, 0
      %v2941 = vsel %vm251, %v2898, 0
      %v2944 = vsel %vm251, %v2899, 0
      %v2947 = vsel %vm251, %v2900, 0
      %v2950 = vsel %vm251, %v2901, 0
      %v2953 = vsel %vm251, %v2902, 0
      %v2956 = vsel %vm251, %v2903, 0
      %v2959 = vsel %vm251, %v2904, 0
      %v2962 = vsel %vm251, %v2905, 0
      %v2965 = vsel %vm251, %v2906, 0
      %v2968 = vsel %vm251, %v2907, 0
      %v2971 = vsel %vm251, %v2908, 0
      %v2974 = vsel %vm251, %v2909, 0
      %v2977 = vsel %vm251, %v2910, 0
      %v2980 = vsel %vm251, %v2911, 0
      %v2983 = vsel %vm251, %v2912, 0
      %v2986 = vsel %vm251, %v2913, 0
      %v2989 = vsel %vm251, %v2914, 0
      %v2992 = vsel %vm251, %v2915, 0
      %v2995 = vsel %vm251, %v2916, 0
      %v2998 = vsel %vm251, %v2917, 0
      %v3001 = vsel %vm251, %v2918, 0
      %v3004 = vsel %vm251, %v2919, 0
      %v3007 = vsel %vm251, %v2920, 0
      %v3010 = vsel %vm251, %v2921, 0
      %v3013 = vsel %vm251, %v2922, 0
      %3015 = vmatprep.subr.mxu0 0.0
      %3016 = vmatpush1.msra.mxu0 %v2924
      %3017 = vmatprep.subr.mxu0 0.0
      %3018 = vmatpush1.msra.mxu0 0.0
      %3019 = vmatprep.subr.mxu0 0.0
      %3020 = vmatpush1.msra.mxu0 0.0
      %3021 = vmatprep.subr.mxu0 0.0
      %3022 = vmatpush1.msra.mxu0 0.0
      %3023 = vmatprep.subr.mxu0 0.0
      %3024 = vmatpush1.msra.mxu0 0.0
      %3025 = vmatprep.subr.mxu0 0.0
      %3026 = vmatpush1.msra.mxu0 0.0
      %3027 = vmatprep.subr.mxu0 0.0
      %3028 = vmatpush1.msra.mxu0 0.0
      %3029 = vmatprep.subr.mxu0 0.0
      %3030 = vmatpush1.msra.mxu0 0.0
      %3031 = vmatprep.subr.mxu0 0.0
      %3032 = vmatpush1.msra.mxu0 0.0
      %3033 = vmatprep.subr.mxu0 0.0
      %3034 = vmatpush1.msra.mxu0 0.0
      %3035 = vmatprep.subr.mxu0 0.0
      %3036 = vmatpush1.msra.mxu0 0.0
      %3037 = vmatprep.subr.mxu0 0.0
      %3038 = vmatpush1.msra.mxu0 0.0
      %3039 = vmatprep.subr.mxu0 0.0
      %3040 = vmatpush1.msra.mxu0 0.0
      %3041 = vmatprep.subr.mxu0 0.0
      %3042 = vmatpush1.msra.mxu0 0.0
      %3043 = vmatprep.subr.mxu0 0.0
      %3044 = vmatpush1.msra.mxu0 0.0
      %3045 = vmatprep.subr.mxu0 0.0
      %3046 = vmatpush1.msra.mxu0 0.0
      %3047 = vmatprep.subr.mxu0 0.0
      %3048 = vmatpush1.msra.mxu0 0.0
      %3049 = vmatprep.subr.mxu0 0.0
      %3050 = vmatpush1.msra.mxu0 0.0
      %3051 = vmatprep.subr.mxu0 0.0
      %3052 = vmatpush1.msra.mxu0 0.0
      %3053 = vmatprep.subr.mxu0 0.0
      %3054 = vmatpush1.msra.mxu0 0.0
      %3055 = vmatprep.subr.mxu0 0.0
      %3056 = vmatpush1.msra.mxu0 0.0
      %3057 = vmatprep.subr.mxu0 0.0
      %3058 = vmatpush1.msra.mxu0 0.0
      %3059 = vmatprep.subr.mxu0 0.0
      %3060 = vmatpush1.msra.mxu0 0.0
      %3061 = vmatprep.subr.mxu0 0.0
      %3062 = vmatpush1.msra.mxu0 0.0
      %3063 = vmatprep.subr.mxu0 0.0
      %3064 = vmatpush1.msra.mxu0 0.0
      %3065 = vmatprep.subr.mxu0 0.0
      %3066 = vmatpush1.msra.mxu0 0.0
      %3067 = vmatprep.subr.mxu0 0.0
      %3068 = vmatpush1.msra.mxu0 0.0
      %3069 = vmatprep.subr.mxu0 0.0
      %3070 = vmatpush1.msra.mxu0 0.0
      %3071 = vmatprep.subr.mxu0 0.0
      %3072 = vmatpush1.msra.mxu0 0.0
      %3073 = vmatprep.subr.mxu0 0.0
      %3074 = vmatpush1.msra.mxu0 0.0
      %3075 = vmatprep.subr.mxu0 0.0
      %3076 = vmatpush1.msra.mxu0 0.0
      %3077 = vmatprep.subr.mxu0 0.0
      %3078 = vmatpush1.msra.mxu0 0.0
      %3079 = vmatprep.mubr.f32.mxu0 0.0
      %3080 = vmatmul.mubr.f32.gmra.mrb[0].mxu0 %v2926
      %v3081 = vpop.f32.mrb[0].mxu0
      %v3082 = vadd.f32 0.0, %v3081
      %v3083 = vpop.f32.mrb[0].mxu0
      %3084 = vmatprep.mubr.f32.mxu0 0.0
      %3085 = vmatmul.mubr.f32.gmra.mrb[0].mxu0 %v2929
      %v3086 = vpop.f32.mrb[0].mxu0
      %v3087 = vadd.f32 0.0, %v3086
      %v3088 = vpop.f32.mrb[0].mxu0
      %3089 = vmatprep.mubr.f32.mxu0 0.0
      %3090 = vmatmul.mubr.f32.gmra.mrb[0].mxu0 %v2932
      %v3091 = vpop.f32.mrb[0].mxu0
      %v3092 = vadd.f32 0.0, %v3091
      %v3093 = vpop.f32.mrb[0].mxu0
      %3094 = vmatprep.mubr.f32.mxu0 0.0
      %3095 = vmatmul.mubr.f32.gmra.mrb[0].mxu0 %v2935
      %v3096 = vpop.f32.mrb[0].mxu0
      %v3097 = vadd.f32 0.0, %v3096
      %v3098 = vpop.f32.mrb[0].mxu0
      %3099 = vmatprep.mubr.f32.mxu0 0.0
      %3100 = vmatmul.mubr.f32.gmra.mrb[0].mxu0 %v2938
      %v3101 = vpop.f32.mrb[0].mxu0
      %v3102 = vadd.f32 0.0, %v3101
      %v3103 = vpop.f32.mrb[0].mxu0
      %3104 = vmatprep.mubr.f32.mxu0 0.0
      %3105 = vmatmul.mubr.f32.gmra.mrb[0].mxu0 %v2941
      %v3106 = vpop.f32.mrb[0].mxu0
      %v3107 = vadd.f32 0.0, %v3106
      %v3108 = vpop.f32.mrb[0].mxu0
      %3109 = vmatprep.mubr.f32.mxu0 0.0
      %3110 = vmatmul.mubr.f32.gmra.mrb[0].mxu0 %v2944
      %v3111 = vpop.f32.mrb[0].mxu0
      %v3112 = vadd.f32 0.0, %v3111
      %v3113 = vpop.f32.mrb[0].mxu0
      %3114 = vmatprep.mubr.f32.mxu0 0.0
      %3115 = vmatmul.mubr.f32.gmra.mrb[0].mxu0 %v2947
      %v3116 = vpop.f32.mrb[0].mxu0
      %v3117 = vadd.f32 0.0, %v3116
      %v3118 = vpop.f32.mrb[0].mxu0
      %3119 = vmatprep.mubr.f32.mxu0 0.0
      %3120 = vmatmul.mubr.f32.gmra.mrb[0].mxu0 %v2950
      %v3121 = vpop.f32.mrb[0].mxu0
      %v3122 = vadd.f32 0.0, %v3121
      %v3123 = vpop.f32.mrb[0].mxu0
      %3124 = vmatprep.mubr.f32.mxu0 0.0
      %3125 = vmatmul.mubr.f32.gmra.mrb[0].mxu0 %v2953
      %v3126 = vpop.f32.mrb[0].mxu0
      %v3127 = vadd.f32 0.0, %v3126
      %v3128 = vpop.f32.mrb[0].mxu0
      %3129 = vmatprep.mubr.f32.mxu0 0.0
      %3130 = vmatmul.mubr.f32.gmra.mrb[0].mxu0 %v2956
      %v3131 = vpop.f32.mrb[0].mxu0
      %v3132 = vadd.f32 0.0, %v3131
      %v3133 = vpop.f32.mrb[0].mxu0
      %3134 = vmatprep.mubr.f32.mxu0 0.0
      %3135 = vmatmul.mubr.f32.gmra.mrb[0].mxu0 %v2959
      %v3136 = vpop.f32.mrb[0].mxu0
      %v3137 = vadd.f32 0.0, %v3136
      %v3138 = vpop.f32.mrb[0].mxu0
      %3139 = vmatprep.mubr.f32.mxu0 0.0
      %3140 = vmatmul.mubr.f32.gmra.mrb[0].mxu0 %v2962
      %v3141 = vpop.f32.mrb[0].mxu0
      %v3142 = vadd.f32 0.0, %v3141
      %v3143 = vpop.f32.mrb[0].mxu0
      %3144 = vmatprep.mubr.f32.mxu0 0.0
      %3145 = vmatmul.mubr.f32.gmra.mrb[0].mxu0 %v2965
      %v3146 = vpop.f32.mrb[0].mxu0
      %v3147 = vadd.f32 0.0, %v3146
      %v3148 = vpop.f32.mrb[0].mxu0
      %3149 = vmatprep.mubr.f32.mxu0 0.0
      %3150 = vmatmul.mubr.f32.gmra.mrb[0].mxu0 %v2968
      %v3151 = vpop.f32.mrb[0].mxu0
      %v3152 = vadd.f32 0.0, %v3151
      %v3153 = vpop.f32.mrb[0].mxu0
      %3154 = vmatprep.mubr.f32.mxu0 0.0
      %3155 = vmatmul.mubr.f32.gmra.mrb[0].mxu0 %v2971
      %v3156 = vpop.f32.mrb[0].mxu0
      %v3157 = vadd.f32 0.0, %v3156
      %v3158 = vpop.f32.mrb[0].mxu0
      %3159 = vmatprep.mubr.f32.mxu0 0.0
      %3160 = vmatmul.mubr.f32.gmra.mrb[0].mxu0 %v2974
      %v3161 = vpop.f32.mrb[0].mxu0
      %v3162 = vadd.f32 0.0, %v3161
      %v3163 = vpop.f32.mrb[0].mxu0
      %3164 = vmatprep.mubr.f32.mxu0 0.0
      %3165 = vmatmul.mubr.f32.gmra.mrb[0].mxu0 %v2977
      %v3166 = vpop.f32.mrb[0].mxu0
      %v3167 = vadd.f32 0.0, %v3166
      %v3168 = vpop.f32.mrb[0].mxu0
      %3169 = vmatprep.mubr.f32.mxu0 0.0
      %3170 = vmatmul.mubr.f32.gmra.mrb[0].mxu0 %v2980
      %v3171 = vpop.f32.mrb[0].mxu0
      %v3172 = vadd.f32 0.0, %v3171
      %v3173 = vpop.f32.mrb[0].mxu0
      %3174 = vmatprep.mubr.f32.mxu0 0.0
      %3175 = vmatmul.mubr.f32.gmra.mrb[0].mxu0 %v2983
      %v3176 = vpop.f32.mrb[0].mxu0
      %v3177 = vadd.f32 0.0, %v3176
      %v3178 = vpop.f32.mrb[0].mxu0
      %3179 = vmatprep.mubr.f32.mxu0 0.0
      %3180 = vmatmul.mubr.f32.gmra.mrb[0].mxu0 %v2986
      %v3181 = vpop.f32.mrb[0].mxu0
      %v3182 = vadd.f32 0.0, %v3181
      %v3183 = vpop.f32.mrb[0].mxu0
      %3184 = vmatprep.mubr.f32.mxu0 0.0
      %3185 = vmatmul.mubr.f32.gmra.mrb[0].mxu0 %v2989
      %v3186 = vpop.f32.mrb[0].mxu0
      %v3187 = vadd.f32 0.0, %v3186
      %v3188 = vpop.f32.mrb[0].mxu0
      %3189 = vmatprep.mubr.f32.mxu0 0.0
      %3190 = vmatmul.mubr.f32.gmra.mrb[0].mxu0 %v2992
      %v3191 = vpop.f32.mrb[0].mxu0
      %v3192 = vadd.f32 0.0, %v3191
      %v3193 = vpop.f32.mrb[0].mxu0
      %3194 = vmatprep.mubr.f32.mxu0 0.0
      %3195 = vmatmul.mubr.f32.gmra.mrb[0].mxu0 %v2995
      %v3196 = vpop.f32.mrb[0].mxu0
      %v3197 = vadd.f32 0.0, %v3196
      %v3198 = vpop.f32.mrb[0].mxu0
      %3199 = vmatprep.mubr.f32.mxu0 0.0
      %3200 = vmatmul.mubr.f32.gmra.mrb[0].mxu0 %v2998
      %v3201 = vpop.f32.mrb[0].mxu0
      %v3202 = vadd.f32 0.0, %v3201
      %v3203 = vpop.f32.mrb[0].mxu0
      %3204 = vmatprep.mubr.f32.mxu0 0.0
      %3205 = vmatmul.mubr.f32.gmra.mrb[0].mxu0 %v3001
      %v3206 = vpop.f32.mrb[0].mxu0
      %v3207 = vadd.f32 0.0, %v3206
      %v3208 = vpop.f32.mrb[0].mxu0
      %3209 = vmatprep.mubr.f32.mxu0 0.0
      %3210 = vmatmul.mubr.f32.gmra.mrb[0].mxu0 %v3004
      %v3211 = vpop.f32.mrb[0].mxu0
      %v3212 = vadd.f32 0.0, %v3211
      %v3213 = vpop.f32.mrb[0].mxu0
      %3214 = vmatprep.mubr.f32.mxu0 0.0
      %3215 = vmatmul.mubr.f32.gmra.mrb[0].mxu0 %v3007
      %v3216 = vpop.f32.mrb[0].mxu0
      %v3217 = vadd.f32 0.0, %v3216
      %v3218 = vpop.f32.mrb[0].mxu0
      %3219 = vmatprep.mubr.f32.mxu0 0.0
      %3220 = vmatmul.mubr.f32.gmra.mrb[0].mxu0 %v3010
      %v3221 = vpop.f32.mrb[0].mxu0
      %v3222 = vadd.f32 0.0, %v3221
      %v3223 = vpop.f32.mrb[0].mxu0
      %3224 = vmatprep.mubr.f32.mxu0 0.0
      %3225 = vmatmul.mubr.f32.gmra.mrb[0].mxu0 %v3013
      %v3226 = vpop.f32.mrb[0].mxu0
      %v3227 = vadd.f32 0.0, %v3226
      %v3228 = vpop.f32.mrb[0].mxu0
      %3229 = vdwg.mxu0
      %v3230 = vadd.f32 %v2863, %v3082
      %v3231 = vadd.f32 %v2864, %v3087
      %v3232 = vadd.f32 %v2865, %v3092
      %v3233 = vadd.f32 %v2866, %v3097
      %v3234 = vadd.f32 %v2867, %v3102
      %v3235 = vadd.f32 %v2868, %v3107
      %v3236 = vadd.f32 %v2869, %v3112
      %v3237 = vadd.f32 %v2870, %v3117
      %v3238 = vadd.f32 %v2871, %v3122
      %v3239 = vadd.f32 %v2872, %v3127
      %v3240 = vadd.f32 %v2873, %v3132
      %v3241 = vadd.f32 %v2874, %v3137
      %v3242 = vadd.f32 %v2875, %v3142
      %v3243 = vadd.f32 %v2876, %v3147
      %v3244 = vadd.f32 %v2877, %v3152
      %v3245 = vadd.f32 %v2878, %v3157
      %v3246 = vadd.f32 %v2879, %v3162
      %v3247 = vadd.f32 %v2880, %v3167
      %v3248 = vadd.f32 %v2881, %v3172
      %v3249 = vadd.f32 %v2882, %v3177
      %v3250 = vadd.f32 %v2883, %v3182
      %v3251 = vadd.f32 %v2884, %v3187
      %v3252 = vadd.f32 %v2885, %v3192
      %v3253 = vadd.f32 %v2886, %v3197
      %v3254 = vadd.f32 %v2887, %v3202
      %v3255 = vadd.f32 %v2888, %v3207
      %v3256 = vadd.f32 %v2889, %v3212
      %v3257 = vadd.f32 %v2890, %v3217
      %v3258 = vadd.f32 %v2891, %v3222
      %v3259 = vadd.f32 %v2892, %v3227
      %v3260 = vld [vmem:[#allocation2 + $0x39] sm:$0xff]
      %v3261 = vld [vmem:[#allocation2 + $0x41] sm:$0xff]
      %v3262 = vld [vmem:[#allocation2 + $0x49] sm:$0xff]
      %v3263 = vld [vmem:[#allocation2 + $0x51] sm:$0xff]
      %v3264 = vld [vmem:[#allocation2 + $0x59] sm:$0xff]
      %v3265 = vld [vmem:[#allocation2 + $0x61] sm:$0xff]
      %v3266 = vld [vmem:[#allocation2 + $0x69] sm:$0xff]
      %v3267 = vld [vmem:[#allocation2 + $0x71] sm:$0xff]
      %v3268 = vld [vmem:[#allocation2 + $0x79] sm:$0xff]
      %v3269 = vld [vmem:[#allocation2 + $0x81] sm:$0xff]
      %v3270 = vld [vmem:[#allocation2 + $0x89] sm:$0xff]
      %v3271 = vld [vmem:[#allocation2 + $0x91] sm:$0xff]
      %v3272 = vld [vmem:[#allocation2 + $0x99] sm:$0xff]
      %v3273 = vld [vmem:[#allocation2 + $0xa1] sm:$0xff]
      %v3274 = vld [vmem:[#allocation2 + $0xa9] sm:$0xff]
      %v3275 = vld [vmem:[#allocation2 + $0xb1] sm:$0xff]
      %v3276 = vld [vmem:[#allocation2 + $0xb9] sm:$0xff]
      %v3277 = vld [vmem:[#allocation2 + $0xc1] sm:$0xff]
      %v3278 = vld [vmem:[#allocation2 + $0xc9] sm:$0xff]
      %v3279 = vld [vmem:[#allocation2 + $0xd1] sm:$0xff]
      %v3280 = vld [vmem:[#allocation2 + $0xd9] sm:$0xff]
      %v3281 = vld [vmem:[#allocation2 + $0xe1] sm:$0xff]
      %v3282 = vld [vmem:[#allocation2 + $0xe9] sm:$0xff]
      %v3283 = vld [vmem:[#allocation2 + $0xf1] sm:$0xff]
      %v3284 = vld [vmem:[#allocation2 + $0xf9] sm:$0xff]
      %v3285 = vld [vmem:[#allocation2 + $0x101] sm:$0xff]
      %v3286 = vld [vmem:[#allocation2 + $0x109] sm:$0xff]
      %v3287 = vld [vmem:[#allocation2 + $0x111] sm:$0xff]
      %v3288 = vld [vmem:[#allocation2 + $0x119] sm:$0xff]
      %v3289 = vld [vmem:[#allocation2 + $0x121] sm:$0xff]
      %s3290 = scalar_lea.vmem %s1, 64
      %v3291 = vld [vmem:[%s3290] sm:$0xff]
      %v3293 = vsel %vm251, %v3260, 0
      %v3296 = vsel %vm251, %v3261, 0
      %v3299 = vsel %vm251, %v3262, 0
      %v3302 = vsel %vm251, %v3263, 0
      %v3305 = vsel %vm251, %v3264, 0
      %v3308 = vsel %vm251, %v3265, 0
      %v3311 = vsel %vm251, %v3266, 0
      %v3314 = vsel %vm251, %v3267, 0
      %v3317 = vsel %vm251, %v3268, 0
      %v3320 = vsel %vm251, %v3269, 0
      %v3323 = vsel %vm251, %v3270, 0
      %v3326 = vsel %vm251, %v3271, 0
      %v3329 = vsel %vm251, %v3272, 0
      %v3332 = vsel %vm251, %v3273, 0
      %v3335 = vsel %vm251, %v3274, 0
      %v3338 = vsel %vm251, %v3275, 0
      %v3341 = vsel %vm251, %v3276, 0
      %v3344 = vsel %vm251, %v3277, 0
      %v3347 = vsel %vm251, %v3278, 0
      %v3350 = vsel %vm251, %v3279, 0
      %v3353 = vsel %vm251, %v3280, 0
      %v3356 = vsel %vm251, %v3281, 0
      %v3359 = vsel %vm251, %v3282, 0
      %v3362 = vsel %vm251, %v3283, 0
      %v3365 = vsel %vm251, %v3284, 0
      %v3368 = vsel %vm251, %v3285, 0
      %v3371 = vsel %vm251, %v3286, 0
      %v3374 = vsel %vm251, %v3287, 0
      %v3377 = vsel %vm251, %v3288, 0
      %v3380 = vsel %vm251, %v3289, 0
      %3382 = vmatprep.subr.mxu0 0.0
      %3383 = vmatpush1.msra.mxu0 %v3291
      %3384 = vmatprep.subr.mxu0 0.0
      %3385 = vmatpush1.msra.mxu0 0.0
      %3386 = vmatprep.subr.mxu0 0.0
      %3387 = vmatpush1.msra.mxu0 0.0
      %3388 = vmatprep.subr.mxu0 0.0
      %3389 = vmatpush1.msra.mxu0 0.0
      %3390 = vmatprep.subr.mxu0 0.0
      %3391 = vmatpush1.msra.mxu0 0.0
      %3392 = vmatprep.subr.mxu0 0.0
      %3393 = vmatpush1.msra.mxu0 0.0
      %3394 = vmatprep.subr.mxu0 0.0
      %3395 = vmatpush1.msra.mxu0 0.0
      %3396 = vmatprep.subr.mxu0 0.0
      %3397 = vmatpush1.msra.mxu0 0.0
      %3398 = vmatprep.subr.mxu0 0.0
      %3399 = vmatpush1.msra.mxu0 0.0
      %3400 = vmatprep.subr.mxu0 0.0
      %3401 = vmatpush1.msra.mxu0 0.0
      %3402 = vmatprep.subr.mxu0 0.0
      %3403 = vmatpush1.msra.mxu0 0.0
      %3404 = vmatprep.subr.mxu0 0.0
      %3405 = vmatpush1.msra.mxu0 0.0
      %3406 = vmatprep.subr.mxu0 0.0
      %3407 = vmatpush1.msra.mxu0 0.0
      %3408 = vmatprep.subr.mxu0 0.0
      %3409 = vmatpush1.msra.mxu0 0.0
      %3410 = vmatprep.subr.mxu0 0.0
      %3411 = vmatpush1.msra.mxu0 0.0
      %3412 = vmatprep.subr.mxu0 0.0
      %3413 = vmatpush1.msra.mxu0 0.0
      %3414 = vmatprep.subr.mxu0 0.0
      %3415 = vmatpush1.msra.mxu0 0.0
      %3416 = vmatprep.subr.mxu0 0.0
      %3417 = vmatpush1.msra.mxu0 0.0
      %3418 = vmatprep.subr.mxu0 0.0
      %3419 = vmatpush1.msra.mxu0 0.0
      %3420 = vmatprep.subr.mxu0 0.0
      %3421 = vmatpush1.msra.mxu0 0.0
      %3422 = vmatprep.subr.mxu0 0.0
      %3423 = vmatpush1.msra.mxu0 0.0
      %3424 = vmatprep.subr.mxu0 0.0
      %3425 = vmatpush1.msra.mxu0 0.0
      %3426 = vmatprep.subr.mxu0 0.0
      %3427 = vmatpush1.msra.mxu0 0.0
      %3428 = vmatprep.subr.mxu0 0.0
      %3429 = vmatpush1.msra.mxu0 0.0
      %3430 = vmatprep.subr.mxu0 0.0
      %3431 = vmatpush1.msra.mxu0 0.0
      %3432 = vmatprep.subr.mxu0 0.0
      %3433 = vmatpush1.msra.mxu0 0.0
      %3434 = vmatprep.subr.mxu0 0.0
      %3435 = vmatpush1.msra.mxu0 0.0
      %3436 = vmatprep.subr.mxu0 0.0
      %3437 = vmatpush1.msra.mxu0 0.0
      %3438 = vmatprep.subr.mxu0 0.0
      %3439 = vmatpush1.msra.mxu0 0.0
      %3440 = vmatprep.subr.mxu0 0.0
      %3441 = vmatpush1.msra.mxu0 0.0
      %3442 = vmatprep.subr.mxu0 0.0
      %3443 = vmatpush1.msra.mxu0 0.0
      %3444 = vmatprep.subr.mxu0 0.0
      %3445 = vmatpush1.msra.mxu0 0.0
      %3446 = vmatprep.mubr.f32.mxu0 0.0
      %3447 = vmatmul.mubr.f32.gmra.mrb[0].mxu0 %v3293
      %v3448 = vpop.f32.mrb[0].mxu0
      %v3449 = vadd.f32 0.0, %v3448
      %v3450 = vpop.f32.mrb[0].mxu0
      %3451 = vmatprep.mubr.f32.mxu0 0.0
      %3452 = vmatmul.mubr.f32.gmra.mrb[0].mxu0 %v3296
      %v3453 = vpop.f32.mrb[0].mxu0
      %v3454 = vadd.f32 0.0, %v3453
      %v3455 = vpop.f32.mrb[0].mxu0
      %3456 = vmatprep.mubr.f32.mxu0 0.0
      %3457 = vmatmul.mubr.f32.gmra.mrb[0].mxu0 %v3299
      %v3458 = vpop.f32.mrb[0].mxu0
      %v3459 = vadd.f32 0.0, %v3458
      %v3460 = vpop.f32.mrb[0].mxu0
      %3461 = vmatprep.mubr.f32.mxu0 0.0
      %3462 = vmatmul.mubr.f32.gmra.mrb[0].mxu0 %v3302
      %v3463 = vpop.f32.mrb[0].mxu0
      %v3464 = vadd.f32 0.0, %v3463
      %v3465 = vpop.f32.mrb[0].mxu0
      %3466 = vmatprep.mubr.f32.mxu0 0.0
      %3467 = vmatmul.mubr.f32.gmra.mrb[0].mxu0 %v3305
      %v3468 = vpop.f32.mrb[0].mxu0
      %v3469 = vadd.f32 0.0, %v3468
      %v3470 = vpop.f32.mrb[0].mxu0
      %3471 = vmatprep.mubr.f32.mxu0 0.0
      %3472 = vmatmul.mubr.f32.gmra.mrb[0].mxu0 %v3308
      %v3473 = vpop.f32.mrb[0].mxu0
      %v3474 = vadd.f32 0.0, %v3473
      %v3475 = vpop.f32.mrb[0].mxu0
      %3476 = vmatprep.mubr.f32.mxu0 0.0
      %3477 = vmatmul.mubr.f32.gmra.mrb[0].mxu0 %v3311
      %v3478 = vpop.f32.mrb[0].mxu0
      %v3479 = vadd.f32 0.0, %v3478
      %v3480 = vpop.f32.mrb[0].mxu0
      %3481 = vmatprep.mubr.f32.mxu0 0.0
      %3482 = vmatmul.mubr.f32.gmra.mrb[0].mxu0 %v3314
      %v3483 = vpop.f32.mrb[0].mxu0
      %v3484 = vadd.f32 0.0, %v3483
      %v3485 = vpop.f32.mrb[0].mxu0
      %3486 = vmatprep.mubr.f32.mxu0 0.0
      %3487 = vmatmul.mubr.f32.gmra.mrb[0].mxu0 %v3317
      %v3488 = vpop.f32.mrb[0].mxu0
      %v3489 = vadd.f32 0.0, %v3488
      %v3490 = vpop.f32.mrb[0].mxu0
      %3491 = vmatprep.mubr.f32.mxu0 0.0
      %3492 = vmatmul.mubr.f32.gmra.mrb[0].mxu0 %v3320
      %v3493 = vpop.f32.mrb[0].mxu0
      %v3494 = vadd.f32 0.0, %v3493
      %v3495 = vpop.f32.mrb[0].mxu0
      %3496 = vmatprep.mubr.f32.mxu0 0.0
      %3497 = vmatmul.mubr.f32.gmra.mrb[0].mxu0 %v3323
      %v3498 = vpop.f32.mrb[0].mxu0
      %v3499 = vadd.f32 0.0, %v3498
      %v3500 = vpop.f32.mrb[0].mxu0
      %3501 = vmatprep.mubr.f32.mxu0 0.0
      %3502 = vmatmul.mubr.f32.gmra.mrb[0].mxu0 %v3326
      %v3503 = vpop.f32.mrb[0].mxu0
      %v3504 = vadd.f32 0.0, %v3503
      %v3505 = vpop.f32.mrb[0].mxu0
      %3506 = vmatprep.mubr.f32.mxu0 0.0
      %3507 = vmatmul.mubr.f32.gmra.mrb[0].mxu0 %v3329
      %v3508 = vpop.f32.mrb[0].mxu0
      %v3509 = vadd.f32 0.0, %v3508
      %v3510 = vpop.f32.mrb[0].mxu0
      %3511 = vmatprep.mubr.f32.mxu0 0.0
      %3512 = vmatmul.mubr.f32.gmra.mrb[0].mxu0 %v3332
      %v3513 = vpop.f32.mrb[0].mxu0
      %v3514 = vadd.f32 0.0, %v3513
      %v3515 = vpop.f32.mrb[0].mxu0
      %3516 = vmatprep.mubr.f32.mxu0 0.0
      %3517 = vmatmul.mubr.f32.gmra.mrb[0].mxu0 %v3335
      %v3518 = vpop.f32.mrb[0].mxu0
      %v3519 = vadd.f32 0.0, %v3518
      %v3520 = vpop.f32.mrb[0].mxu0
      %3521 = vmatprep.mubr.f32.mxu0 0.0
      %3522 = vmatmul.mubr.f32.gmra.mrb[0].mxu0 %v3338
      %v3523 = vpop.f32.mrb[0].mxu0
      %v3524 = vadd.f32 0.0, %v3523
      %v3525 = vpop.f32.mrb[0].mxu0
      %3526 = vmatprep.mubr.f32.mxu0 0.0
      %3527 = vmatmul.mubr.f32.gmra.mrb[0].mxu0 %v3341
      %v3528 = vpop.f32.mrb[0].mxu0
      %v3529 = vadd.f32 0.0, %v3528
      %v3530 = vpop.f32.mrb[0].mxu0
      %3531 = vmatprep.mubr.f32.mxu0 0.0
      %3532 = vmatmul.mubr.f32.gmra.mrb[0].mxu0 %v3344
      %v3533 = vpop.f32.mrb[0].mxu0
      %v3534 = vadd.f32 0.0, %v3533
      %v3535 = vpop.f32.mrb[0].mxu0
      %3536 = vmatprep.mubr.f32.mxu0 0.0
      %3537 = vmatmul.mubr.f32.gmra.mrb[0].mxu0 %v3347
      %v3538 = vpop.f32.mrb[0].mxu0
      %v3539 = vadd.f32 0.0, %v3538
      %v3540 = vpop.f32.mrb[0].mxu0
      %3541 = vmatprep.mubr.f32.mxu0 0.0
      %3542 = vmatmul.mubr.f32.gmra.mrb[0].mxu0 %v3350
      %v3543 = vpop.f32.mrb[0].mxu0
      %v3544 = vadd.f32 0.0, %v3543
      %v3545 = vpop.f32.mrb[0].mxu0
      %3546 = vmatprep.mubr.f32.mxu0 0.0
      %3547 = vmatmul.mubr.f32.gmra.mrb[0].mxu0 %v3353
      %v3548 = vpop.f32.mrb[0].mxu0
      %v3549 = vadd.f32 0.0, %v3548
      %v3550 = vpop.f32.mrb[0].mxu0
      %3551 = vmatprep.mubr.f32.mxu0 0.0
      %3552 = vmatmul.mubr.f32.gmra.mrb[0].mxu0 %v3356
      %v3553 = vpop.f32.mrb[0].mxu0
      %v3554 = vadd.f32 0.0, %v3553
      %v3555 = vpop.f32.mrb[0].mxu0
      %3556 = vmatprep.mubr.f32.mxu0 0.0
      %3557 = vmatmul.mubr.f32.gmra.mrb[0].mxu0 %v3359
      %v3558 = vpop.f32.mrb[0].mxu0
      %v3559 = vadd.f32 0.0, %v3558
      %v3560 = vpop.f32.mrb[0].mxu0
      %3561 = vmatprep.mubr.f32.mxu0 0.0
      %3562 = vmatmul.mubr.f32.gmra.mrb[0].mxu0 %v3362
      %v3563 = vpop.f32.mrb[0].mxu0
      %v3564 = vadd.f32 0.0, %v3563
      %v3565 = vpop.f32.mrb[0].mxu0
      %3566 = vmatprep.mubr.f32.mxu0 0.0
      %3567 = vmatmul.mubr.f32.gmra.mrb[0].mxu0 %v3365
      %v3568 = vpop.f32.mrb[0].mxu0
      %v3569 = vadd.f32 0.0, %v3568
      %v3570 = vpop.f32.mrb[0].mxu0
      %3571 = vmatprep.mubr.f32.mxu0 0.0
      %3572 = vmatmul.mubr.f32.gmra.mrb[0].mxu0 %v3368
      %v3573 = vpop.f32.mrb[0].mxu0
      %v3574 = vadd.f32 0.0, %v3573
      %v3575 = vpop.f32.mrb[0].mxu0
      %3576 = vmatprep.mubr.f32.mxu0 0.0
      %3577 = vmatmul.mubr.f32.gmra.mrb[0].mxu0 %v3371
      %v3578 = vpop.f32.mrb[0].mxu0
      %v3579 = vadd.f32 0.0, %v3578
      %v3580 = vpop.f32.mrb[0].mxu0
      %3581 = vmatprep.mubr.f32.mxu0 0.0
      %3582 = vmatmul.mubr.f32.gmra.mrb[0].mxu0 %v3374
      %v3583 = vpop.f32.mrb[0].mxu0
      %v3584 = vadd.f32 0.0, %v3583
      %v3585 = vpop.f32.mrb[0].mxu0
      %3586 = vmatprep.mubr.f32.mxu0 0.0
      %3587 = vmatmul.mubr.f32.gmra.mrb[0].mxu0 %v3377
      %v3588 = vpop.f32.mrb[0].mxu0
      %v3589 = vadd.f32 0.0, %v3588
      %v3590 = vpop.f32.mrb[0].mxu0
      %3591 = vmatprep.mubr.f32.mxu0 0.0
      %3592 = vmatmul.mubr.f32.gmra.mrb[0].mxu0 %v3380
      %v3593 = vpop.f32.mrb[0].mxu0
      %v3594 = vadd.f32 0.0, %v3593
      %v3595 = vpop.f32.mrb[0].mxu0
      %3596 = vdwg.mxu0
      %v3597 = vadd.f32 %v3230, %v3449
      %v3598 = vadd.f32 %v3231, %v3454
      %v3599 = vadd.f32 %v3232, %v3459
      %v3600 = vadd.f32 %v3233, %v3464
      %v3601 = vadd.f32 %v3234, %v3469
      %v3602 = vadd.f32 %v3235, %v3474
      %v3603 = vadd.f32 %v3236, %v3479
      %v3604 = vadd.f32 %v3237, %v3484
      %v3605 = vadd.f32 %v3238, %v3489
      %v3606 = vadd.f32 %v3239, %v3494
      %v3607 = vadd.f32 %v3240, %v3499
      %v3608 = vadd.f32 %v3241, %v3504
      %v3609 = vadd.f32 %v3242, %v3509
      %v3610 = vadd.f32 %v3243, %v3514
      %v3611 = vadd.f32 %v3244, %v3519
      %v3612 = vadd.f32 %v3245, %v3524
      %v3613 = vadd.f32 %v3246, %v3529
      %v3614 = vadd.f32 %v3247, %v3534
      %v3615 = vadd.f32 %v3248, %v3539
      %v3616 = vadd.f32 %v3249, %v3544
      %v3617 = vadd.f32 %v3250, %v3549
      %v3618 = vadd.f32 %v3251, %v3554
      %v3619 = vadd.f32 %v3252, %v3559
      %v3620 = vadd.f32 %v3253, %v3564
      %v3621 = vadd.f32 %v3254, %v3569
      %v3622 = vadd.f32 %v3255, %v3574
      %v3623 = vadd.f32 %v3256, %v3579
      %v3624 = vadd.f32 %v3257, %v3584
      %v3625 = vadd.f32 %v3258, %v3589
      %v3626 = vadd.f32 %v3259, %v3594
      %v3627 = vld [vmem:[%s3] sm:$0x1]
      %v3629 = vlaneseq
      %v3630 = vshrl.u32 %v3629, 7
      %v3631 = vsub.s32 0, %v3630
      %v3632 = vrot.slane %v3627, %v3631
      %v3634 = vadd.f32 %v3597, %v3632
      %v3635 = vadd.f32 %v3598, %v3632
      %v3636 = vadd.f32 %v3599, %v3632
      %v3637 = vadd.f32 %v3600, %v3632
      %v3638 = vadd.f32 %v3601, %v3632
      %v3639 = vadd.f32 %v3602, %v3632
      %v3640 = vadd.f32 %v3603, %v3632
      %v3641 = vadd.f32 %v3604, %v3632
      %v3642 = vadd.f32 %v3605, %v3632
      %v3643 = vadd.f32 %v3606, %v3632
      %v3644 = vadd.f32 %v3607, %v3632
      %v3645 = vadd.f32 %v3608, %v3632
      %v3646 = vadd.f32 %v3609, %v3632
      %v3647 = vadd.f32 %v3610, %v3632
      %v3648 = vadd.f32 %v3611, %v3632
      %v3649 = vadd.f32 %v3612, %v3632
      %v3650 = vadd.f32 %v3613, %v3632
      %v3651 = vadd.f32 %v3614, %v3632
      %v3652 = vadd.f32 %v3615, %v3632
      %v3653 = vadd.f32 %v3616, %v3632
      %v3654 = vadd.f32 %v3617, %v3632
      %v3655 = vadd.f32 %v3618, %v3632
      %v3656 = vadd.f32 %v3619, %v3632
      %v3657 = vadd.f32 %v3620, %v3632
      %v3658 = vadd.f32 %v3621, %v3632
      %v3659 = vadd.f32 %v3622, %v3632
      %v3660 = vadd.f32 %v3623, %v3632
      %v3661 = vadd.f32 %v3624, %v3632
      %v3662 = vadd.f32 %v3625, %v3632
      %v3663 = vadd.f32 %v3626, %v3632
      %v3664 = vmax.f32 %v3634, 0.0
      %v3665 = vmax.f32 %v3635, 0.0
      %v3666 = vmax.f32 %v3636, 0.0
      %v3667 = vmax.f32 %v3637, 0.0
      %v3668 = vmax.f32 %v3638, 0.0
      %v3669 = vmax.f32 %v3639, 0.0
      %v3670 = vmax.f32 %v3640, 0.0
      %v3671 = vmax.f32 %v3641, 0.0
      %v3672 = vmax.f32 %v3642, 0.0
      %v3673 = vmax.f32 %v3643, 0.0
      %v3674 = vmax.f32 %v3644, 0.0
      %v3675 = vmax.f32 %v3645, 0.0
      %v3676 = vmax.f32 %v3646, 0.0
      %v3677 = vmax.f32 %v3647, 0.0
      %v3678 = vmax.f32 %v3648, 0.0
      %v3679 = vmax.f32 %v3649, 0.0
      %v3680 = vmax.f32 %v3650, 0.0
      %v3681 = vmax.f32 %v3651, 0.0
      %v3682 = vmax.f32 %v3652, 0.0
      %v3683 = vmax.f32 %v3653, 0.0
      %v3684 = vmax.f32 %v3654, 0.0
      %v3685 = vmax.f32 %v3655, 0.0
      %v3686 = vmax.f32 %v3656, 0.0
      %v3687 = vmax.f32 %v3657, 0.0
      %v3688 = vmax.f32 %v3658, 0.0
      %v3689 = vmax.f32 %v3659, 0.0
      %v3690 = vmax.f32 %v3660, 0.0
      %v3691 = vmax.f32 %v3661, 0.0
      %v3692 = vmax.f32 %v3662, 0.0
      %v3693 = vmax.f32 %v3663, 0.0
      %3694 = vst.msk [vmem:[#allocation3] sm:$0xff] %vm251, 0.0
      %3695 = vst.msk [vmem:[#allocation3 + $0x8] sm:$0xff] %vm251, %v3664
      %3696 = vst.msk [vmem:[#allocation3 + $0x10] sm:$0xff] %vm251, %v3665
      %3697 = vst.msk [vmem:[#allocation3 + $0x18] sm:$0xff] %vm251, %v3666
      %3698 = vst.msk [vmem:[#allocation3 + $0x20] sm:$0xff] %vm251, %v3667
      %3699 = vst.msk [vmem:[#allocation3 + $0x28] sm:$0xff] %vm251, %v3668
      %3700 = vst.msk [vmem:[#allocation3 + $0x30] sm:$0xff] %vm251, %v3669
      %3701 = vst.msk [vmem:[#allocation3 + $0x38] sm:$0xff] %vm251, %v3670
      %3702 = vst.msk [vmem:[#allocation3 + $0x40] sm:$0xff] %vm251, %v3671
      %3703 = vst.msk [vmem:[#allocation3 + $0x48] sm:$0xff] %vm251, %v3672
      %3704 = vst.msk [vmem:[#allocation3 + $0x50] sm:$0xff] %vm251, %v3673
      %3705 = vst.msk [vmem:[#allocation3 + $0x58] sm:$0xff] %vm251, %v3674
      %3706 = vst.msk [vmem:[#allocation3 + $0x60] sm:$0xff] %vm251, %v3675
      %3707 = vst.msk [vmem:[#allocation3 + $0x68] sm:$0xff] %vm251, %v3676
      %3708 = vst.msk [vmem:[#allocation3 + $0x70] sm:$0xff] %vm251, %v3677
      %3709 = vst.msk [vmem:[#allocation3 + $0x78] sm:$0xff] %vm251, %v3678
      %3710 = vst.msk [vmem:[#allocation3 + $0x80] sm:$0xff] %vm251, %v3679
      %3711 = vst.msk [vmem:[#allocation3 + $0x88] sm:$0xff] %vm251, %v3680
      %3712 = vst.msk [vmem:[#allocation3 + $0x90] sm:$0xff] %vm251, %v3681
      %3713 = vst.msk [vmem:[#allocation3 + $0x98] sm:$0xff] %vm251, %v3682
      %3714 = vst.msk [vmem:[#allocation3 + $0xa0] sm:$0xff] %vm251, %v3683
      %3715 = vst.msk [vmem:[#allocation3 + $0xa8] sm:$0xff] %vm251, %v3684
      %3716 = vst.msk [vmem:[#allocation3 + $0xb0] sm:$0xff] %vm251, %v3685
      %3717 = vst.msk [vmem:[#allocation3 + $0xb8] sm:$0xff] %vm251, %v3686
      %3718 = vst.msk [vmem:[#allocation3 + $0xc0] sm:$0xff] %vm251, %v3687
      %3719 = vst.msk [vmem:[#allocation3 + $0xc8] sm:$0xff] %vm251, %v3688
      %3720 = vst.msk [vmem:[#allocation3 + $0xd0] sm:$0xff] %vm251, %v3689
      %3721 = vst.msk [vmem:[#allocation3 + $0xd8] sm:$0xff] %vm251, %v3690
      %3722 = vst.msk [vmem:[#allocation3 + $0xe0] sm:$0xff] %vm251, %v3691
      %3723 = vst.msk [vmem:[#allocation3 + $0xe8] sm:$0xff] %vm251, %v3692
      %3724 = vst.msk [vmem:[#allocation3 + $0xf0] sm:$0xff] %vm251, %v3693
      %3725 = vst.msk [vmem:[#allocation3 + $0xf8] sm:$0xff] %vm251, 0.0
      %3726 = vst.msk [vmem:[#allocation3 + $0x18] sm:$0xff] %vm251, 0.0
      %3727 = vst.msk [vmem:[#allocation3 + $0x30] sm:$0xff] %vm251, 0.0
      %3728 = vst.msk [vmem:[#allocation3 + $0x48] sm:$0xff] %vm251, 0.0
      %3729 = vst.msk [vmem:[#allocation3 + $0x60] sm:$0xff] %vm251, 0.0
      %3730 = vst.msk [vmem:[#allocation3 + $0x78] sm:$0xff] %vm251, 0.0
      %3731 = vst.msk [vmem:[#allocation3 + $0x90] sm:$0xff] %vm251, 0.0
      %3732 = vst.msk [vmem:[#allocation3 + $0xa8] sm:$0xff] %vm251, 0.0
      %3733 = vst.msk [vmem:[#allocation3 + $0xc0] sm:$0xff] %vm251, 0.0
      %3734 = vst.msk [vmem:[#allocation3 + $0xd8] sm:$0xff] %vm251, 0.0
      %3735 = vst.msk [vmem:[#allocation3 + $0xf0] sm:$0xff] %vm251, 0.0
      // Predicated region
      $region73: #{basic_block.1} parent=39 // pred_check
        %p3736 = pneg %p256
      $region74: #{basic_block.1} parent=39 // pred_check_branch
        %3738 = sbr.rel (%p3736) target = $region76
      $region75: #{basic_block.1} parent=39 // pred_region
        %3739 = vst.msk [vmem:[#allocation3 + $0x8] sm:$0xff] %vm251, 0.0
        %3740 = vst.msk [vmem:[#allocation3 + $0x10] sm:$0xff] %vm251, 0.0
      $region76: #{basic_block.1} parent=39 // pred_fallthru
        _
      // Predicated region
      $region77: #{basic_block.1} parent=39 // pred_check
        %p3741 = pneg %p353
      $region78: #{basic_block.1} parent=39 // pred_check_branch
        %3743 = sbr.rel (%p3741) target = $region80
      $region79: #{basic_block.1} parent=39 // pred_region
        %3744 = vst.msk [vmem:[#allocation3 + $0xe0] sm:$0xff] %vm251, 0.0
        %3745 = vst.msk [vmem:[#allocation3 + $0xe8] sm:$0xff] %vm251, 0.0
      $region80: #{basic_block.1} parent=39 // pred_fallthru
        _
      %v3746 = vld [vmem:[#allocation3 + $0x7] sm:$0xff]
      %v3747 = vld [vmem:[#allocation3 + $0xf] sm:$0xff]
      %v3748 = vld [vmem:[#allocation3 + $0x17] sm:$0xff]
      %v3749 = vld [vmem:[#allocation3 + $0x1f] sm:$0xff]
      %v3750 = vld [vmem:[#allocation3 + $0x27] sm:$0xff]
      %v3751 = vld [vmem:[#allocation3 + $0x2f] sm:$0xff]
      %v3752 = vld [vmem:[#allocation3 + $0x37] sm:$0xff]
      %v3753 = vld [vmem:[#allocation3 + $0x3f] sm:$0xff]
      %v3754 = vld [vmem:[#allocation3 + $0x47] sm:$0xff]
      %v3755 = vld [vmem:[#allocation3 + $0x4f] sm:$0xff]
      %v3756 = vld [vmem:[#allocation3 + $0x57] sm:$0xff]
      %v3757 = vld [vmem:[#allocation3 + $0x5f] sm:$0xff]
      %v3758 = vld [vmem:[#allocation3 + $0x67] sm:$0xff]
      %v3759 = vld [vmem:[#allocation3 + $0x6f] sm:$0xff]
      %v3760 = vld [vmem:[#allocation3 + $0x77] sm:$0xff]
      %v3761 = vld [vmem:[#allocation3 + $0x7f] sm:$0xff]
      %v3762 = vld [vmem:[#allocation3 + $0x87] sm:$0xff]
      %v3763 = vld [vmem:[#allocation3 + $0x8f] sm:$0xff]
      %v3764 = vld [vmem:[#allocation3 + $0x97] sm:$0xff]
      %v3765 = vld [vmem:[#allocation3 + $0x9f] sm:$0xff]
      %v3766 = vld [vmem:[#allocation3 + $0xa7] sm:$0xff]
      %v3767 = vld [vmem:[#allocation3 + $0xaf] sm:$0xff]
      %v3768 = vld [vmem:[#allocation3 + $0xb7] sm:$0xff]
      %v3769 = vld [vmem:[#allocation3 + $0xbf] sm:$0xff]
      %v3770 = vld [vmem:[%s2] sm:$0xff]
      %v3771 = vld [vmem:[#allocation3 + $0x8] sm:$0xff]
      %v3772 = vld [vmem:[#allocation3 + $0x10] sm:$0xff]
      %v3773 = vld [vmem:[#allocation3 + $0x18] sm:$0xff]
      %v3774 = vld [vmem:[#allocation3 + $0x20] sm:$0xff]
      %v3775 = vld [vmem:[#allocation3 + $0x28] sm:$0xff]
      %v3776 = vld [vmem:[#allocation3 + $0x30] sm:$0xff]
      %v3777 = vld [vmem:[#allocation3 + $0x38] sm:$0xff]
      %v3778 = vld [vmem:[#allocation3 + $0x40] sm:$0xff]
      %v3779 = vld [vmem:[#allocation3 + $0x48] sm:$0xff]
      %v3780 = vld [vmem:[#allocation3 + $0x50] sm:$0xff]
      %v3781 = vld [vmem:[#allocation3 + $0x58] sm:$0xff]
      %v3782 = vld [vmem:[#allocation3 + $0x60] sm:$0xff]
      %v3783 = vld [vmem:[#allocation3 + $0x68] sm:$0xff]
      %v3784 = vld [vmem:[#allocation3 + $0x70] sm:$0xff]
      %v3785 = vld [vmem:[#allocation3 + $0x78] sm:$0xff]
      %v3786 = vld [vmem:[#allocation3 + $0x80] sm:$0xff]
      %v3787 = vld [vmem:[#allocation3 + $0x88] sm:$0xff]
      %v3788 = vld [vmem:[#allocation3 + $0x90] sm:$0xff]
      %v3789 = vld [vmem:[#allocation3 + $0x98] sm:$0xff]
      %v3790 = vld [vmem:[#allocation3 + $0xa0] sm:$0xff]
      %v3791 = vld [vmem:[#allocation3 + $0xa8] sm:$0xff]
      %v3792 = vld [vmem:[#allocation3 + $0xb0] sm:$0xff]
      %v3793 = vld [vmem:[#allocation3 + $0xb8] sm:$0xff]
      %v3794 = vld [vmem:[#allocation3 + $0xc0] sm:$0xff]
      %s3795 = scalar_lea.vmem %s2, 8
      %v3796 = vld [vmem:[%s3795] sm:$0xff]
      %v3798 = vsel %vm251, %v3771, 0
      %v3801 = vsel %vm251, %v3772, 0
      %v3804 = vsel %vm251, %v3773, 0
      %v3807 = vsel %vm251, %v3774, 0
      %v3810 = vsel %vm251, %v3775, 0
      %v3813 = vsel %vm251, %v3776, 0
      %v3816 = vsel %vm251, %v3777, 0
      %v3819 = vsel %vm251, %v3778, 0
      %v3822 = vsel %vm251, %v3779, 0
      %v3825 = vsel %vm251, %v3780, 0
      %v3828 = vsel %vm251, %v3781, 0
      %v3831 = vsel %vm251, %v3782, 0
      %v3834 = vsel %vm251, %v3783, 0
      %v3837 = vsel %vm251, %v3784, 0
      %v3840 = vsel %vm251, %v3785, 0
      %v3843 = vsel %vm251, %v3786, 0
      %v3846 = vsel %vm251, %v3787, 0
      %v3849 = vsel %vm251, %v3788, 0
      %v3852 = vsel %vm251, %v3789, 0
      %v3855 = vsel %vm251, %v3790, 0
      %v3858 = vsel %vm251, %v3791, 0
      %v3861 = vsel %vm251, %v3792, 0
      %v3864 = vsel %vm251, %v3793, 0
      %v3867 = vsel %vm251, %v3794, 0
      %3869 = vmatprep.subr.mxu0 0.0
      %3870 = vmatpush1.msra.mxu0 %v3796
      %3871 = vmatprep.subr.mxu0 0.0
      %3872 = vmatpush1.msra.mxu0 0.0
      %3873 = vmatprep.subr.mxu0 0.0
      %3874 = vmatpush1.msra.mxu0 0.0
      %3875 = vmatprep.subr.mxu0 0.0
      %3876 = vmatpush1.msra.mxu0 0.0
      %3877 = vmatprep.subr.mxu0 0.0
      %3878 = vmatpush1.msra.mxu0 0.0
      %3879 = vmatprep.subr.mxu0 0.0
      %3880 = vmatpush1.msra.mxu0 0.0
      %3881 = vmatprep.subr.mxu0 0.0
      %3882 = vmatpush1.msra.mxu0 0.0
      %3883 = vmatprep.subr.mxu0 0.0
      %3884 = vmatpush1.msra.mxu0 0.0
      %3885 = vmatprep.subr.mxu0 0.0
      %3886 = vmatpush1.msra.mxu0 0.0
      %3887 = vmatprep.subr.mxu0 0.0
      %3888 = vmatpush1.msra.mxu0 0.0
      %3889 = vmatprep.subr.mxu0 0.0
      %3890 = vmatpush1.msra.mxu0 0.0
      %3891 = vmatprep.subr.mxu0 0.0
      %3892 = vmatpush1.msra.mxu0 0.0
      %3893 = vmatprep.subr.mxu0 0.0
      %3894 = vmatpush1.msra.mxu0 0.0
      %3895 = vmatprep.subr.mxu0 0.0
      %3896 = vmatpush1.msra.mxu0 0.0
      %3897 = vmatprep.subr.mxu0 0.0
      %3898 = vmatpush1.msra.mxu0 0.0
      %3899 = vmatprep.subr.mxu0 0.0
      %3900 = vmatpush1.msra.mxu0 0.0
      %3901 = vmatprep.subr.mxu0 0.0
      %3902 = vmatpush1.msra.mxu0 0.0
      %3903 = vmatprep.subr.mxu0 0.0
      %3904 = vmatpush1.msra.mxu0 0.0
      %3905 = vmatprep.subr.mxu0 0.0
      %3906 = vmatpush1.msra.mxu0 0.0
      %3907 = vmatprep.subr.mxu0 0.0
      %3908 = vmatpush1.msra.mxu0 0.0
      %3909 = vmatprep.subr.mxu0 0.0
      %3910 = vmatpush1.msra.mxu0 0.0
      %3911 = vmatprep.subr.mxu0 0.0
      %3912 = vmatpush1.msra.mxu0 0.0
      %3913 = vmatprep.subr.mxu0 0.0
      %3914 = vmatpush1.msra.mxu0 0.0
      %3915 = vmatprep.subr.mxu0 0.0
      %3916 = vmatpush1.msra.mxu0 0.0
      %3917 = vmatprep.subr.mxu0 0.0
      %3918 = vmatpush1.msra.mxu0 0.0
      %3919 = vmatprep.subr.mxu0 0.0
      %3920 = vmatpush1.msra.mxu0 0.0
      %3921 = vmatprep.subr.mxu0 0.0
      %3922 = vmatpush1.msra.mxu0 0.0
      %3923 = vmatprep.subr.mxu0 0.0
      %3924 = vmatpush1.msra.mxu0 0.0
      %3925 = vmatprep.subr.mxu0 0.0
      %3926 = vmatpush1.msra.mxu0 0.0
      %3927 = vmatprep.subr.mxu0 0.0
      %3928 = vmatpush1.msra.mxu0 0.0
      %3929 = vmatprep.subr.mxu0 0.0
      %3930 = vmatpush1.msra.mxu0 0.0
      %3931 = vmatprep.subr.mxu0 0.0
      %3932 = vmatpush1.msra.mxu0 0.0
      %3933 = vmatprep.mubr.f32.mxu0 0.0
      %3934 = vmatmul.mubr.f32.gmra.mrb[0].mxu0 %v3798
      %v3935 = vpop.f32.mrb[0].mxu0
      %v3936 = vadd.f32 0.0, %v3935
      %v3937 = vpop.f32.mrb[0].mxu0
      %3938 = vmatprep.mubr.f32.mxu0 0.0
      %3939 = vmatmul.mubr.f32.gmra.mrb[0].mxu0 %v3801
      %v3940 = vpop.f32.mrb[0].mxu0
      %v3941 = vadd.f32 0.0, %v3940
      %v3942 = vpop.f32.mrb[0].mxu0
      %3943 = vmatprep.mubr.f32.mxu0 0.0
      %3944 = vmatmul.mubr.f32.gmra.mrb[0].mxu0 %v3804
      %v3945 = vpop.f32.mrb[0].mxu0
      %v3946 = vpop.f32.mrb[0].mxu0
      %3947 = vmatprep.mubr.f32.mxu0 0.0
      %3948 = vmatmul.mubr.f32.gmra.mrb[0].mxu0 %v3807
      %v3949 = vpop.f32.mrb[0].mxu0
      %v3950 = vadd.f32 0.0, %v3949
      %v3951 = vpop.f32.mrb[0].mxu0
      %3952 = vmatprep.mubr.f32.mxu0 0.0
      %3953 = vmatmul.mubr.f32.gmra.mrb[0].mxu0 %v3810
      %v3954 = vpop.f32.mrb[0].mxu0
      %v3955 = vadd.f32 0.0, %v3954
      %v3956 = vpop.f32.mrb[0].mxu0
      %3957 = vmatprep.mubr.f32.mxu0 0.0
      %3958 = vmatmul.mubr.f32.gmra.mrb[0].mxu0 %v3813
      %v3959 = vpop.f32.mrb[0].mxu0
      %v3960 = vpop.f32.mrb[0].mxu0
      %3961 = vmatprep.mubr.f32.mxu0 0.0
      %3962 = vmatmul.mubr.f32.gmra.mrb[0].mxu0 %v3816
      %v3963 = vpop.f32.mrb[0].mxu0
      %v3964 = vadd.f32 0.0, %v3963
      %v3965 = vpop.f32.mrb[0].mxu0
      %3966 = vmatprep.mubr.f32.mxu0 0.0
      %3967 = vmatmul.mubr.f32.gmra.mrb[0].mxu0 %v3819
      %v3968 = vpop.f32.mrb[0].mxu0
      %v3969 = vadd.f32 0.0, %v3968
      %v3970 = vpop.f32.mrb[0].mxu0
      %3971 = vmatprep.mubr.f32.mxu0 0.0
      %3972 = vmatmul.mubr.f32.gmra.mrb[0].mxu0 %v3822
      %v3973 = vpop.f32.mrb[0].mxu0
      %v3974 = vpop.f32.mrb[0].mxu0
      %3975 = vmatprep.mubr.f32.mxu0 0.0
      %3976 = vmatmul.mubr.f32.gmra.mrb[0].mxu0 %v3825
      %v3977 = vpop.f32.mrb[0].mxu0
      %v3978 = vadd.f32 0.0, %v3977
      %v3979 = vpop.f32.mrb[0].mxu0
      %3980 = vmatprep.mubr.f32.mxu0 0.0
      %3981 = vmatmul.mubr.f32.gmra.mrb[0].mxu0 %v3828
      %v3982 = vpop.f32.mrb[0].mxu0
      %v3983 = vadd.f32 0.0, %v3982
      %v3984 = vpop.f32.mrb[0].mxu0
      %3985 = vmatprep.mubr.f32.mxu0 0.0
      %3986 = vmatmul.mubr.f32.gmra.mrb[0].mxu0 %v3831
      %v3987 = vpop.f32.mrb[0].mxu0
      %v3988 = vpop.f32.mrb[0].mxu0
      %3989 = vmatprep.mubr.f32.mxu0 0.0
      %3990 = vmatmul.mubr.f32.gmra.mrb[0].mxu0 %v3834
      %v3991 = vpop.f32.mrb[0].mxu0
      %v3992 = vadd.f32 0.0, %v3991
      %v3993 = vpop.f32.mrb[0].mxu0
      %3994 = vmatprep.mubr.f32.mxu0 0.0
      %3995 = vmatmul.mubr.f32.gmra.mrb[0].mxu0 %v3837
      %v3996 = vpop.f32.mrb[0].mxu0
      %v3997 = vadd.f32 0.0, %v3996
      %v3998 = vpop.f32.mrb[0].mxu0
      %3999 = vmatprep.mubr.f32.mxu0 0.0
      %4000 = vmatmul.mubr.f32.gmra.mrb[0].mxu0 %v3840
      %v4001 = vpop.f32.mrb[0].mxu0
      %v4002 = vpop.f32.mrb[0].mxu0
      %4003 = vmatprep.mubr.f32.mxu0 0.0
      %4004 = vmatmul.mubr.f32.gmra.mrb[0].mxu0 %v3843
      %v4005 = vpop.f32.mrb[0].mxu0
      %v4006 = vadd.f32 0.0, %v4005
      %v4007 = vpop.f32.mrb[0].mxu0
      %4008 = vmatprep.mubr.f32.mxu0 0.0
      %4009 = vmatmul.mubr.f32.gmra.mrb[0].mxu0 %v3846
      %v4010 = vpop.f32.mrb[0].mxu0
      %v4011 = vadd.f32 0.0, %v4010
      %v4012 = vpop.f32.mrb[0].mxu0
      %4013 = vmatprep.mubr.f32.mxu0 0.0
      %4014 = vmatmul.mubr.f32.gmra.mrb[0].mxu0 %v3849
      %v4015 = vpop.f32.mrb[0].mxu0
      %v4016 = vpop.f32.mrb[0].mxu0
      %4017 = vmatprep.mubr.f32.mxu0 0.0
      %4018 = vmatmul.mubr.f32.gmra.mrb[0].mxu0 %v3852
      %v4019 = vpop.f32.mrb[0].mxu0
      %v4020 = vadd.f32 0.0, %v4019
      %v4021 = vpop.f32.mrb[0].mxu0
      %4022 = vmatprep.mubr.f32.mxu0 0.0
      %4023 = vmatmul.mubr.f32.gmra.mrb[0].mxu0 %v3855
      %v4024 = vpop.f32.mrb[0].mxu0
      %v4025 = vadd.f32 0.0, %v4024
      %v4026 = vpop.f32.mrb[0].mxu0
      %4027 = vmatprep.mubr.f32.mxu0 0.0
      %4028 = vmatmul.mubr.f32.gmra.mrb[0].mxu0 %v3858
      %v4029 = vpop.f32.mrb[0].mxu0
      %v4030 = vpop.f32.mrb[0].mxu0
      %4031 = vmatprep.mubr.f32.mxu0 0.0
      %4032 = vmatmul.mubr.f32.gmra.mrb[0].mxu0 %v3861
      %v4033 = vpop.f32.mrb[0].mxu0
      %v4034 = vadd.f32 0.0, %v4033
      %v4035 = vpop.f32.mrb[0].mxu0
      %4036 = vmatprep.mubr.f32.mxu0 0.0
      %4037 = vmatmul.mubr.f32.gmra.mrb[0].mxu0 %v3864
      %v4038 = vpop.f32.mrb[0].mxu0
      %v4039 = vadd.f32 0.0, %v4038
      %v4040 = vpop.f32.mrb[0].mxu0
      %4041 = vmatprep.mubr.f32.mxu0 0.0
      %4042 = vmatmul.mubr.f32.gmra.mrb[0].mxu0 %v3867
      %v4043 = vpop.f32.mrb[0].mxu0
      %v4044 = vpop.f32.mrb[0].mxu0
      %4045 = vdwg.mxu0
      %v4047 = vsel %vm251, %v3746, 0
      %v4050 = vsel %vm251, %v3747, 0
      %v4053 = vsel %vm251, %v3748, 0
      %v4056 = vsel %vm251, %v3749, 0
      %v4059 = vsel %vm251, %v3750, 0
      %v4062 = vsel %vm251, %v3751, 0
      %v4065 = vsel %vm251, %v3752, 0
      %v4068 = vsel %vm251, %v3753, 0
      %v4071 = vsel %vm251, %v3754, 0
      %v4074 = vsel %vm251, %v3755, 0
      %v4077 = vsel %vm251, %v3756, 0
      %v4080 = vsel %vm251, %v3757, 0
      %v4083 = vsel %vm251, %v3758, 0
      %v4086 = vsel %vm251, %v3759, 0
      %v4089 = vsel %vm251, %v3760, 0
      %v4092 = vsel %vm251, %v3761, 0
      %v4095 = vsel %vm251, %v3762, 0
      %v4098 = vsel %vm251, %v3763, 0
      %v4101 = vsel %vm251, %v3764, 0
      %v4104 = vsel %vm251, %v3765, 0
      %v4107 = vsel %vm251, %v3766, 0
      %v4110 = vsel %vm251, %v3767, 0
      %v4113 = vsel %vm251, %v3768, 0
      %v4116 = vsel %vm251, %v3769, 0
      %4118 = vmatprep.subr.mxu0 0.0
      %4119 = vmatpush1.msra.mxu0 %v3770
      %4120 = vmatprep.subr.mxu0 0.0
      %4121 = vmatpush1.msra.mxu0 0.0
      %4122 = vmatprep.subr.mxu0 0.0
      %4123 = vmatpush1.msra.mxu0 0.0
      %4124 = vmatprep.subr.mxu0 0.0
      %4125 = vmatpush1.msra.mxu0 0.0
      %4126 = vmatprep.subr.mxu0 0.0
      %4127 = vmatpush1.msra.mxu0 0.0
      %4128 = vmatprep.subr.mxu0 0.0
      %4129 = vmatpush1.msra.mxu0 0.0
      %4130 = vmatprep.subr.mxu0 0.0
      %4131 = vmatpush1.msra.mxu0 0.0
      %4132 = vmatprep.subr.mxu0 0.0
      %4133 = vmatpush1.msra.mxu0 0.0
      %4134 = vmatprep.subr.mxu0 0.0
      %4135 = vmatpush1.msra.mxu0 0.0
      %4136 = vmatprep.subr.mxu0 0.0
      %4137 = vmatpush1.msra.mxu0 0.0
      %4138 = vmatprep.subr.mxu0 0.0
      %4139 = vmatpush1.msra.mxu0 0.0
      %4140 = vmatprep.subr.mxu0 0.0
      %4141 = vmatpush1.msra.mxu0 0.0
      %4142 = vmatprep.subr.mxu0 0.0
      %4143 = vmatpush1.msra.mxu0 0.0
      %4144 = vmatprep.subr.mxu0 0.0
      %4145 = vmatpush1.msra.mxu0 0.0
      %4146 = vmatprep.subr.mxu0 0.0
      %4147 = vmatpush1.msra.mxu0 0.0
      %4148 = vmatprep.subr.mxu0 0.0
      %4149 = vmatpush1.msra.mxu0 0.0
      %4150 = vmatprep.subr.mxu0 0.0
      %4151 = vmatpush1.msra.mxu0 0.0
      %4152 = vmatprep.subr.mxu0 0.0
      %4153 = vmatpush1.msra.mxu0 0.0
      %4154 = vmatprep.subr.mxu0 0.0
      %4155 = vmatpush1.msra.mxu0 0.0
      %4156 = vmatprep.subr.mxu0 0.0
      %4157 = vmatpush1.msra.mxu0 0.0
      %4158 = vmatprep.subr.mxu0 0.0
      %4159 = vmatpush1.msra.mxu0 0.0
      %4160 = vmatprep.subr.mxu0 0.0
      %4161 = vmatpush1.msra.mxu0 0.0
      %4162 = vmatprep.subr.mxu0 0.0
      %4163 = vmatpush1.msra.mxu0 0.0
      %4164 = vmatprep.subr.mxu0 0.0
      %4165 = vmatpush1.msra.mxu0 0.0
      %4166 = vmatprep.subr.mxu0 0.0
      %4167 = vmatpush1.msra.mxu0 0.0
      %4168 = vmatprep.subr.mxu0 0.0
      %4169 = vmatpush1.msra.mxu0 0.0
      %4170 = vmatprep.subr.mxu0 0.0
      %4171 = vmatpush1.msra.mxu0 0.0
      %4172 = vmatprep.subr.mxu0 0.0
      %4173 = vmatpush1.msra.mxu0 0.0
      %4174 = vmatprep.subr.mxu0 0.0
      %4175 = vmatpush1.msra.mxu0 0.0
      %4176 = vmatprep.subr.mxu0 0.0
      %4177 = vmatpush1.msra.mxu0 0.0
      %4178 = vmatprep.subr.mxu0 0.0
      %4179 = vmatpush1.msra.mxu0 0.0
      %4180 = vmatprep.subr.mxu0 0.0
      %4181 = vmatpush1.msra.mxu0 0.0
      %4182 = vmatprep.mubr.f32.mxu0 0.0
      %4183 = vmatmul.mubr.f32.gmra.mrb[0].mxu0 %v4047
      %v4184 = vpop.f32.mrb[0].mxu0
      %v4185 = vadd.f32 %v3936, %v4184
      %v4186 = vpop.f32.mrb[0].mxu0
      %4187 = vmatprep.mubr.f32.mxu0 0.0
      %4188 = vmatmul.mubr.f32.gmra.mrb[0].mxu0 %v4050
      %v4189 = vpop.f32.mrb[0].mxu0
      %v4190 = vadd.f32 %v3941, %v4189
      %v4191 = vpop.f32.mrb[0].mxu0
      %4192 = vmatprep.mubr.f32.mxu0 0.0
      %4193 = vmatmul.mubr.f32.gmra.mrb[0].mxu0 %v4053
      %v4194 = vpop.f32.mrb[0].mxu0
      %v4195 = vpop.f32.mrb[0].mxu0
      %4196 = vmatprep.mubr.f32.mxu0 0.0
      %4197 = vmatmul.mubr.f32.gmra.mrb[0].mxu0 %v4056
      %v4198 = vpop.f32.mrb[0].mxu0
      %v4199 = vadd.f32 %v3950, %v4198
      %v4200 = vpop.f32.mrb[0].mxu0
      %4201 = vmatprep.mubr.f32.mxu0 0.0
      %4202 = vmatmul.mubr.f32.gmra.mrb[0].mxu0 %v4059
      %v4203 = vpop.f32.mrb[0].mxu0
      %v4204 = vadd.f32 %v3955, %v4203
      %v4205 = vpop.f32.mrb[0].mxu0
      %4206 = vmatprep.mubr.f32.mxu0 0.0
      %4207 = vmatmul.mubr.f32.gmra.mrb[0].mxu0 %v4062
      %v4208 = vpop.f32.mrb[0].mxu0
      %v4209 = vpop.f32.mrb[0].mxu0
      %4210 = vmatprep.mubr.f32.mxu0 0.0
      %4211 = vmatmul.mubr.f32.gmra.mrb[0].mxu0 %v4065
      %v4212 = vpop.f32.mrb[0].mxu0
      %v4213 = vadd.f32 %v3964, %v4212
      %v4214 = vpop.f32.mrb[0].mxu0
      %4215 = vmatprep.mubr.f32.mxu0 0.0
      %4216 = vmatmul.mubr.f32.gmra.mrb[0].mxu0 %v4068
      %v4217 = vpop.f32.mrb[0].mxu0
      %v4218 = vadd.f32 %v3969, %v4217
      %v4219 = vpop.f32.mrb[0].mxu0
      %4220 = vmatprep.mubr.f32.mxu0 0.0
      %4221 = vmatmul.mubr.f32.gmra.mrb[0].mxu0 %v4071
      %v4222 = vpop.f32.mrb[0].mxu0
      %v4223 = vpop.f32.mrb[0].mxu0
      %4224 = vmatprep.mubr.f32.mxu0 0.0
      %4225 = vmatmul.mubr.f32.gmra.mrb[0].mxu0 %v4074
      %v4226 = vpop.f32.mrb[0].mxu0
      %v4227 = vadd.f32 %v3978, %v4226
      %v4228 = vpop.f32.mrb[0].mxu0
      %4229 = vmatprep.mubr.f32.mxu0 0.0
      %4230 = vmatmul.mubr.f32.gmra.mrb[0].mxu0 %v4077
      %v4231 = vpop.f32.mrb[0].mxu0
      %v4232 = vadd.f32 %v3983, %v4231
      %v4233 = vpop.f32.mrb[0].mxu0
      %4234 = vmatprep.mubr.f32.mxu0 0.0
      %4235 = vmatmul.mubr.f32.gmra.mrb[0].mxu0 %v4080
      %v4236 = vpop.f32.mrb[0].mxu0
      %v4237 = vpop.f32.mrb[0].mxu0
      %4238 = vmatprep.mubr.f32.mxu0 0.0
      %4239 = vmatmul.mubr.f32.gmra.mrb[0].mxu0 %v4083
      %v4240 = vpop.f32.mrb[0].mxu0
      %v4241 = vadd.f32 %v3992, %v4240
      %v4242 = vpop.f32.mrb[0].mxu0
      %4243 = vmatprep.mubr.f32.mxu0 0.0
      %4244 = vmatmul.mubr.f32.gmra.mrb[0].mxu0 %v4086
      %v4245 = vpop.f32.mrb[0].mxu0
      %v4246 = vadd.f32 %v3997, %v4245
      %v4247 = vpop.f32.mrb[0].mxu0
      %4248 = vmatprep.mubr.f32.mxu0 0.0
      %4249 = vmatmul.mubr.f32.gmra.mrb[0].mxu0 %v4089
      %v4250 = vpop.f32.mrb[0].mxu0
      %v4251 = vpop.f32.mrb[0].mxu0
      %4252 = vmatprep.mubr.f32.mxu0 0.0
      %4253 = vmatmul.mubr.f32.gmra.mrb[0].mxu0 %v4092
      %v4254 = vpop.f32.mrb[0].mxu0
      %v4255 = vadd.f32 %v4006, %v4254
      %v4256 = vpop.f32.mrb[0].mxu0
      %4257 = vmatprep.mubr.f32.mxu0 0.0
      %4258 = vmatmul.mubr.f32.gmra.mrb[0].mxu0 %v4095
      %v4259 = vpop.f32.mrb[0].mxu0
      %v4260 = vadd.f32 %v4011, %v4259
      %v4261 = vpop.f32.mrb[0].mxu0
      %4262 = vmatprep.mubr.f32.mxu0 0.0
      %4263 = vmatmul.mubr.f32.gmra.mrb[0].mxu0 %v4098
      %v4264 = vpop.f32.mrb[0].mxu0
      %v4265 = vpop.f32.mrb[0].mxu0
      %4266 = vmatprep.mubr.f32.mxu0 0.0
      %4267 = vmatmul.mubr.f32.gmra.mrb[0].mxu0 %v4101
      %v4268 = vpop.f32.mrb[0].mxu0
      %v4269 = vadd.f32 %v4020, %v4268
      %v4270 = vpop.f32.mrb[0].mxu0
      %4271 = vmatprep.mubr.f32.mxu0 0.0
      %4272 = vmatmul.mubr.f32.gmra.mrb[0].mxu0 %v4104
      %v4273 = vpop.f32.mrb[0].mxu0
      %v4274 = vadd.f32 %v4025, %v4273
      %v4275 = vpop.f32.mrb[0].mxu0
      %4276 = vmatprep.mubr.f32.mxu0 0.0
      %4277 = vmatmul.mubr.f32.gmra.mrb[0].mxu0 %v4107
      %v4278 = vpop.f32.mrb[0].mxu0
      %v4279 = vpop.f32.mrb[0].mxu0
      %4280 = vmatprep.mubr.f32.mxu0 0.0
      %4281 = vmatmul.mubr.f32.gmra.mrb[0].mxu0 %v4110
      %v4282 = vpop.f32.mrb[0].mxu0
      %v4283 = vadd.f32 %v4034, %v4282
      %v4284 = vpop.f32.mrb[0].mxu0
      %4285 = vmatprep.mubr.f32.mxu0 0.0
      %4286 = vmatmul.mubr.f32.gmra.mrb[0].mxu0 %v4113
      %v4287 = vpop.f32.mrb[0].mxu0
      %v4288 = vadd.f32 %v4039, %v4287
      %v4289 = vpop.f32.mrb[0].mxu0
      %4290 = vmatprep.mubr.f32.mxu0 0.0
      %4291 = vmatmul.mubr.f32.gmra.mrb[0].mxu0 %v4116
      %v4292 = vpop.f32.mrb[0].mxu0
      %v4293 = vpop.f32.mrb[0].mxu0
      %4294 = vdwg.mxu0
      %v4295 = vld [vmem:[#allocation3 + $0x9] sm:$0xff]
      %v4296 = vld [vmem:[#allocation3 + $0x11] sm:$0xff]
      %v4297 = vld [vmem:[#allocation3 + $0x19] sm:$0xff]
      %v4298 = vld [vmem:[#allocation3 + $0x21] sm:$0xff]
      %v4299 = vld [vmem:[#allocation3 + $0x29] sm:$0xff]
      %v4300 = vld [vmem:[#allocation3 + $0x31] sm:$0xff]
      %v4301 = vld [vmem:[#allocation3 + $0x39] sm:$0xff]
      %v4302 = vld [vmem:[#allocation3 + $0x41] sm:$0xff]
      %v4303 = vld [vmem:[#allocation3 + $0x49] sm:$0xff]
      %v4304 = vld [vmem:[#allocation3 + $0x51] sm:$0xff]
      %v4305 = vld [vmem:[#allocation3 + $0x59] sm:$0xff]
      %v4306 = vld [vmem:[#allocation3 + $0x61] sm:$0xff]
      %v4307 = vld [vmem:[#allocation3 + $0x69] sm:$0xff]
      %v4308 = vld [vmem:[#allocation3 + $0x71] sm:$0xff]
      %v4309 = vld [vmem:[#allocation3 + $0x79] sm:$0xff]
      %v4310 = vld [vmem:[#allocation3 + $0x81] sm:$0xff]
      %v4311 = vld [vmem:[#allocation3 + $0x89] sm:$0xff]
      %v4312 = vld [vmem:[#allocation3 + $0x91] sm:$0xff]
      %v4313 = vld [vmem:[#allocation3 + $0x99] sm:$0xff]
      %v4314 = vld [vmem:[#allocation3 + $0xa1] sm:$0xff]
      %v4315 = vld [vmem:[#allocation3 + $0xa9] sm:$0xff]
      %v4316 = vld [vmem:[#allocation3 + $0xb1] sm:$0xff]
      %v4317 = vld [vmem:[#allocation3 + $0xb9] sm:$0xff]
      %v4318 = vld [vmem:[#allocation3 + $0xc1] sm:$0xff]
      %s4319 = scalar_lea.vmem %s2, 16
      %v4320 = vld [vmem:[%s4319] sm:$0xff]
      %v4322 = vsel %vm251, %v4295, 0
      %v4325 = vsel %vm251, %v4296, 0
      %v4328 = vsel %vm251, %v4297, 0
      %v4331 = vsel %vm251, %v4298, 0
      %v4334 = vsel %vm251, %v4299, 0
      %v4337 = vsel %vm251, %v4300, 0
      %v4340 = vsel %vm251, %v4301, 0
      %v4343 = vsel %vm251, %v4302, 0
      %v4346 = vsel %vm251, %v4303, 0
      %v4349 = vsel %vm251, %v4304, 0
      %v4352 = vsel %vm251, %v4305, 0
      %v4355 = vsel %vm251, %v4306, 0
      %v4358 = vsel %vm251, %v4307, 0
      %v4361 = vsel %vm251, %v4308, 0
      %v4364 = vsel %vm251, %v4309, 0
      %v4367 = vsel %vm251, %v4310, 0
      %v4370 = vsel %vm251, %v4311, 0
      %v4373 = vsel %vm251, %v4312, 0
      %v4376 = vsel %vm251, %v4313, 0
      %v4379 = vsel %vm251, %v4314, 0
      %v4382 = vsel %vm251, %v4315, 0
      %v4385 = vsel %vm251, %v4316, 0
      %v4388 = vsel %vm251, %v4317, 0
      %v4391 = vsel %vm251, %v4318, 0
      %4393 = vmatprep.subr.mxu0 0.0
      %4394 = vmatpush1.msra.mxu0 %v4320
      %4395 = vmatprep.subr.mxu0 0.0
      %4396 = vmatpush1.msra.mxu0 0.0
      %4397 = vmatprep.subr.mxu0 0.0
      %4398 = vmatpush1.msra.mxu0 0.0
      %4399 = vmatprep.subr.mxu0 0.0
      %4400 = vmatpush1.msra.mxu0 0.0
      %4401 = vmatprep.subr.mxu0 0.0
      %4402 = vmatpush1.msra.mxu0 0.0
      %4403 = vmatprep.subr.mxu0 0.0
      %4404 = vmatpush1.msra.mxu0 0.0
      %4405 = vmatprep.subr.mxu0 0.0
      %4406 = vmatpush1.msra.mxu0 0.0
      %4407 = vmatprep.subr.mxu0 0.0
      %4408 = vmatpush1.msra.mxu0 0.0
      %4409 = vmatprep.subr.mxu0 0.0
      %4410 = vmatpush1.msra.mxu0 0.0
      %4411 = vmatprep.subr.mxu0 0.0
      %4412 = vmatpush1.msra.mxu0 0.0
      %4413 = vmatprep.subr.mxu0 0.0
      %4414 = vmatpush1.msra.mxu0 0.0
      %4415 = vmatprep.subr.mxu0 0.0
      %4416 = vmatpush1.msra.mxu0 0.0
      %4417 = vmatprep.subr.mxu0 0.0
      %4418 = vmatpush1.msra.mxu0 0.0
      %4419 = vmatprep.subr.mxu0 0.0
      %4420 = vmatpush1.msra.mxu0 0.0
      %4421 = vmatprep.subr.mxu0 0.0
      %4422 = vmatpush1.msra.mxu0 0.0
      %4423 = vmatprep.subr.mxu0 0.0
      %4424 = vmatpush1.msra.mxu0 0.0
      %4425 = vmatprep.subr.mxu0 0.0
      %4426 = vmatpush1.msra.mxu0 0.0
      %4427 = vmatprep.subr.mxu0 0.0
      %4428 = vmatpush1.msra.mxu0 0.0
      %4429 = vmatprep.subr.mxu0 0.0
      %4430 = vmatpush1.msra.mxu0 0.0
      %4431 = vmatprep.subr.mxu0 0.0
      %4432 = vmatpush1.msra.mxu0 0.0
      %4433 = vmatprep.subr.mxu0 0.0
      %4434 = vmatpush1.msra.mxu0 0.0
      %4435 = vmatprep.subr.mxu0 0.0
      %4436 = vmatpush1.msra.mxu0 0.0
      %4437 = vmatprep.subr.mxu0 0.0
      %4438 = vmatpush1.msra.mxu0 0.0
      %4439 = vmatprep.subr.mxu0 0.0
      %4440 = vmatpush1.msra.mxu0 0.0
      %4441 = vmatprep.subr.mxu0 0.0
      %4442 = vmatpush1.msra.mxu0 0.0
      %4443 = vmatprep.subr.mxu0 0.0
      %4444 = vmatpush1.msra.mxu0 0.0
      %4445 = vmatprep.subr.mxu0 0.0
      %4446 = vmatpush1.msra.mxu0 0.0
      %4447 = vmatprep.subr.mxu0 0.0
      %4448 = vmatpush1.msra.mxu0 0.0
      %4449 = vmatprep.subr.mxu0 0.0
      %4450 = vmatpush1.msra.mxu0 0.0
      %4451 = vmatprep.subr.mxu0 0.0
      %4452 = vmatpush1.msra.mxu0 0.0
      %4453 = vmatprep.subr.mxu0 0.0
      %4454 = vmatpush1.msra.mxu0 0.0
      %4455 = vmatprep.subr.mxu0 0.0
      %4456 = vmatpush1.msra.mxu0 0.0
      %4457 = vmatprep.mubr.f32.mxu0 0.0
      %4458 = vmatmul.mubr.f32.gmra.mrb[0].mxu0 %v4322
      %v4459 = vpop.f32.mrb[0].mxu0
      %v4460 = vadd.f32 0.0, %v4459
      %v4461 = vpop.f32.mrb[0].mxu0
      %4462 = vmatprep.mubr.f32.mxu0 0.0
      %4463 = vmatmul.mubr.f32.gmra.mrb[0].mxu0 %v4325
      %v4464 = vpop.f32.mrb[0].mxu0
      %v4465 = vadd.f32 0.0, %v4464
      %v4466 = vpop.f32.mrb[0].mxu0
      %4467 = vmatprep.mubr.f32.mxu0 0.0
      %4468 = vmatmul.mubr.f32.gmra.mrb[0].mxu0 %v4328
      %v4469 = vpop.f32.mrb[0].mxu0
      %v4470 = vpop.f32.mrb[0].mxu0
      %4471 = vmatprep.mubr.f32.mxu0 0.0
      %4472 = vmatmul.mubr.f32.gmra.mrb[0].mxu0 %v4331
      %v4473 = vpop.f32.mrb[0].mxu0
      %v4474 = vadd.f32 0.0, %v4473
      %v4475 = vpop.f32.mrb[0].mxu0
      %4476 = vmatprep.mubr.f32.mxu0 0.0
      %4477 = vmatmul.mubr.f32.gmra.mrb[0].mxu0 %v4334
      %v4478 = vpop.f32.mrb[0].mxu0
      %v4479 = vadd.f32 0.0, %v4478
      %v4480 = vpop.f32.mrb[0].mxu0
      %4481 = vmatprep.mubr.f32.mxu0 0.0
      %4482 = vmatmul.mubr.f32.gmra.mrb[0].mxu0 %v4337
      %v4483 = vpop.f32.mrb[0].mxu0
      %v4484 = vpop.f32.mrb[0].mxu0
      %4485 = vmatprep.mubr.f32.mxu0 0.0
      %4486 = vmatmul.mubr.f32.gmra.mrb[0].mxu0 %v4340
      %v4487 = vpop.f32.mrb[0].mxu0
      %v4488 = vadd.f32 0.0, %v4487
      %v4489 = vpop.f32.mrb[0].mxu0
      %4490 = vmatprep.mubr.f32.mxu0 0.0
      %4491 = vmatmul.mubr.f32.gmra.mrb[0].mxu0 %v4343
      %v4492 = vpop.f32.mrb[0].mxu0
      %v4493 = vadd.f32 0.0, %v4492
      %v4494 = vpop.f32.mrb[0].mxu0
      %4495 = vmatprep.mubr.f32.mxu0 0.0
      %4496 = vmatmul.mubr.f32.gmra.mrb[0].mxu0 %v4346
      %v4497 = vpop.f32.mrb[0].mxu0
      %v4498 = vpop.f32.mrb[0].mxu0
      %4499 = vmatprep.mubr.f32.mxu0 0.0
      %4500 = vmatmul.mubr.f32.gmra.mrb[0].mxu0 %v4349
      %v4501 = vpop.f32.mrb[0].mxu0
      %v4502 = vadd.f32 0.0, %v4501
      %v4503 = vpop.f32.mrb[0].mxu0
      %4504 = vmatprep.mubr.f32.mxu0 0.0
      %4505 = vmatmul.mubr.f32.gmra.mrb[0].mxu0 %v4352
      %v4506 = vpop.f32.mrb[0].mxu0
      %v4507 = vadd.f32 0.0, %v4506
      %v4508 = vpop.f32.mrb[0].mxu0
      %4509 = vmatprep.mubr.f32.mxu0 0.0
      %4510 = vmatmul.mubr.f32.gmra.mrb[0].mxu0 %v4355
      %v4511 = vpop.f32.mrb[0].mxu0
      %v4512 = vpop.f32.mrb[0].mxu0
      %4513 = vmatprep.mubr.f32.mxu0 0.0
      %4514 = vmatmul.mubr.f32.gmra.mrb[0].mxu0 %v4358
      %v4515 = vpop.f32.mrb[0].mxu0
      %v4516 = vadd.f32 0.0, %v4515
      %v4517 = vpop.f32.mrb[0].mxu0
      %4518 = vmatprep.mubr.f32.mxu0 0.0
      %4519 = vmatmul.mubr.f32.gmra.mrb[0].mxu0 %v4361
      %v4520 = vpop.f32.mrb[0].mxu0
      %v4521 = vadd.f32 0.0, %v4520
      %v4522 = vpop.f32.mrb[0].mxu0
      %4523 = vmatprep.mubr.f32.mxu0 0.0
      %4524 = vmatmul.mubr.f32.gmra.mrb[0].mxu0 %v4364
      %v4525 = vpop.f32.mrb[0].mxu0
      %v4526 = vpop.f32.mrb[0].mxu0
      %4527 = vmatprep.mubr.f32.mxu0 0.0
      %4528 = vmatmul.mubr.f32.gmra.mrb[0].mxu0 %v4367
      %v4529 = vpop.f32.mrb[0].mxu0
      %v4530 = vadd.f32 0.0, %v4529
      %v4531 = vpop.f32.mrb[0].mxu0
      %4532 = vmatprep.mubr.f32.mxu0 0.0
      %4533 = vmatmul.mubr.f32.gmra.mrb[0].mxu0 %v4370
      %v4534 = vpop.f32.mrb[0].mxu0
      %v4535 = vadd.f32 0.0, %v4534
      %v4536 = vpop.f32.mrb[0].mxu0
      %4537 = vmatprep.mubr.f32.mxu0 0.0
      %4538 = vmatmul.mubr.f32.gmra.mrb[0].mxu0 %v4373
      %v4539 = vpop.f32.mrb[0].mxu0
      %v4540 = vpop.f32.mrb[0].mxu0
      %4541 = vmatprep.mubr.f32.mxu0 0.0
      %4542 = vmatmul.mubr.f32.gmra.mrb[0].mxu0 %v4376
      %v4543 = vpop.f32.mrb[0].mxu0
      %v4544 = vadd.f32 0.0, %v4543
      %v4545 = vpop.f32.mrb[0].mxu0
      %4546 = vmatprep.mubr.f32.mxu0 0.0
      %4547 = vmatmul.mubr.f32.gmra.mrb[0].mxu0 %v4379
      %v4548 = vpop.f32.mrb[0].mxu0
      %v4549 = vadd.f32 0.0, %v4548
      %v4550 = vpop.f32.mrb[0].mxu0
      %4551 = vmatprep.mubr.f32.mxu0 0.0
      %4552 = vmatmul.mubr.f32.gmra.mrb[0].mxu0 %v4382
      %v4553 = vpop.f32.mrb[0].mxu0
      %v4554 = vpop.f32.mrb[0].mxu0
      %4555 = vmatprep.mubr.f32.mxu0 0.0
      %4556 = vmatmul.mubr.f32.gmra.mrb[0].mxu0 %v4385
      %v4557 = vpop.f32.mrb[0].mxu0
      %v4558 = vadd.f32 0.0, %v4557
      %v4559 = vpop.f32.mrb[0].mxu0
      %4560 = vmatprep.mubr.f32.mxu0 0.0
      %4561 = vmatmul.mubr.f32.gmra.mrb[0].mxu0 %v4388
      %v4562 = vpop.f32.mrb[0].mxu0
      %v4563 = vadd.f32 0.0, %v4562
      %v4564 = vpop.f32.mrb[0].mxu0
      %4565 = vmatprep.mubr.f32.mxu0 0.0
      %4566 = vmatmul.mubr.f32.gmra.mrb[0].mxu0 %v4391
      %v4567 = vpop.f32.mrb[0].mxu0
      %v4568 = vpop.f32.mrb[0].mxu0
      %4569 = vdwg.mxu0
      %v4570 = vadd.f32 %v4185, %v4460
      %v4571 = vadd.f32 %v4190, %v4465
      %v4572 = vadd.f32 %v4199, %v4474
      %v4573 = vadd.f32 %v4204, %v4479
      %v4574 = vadd.f32 %v4213, %v4488
      %v4575 = vadd.f32 %v4218, %v4493
      %v4576 = vadd.f32 %v4227, %v4502
      %v4577 = vadd.f32 %v4232, %v4507
      %v4578 = vadd.f32 %v4241, %v4516
      %v4579 = vadd.f32 %v4246, %v4521
      %v4580 = vadd.f32 %v4255, %v4530
      %v4581 = vadd.f32 %v4260, %v4535
      %v4582 = vadd.f32 %v4269, %v4544
      %v4583 = vadd.f32 %v4274, %v4549
      %v4584 = vadd.f32 %v4283, %v4558
      %v4585 = vadd.f32 %v4288, %v4563
      %v4586 = vld [vmem:[#allocation3 + $0x1f] sm:$0xff]
      %v4587 = vld [vmem:[#allocation3 + $0x27] sm:$0xff]
      %v4588 = vld [vmem:[#allocation3 + $0x2f] sm:$0xff]
      %v4589 = vld [vmem:[#allocation3 + $0x37] sm:$0xff]
      %v4590 = vld [vmem:[#allocation3 + $0x3f] sm:$0xff]
      %v4591 = vld [vmem:[#allocation3 + $0x47] sm:$0xff]
      %v4592 = vld [vmem:[#allocation3 + $0x4f] sm:$0xff]
      %v4593 = vld [vmem:[#allocation3 + $0x57] sm:$0xff]
      %v4594 = vld [vmem:[#allocation3 + $0x5f] sm:$0xff]
      %v4595 = vld [vmem:[#allocation3 + $0x67] sm:$0xff]
      %v4596 = vld [vmem:[#allocation3 + $0x6f] sm:$0xff]
      %v4597 = vld [vmem:[#allocation3 + $0x77] sm:$0xff]
      %v4598 = vld [vmem:[#allocation3 + $0x7f] sm:$0xff]
      %v4599 = vld [vmem:[#allocation3 + $0x87] sm:$0xff]
      %v4600 = vld [vmem:[#allocation3 + $0x8f] sm:$0xff]
      %v4601 = vld [vmem:[#allocation3 + $0x97] sm:$0xff]
      %v4602 = vld [vmem:[#allocation3 + $0x9f] sm:$0xff]
      %v4603 = vld [vmem:[#allocation3 + $0xa7] sm:$0xff]
      %v4604 = vld [vmem:[#allocation3 + $0xaf] sm:$0xff]
      %v4605 = vld [vmem:[#allocation3 + $0xb7] sm:$0xff]
      %v4606 = vld [vmem:[#allocation3 + $0xbf] sm:$0xff]
      %v4607 = vld [vmem:[#allocation3 + $0xc7] sm:$0xff]
      %v4608 = vld [vmem:[#allocation3 + $0xcf] sm:$0xff]
      %v4609 = vld [vmem:[#allocation3 + $0xd7] sm:$0xff]
      %s4610 = scalar_lea.vmem %s2, 24
      %v4611 = vld [vmem:[%s4610] sm:$0xff]
      %v4613 = vsel %vm251, %v4586, 0
      %v4616 = vsel %vm251, %v4587, 0
      %v4619 = vsel %vm251, %v4588, 0
      %v4622 = vsel %vm251, %v4589, 0
      %v4625 = vsel %vm251, %v4590, 0
      %v4628 = vsel %vm251, %v4591, 0
      %v4631 = vsel %vm251, %v4592, 0
      %v4634 = vsel %vm251, %v4593, 0
      %v4637 = vsel %vm251, %v4594, 0
      %v4640 = vsel %vm251, %v4595, 0
      %v4643 = vsel %vm251, %v4596, 0
      %v4646 = vsel %vm251, %v4597, 0
      %v4649 = vsel %vm251, %v4598, 0
      %v4652 = vsel %vm251, %v4599, 0
      %v4655 = vsel %vm251, %v4600, 0
      %v4658 = vsel %vm251, %v4601, 0
      %v4661 = vsel %vm251, %v4602, 0
      %v4664 = vsel %vm251, %v4603, 0
      %v4667 = vsel %vm251, %v4604, 0
      %v4670 = vsel %vm251, %v4605, 0
      %v4673 = vsel %vm251, %v4606, 0
      %v4676 = vsel %vm251, %v4607, 0
      %v4679 = vsel %vm251, %v4608, 0
      %v4682 = vsel %vm251, %v4609, 0
      %4684 = vmatprep.subr.mxu0 0.0
      %4685 = vmatpush1.msra.mxu0 %v4611
      %4686 = vmatprep.subr.mxu0 0.0
      %4687 = vmatpush1.msra.mxu0 0.0
      %4688 = vmatprep.subr.mxu0 0.0
      %4689 = vmatpush1.msra.mxu0 0.0
      %4690 = vmatprep.subr.mxu0 0.0
      %4691 = vmatpush1.msra.mxu0 0.0
      %4692 = vmatprep.subr.mxu0 0.0
      %4693 = vmatpush1.msra.mxu0 0.0
      %4694 = vmatprep.subr.mxu0 0.0
      %4695 = vmatpush1.msra.mxu0 0.0
      %4696 = vmatprep.subr.mxu0 0.0
      %4697 = vmatpush1.msra.mxu0 0.0
      %4698 = vmatprep.subr.mxu0 0.0
      %4699 = vmatpush1.msra.mxu0 0.0
      %4700 = vmatprep.subr.mxu0 0.0
      %4701 = vmatpush1.msra.mxu0 0.0
      %4702 = vmatprep.subr.mxu0 0.0
      %4703 = vmatpush1.msra.mxu0 0.0
      %4704 = vmatprep.subr.mxu0 0.0
      %4705 = vmatpush1.msra.mxu0 0.0
      %4706 = vmatprep.subr.mxu0 0.0
      %4707 = vmatpush1.msra.mxu0 0.0
      %4708 = vmatprep.subr.mxu0 0.0
      %4709 = vmatpush1.msra.mxu0 0.0
      %4710 = vmatprep.subr.mxu0 0.0
      %4711 = vmatpush1.msra.mxu0 0.0
      %4712 = vmatprep.subr.mxu0 0.0
      %4713 = vmatpush1.msra.mxu0 0.0
      %4714 = vmatprep.subr.mxu0 0.0
      %4715 = vmatpush1.msra.mxu0 0.0
      %4716 = vmatprep.subr.mxu0 0.0
      %4717 = vmatpush1.msra.mxu0 0.0
      %4718 = vmatprep.subr.mxu0 0.0
      %4719 = vmatpush1.msra.mxu0 0.0
      %4720 = vmatprep.subr.mxu0 0.0
      %4721 = vmatpush1.msra.mxu0 0.0
      %4722 = vmatprep.subr.mxu0 0.0
      %4723 = vmatpush1.msra.mxu0 0.0
      %4724 = vmatprep.subr.mxu0 0.0
      %4725 = vmatpush1.msra.mxu0 0.0
      %4726 = vmatprep.subr.mxu0 0.0
      %4727 = vmatpush1.msra.mxu0 0.0
      %4728 = vmatprep.subr.mxu0 0.0
      %4729 = vmatpush1.msra.mxu0 0.0
      %4730 = vmatprep.subr.mxu0 0.0
      %4731 = vmatpush1.msra.mxu0 0.0
      %4732 = vmatprep.subr.mxu0 0.0
      %4733 = vmatpush1.msra.mxu0 0.0
      %4734 = vmatprep.subr.mxu0 0.0
      %4735 = vmatpush1.msra.mxu0 0.0
      %4736 = vmatprep.subr.mxu0 0.0
      %4737 = vmatpush1.msra.mxu0 0.0
      %4738 = vmatprep.subr.mxu0 0.0
      %4739 = vmatpush1.msra.mxu0 0.0
      %4740 = vmatprep.subr.mxu0 0.0
      %4741 = vmatpush1.msra.mxu0 0.0
      %4742 = vmatprep.subr.mxu0 0.0
      %4743 = vmatpush1.msra.mxu0 0.0
      %4744 = vmatprep.subr.mxu0 0.0
      %4745 = vmatpush1.msra.mxu0 0.0
      %4746 = vmatprep.subr.mxu0 0.0
      %4747 = vmatpush1.msra.mxu0 0.0
      %4748 = vmatprep.mubr.f32.mxu0 0.0
      %4749 = vmatmul.mubr.f32.gmra.mrb[0].mxu0 %v4613
      %v4750 = vpop.f32.mrb[0].mxu0
      %v4751 = vadd.f32 0.0, %v4750
      %v4752 = vpop.f32.mrb[0].mxu0
      %4753 = vmatprep.mubr.f32.mxu0 0.0
      %4754 = vmatmul.mubr.f32.gmra.mrb[0].mxu0 %v4616
      %v4755 = vpop.f32.mrb[0].mxu0
      %v4756 = vadd.f32 0.0, %v4755
      %v4757 = vpop.f32.mrb[0].mxu0
      %4758 = vmatprep.mubr.f32.mxu0 0.0
      %4759 = vmatmul.mubr.f32.gmra.mrb[0].mxu0 %v4619
      %v4760 = vpop.f32.mrb[0].mxu0
      %v4761 = vpop.f32.mrb[0].mxu0
      %4762 = vmatprep.mubr.f32.mxu0 0.0
      %4763 = vmatmul.mubr.f32.gmra.mrb[0].mxu0 %v4622
      %v4764 = vpop.f32.mrb[0].mxu0
      %v4765 = vadd.f32 0.0, %v4764
      %v4766 = vpop.f32.mrb[0].mxu0
      %4767 = vmatprep.mubr.f32.mxu0 0.0
      %4768 = vmatmul.mubr.f32.gmra.mrb[0].mxu0 %v4625
      %v4769 = vpop.f32.mrb[0].mxu0
      %v4770 = vadd.f32 0.0, %v4769
      %v4771 = vpop.f32.mrb[0].mxu0
      %4772 = vmatprep.mubr.f32.mxu0 0.0
      %4773 = vmatmul.mubr.f32.gmra.mrb[0].mxu0 %v4628
      %v4774 = vpop.f32.mrb[0].mxu0
      %v4775 = vpop.f32.mrb[0].mxu0
      %4776 = vmatprep.mubr.f32.mxu0 0.0
      %4777 = vmatmul.mubr.f32.gmra.mrb[0].mxu0 %v4631
      %v4778 = vpop.f32.mrb[0].mxu0
      %v4779 = vadd.f32 0.0, %v4778
      %v4780 = vpop.f32.mrb[0].mxu0
      %4781 = vmatprep.mubr.f32.mxu0 0.0
      %4782 = vmatmul.mubr.f32.gmra.mrb[0].mxu0 %v4634
      %v4783 = vpop.f32.mrb[0].mxu0
      %v4784 = vadd.f32 0.0, %v4783
      %v4785 = vpop.f32.mrb[0].mxu0
      %4786 = vmatprep.mubr.f32.mxu0 0.0
      %4787 = vmatmul.mubr.f32.gmra.mrb[0].mxu0 %v4637
      %v4788 = vpop.f32.mrb[0].mxu0
      %v4789 = vpop.f32.mrb[0].mxu0
      %4790 = vmatprep.mubr.f32.mxu0 0.0
      %4791 = vmatmul.mubr.f32.gmra.mrb[0].mxu0 %v4640
      %v4792 = vpop.f32.mrb[0].mxu0
      %v4793 = vadd.f32 0.0, %v4792
      %v4794 = vpop.f32.mrb[0].mxu0
      %4795 = vmatprep.mubr.f32.mxu0 0.0
      %4796 = vmatmul.mubr.f32.gmra.mrb[0].mxu0 %v4643
      %v4797 = vpop.f32.mrb[0].mxu0
      %v4798 = vadd.f32 0.0, %v4797
      %v4799 = vpop.f32.mrb[0].mxu0
      %4800 = vmatprep.mubr.f32.mxu0 0.0
      %4801 = vmatmul.mubr.f32.gmra.mrb[0].mxu0 %v4646
      %v4802 = vpop.f32.mrb[0].mxu0
      %v4803 = vpop.f32.mrb[0].mxu0
      %4804 = vmatprep.mubr.f32.mxu0 0.0
      %4805 = vmatmul.mubr.f32.gmra.mrb[0].mxu0 %v4649
      %v4806 = vpop.f32.mrb[0].mxu0
      %v4807 = vadd.f32 0.0, %v4806
      %v4808 = vpop.f32.mrb[0].mxu0
      %4809 = vmatprep.mubr.f32.mxu0 0.0
      %4810 = vmatmul.mubr.f32.gmra.mrb[0].mxu0 %v4652
      %v4811 = vpop.f32.mrb[0].mxu0
      %v4812 = vadd.f32 0.0, %v4811
      %v4813 = vpop.f32.mrb[0].mxu0
      %4814 = vmatprep.mubr.f32.mxu0 0.0
      %4815 = vmatmul.mubr.f32.gmra.mrb[0].mxu0 %v4655
      %v4816 = vpop.f32.mrb[0].mxu0
      %v4817 = vpop.f32.mrb[0].mxu0
      %4818 = vmatprep.mubr.f32.mxu0 0.0
      %4819 = vmatmul.mubr.f32.gmra.mrb[0].mxu0 %v4658
      %v4820 = vpop.f32.mrb[0].mxu0
      %v4821 = vadd.f32 0.0, %v4820
      %v4822 = vpop.f32.mrb[0].mxu0
      %4823 = vmatprep.mubr.f32.mxu0 0.0
      %4824 = vmatmul.mubr.f32.gmra.mrb[0].mxu0 %v4661
      %v4825 = vpop.f32.mrb[0].mxu0
      %v4826 = vadd.f32 0.0, %v4825
      %v4827 = vpop.f32.mrb[0].mxu0
      %4828 = vmatprep.mubr.f32.mxu0 0.0
      %4829 = vmatmul.mubr.f32.gmra.mrb[0].mxu0 %v4664
      %v4830 = vpop.f32.mrb[0].mxu0
      %v4831 = vpop.f32.mrb[0].mxu0
      %4832 = vmatprep.mubr.f32.mxu0 0.0
      %4833 = vmatmul.mubr.f32.gmra.mrb[0].mxu0 %v4667
      %v4834 = vpop.f32.mrb[0].mxu0
      %v4835 = vadd.f32 0.0, %v4834
      %v4836 = vpop.f32.mrb[0].mxu0
      %4837 = vmatprep.mubr.f32.mxu0 0.0
      %4838 = vmatmul.mubr.f32.gmra.mrb[0].mxu0 %v4670
      %v4839 = vpop.f32.mrb[0].mxu0
      %v4840 = vadd.f32 0.0, %v4839
      %v4841 = vpop.f32.mrb[0].mxu0
      %4842 = vmatprep.mubr.f32.mxu0 0.0
      %4843 = vmatmul.mubr.f32.gmra.mrb[0].mxu0 %v4673
      %v4844 = vpop.f32.mrb[0].mxu0
      %v4845 = vpop.f32.mrb[0].mxu0
      %4846 = vmatprep.mubr.f32.mxu0 0.0
      %4847 = vmatmul.mubr.f32.gmra.mrb[0].mxu0 %v4676
      %v4848 = vpop.f32.mrb[0].mxu0
      %v4849 = vadd.f32 0.0, %v4848
      %v4850 = vpop.f32.mrb[0].mxu0
      %4851 = vmatprep.mubr.f32.mxu0 0.0
      %4852 = vmatmul.mubr.f32.gmra.mrb[0].mxu0 %v4679
      %v4853 = vpop.f32.mrb[0].mxu0
      %v4854 = vadd.f32 0.0, %v4853
      %v4855 = vpop.f32.mrb[0].mxu0
      %4856 = vmatprep.mubr.f32.mxu0 0.0
      %4857 = vmatmul.mubr.f32.gmra.mrb[0].mxu0 %v4682
      %v4858 = vpop.f32.mrb[0].mxu0
      %v4859 = vpop.f32.mrb[0].mxu0
      %4860 = vdwg.mxu0
      %v4861 = vadd.f32 %v4570, %v4751
      %v4862 = vadd.f32 %v4571, %v4756
      %v4863 = vadd.f32 %v4572, %v4765
      %v4864 = vadd.f32 %v4573, %v4770
      %v4865 = vadd.f32 %v4574, %v4779
      %v4866 = vadd.f32 %v4575, %v4784
      %v4867 = vadd.f32 %v4576, %v4793
      %v4868 = vadd.f32 %v4577, %v4798
      %v4869 = vadd.f32 %v4578, %v4807
      %v4870 = vadd.f32 %v4579, %v4812
      %v4871 = vadd.f32 %v4580, %v4821
      %v4872 = vadd.f32 %v4581, %v4826
      %v4873 = vadd.f32 %v4582, %v4835
      %v4874 = vadd.f32 %v4583, %v4840
      %v4875 = vadd.f32 %v4584, %v4849
      %v4876 = vadd.f32 %v4585, %v4854
      %v4877 = vld [vmem:[#allocation3 + $0x20] sm:$0xff]
      %v4878 = vld [vmem:[#allocation3 + $0x28] sm:$0xff]
      %v4879 = vld [vmem:[#allocation3 + $0x30] sm:$0xff]
      %v4880 = vld [vmem:[#allocation3 + $0x38] sm:$0xff]
      %v4881 = vld [vmem:[#allocation3 + $0x40] sm:$0xff]
      %v4882 = vld [vmem:[#allocation3 + $0x48] sm:$0xff]
      %v4883 = vld [vmem:[#allocation3 + $0x50] sm:$0xff]
      %v4884 = vld [vmem:[#allocation3 + $0x58] sm:$0xff]
      %v4885 = vld [vmem:[#allocation3 + $0x60] sm:$0xff]
      %v4886 = vld [vmem:[#allocation3 + $0x68] sm:$0xff]
      %v4887 = vld [vmem:[#allocation3 + $0x70] sm:$0xff]
      %v4888 = vld [vmem:[#allocation3 + $0x78] sm:$0xff]
      %v4889 = vld [vmem:[#allocation3 + $0x80] sm:$0xff]
      %v4890 = vld [vmem:[#allocation3 + $0x88] sm:$0xff]
      %v4891 = vld [vmem:[#allocation3 + $0x90] sm:$0xff]
      %v4892 = vld [vmem:[#allocation3 + $0x98] sm:$0xff]
      %v4893 = vld [vmem:[#allocation3 + $0xa0] sm:$0xff]
      %v4894 = vld [vmem:[#allocation3 + $0xa8] sm:$0xff]
      %v4895 = vld [vmem:[#allocation3 + $0xb0] sm:$0xff]
      %v4896 = vld [vmem:[#allocation3 + $0xb8] sm:$0xff]
      %v4897 = vld [vmem:[#allocation3 + $0xc0] sm:$0xff]
      %v4898 = vld [vmem:[#allocation3 + $0xc8] sm:$0xff]
      %v4899 = vld [vmem:[#allocation3 + $0xd0] sm:$0xff]
      %v4900 = vld [vmem:[#allocation3 + $0xd8] sm:$0xff]
      %s4901 = scalar_lea.vmem %s2, 32
      %v4902 = vld [vmem:[%s4901] sm:$0xff]
      %v4904 = vsel %vm251, %v4877, 0
      %v4907 = vsel %vm251, %v4878, 0
      %v4910 = vsel %vm251, %v4879, 0
      %v4913 = vsel %vm251, %v4880, 0
      %v4916 = vsel %vm251, %v4881, 0
      %v4919 = vsel %vm251, %v4882, 0
      %v4922 = vsel %vm251, %v4883, 0
      %v4925 = vsel %vm251, %v4884, 0
      %v4928 = vsel %vm251, %v4885, 0
      %v4931 = vsel %vm251, %v4886, 0
      %v4934 = vsel %vm251, %v4887, 0
      %v4937 = vsel %vm251, %v4888, 0
      %v4940 = vsel %vm251, %v4889, 0
      %v4943 = vsel %vm251, %v4890, 0
      %v4946 = vsel %vm251, %v4891, 0
      %v4949 = vsel %vm251, %v4892, 0
      %v4952 = vsel %vm251, %v4893, 0
      %v4955 = vsel %vm251, %v4894, 0
      %v4958 = vsel %vm251, %v4895, 0
      %v4961 = vsel %vm251, %v4896, 0
      %v4964 = vsel %vm251, %v4897, 0
      %v4967 = vsel %vm251, %v4898, 0
      %v4970 = vsel %vm251, %v4899, 0
      %v4973 = vsel %vm251, %v4900, 0
      %4975 = vmatprep.subr.mxu0 0.0
      %4976 = vmatpush1.msra.mxu0 %v4902
      %4977 = vmatprep.subr.mxu0 0.0
      %4978 = vmatpush1.msra.mxu0 0.0
      %4979 = vmatprep.subr.mxu0 0.0
      %4980 = vmatpush1.msra.mxu0 0.0
      %4981 = vmatprep.subr.mxu0 0.0
      %4982 = vmatpush1.msra.mxu0 0.0
      %4983 = vmatprep.subr.mxu0 0.0
      %4984 = vmatpush1.msra.mxu0 0.0
      %4985 = vmatprep.subr.mxu0 0.0
      %4986 = vmatpush1.msra.mxu0 0.0
      %4987 = vmatprep.subr.mxu0 0.0
      %4988 = vmatpush1.msra.mxu0 0.0
      %4989 = vmatprep.subr.mxu0 0.0
      %4990 = vmatpush1.msra.mxu0 0.0
      %4991 = vmatprep.subr.mxu0 0.0
      %4992 = vmatpush1.msra.mxu0 0.0
      %4993 = vmatprep.subr.mxu0 0.0
      %4994 = vmatpush1.msra.mxu0 0.0
      %4995 = vmatprep.subr.mxu0 0.0
      %4996 = vmatpush1.msra.mxu0 0.0
      %4997 = vmatprep.subr.mxu0 0.0
      %4998 = vmatpush1.msra.mxu0 0.0
      %4999 = vmatprep.subr.mxu0 0.0
      %5000 = vmatpush1.msra.mxu0 0.0
      %5001 = vmatprep.subr.mxu0 0.0
      %5002 = vmatpush1.msra.mxu0 0.0
      %5003 = vmatprep.subr.mxu0 0.0
      %5004 = vmatpush1.msra.mxu0 0.0
      %5005 = vmatprep.subr.mxu0 0.0
      %5006 = vmatpush1.msra.mxu0 0.0
      %5007 = vmatprep.subr.mxu0 0.0
      %5008 = vmatpush1.msra.mxu0 0.0
      %5009 = vmatprep.subr.mxu0 0.0
      %5010 = vmatpush1.msra.mxu0 0.0
      %5011 = vmatprep.subr.mxu0 0.0
      %5012 = vmatpush1.msra.mxu0 0.0
      %5013 = vmatprep.subr.mxu0 0.0
      %5014 = vmatpush1.msra.mxu0 0.0
      %5015 = vmatprep.subr.mxu0 0.0
      %5016 = vmatpush1.msra.mxu0 0.0
      %5017 = vmatprep.subr.mxu0 0.0
      %5018 = vmatpush1.msra.mxu0 0.0
      %5019 = vmatprep.subr.mxu0 0.0
      %5020 = vmatpush1.msra.mxu0 0.0
      %5021 = vmatprep.subr.mxu0 0.0
      %5022 = vmatpush1.msra.mxu0 0.0
      %5023 = vmatprep.subr.mxu0 0.0
      %5024 = vmatpush1.msra.mxu0 0.0
      %5025 = vmatprep.subr.mxu0 0.0
      %5026 = vmatpush1.msra.mxu0 0.0
      %5027 = vmatprep.subr.mxu0 0.0
      %5028 = vmatpush1.msra.mxu0 0.0
      %5029 = vmatprep.subr.mxu0 0.0
      %5030 = vmatpush1.msra.mxu0 0.0
      %5031 = vmatprep.subr.mxu0 0.0
      %5032 = vmatpush1.msra.mxu0 0.0
      %5033 = vmatprep.subr.mxu0 0.0
      %5034 = vmatpush1.msra.mxu0 0.0
      %5035 = vmatprep.subr.mxu0 0.0
      %5036 = vmatpush1.msra.mxu0 0.0
      %5037 = vmatprep.subr.mxu0 0.0
      %5038 = vmatpush1.msra.mxu0 0.0
      %5039 = vmatprep.mubr.f32.mxu0 0.0
      %5040 = vmatmul.mubr.f32.gmra.mrb[0].mxu0 %v4904
      %v5041 = vpop.f32.mrb[0].mxu0
      %v5042 = vadd.f32 0.0, %v5041
      %v5043 = vpop.f32.mrb[0].mxu0
      %5044 = vmatprep.mubr.f32.mxu0 0.0
      %5045 = vmatmul.mubr.f32.gmra.mrb[0].mxu0 %v4907
      %v5046 = vpop.f32.mrb[0].mxu0
      %v5047 = vadd.f32 0.0, %v5046
      %v5048 = vpop.f32.mrb[0].mxu0
      %5049 = vmatprep.mubr.f32.mxu0 0.0
      %5050 = vmatmul.mubr.f32.gmra.mrb[0].mxu0 %v4910
      %v5051 = vpop.f32.mrb[0].mxu0
      %v5052 = vpop.f32.mrb[0].mxu0
      %5053 = vmatprep.mubr.f32.mxu0 0.0
      %5054 = vmatmul.mubr.f32.gmra.mrb[0].mxu0 %v4913
      %v5055 = vpop.f32.mrb[0].mxu0
      %v5056 = vadd.f32 0.0, %v5055
      %v5057 = vpop.f32.mrb[0].mxu0
      %5058 = vmatprep.mubr.f32.mxu0 0.0
      %5059 = vmatmul.mubr.f32.gmra.mrb[0].mxu0 %v4916
      %v5060 = vpop.f32.mrb[0].mxu0
      %v5061 = vadd.f32 0.0, %v5060
      %v5062 = vpop.f32.mrb[0].mxu0
      %5063 = vmatprep.mubr.f32.mxu0 0.0
      %5064 = vmatmul.mubr.f32.gmra.mrb[0].mxu0 %v4919
      %v5065 = vpop.f32.mrb[0].mxu0
      %v5066 = vpop.f32.mrb[0].mxu0
      %5067 = vmatprep.mubr.f32.mxu0 0.0
      %5068 = vmatmul.mubr.f32.gmra.mrb[0].mxu0 %v4922
      %v5069 = vpop.f32.mrb[0].mxu0
      %v5070 = vadd.f32 0.0, %v5069
      %v5071 = vpop.f32.mrb[0].mxu0
      %5072 = vmatprep.mubr.f32.mxu0 0.0
      %5073 = vmatmul.mubr.f32.gmra.mrb[0].mxu0 %v4925
      %v5074 = vpop.f32.mrb[0].mxu0
      %v5075 = vadd.f32 0.0, %v5074
      %v5076 = vpop.f32.mrb[0].mxu0
      %5077 = vmatprep.mubr.f32.mxu0 0.0
      %5078 = vmatmul.mubr.f32.gmra.mrb[0].mxu0 %v4928
      %v5079 = vpop.f32.mrb[0].mxu0
      %v5080 = vpop.f32.mrb[0].mxu0
      %5081 = vmatprep.mubr.f32.mxu0 0.0
      %5082 = vmatmul.mubr.f32.gmra.mrb[0].mxu0 %v4931
      %v5083 = vpop.f32.mrb[0].mxu0
      %v5084 = vadd.f32 0.0, %v5083
      %v5085 = vpop.f32.mrb[0].mxu0
      %5086 = vmatprep.mubr.f32.mxu0 0.0
      %5087 = vmatmul.mubr.f32.gmra.mrb[0].mxu0 %v4934
      %v5088 = vpop.f32.mrb[0].mxu0
      %v5089 = vadd.f32 0.0, %v5088
      %v5090 = vpop.f32.mrb[0].mxu0
      %5091 = vmatprep.mubr.f32.mxu0 0.0
      %5092 = vmatmul.mubr.f32.gmra.mrb[0].mxu0 %v4937
      %v5093 = vpop.f32.mrb[0].mxu0
      %v5094 = vpop.f32.mrb[0].mxu0
      %5095 = vmatprep.mubr.f32.mxu0 0.0
      %5096 = vmatmul.mubr.f32.gmra.mrb[0].mxu0 %v4940
      %v5097 = vpop.f32.mrb[0].mxu0
      %v5098 = vadd.f32 0.0, %v5097
      %v5099 = vpop.f32.mrb[0].mxu0
      %5100 = vmatprep.mubr.f32.mxu0 0.0
      %5101 = vmatmul.mubr.f32.gmra.mrb[0].mxu0 %v4943
      %v5102 = vpop.f32.mrb[0].mxu0
      %v5103 = vadd.f32 0.0, %v5102
      %v5104 = vpop.f32.mrb[0].mxu0
      %5105 = vmatprep.mubr.f32.mxu0 0.0
      %5106 = vmatmul.mubr.f32.gmra.mrb[0].mxu0 %v4946
      %v5107 = vpop.f32.mrb[0].mxu0
      %v5108 = vpop.f32.mrb[0].mxu0
      %5109 = vmatprep.mubr.f32.mxu0 0.0
      %5110 = vmatmul.mubr.f32.gmra.mrb[0].mxu0 %v4949
      %v5111 = vpop.f32.mrb[0].mxu0
      %v5112 = vadd.f32 0.0, %v5111
      %v5113 = vpop.f32.mrb[0].mxu0
      %5114 = vmatprep.mubr.f32.mxu0 0.0
      %5115 = vmatmul.mubr.f32.gmra.mrb[0].mxu0 %v4952
      %v5116 = vpop.f32.mrb[0].mxu0
      %v5117 = vadd.f32 0.0, %v5116
      %v5118 = vpop.f32.mrb[0].mxu0
      %5119 = vmatprep.mubr.f32.mxu0 0.0
      %5120 = vmatmul.mubr.f32.gmra.mrb[0].mxu0 %v4955
      %v5121 = vpop.f32.mrb[0].mxu0
      %v5122 = vpop.f32.mrb[0].mxu0
      %5123 = vmatprep.mubr.f32.mxu0 0.0
      %5124 = vmatmul.mubr.f32.gmra.mrb[0].mxu0 %v4958
      %v5125 = vpop.f32.mrb[0].mxu0
      %v5126 = vadd.f32 0.0, %v5125
      %v5127 = vpop.f32.mrb[0].mxu0
      %5128 = vmatprep.mubr.f32.mxu0 0.0
      %5129 = vmatmul.mubr.f32.gmra.mrb[0].mxu0 %v4961
      %v5130 = vpop.f32.mrb[0].mxu0
      %v5131 = vadd.f32 0.0, %v5130
      %v5132 = vpop.f32.mrb[0].mxu0
      %5133 = vmatprep.mubr.f32.mxu0 0.0
      %5134 = vmatmul.mubr.f32.gmra.mrb[0].mxu0 %v4964
      %v5135 = vpop.f32.mrb[0].mxu0
      %v5136 = vpop.f32.mrb[0].mxu0
      %5137 = vmatprep.mubr.f32.mxu0 0.0
      %5138 = vmatmul.mubr.f32.gmra.mrb[0].mxu0 %v4967
      %v5139 = vpop.f32.mrb[0].mxu0
      %v5140 = vadd.f32 0.0, %v5139
      %v5141 = vpop.f32.mrb[0].mxu0
      %5142 = vmatprep.mubr.f32.mxu0 0.0
      %5143 = vmatmul.mubr.f32.gmra.mrb[0].mxu0 %v4970
      %v5144 = vpop.f32.mrb[0].mxu0
      %v5145 = vadd.f32 0.0, %v5144
      %v5146 = vpop.f32.mrb[0].mxu0
      %5147 = vmatprep.mubr.f32.mxu0 0.0
      %5148 = vmatmul.mubr.f32.gmra.mrb[0].mxu0 %v4973
      %v5149 = vpop.f32.mrb[0].mxu0
      %v5150 = vpop.f32.mrb[0].mxu0
      %5151 = vdwg.mxu0
      %v5152 = vadd.f32 %v4861, %v5042
      %v5153 = vadd.f32 %v4862, %v5047
      %v5154 = vadd.f32 %v4863, %v5056
      %v5155 = vadd.f32 %v4864, %v5061
      %v5156 = vadd.f32 %v4865, %v5070
      %v5157 = vadd.f32 %v4866, %v5075
      %v5158 = vadd.f32 %v4867, %v5084
      %v5159 = vadd.f32 %v4868, %v5089
      %v5160 = vadd.f32 %v4869, %v5098
      %v5161 = vadd.f32 %v4870, %v5103
      %v5162 = vadd.f32 %v4871, %v5112
      %v5163 = vadd.f32 %v4872, %v5117
      %v5164 = vadd.f32 %v4873, %v5126
      %v5165 = vadd.f32 %v4874, %v5131
      %v5166 = vadd.f32 %v4875, %v5140
      %v5167 = vadd.f32 %v4876, %v5145
      %v5168 = vld [vmem:[#allocation3 + $0x21] sm:$0xff]
      %v5169 = vld [vmem:[#allocation3 + $0x29] sm:$0xff]
      %v5170 = vld [vmem:[#allocation3 + $0x31] sm:$0xff]
      %v5171 = vld [vmem:[#allocation3 + $0x39] sm:$0xff]
      %v5172 = vld [vmem:[#allocation3 + $0x41] sm:$0xff]
      %v5173 = vld [vmem:[#allocation3 + $0x49] sm:$0xff]
      %v5174 = vld [vmem:[#allocation3 + $0x51] sm:$0xff]
      %v5175 = vld [vmem:[#allocation3 + $0x59] sm:$0xff]
      %v5176 = vld [vmem:[#allocation3 + $0x61] sm:$0xff]
      %v5177 = vld [vmem:[#allocation3 + $0x69] sm:$0xff]
      %v5178 = vld [vmem:[#allocation3 + $0x71] sm:$0xff]
      %v5179 = vld [vmem:[#allocation3 + $0x79] sm:$0xff]
      %v5180 = vld [vmem:[#allocation3 + $0x81] sm:$0xff]
      %v5181 = vld [vmem:[#allocation3 + $0x89] sm:$0xff]
      %v5182 = vld [vmem:[#allocation3 + $0x91] sm:$0xff]
      %v5183 = vld [vmem:[#allocation3 + $0x99] sm:$0xff]
      %v5184 = vld [vmem:[#allocation3 + $0xa1] sm:$0xff]
      %v5185 = vld [vmem:[#allocation3 + $0xa9] sm:$0xff]
      %v5186 = vld [vmem:[#allocation3 + $0xb1] sm:$0xff]
      %v5187 = vld [vmem:[#allocation3 + $0xb9] sm:$0xff]
      %v5188 = vld [vmem:[#allocation3 + $0xc1] sm:$0xff]
      %v5189 = vld [vmem:[#allocation3 + $0xc9] sm:$0xff]
      %v5190 = vld [vmem:[#allocation3 + $0xd1] sm:$0xff]
      %v5191 = vld [vmem:[#allocation3 + $0xd9] sm:$0xff]
      %s5192 = scalar_lea.vmem %s2, 40
      %v5193 = vld [vmem:[%s5192] sm:$0xff]
      %v5195 = vsel %vm251, %v5168, 0
      %v5198 = vsel %vm251, %v5169, 0
      %v5201 = vsel %vm251, %v5170, 0
      %v5204 = vsel %vm251, %v5171, 0
      %v5207 = vsel %vm251, %v5172, 0
      %v5210 = vsel %vm251, %v5173, 0
      %v5213 = vsel %vm251, %v5174, 0
      %v5216 = vsel %vm251, %v5175, 0
      %v5219 = vsel %vm251, %v5176, 0
      %v5222 = vsel %vm251, %v5177, 0
      %v5225 = vsel %vm251, %v5178, 0
      %v5228 = vsel %vm251, %v5179, 0
      %v5231 = vsel %vm251, %v5180, 0
      %v5234 = vsel %vm251, %v5181, 0
      %v5237 = vsel %vm251, %v5182, 0
      %v5240 = vsel %vm251, %v5183, 0
      %v5243 = vsel %vm251, %v5184, 0
      %v5246 = vsel %vm251, %v5185, 0
      %v5249 = vsel %vm251, %v5186, 0
      %v5252 = vsel %vm251, %v5187, 0
      %v5255 = vsel %vm251, %v5188, 0
      %v5258 = vsel %vm251, %v5189, 0
      %v5261 = vsel %vm251, %v5190, 0
      %v5264 = vsel %vm251, %v5191, 0
      %5266 = vmatprep.subr.mxu0 0.0
      %5267 = vmatpush1.msra.mxu0 %v5193
      %5268 = vmatprep.subr.mxu0 0.0
      %5269 = vmatpush1.msra.mxu0 0.0
      %5270 = vmatprep.subr.mxu0 0.0
      %5271 = vmatpush1.msra.mxu0 0.0
      %5272 = vmatprep.subr.mxu0 0.0
      %5273 = vmatpush1.msra.mxu0 0.0
      %5274 = vmatprep.subr.mxu0 0.0
      %5275 = vmatpush1.msra.mxu0 0.0
      %5276 = vmatprep.subr.mxu0 0.0
      %5277 = vmatpush1.msra.mxu0 0.0
      %5278 = vmatprep.subr.mxu0 0.0
      %5279 = vmatpush1.msra.mxu0 0.0
      %5280 = vmatprep.subr.mxu0 0.0
      %5281 = vmatpush1.msra.mxu0 0.0
      %5282 = vmatprep.subr.mxu0 0.0
      %5283 = vmatpush1.msra.mxu0 0.0
      %5284 = vmatprep.subr.mxu0 0.0
      %5285 = vmatpush1.msra.mxu0 0.0
      %5286 = vmatprep.subr.mxu0 0.0
      %5287 = vmatpush1.msra.mxu0 0.0
      %5288 = vmatprep.subr.mxu0 0.0
      %5289 = vmatpush1.msra.mxu0 0.0
      %5290 = vmatprep.subr.mxu0 0.0
      %5291 = vmatpush1.msra.mxu0 0.0
      %5292 = vmatprep.subr.mxu0 0.0
      %5293 = vmatpush1.msra.mxu0 0.0
      %5294 = vmatprep.subr.mxu0 0.0
      %5295 = vmatpush1.msra.mxu0 0.0
      %5296 = vmatprep.subr.mxu0 0.0
      %5297 = vmatpush1.msra.mxu0 0.0
      %5298 = vmatprep.subr.mxu0 0.0
      %5299 = vmatpush1.msra.mxu0 0.0
      %5300 = vmatprep.subr.mxu0 0.0
      %5301 = vmatpush1.msra.mxu0 0.0
      %5302 = vmatprep.subr.mxu0 0.0
      %5303 = vmatpush1.msra.mxu0 0.0
      %5304 = vmatprep.subr.mxu0 0.0
      %5305 = vmatpush1.msra.mxu0 0.0
      %5306 = vmatprep.subr.mxu0 0.0
      %5307 = vmatpush1.msra.mxu0 0.0
      %5308 = vmatprep.subr.mxu0 0.0
      %5309 = vmatpush1.msra.mxu0 0.0
      %5310 = vmatprep.subr.mxu0 0.0
      %5311 = vmatpush1.msra.mxu0 0.0
      %5312 = vmatprep.subr.mxu0 0.0
      %5313 = vmatpush1.msra.mxu0 0.0
      %5314 = vmatprep.subr.mxu0 0.0
      %5315 = vmatpush1.msra.mxu0 0.0
      %5316 = vmatprep.subr.mxu0 0.0
      %5317 = vmatpush1.msra.mxu0 0.0
      %5318 = vmatprep.subr.mxu0 0.0
      %5319 = vmatpush1.msra.mxu0 0.0
      %5320 = vmatprep.subr.mxu0 0.0
      %5321 = vmatpush1.msra.mxu0 0.0
      %5322 = vmatprep.subr.mxu0 0.0
      %5323 = vmatpush1.msra.mxu0 0.0
      %5324 = vmatprep.subr.mxu0 0.0
      %5325 = vmatpush1.msra.mxu0 0.0
      %5326 = vmatprep.subr.mxu0 0.0
      %5327 = vmatpush1.msra.mxu0 0.0
      %5328 = vmatprep.subr.mxu0 0.0
      %5329 = vmatpush1.msra.mxu0 0.0
      %5330 = vmatprep.mubr.f32.mxu0 0.0
      %5331 = vmatmul.mubr.f32.gmra.mrb[0].mxu0 %v5195
      %v5332 = vpop.f32.mrb[0].mxu0
      %v5333 = vadd.f32 0.0, %v5332
      %v5334 = vpop.f32.mrb[0].mxu0
      %5335 = vmatprep.mubr.f32.mxu0 0.0
      %5336 = vmatmul.mubr.f32.gmra.mrb[0].mxu0 %v5198
      %v5337 = vpop.f32.mrb[0].mxu0
      %v5338 = vadd.f32 0.0, %v5337
      %v5339 = vpop.f32.mrb[0].mxu0
      %5340 = vmatprep.mubr.f32.mxu0 0.0
      %5341 = vmatmul.mubr.f32.gmra.mrb[0].mxu0 %v5201
      %v5342 = vpop.f32.mrb[0].mxu0
      %v5343 = vpop.f32.mrb[0].mxu0
      %5344 = vmatprep.mubr.f32.mxu0 0.0
      %5345 = vmatmul.mubr.f32.gmra.mrb[0].mxu0 %v5204
      %v5346 = vpop.f32.mrb[0].mxu0
      %v5347 = vadd.f32 0.0, %v5346
      %v5348 = vpop.f32.mrb[0].mxu0
      %5349 = vmatprep.mubr.f32.mxu0 0.0
      %5350 = vmatmul.mubr.f32.gmra.mrb[0].mxu0 %v5207
      %v5351 = vpop.f32.mrb[0].mxu0
      %v5352 = vadd.f32 0.0, %v5351
      %v5353 = vpop.f32.mrb[0].mxu0
      %5354 = vmatprep.mubr.f32.mxu0 0.0
      %5355 = vmatmul.mubr.f32.gmra.mrb[0].mxu0 %v5210
      %v5356 = vpop.f32.mrb[0].mxu0
      %v5357 = vpop.f32.mrb[0].mxu0
      %5358 = vmatprep.mubr.f32.mxu0 0.0
      %5359 = vmatmul.mubr.f32.gmra.mrb[0].mxu0 %v5213
      %v5360 = vpop.f32.mrb[0].mxu0
      %v5361 = vadd.f32 0.0, %v5360
      %v5362 = vpop.f32.mrb[0].mxu0
      %5363 = vmatprep.mubr.f32.mxu0 0.0
      %5364 = vmatmul.mubr.f32.gmra.mrb[0].mxu0 %v5216
      %v5365 = vpop.f32.mrb[0].mxu0
      %v5366 = vadd.f32 0.0, %v5365
      %v5367 = vpop.f32.mrb[0].mxu0
      %5368 = vmatprep.mubr.f32.mxu0 0.0
      %5369 = vmatmul.mubr.f32.gmra.mrb[0].mxu0 %v5219
      %v5370 = vpop.f32.mrb[0].mxu0
      %v5371 = vpop.f32.mrb[0].mxu0
      %5372 = vmatprep.mubr.f32.mxu0 0.0
      %5373 = vmatmul.mubr.f32.gmra.mrb[0].mxu0 %v5222
      %v5374 = vpop.f32.mrb[0].mxu0
      %v5375 = vadd.f32 0.0, %v5374
      %v5376 = vpop.f32.mrb[0].mxu0
      %5377 = vmatprep.mubr.f32.mxu0 0.0
      %5378 = vmatmul.mubr.f32.gmra.mrb[0].mxu0 %v5225
      %v5379 = vpop.f32.mrb[0].mxu0
      %v5380 = vadd.f32 0.0, %v5379
      %v5381 = vpop.f32.mrb[0].mxu0
      %5382 = vmatprep.mubr.f32.mxu0 0.0
      %5383 = vmatmul.mubr.f32.gmra.mrb[0].mxu0 %v5228
      %v5384 = vpop.f32.mrb[0].mxu0
      %v5385 = vpop.f32.mrb[0].mxu0
      %5386 = vmatprep.mubr.f32.mxu0 0.0
      %5387 = vmatmul.mubr.f32.gmra.mrb[0].mxu0 %v5231
      %v5388 = vpop.f32.mrb[0].mxu0
      %v5389 = vadd.f32 0.0, %v5388
      %v5390 = vpop.f32.mrb[0].mxu0
      %5391 = vmatprep.mubr.f32.mxu0 0.0
      %5392 = vmatmul.mubr.f32.gmra.mrb[0].mxu0 %v5234
      %v5393 = vpop.f32.mrb[0].mxu0
      %v5394 = vadd.f32 0.0, %v5393
      %v5395 = vpop.f32.mrb[0].mxu0
      %5396 = vmatprep.mubr.f32.mxu0 0.0
      %5397 = vmatmul.mubr.f32.gmra.mrb[0].mxu0 %v5237
      %v5398 = vpop.f32.mrb[0].mxu0
      %v5399 = vpop.f32.mrb[0].mxu0
      %5400 = vmatprep.mubr.f32.mxu0 0.0
      %5401 = vmatmul.mubr.f32.gmra.mrb[0].mxu0 %v5240
      %v5402 = vpop.f32.mrb[0].mxu0
      %v5403 = vadd.f32 0.0, %v5402
      %v5404 = vpop.f32.mrb[0].mxu0
      %5405 = vmatprep.mubr.f32.mxu0 0.0
      %5406 = vmatmul.mubr.f32.gmra.mrb[0].mxu0 %v5243
      %v5407 = vpop.f32.mrb[0].mxu0
      %v5408 = vadd.f32 0.0, %v5407
      %v5409 = vpop.f32.mrb[0].mxu0
      %5410 = vmatprep.mubr.f32.mxu0 0.0
      %5411 = vmatmul.mubr.f32.gmra.mrb[0].mxu0 %v5246
      %v5412 = vpop.f32.mrb[0].mxu0
      %v5413 = vpop.f32.mrb[0].mxu0
      %5414 = vmatprep.mubr.f32.mxu0 0.0
      %5415 = vmatmul.mubr.f32.gmra.mrb[0].mxu0 %v5249
      %v5416 = vpop.f32.mrb[0].mxu0
      %v5417 = vadd.f32 0.0, %v5416
      %v5418 = vpop.f32.mrb[0].mxu0
      %5419 = vmatprep.mubr.f32.mxu0 0.0
      %5420 = vmatmul.mubr.f32.gmra.mrb[0].mxu0 %v5252
      %v5421 = vpop.f32.mrb[0].mxu0
      %v5422 = vadd.f32 0.0, %v5421
      %v5423 = vpop.f32.mrb[0].mxu0
      %5424 = vmatprep.mubr.f32.mxu0 0.0
      %5425 = vmatmul.mubr.f32.gmra.mrb[0].mxu0 %v5255
      %v5426 = vpop.f32.mrb[0].mxu0
      %v5427 = vpop.f32.mrb[0].mxu0
      %5428 = vmatprep.mubr.f32.mxu0 0.0
      %5429 = vmatmul.mubr.f32.gmra.mrb[0].mxu0 %v5258
      %v5430 = vpop.f32.mrb[0].mxu0
      %v5431 = vadd.f32 0.0, %v5430
      %v5432 = vpop.f32.mrb[0].mxu0
      %5433 = vmatprep.mubr.f32.mxu0 0.0
      %5434 = vmatmul.mubr.f32.gmra.mrb[0].mxu0 %v5261
      %v5435 = vpop.f32.mrb[0].mxu0
      %v5436 = vadd.f32 0.0, %v5435
      %v5437 = vpop.f32.mrb[0].mxu0
      %5438 = vmatprep.mubr.f32.mxu0 0.0
      %5439 = vmatmul.mubr.f32.gmra.mrb[0].mxu0 %v5264
      %v5440 = vpop.f32.mrb[0].mxu0
      %v5441 = vpop.f32.mrb[0].mxu0
      %5442 = vdwg.mxu0
      %v5443 = vadd.f32 %v5152, %v5333
      %v5444 = vadd.f32 %v5153, %v5338
      %v5445 = vadd.f32 %v5154, %v5347
      %v5446 = vadd.f32 %v5155, %v5352
      %v5447 = vadd.f32 %v5156, %v5361
      %v5448 = vadd.f32 %v5157, %v5366
      %v5449 = vadd.f32 %v5158, %v5375
      %v5450 = vadd.f32 %v5159, %v5380
      %v5451 = vadd.f32 %v5160, %v5389
      %v5452 = vadd.f32 %v5161, %v5394
      %v5453 = vadd.f32 %v5162, %v5403
      %v5454 = vadd.f32 %v5163, %v5408
      %v5455 = vadd.f32 %v5164, %v5417
      %v5456 = vadd.f32 %v5165, %v5422
      %v5457 = vadd.f32 %v5166, %v5431
      %v5458 = vadd.f32 %v5167, %v5436
      %v5459 = vld [vmem:[#allocation3 + $0x37] sm:$0xff]
      %v5460 = vld [vmem:[#allocation3 + $0x3f] sm:$0xff]
      %v5461 = vld [vmem:[#allocation3 + $0x47] sm:$0xff]
      %v5462 = vld [vmem:[#allocation3 + $0x4f] sm:$0xff]
      %v5463 = vld [vmem:[#allocation3 + $0x57] sm:$0xff]
      %v5464 = vld [vmem:[#allocation3 + $0x5f] sm:$0xff]
      %v5465 = vld [vmem:[#allocation3 + $0x67] sm:$0xff]
      %v5466 = vld [vmem:[#allocation3 + $0x6f] sm:$0xff]
      %v5467 = vld [vmem:[#allocation3 + $0x77] sm:$0xff]
      %v5468 = vld [vmem:[#allocation3 + $0x7f] sm:$0xff]
      %v5469 = vld [vmem:[#allocation3 + $0x87] sm:$0xff]
      %v5470 = vld [vmem:[#allocation3 + $0x8f] sm:$0xff]
      %v5471 = vld [vmem:[#allocation3 + $0x97] sm:$0xff]
      %v5472 = vld [vmem:[#allocation3 + $0x9f] sm:$0xff]
      %v5473 = vld [vmem:[#allocation3 + $0xa7] sm:$0xff]
      %v5474 = vld [vmem:[#allocation3 + $0xaf] sm:$0xff]
      %v5475 = vld [vmem:[#allocation3 + $0xb7] sm:$0xff]
      %v5476 = vld [vmem:[#allocation3 + $0xbf] sm:$0xff]
      %v5477 = vld [vmem:[#allocation3 + $0xc7] sm:$0xff]
      %v5478 = vld [vmem:[#allocation3 + $0xcf] sm:$0xff]
      %v5479 = vld [vmem:[#allocation3 + $0xd7] sm:$0xff]
      %v5480 = vld [vmem:[#allocation3 + $0xdf] sm:$0xff]
      %v5481 = vld [vmem:[#allocation3 + $0xe7] sm:$0xff]
      %v5482 = vld [vmem:[#allocation3 + $0xef] sm:$0xff]
      %s5483 = scalar_lea.vmem %s2, 48
      %v5484 = vld [vmem:[%s5483] sm:$0xff]
      %v5486 = vsel %vm251, %v5459, 0
      %v5489 = vsel %vm251, %v5460, 0
      %v5492 = vsel %vm251, %v5461, 0
      %v5495 = vsel %vm251, %v5462, 0
      %v5498 = vsel %vm251, %v5463, 0
      %v5501 = vsel %vm251, %v5464, 0
      %v5504 = vsel %vm251, %v5465, 0
      %v5507 = vsel %vm251, %v5466, 0
      %v5510 = vsel %vm251, %v5467, 0
      %v5513 = vsel %vm251, %v5468, 0
      %v5516 = vsel %vm251, %v5469, 0
      %v5519 = vsel %vm251, %v5470, 0
      %v5522 = vsel %vm251, %v5471, 0
      %v5525 = vsel %vm251, %v5472, 0
      %v5528 = vsel %vm251, %v5473, 0
      %v5531 = vsel %vm251, %v5474, 0
      %v5534 = vsel %vm251, %v5475, 0
      %v5537 = vsel %vm251, %v5476, 0
      %v5540 = vsel %vm251, %v5477, 0
      %v5543 = vsel %vm251, %v5478, 0
      %v5546 = vsel %vm251, %v5479, 0
      %v5549 = vsel %vm251, %v5480, 0
      %v5552 = vsel %vm251, %v5481, 0
      %v5555 = vsel %vm251, %v5482, 0
      %5557 = vmatprep.subr.mxu0 0.0
      %5558 = vmatpush1.msra.mxu0 %v5484
      %5559 = vmatprep.subr.mxu0 0.0
      %5560 = vmatpush1.msra.mxu0 0.0
      %5561 = vmatprep.subr.mxu0 0.0
      %5562 = vmatpush1.msra.mxu0 0.0
      %5563 = vmatprep.subr.mxu0 0.0
      %5564 = vmatpush1.msra.mxu0 0.0
      %5565 = vmatprep.subr.mxu0 0.0
      %5566 = vmatpush1.msra.mxu0 0.0
      %5567 = vmatprep.subr.mxu0 0.0
      %5568 = vmatpush1.msra.mxu0 0.0
      %5569 = vmatprep.subr.mxu0 0.0
      %5570 = vmatpush1.msra.mxu0 0.0
      %5571 = vmatprep.subr.mxu0 0.0
      %5572 = vmatpush1.msra.mxu0 0.0
      %5573 = vmatprep.subr.mxu0 0.0
      %5574 = vmatpush1.msra.mxu0 0.0
      %5575 = vmatprep.subr.mxu0 0.0
      %5576 = vmatpush1.msra.mxu0 0.0
      %5577 = vmatprep.subr.mxu0 0.0
      %5578 = vmatpush1.msra.mxu0 0.0
      %5579 = vmatprep.subr.mxu0 0.0
      %5580 = vmatpush1.msra.mxu0 0.0
      %5581 = vmatprep.subr.mxu0 0.0
      %5582 = vmatpush1.msra.mxu0 0.0
      %5583 = vmatprep.subr.mxu0 0.0
      %5584 = vmatpush1.msra.mxu0 0.0
      %5585 = vmatprep.subr.mxu0 0.0
      %5586 = vmatpush1.msra.mxu0 0.0
      %5587 = vmatprep.subr.mxu0 0.0
      %5588 = vmatpush1.msra.mxu0 0.0
      %5589 = vmatprep.subr.mxu0 0.0
      %5590 = vmatpush1.msra.mxu0 0.0
      %5591 = vmatprep.subr.mxu0 0.0
      %5592 = vmatpush1.msra.mxu0 0.0
      %5593 = vmatprep.subr.mxu0 0.0
      %5594 = vmatpush1.msra.mxu0 0.0
      %5595 = vmatprep.subr.mxu0 0.0
      %5596 = vmatpush1.msra.mxu0 0.0
      %5597 = vmatprep.subr.mxu0 0.0
      %5598 = vmatpush1.msra.mxu0 0.0
      %5599 = vmatprep.subr.mxu0 0.0
      %5600 = vmatpush1.msra.mxu0 0.0
      %5601 = vmatprep.subr.mxu0 0.0
      %5602 = vmatpush1.msra.mxu0 0.0
      %5603 = vmatprep.subr.mxu0 0.0
      %5604 = vmatpush1.msra.mxu0 0.0
      %5605 = vmatprep.subr.mxu0 0.0
      %5606 = vmatpush1.msra.mxu0 0.0
      %5607 = vmatprep.subr.mxu0 0.0
      %5608 = vmatpush1.msra.mxu0 0.0
      %5609 = vmatprep.subr.mxu0 0.0
      %5610 = vmatpush1.msra.mxu0 0.0
      %5611 = vmatprep.subr.mxu0 0.0
      %5612 = vmatpush1.msra.mxu0 0.0
      %5613 = vmatprep.subr.mxu0 0.0
      %5614 = vmatpush1.msra.mxu0 0.0
      %5615 = vmatprep.subr.mxu0 0.0
      %5616 = vmatpush1.msra.mxu0 0.0
      %5617 = vmatprep.subr.mxu0 0.0
      %5618 = vmatpush1.msra.mxu0 0.0
      %5619 = vmatprep.subr.mxu0 0.0
      %5620 = vmatpush1.msra.mxu0 0.0
      %5621 = vmatprep.mubr.f32.mxu0 0.0
      %5622 = vmatmul.mubr.f32.gmra.mrb[0].mxu0 %v5486
      %v5623 = vpop.f32.mrb[0].mxu0
      %v5624 = vadd.f32 0.0, %v5623
      %v5625 = vpop.f32.mrb[0].mxu0
      %5626 = vmatprep.mubr.f32.mxu0 0.0
      %5627 = vmatmul.mubr.f32.gmra.mrb[0].mxu0 %v5489
      %v5628 = vpop.f32.mrb[0].mxu0
      %v5629 = vadd.f32 0.0, %v5628
      %v5630 = vpop.f32.mrb[0].mxu0
      %5631 = vmatprep.mubr.f32.mxu0 0.0
      %5632 = vmatmul.mubr.f32.gmra.mrb[0].mxu0 %v5492
      %v5633 = vpop.f32.mrb[0].mxu0
      %v5634 = vpop.f32.mrb[0].mxu0
      %5635 = vmatprep.mubr.f32.mxu0 0.0
      %5636 = vmatmul.mubr.f32.gmra.mrb[0].mxu0 %v5495
      %v5637 = vpop.f32.mrb[0].mxu0
      %v5638 = vadd.f32 0.0, %v5637
      %v5639 = vpop.f32.mrb[0].mxu0
      %5640 = vmatprep.mubr.f32.mxu0 0.0
      %5641 = vmatmul.mubr.f32.gmra.mrb[0].mxu0 %v5498
      %v5642 = vpop.f32.mrb[0].mxu0
      %v5643 = vadd.f32 0.0, %v5642
      %v5644 = vpop.f32.mrb[0].mxu0
      %5645 = vmatprep.mubr.f32.mxu0 0.0
      %5646 = vmatmul.mubr.f32.gmra.mrb[0].mxu0 %v5501
      %v5647 = vpop.f32.mrb[0].mxu0
      %v5648 = vpop.f32.mrb[0].mxu0
      %5649 = vmatprep.mubr.f32.mxu0 0.0
      %5650 = vmatmul.mubr.f32.gmra.mrb[0].mxu0 %v5504
      %v5651 = vpop.f32.mrb[0].mxu0
      %v5652 = vadd.f32 0.0, %v5651
      %v5653 = vpop.f32.mrb[0].mxu0
      %5654 = vmatprep.mubr.f32.mxu0 0.0
      %5655 = vmatmul.mubr.f32.gmra.mrb[0].mxu0 %v5507
      %v5656 = vpop.f32.mrb[0].mxu0
      %v5657 = vadd.f32 0.0, %v5656
      %v5658 = vpop.f32.mrb[0].mxu0
      %5659 = vmatprep.mubr.f32.mxu0 0.0
      %5660 = vmatmul.mubr.f32.gmra.mrb[0].mxu0 %v5510
      %v5661 = vpop.f32.mrb[0].mxu0
      %v5662 = vpop.f32.mrb[0].mxu0
      %5663 = vmatprep.mubr.f32.mxu0 0.0
      %5664 = vmatmul.mubr.f32.gmra.mrb[0].mxu0 %v5513
      %v5665 = vpop.f32.mrb[0].mxu0
      %v5666 = vadd.f32 0.0, %v5665
      %v5667 = vpop.f32.mrb[0].mxu0
      %5668 = vmatprep.mubr.f32.mxu0 0.0
      %5669 = vmatmul.mubr.f32.gmra.mrb[0].mxu0 %v5516
      %v5670 = vpop.f32.mrb[0].mxu0
      %v5671 = vadd.f32 0.0, %v5670
      %v5672 = vpop.f32.mrb[0].mxu0
      %5673 = vmatprep.mubr.f32.mxu0 0.0
      %5674 = vmatmul.mubr.f32.gmra.mrb[0].mxu0 %v5519
      %v5675 = vpop.f32.mrb[0].mxu0
      %v5676 = vpop.f32.mrb[0].mxu0
      %5677 = vmatprep.mubr.f32.mxu0 0.0
      %5678 = vmatmul.mubr.f32.gmra.mrb[0].mxu0 %v5522
      %v5679 = vpop.f32.mrb[0].mxu0
      %v5680 = vadd.f32 0.0, %v5679
      %v5681 = vpop.f32.mrb[0].mxu0
      %5682 = vmatprep.mubr.f32.mxu0 0.0
      %5683 = vmatmul.mubr.f32.gmra.mrb[0].mxu0 %v5525
      %v5684 = vpop.f32.mrb[0].mxu0
      %v5685 = vadd.f32 0.0, %v5684
      %v5686 = vpop.f32.mrb[0].mxu0
      %5687 = vmatprep.mubr.f32.mxu0 0.0
      %5688 = vmatmul.mubr.f32.gmra.mrb[0].mxu0 %v5528
      %v5689 = vpop.f32.mrb[0].mxu0
      %v5690 = vpop.f32.mrb[0].mxu0
      %5691 = vmatprep.mubr.f32.mxu0 0.0
      %5692 = vmatmul.mubr.f32.gmra.mrb[0].mxu0 %v5531
      %v5693 = vpop.f32.mrb[0].mxu0
      %v5694 = vadd.f32 0.0, %v5693
      %v5695 = vpop.f32.mrb[0].mxu0
      %5696 = vmatprep.mubr.f32.mxu0 0.0
      %5697 = vmatmul.mubr.f32.gmra.mrb[0].mxu0 %v5534
      %v5698 = vpop.f32.mrb[0].mxu0
      %v5699 = vadd.f32 0.0, %v5698
      %v5700 = vpop.f32.mrb[0].mxu0
      %5701 = vmatprep.mubr.f32.mxu0 0.0
      %5702 = vmatmul.mubr.f32.gmra.mrb[0].mxu0 %v5537
      %v5703 = vpop.f32.mrb[0].mxu0
      %v5704 = vpop.f32.mrb[0].mxu0
      %5705 = vmatprep.mubr.f32.mxu0 0.0
      %5706 = vmatmul.mubr.f32.gmra.mrb[0].mxu0 %v5540
      %v5707 = vpop.f32.mrb[0].mxu0
      %v5708 = vadd.f32 0.0, %v5707
      %v5709 = vpop.f32.mrb[0].mxu0
      %5710 = vmatprep.mubr.f32.mxu0 0.0
      %5711 = vmatmul.mubr.f32.gmra.mrb[0].mxu0 %v5543
      %v5712 = vpop.f32.mrb[0].mxu0
      %v5713 = vadd.f32 0.0, %v5712
      %v5714 = vpop.f32.mrb[0].mxu0
      %5715 = vmatprep.mubr.f32.mxu0 0.0
      %5716 = vmatmul.mubr.f32.gmra.mrb[0].mxu0 %v5546
      %v5717 = vpop.f32.mrb[0].mxu0
      %v5718 = vpop.f32.mrb[0].mxu0
      %5719 = vmatprep.mubr.f32.mxu0 0.0
      %5720 = vmatmul.mubr.f32.gmra.mrb[0].mxu0 %v5549
      %v5721 = vpop.f32.mrb[0].mxu0
      %v5722 = vadd.f32 0.0, %v5721
      %v5723 = vpop.f32.mrb[0].mxu0
      %5724 = vmatprep.mubr.f32.mxu0 0.0
      %5725 = vmatmul.mubr.f32.gmra.mrb[0].mxu0 %v5552
      %v5726 = vpop.f32.mrb[0].mxu0
      %v5727 = vadd.f32 0.0, %v5726
      %v5728 = vpop.f32.mrb[0].mxu0
      %5729 = vmatprep.mubr.f32.mxu0 0.0
      %5730 = vmatmul.mubr.f32.gmra.mrb[0].mxu0 %v5555
      %v5731 = vpop.f32.mrb[0].mxu0
      %v5732 = vpop.f32.mrb[0].mxu0
      %5733 = vdwg.mxu0
      %v5734 = vadd.f32 %v5443, %v5624
      %v5735 = vadd.f32 %v5444, %v5629
      %v5736 = vadd.f32 %v5445, %v5638
      %v5737 = vadd.f32 %v5446, %v5643
      %v5738 = vadd.f32 %v5447, %v5652
      %v5739 = vadd.f32 %v5448, %v5657
      %v5740 = vadd.f32 %v5449, %v5666
      %v5741 = vadd.f32 %v5450, %v5671
      %v5742 = vadd.f32 %v5451, %v5680
      %v5743 = vadd.f32 %v5452, %v5685
      %v5744 = vadd.f32 %v5453, %v5694
      %v5745 = vadd.f32 %v5454, %v5699
      %v5746 = vadd.f32 %v5455, %v5708
      %v5747 = vadd.f32 %v5456, %v5713
      %v5748 = vadd.f32 %v5457, %v5722
      %v5749 = vadd.f32 %v5458, %v5727
      %v5750 = vld [vmem:[#allocation3 + $0x38] sm:$0xff]
      %v5751 = vld [vmem:[#allocation3 + $0x40] sm:$0xff]
      %v5752 = vld [vmem:[#allocation3 + $0x48] sm:$0xff]
      %v5753 = vld [vmem:[#allocation3 + $0x50] sm:$0xff]
      %v5754 = vld [vmem:[#allocation3 + $0x58] sm:$0xff]
      %v5755 = vld [vmem:[#allocation3 + $0x60] sm:$0xff]
      %v5756 = vld [vmem:[#allocation3 + $0x68] sm:$0xff]
      %v5757 = vld [vmem:[#allocation3 + $0x70] sm:$0xff]
      %v5758 = vld [vmem:[#allocation3 + $0x78] sm:$0xff]
      %v5759 = vld [vmem:[#allocation3 + $0x80] sm:$0xff]
      %v5760 = vld [vmem:[#allocation3 + $0x88] sm:$0xff]
      %v5761 = vld [vmem:[#allocation3 + $0x90] sm:$0xff]
      %v5762 = vld [vmem:[#allocation3 + $0x98] sm:$0xff]
      %v5763 = vld [vmem:[#allocation3 + $0xa0] sm:$0xff]
      %v5764 = vld [vmem:[#allocation3 + $0xa8] sm:$0xff]
      %v5765 = vld [vmem:[#allocation3 + $0xb0] sm:$0xff]
      %v5766 = vld [vmem:[#allocation3 + $0xb8] sm:$0xff]
      %v5767 = vld [vmem:[#allocation3 + $0xc0] sm:$0xff]
      %v5768 = vld [vmem:[#allocation3 + $0xc8] sm:$0xff]
      %v5769 = vld [vmem:[#allocation3 + $0xd0] sm:$0xff]
      %v5770 = vld [vmem:[#allocation3 + $0xd8] sm:$0xff]
      %v5771 = vld [vmem:[#allocation3 + $0xe0] sm:$0xff]
      %v5772 = vld [vmem:[#allocation3 + $0xe8] sm:$0xff]
      %v5773 = vld [vmem:[#allocation3 + $0xf0] sm:$0xff]
      %s5774 = scalar_lea.vmem %s2, 56
      %v5775 = vld [vmem:[%s5774] sm:$0xff]
      %v5777 = vsel %vm251, %v5750, 0
      %v5780 = vsel %vm251, %v5751, 0
      %v5783 = vsel %vm251, %v5752, 0
      %v5786 = vsel %vm251, %v5753, 0
      %v5789 = vsel %vm251, %v5754, 0
      %v5792 = vsel %vm251, %v5755, 0
      %v5795 = vsel %vm251, %v5756, 0
      %v5798 = vsel %vm251, %v5757, 0
      %v5801 = vsel %vm251, %v5758, 0
      %v5804 = vsel %vm251, %v5759, 0
      %v5807 = vsel %vm251, %v5760, 0
      %v5810 = vsel %vm251, %v5761, 0
      %v5813 = vsel %vm251, %v5762, 0
      %v5816 = vsel %vm251, %v5763, 0
      %v5819 = vsel %vm251, %v5764, 0
      %v5822 = vsel %vm251, %v5765, 0
      %v5825 = vsel %vm251, %v5766, 0
      %v5828 = vsel %vm251, %v5767, 0
      %v5831 = vsel %vm251, %v5768, 0
      %v5834 = vsel %vm251, %v5769, 0
      %v5837 = vsel %vm251, %v5770, 0
      %v5840 = vsel %vm251, %v5771, 0
      %v5843 = vsel %vm251, %v5772, 0
      %v5846 = vsel %vm251, %v5773, 0
      %5848 = vmatprep.subr.mxu0 0.0
      %5849 = vmatpush1.msra.mxu0 %v5775
      %5850 = vmatprep.subr.mxu0 0.0
      %5851 = vmatpush1.msra.mxu0 0.0
      %5852 = vmatprep.subr.mxu0 0.0
      %5853 = vmatpush1.msra.mxu0 0.0
      %5854 = vmatprep.subr.mxu0 0.0
      %5855 = vmatpush1.msra.mxu0 0.0
      %5856 = vmatprep.subr.mxu0 0.0
      %5857 = vmatpush1.msra.mxu0 0.0
      %5858 = vmatprep.subr.mxu0 0.0
      %5859 = vmatpush1.msra.mxu0 0.0
      %5860 = vmatprep.subr.mxu0 0.0
      %5861 = vmatpush1.msra.mxu0 0.0
      %5862 = vmatprep.subr.mxu0 0.0
      %5863 = vmatpush1.msra.mxu0 0.0
      %5864 = vmatprep.subr.mxu0 0.0
      %5865 = vmatpush1.msra.mxu0 0.0
      %5866 = vmatprep.subr.mxu0 0.0
      %5867 = vmatpush1.msra.mxu0 0.0
      %5868 = vmatprep.subr.mxu0 0.0
      %5869 = vmatpush1.msra.mxu0 0.0
      %5870 = vmatprep.subr.mxu0 0.0
      %5871 = vmatpush1.msra.mxu0 0.0
      %5872 = vmatprep.subr.mxu0 0.0
      %5873 = vmatpush1.msra.mxu0 0.0
      %5874 = vmatprep.subr.mxu0 0.0
      %5875 = vmatpush1.msra.mxu0 0.0
      %5876 = vmatprep.subr.mxu0 0.0
      %5877 = vmatpush1.msra.mxu0 0.0
      %5878 = vmatprep.subr.mxu0 0.0
      %5879 = vmatpush1.msra.mxu0 0.0
      %5880 = vmatprep.subr.mxu0 0.0
      %5881 = vmatpush1.msra.mxu0 0.0
      %5882 = vmatprep.subr.mxu0 0.0
      %5883 = vmatpush1.msra.mxu0 0.0
      %5884 = vmatprep.subr.mxu0 0.0
      %5885 = vmatpush1.msra.mxu0 0.0
      %5886 = vmatprep.subr.mxu0 0.0
      %5887 = vmatpush1.msra.mxu0 0.0
      %5888 = vmatprep.subr.mxu0 0.0
      %5889 = vmatpush1.msra.mxu0 0.0
      %5890 = vmatprep.subr.mxu0 0.0
      %5891 = vmatpush1.msra.mxu0 0.0
      %5892 = vmatprep.subr.mxu0 0.0
      %5893 = vmatpush1.msra.mxu0 0.0
      %5894 = vmatprep.subr.mxu0 0.0
      %5895 = vmatpush1.msra.mxu0 0.0
      %5896 = vmatprep.subr.mxu0 0.0
      %5897 = vmatpush1.msra.mxu0 0.0
      %5898 = vmatprep.subr.mxu0 0.0
      %5899 = vmatpush1.msra.mxu0 0.0
      %5900 = vmatprep.subr.mxu0 0.0
      %5901 = vmatpush1.msra.mxu0 0.0
      %5902 = vmatprep.subr.mxu0 0.0
      %5903 = vmatpush1.msra.mxu0 0.0
      %5904 = vmatprep.subr.mxu0 0.0
      %5905 = vmatpush1.msra.mxu0 0.0
      %5906 = vmatprep.subr.mxu0 0.0
      %5907 = vmatpush1.msra.mxu0 0.0
      %5908 = vmatprep.subr.mxu0 0.0
      %5909 = vmatpush1.msra.mxu0 0.0
      %5910 = vmatprep.subr.mxu0 0.0
      %5911 = vmatpush1.msra.mxu0 0.0
      %5912 = vmatprep.mubr.f32.mxu0 0.0
      %5913 = vmatmul.mubr.f32.gmra.mrb[0].mxu0 %v5777
      %v5914 = vpop.f32.mrb[0].mxu0
      %v5915 = vadd.f32 0.0, %v5914
      %v5916 = vpop.f32.mrb[0].mxu0
      %5917 = vmatprep.mubr.f32.mxu0 0.0
      %5918 = vmatmul.mubr.f32.gmra.mrb[0].mxu0 %v5780
      %v5919 = vpop.f32.mrb[0].mxu0
      %v5920 = vadd.f32 0.0, %v5919
      %v5921 = vpop.f32.mrb[0].mxu0
      %5922 = vmatprep.mubr.f32.mxu0 0.0
      %5923 = vmatmul.mubr.f32.gmra.mrb[0].mxu0 %v5783
      %v5924 = vpop.f32.mrb[0].mxu0
      %v5925 = vpop.f32.mrb[0].mxu0
      %5926 = vmatprep.mubr.f32.mxu0 0.0
      %5927 = vmatmul.mubr.f32.gmra.mrb[0].mxu0 %v5786
      %v5928 = vpop.f32.mrb[0].mxu0
      %v5929 = vadd.f32 0.0, %v5928
      %v5930 = vpop.f32.mrb[0].mxu0
      %5931 = vmatprep.mubr.f32.mxu0 0.0
      %5932 = vmatmul.mubr.f32.gmra.mrb[0].mxu0 %v5789
      %v5933 = vpop.f32.mrb[0].mxu0
      %v5934 = vadd.f32 0.0, %v5933
      %v5935 = vpop.f32.mrb[0].mxu0
      %5936 = vmatprep.mubr.f32.mxu0 0.0
      %5937 = vmatmul.mubr.f32.gmra.mrb[0].mxu0 %v5792
      %v5938 = vpop.f32.mrb[0].mxu0
      %v5939 = vpop.f32.mrb[0].mxu0
      %5940 = vmatprep.mubr.f32.mxu0 0.0
      %5941 = vmatmul.mubr.f32.gmra.mrb[0].mxu0 %v5795
      %v5942 = vpop.f32.mrb[0].mxu0
      %v5943 = vadd.f32 0.0, %v5942
      %v5944 = vpop.f32.mrb[0].mxu0
      %5945 = vmatprep.mubr.f32.mxu0 0.0
      %5946 = vmatmul.mubr.f32.gmra.mrb[0].mxu0 %v5798
      %v5947 = vpop.f32.mrb[0].mxu0
      %v5948 = vadd.f32 0.0, %v5947
      %v5949 = vpop.f32.mrb[0].mxu0
      %5950 = vmatprep.mubr.f32.mxu0 0.0
      %5951 = vmatmul.mubr.f32.gmra.mrb[0].mxu0 %v5801
      %v5952 = vpop.f32.mrb[0].mxu0
      %v5953 = vpop.f32.mrb[0].mxu0
      %5954 = vmatprep.mubr.f32.mxu0 0.0
      %5955 = vmatmul.mubr.f32.gmra.mrb[0].mxu0 %v5804
      %v5956 = vpop.f32.mrb[0].mxu0
      %v5957 = vadd.f32 0.0, %v5956
      %v5958 = vpop.f32.mrb[0].mxu0
      %5959 = vmatprep.mubr.f32.mxu0 0.0
      %5960 = vmatmul.mubr.f32.gmra.mrb[0].mxu0 %v5807
      %v5961 = vpop.f32.mrb[0].mxu0
      %v5962 = vadd.f32 0.0, %v5961
      %v5963 = vpop.f32.mrb[0].mxu0
      %5964 = vmatprep.mubr.f32.mxu0 0.0
      %5965 = vmatmul.mubr.f32.gmra.mrb[0].mxu0 %v5810
      %v5966 = vpop.f32.mrb[0].mxu0
      %v5967 = vpop.f32.mrb[0].mxu0
      %5968 = vmatprep.mubr.f32.mxu0 0.0
      %5969 = vmatmul.mubr.f32.gmra.mrb[0].mxu0 %v5813
      %v5970 = vpop.f32.mrb[0].mxu0
      %v5971 = vadd.f32 0.0, %v5970
      %v5972 = vpop.f32.mrb[0].mxu0
      %5973 = vmatprep.mubr.f32.mxu0 0.0
      %5974 = vmatmul.mubr.f32.gmra.mrb[0].mxu0 %v5816
      %v5975 = vpop.f32.mrb[0].mxu0
      %v5976 = vadd.f32 0.0, %v5975
      %v5977 = vpop.f32.mrb[0].mxu0
      %5978 = vmatprep.mubr.f32.mxu0 0.0
      %5979 = vmatmul.mubr.f32.gmra.mrb[0].mxu0 %v5819
      %v5980 = vpop.f32.mrb[0].mxu0
      %v5981 = vpop.f32.mrb[0].mxu0
      %5982 = vmatprep.mubr.f32.mxu0 0.0
      %5983 = vmatmul.mubr.f32.gmra.mrb[0].mxu0 %v5822
      %v5984 = vpop.f32.mrb[0].mxu0
      %v5985 = vadd.f32 0.0, %v5984
      %v5986 = vpop.f32.mrb[0].mxu0
      %5987 = vmatprep.mubr.f32.mxu0 0.0
      %5988 = vmatmul.mubr.f32.gmra.mrb[0].mxu0 %v5825
      %v5989 = vpop.f32.mrb[0].mxu0
      %v5990 = vadd.f32 0.0, %v5989
      %v5991 = vpop.f32.mrb[0].mxu0
      %5992 = vmatprep.mubr.f32.mxu0 0.0
      %5993 = vmatmul.mubr.f32.gmra.mrb[0].mxu0 %v5828
      %v5994 = vpop.f32.mrb[0].mxu0
      %v5995 = vpop.f32.mrb[0].mxu0
      %5996 = vmatprep.mubr.f32.mxu0 0.0
      %5997 = vmatmul.mubr.f32.gmra.mrb[0].mxu0 %v5831
      %v5998 = vpop.f32.mrb[0].mxu0
      %v5999 = vadd.f32 0.0, %v5998
      %v6000 = vpop.f32.mrb[0].mxu0
      %6001 = vmatprep.mubr.f32.mxu0 0.0
      %6002 = vmatmul.mubr.f32.gmra.mrb[0].mxu0 %v5834
      %v6003 = vpop.f32.mrb[0].mxu0
      %v6004 = vadd.f32 0.0, %v6003
      %v6005 = vpop.f32.mrb[0].mxu0
      %6006 = vmatprep.mubr.f32.mxu0 0.0
      %6007 = vmatmul.mubr.f32.gmra.mrb[0].mxu0 %v5837
      %v6008 = vpop.f32.mrb[0].mxu0
      %v6009 = vpop.f32.mrb[0].mxu0
      %6010 = vmatprep.mubr.f32.mxu0 0.0
      %6011 = vmatmul.mubr.f32.gmra.mrb[0].mxu0 %v5840
      %v6012 = vpop.f32.mrb[0].mxu0
      %v6013 = vadd.f32 0.0, %v6012
      %v6014 = vpop.f32.mrb[0].mxu0
      %6015 = vmatprep.mubr.f32.mxu0 0.0
      %6016 = vmatmul.mubr.f32.gmra.mrb[0].mxu0 %v5843
      %v6017 = vpop.f32.mrb[0].mxu0
      %v6018 = vadd.f32 0.0, %v6017
      %v6019 = vpop.f32.mrb[0].mxu0
      %6020 = vmatprep.mubr.f32.mxu0 0.0
      %6021 = vmatmul.mubr.f32.gmra.mrb[0].mxu0 %v5846
      %v6022 = vpop.f32.mrb[0].mxu0
      %v6023 = vpop.f32.mrb[0].mxu0
      %6024 = vdwg.mxu0
      %v6025 = vadd.f32 %v5734, %v5915
      %v6026 = vadd.f32 %v5735, %v5920
      %v6027 = vadd.f32 %v5736, %v5929
      %v6028 = vadd.f32 %v5737, %v5934
      %v6029 = vadd.f32 %v5738, %v5943
      %v6030 = vadd.f32 %v5739, %v5948
      %v6031 = vadd.f32 %v5740, %v5957
      %v6032 = vadd.f32 %v5741, %v5962
      %v6033 = vadd.f32 %v5742, %v5971
      %v6034 = vadd.f32 %v5743, %v5976
      %v6035 = vadd.f32 %v5744, %v5985
      %v6036 = vadd.f32 %v5745, %v5990
      %v6037 = vadd.f32 %v5746, %v5999
      %v6038 = vadd.f32 %v5747, %v6004
      %v6039 = vadd.f32 %v5748, %v6013
      %v6040 = vadd.f32 %v5749, %v6018
      %v6041 = vld [vmem:[#allocation3 + $0x39] sm:$0xff]
      %v6042 = vld [vmem:[#allocation3 + $0x41] sm:$0xff]
      %v6043 = vld [vmem:[#allocation3 + $0x49] sm:$0xff]
      %v6044 = vld [vmem:[#allocation3 + $0x51] sm:$0xff]
      %v6045 = vld [vmem:[#allocation3 + $0x59] sm:$0xff]
      %v6046 = vld [vmem:[#allocation3 + $0x61] sm:$0xff]
      %v6047 = vld [vmem:[#allocation3 + $0x69] sm:$0xff]
      %v6048 = vld [vmem:[#allocation3 + $0x71] sm:$0xff]
      %v6049 = vld [vmem:[#allocation3 + $0x79] sm:$0xff]
      %v6050 = vld [vmem:[#allocation3 + $0x81] sm:$0xff]
      %v6051 = vld [vmem:[#allocation3 + $0x89] sm:$0xff]
      %v6052 = vld [vmem:[#allocation3 + $0x91] sm:$0xff]
      %v6053 = vld [vmem:[#allocation3 + $0x99] sm:$0xff]
      %v6054 = vld [vmem:[#allocation3 + $0xa1] sm:$0xff]
      %v6055 = vld [vmem:[#allocation3 + $0xa9] sm:$0xff]
      %v6056 = vld [vmem:[#allocation3 + $0xb1] sm:$0xff]
      %v6057 = vld [vmem:[#allocation3 + $0xb9] sm:$0xff]
      %v6058 = vld [vmem:[#allocation3 + $0xc1] sm:$0xff]
      %v6059 = vld [vmem:[#allocation3 + $0xc9] sm:$0xff]
      %v6060 = vld [vmem:[#allocation3 + $0xd1] sm:$0xff]
      %v6061 = vld [vmem:[#allocation3 + $0xd9] sm:$0xff]
      %v6062 = vld [vmem:[#allocation3 + $0xe1] sm:$0xff]
      %v6063 = vld [vmem:[#allocation3 + $0xe9] sm:$0xff]
      %v6064 = vld [vmem:[#allocation3 + $0xf1] sm:$0xff]
      %s6065 = scalar_lea.vmem %s2, 64
      %v6066 = vld [vmem:[%s6065] sm:$0xff]
      %v6068 = vsel %vm251, %v6041, 0
      %v6071 = vsel %vm251, %v6042, 0
      %v6074 = vsel %vm251, %v6043, 0
      %v6077 = vsel %vm251, %v6044, 0
      %v6080 = vsel %vm251, %v6045, 0
      %v6083 = vsel %vm251, %v6046, 0
      %v6086 = vsel %vm251, %v6047, 0
      %v6089 = vsel %vm251, %v6048, 0
      %v6092 = vsel %vm251, %v6049, 0
      %v6095 = vsel %vm251, %v6050, 0
      %v6098 = vsel %vm251, %v6051, 0
      %v6101 = vsel %vm251, %v6052, 0
      %v6104 = vsel %vm251, %v6053, 0
      %v6107 = vsel %vm251, %v6054, 0
      %v6110 = vsel %vm251, %v6055, 0
      %v6113 = vsel %vm251, %v6056, 0
      %v6116 = vsel %vm251, %v6057, 0
      %v6119 = vsel %vm251, %v6058, 0
      %v6122 = vsel %vm251, %v6059, 0
      %v6125 = vsel %vm251, %v6060, 0
      %v6128 = vsel %vm251, %v6061, 0
      %v6131 = vsel %vm251, %v6062, 0
      %v6134 = vsel %vm251, %v6063, 0
      %v6137 = vsel %vm251, %v6064, 0
      %6139 = vmatprep.subr.mxu0 0.0
      %6140 = vmatpush1.msra.mxu0 %v6066
      %6141 = vmatprep.subr.mxu0 0.0
      %6142 = vmatpush1.msra.mxu0 0.0
      %6143 = vmatprep.subr.mxu0 0.0
      %6144 = vmatpush1.msra.mxu0 0.0
      %6145 = vmatprep.subr.mxu0 0.0
      %6146 = vmatpush1.msra.mxu0 0.0
      %6147 = vmatprep.subr.mxu0 0.0
      %6148 = vmatpush1.msra.mxu0 0.0
      %6149 = vmatprep.subr.mxu0 0.0
      %6150 = vmatpush1.msra.mxu0 0.0
      %6151 = vmatprep.subr.mxu0 0.0
      %6152 = vmatpush1.msra.mxu0 0.0
      %6153 = vmatprep.subr.mxu0 0.0
      %6154 = vmatpush1.msra.mxu0 0.0
      %6155 = vmatprep.subr.mxu0 0.0
      %6156 = vmatpush1.msra.mxu0 0.0
      %6157 = vmatprep.subr.mxu0 0.0
      %6158 = vmatpush1.msra.mxu0 0.0
      %6159 = vmatprep.subr.mxu0 0.0
      %6160 = vmatpush1.msra.mxu0 0.0
      %6161 = vmatprep.subr.mxu0 0.0
      %6162 = vmatpush1.msra.mxu0 0.0
      %6163 = vmatprep.subr.mxu0 0.0
      %6164 = vmatpush1.msra.mxu0 0.0
      %6165 = vmatprep.subr.mxu0 0.0
      %6166 = vmatpush1.msra.mxu0 0.0
      %6167 = vmatprep.subr.mxu0 0.0
      %6168 = vmatpush1.msra.mxu0 0.0
      %6169 = vmatprep.subr.mxu0 0.0
      %6170 = vmatpush1.msra.mxu0 0.0
      %6171 = vmatprep.subr.mxu0 0.0
      %6172 = vmatpush1.msra.mxu0 0.0
      %6173 = vmatprep.subr.mxu0 0.0
      %6174 = vmatpush1.msra.mxu0 0.0
      %6175 = vmatprep.subr.mxu0 0.0
      %6176 = vmatpush1.msra.mxu0 0.0
      %6177 = vmatprep.subr.mxu0 0.0
      %6178 = vmatpush1.msra.mxu0 0.0
      %6179 = vmatprep.subr.mxu0 0.0
      %6180 = vmatpush1.msra.mxu0 0.0
      %6181 = vmatprep.subr.mxu0 0.0
      %6182 = vmatpush1.msra.mxu0 0.0
      %6183 = vmatprep.subr.mxu0 0.0
      %6184 = vmatpush1.msra.mxu0 0.0
      %6185 = vmatprep.subr.mxu0 0.0
      %6186 = vmatpush1.msra.mxu0 0.0
      %6187 = vmatprep.subr.mxu0 0.0
      %6188 = vmatpush1.msra.mxu0 0.0
      %6189 = vmatprep.subr.mxu0 0.0
      %6190 = vmatpush1.msra.mxu0 0.0
      %6191 = vmatprep.subr.mxu0 0.0
      %6192 = vmatpush1.msra.mxu0 0.0
      %6193 = vmatprep.subr.mxu0 0.0
      %6194 = vmatpush1.msra.mxu0 0.0
      %6195 = vmatprep.subr.mxu0 0.0
      %6196 = vmatpush1.msra.mxu0 0.0
      %6197 = vmatprep.subr.mxu0 0.0
      %6198 = vmatpush1.msra.mxu0 0.0
      %6199 = vmatprep.subr.mxu0 0.0
      %6200 = vmatpush1.msra.mxu0 0.0
      %6201 = vmatprep.subr.mxu0 0.0
      %6202 = vmatpush1.msra.mxu0 0.0
      %6203 = vmatprep.mubr.f32.mxu0 0.0
      %6204 = vmatmul.mubr.f32.gmra.mrb[0].mxu0 %v6068
      %v6205 = vpop.f32.mrb[0].mxu0
      %v6206 = vadd.f32 0.0, %v6205
      %v6207 = vpop.f32.mrb[0].mxu0
      %6208 = vmatprep.mubr.f32.mxu0 0.0
      %6209 = vmatmul.mubr.f32.gmra.mrb[0].mxu0 %v6071
      %v6210 = vpop.f32.mrb[0].mxu0
      %v6211 = vadd.f32 0.0, %v6210
      %v6212 = vpop.f32.mrb[0].mxu0
      %6213 = vmatprep.mubr.f32.mxu0 0.0
      %6214 = vmatmul.mubr.f32.gmra.mrb[0].mxu0 %v6074
      %v6215 = vpop.f32.mrb[0].mxu0
      %v6216 = vpop.f32.mrb[0].mxu0
      %6217 = vmatprep.mubr.f32.mxu0 0.0
      %6218 = vmatmul.mubr.f32.gmra.mrb[0].mxu0 %v6077
      %v6219 = vpop.f32.mrb[0].mxu0
      %v6220 = vadd.f32 0.0, %v6219
      %v6221 = vpop.f32.mrb[0].mxu0
      %6222 = vmatprep.mubr.f32.mxu0 0.0
      %6223 = vmatmul.mubr.f32.gmra.mrb[0].mxu0 %v6080
      %v6224 = vpop.f32.mrb[0].mxu0
      %v6225 = vadd.f32 0.0, %v6224
      %v6226 = vpop.f32.mrb[0].mxu0
      %6227 = vmatprep.mubr.f32.mxu0 0.0
      %6228 = vmatmul.mubr.f32.gmra.mrb[0].mxu0 %v6083
      %v6229 = vpop.f32.mrb[0].mxu0
      %v6230 = vpop.f32.mrb[0].mxu0
      %6231 = vmatprep.mubr.f32.mxu0 0.0
      %6232 = vmatmul.mubr.f32.gmra.mrb[0].mxu0 %v6086
      %v6233 = vpop.f32.mrb[0].mxu0
      %v6234 = vadd.f32 0.0, %v6233
      %v6235 = vpop.f32.mrb[0].mxu0
      %6236 = vmatprep.mubr.f32.mxu0 0.0
      %6237 = vmatmul.mubr.f32.gmra.mrb[0].mxu0 %v6089
      %v6238 = vpop.f32.mrb[0].mxu0
      %v6239 = vadd.f32 0.0, %v6238
      %v6240 = vpop.f32.mrb[0].mxu0
      %6241 = vmatprep.mubr.f32.mxu0 0.0
      %6242 = vmatmul.mubr.f32.gmra.mrb[0].mxu0 %v6092
      %v6243 = vpop.f32.mrb[0].mxu0
      %v6244 = vpop.f32.mrb[0].mxu0
      %6245 = vmatprep.mubr.f32.mxu0 0.0
      %6246 = vmatmul.mubr.f32.gmra.mrb[0].mxu0 %v6095
      %v6247 = vpop.f32.mrb[0].mxu0
      %v6248 = vadd.f32 0.0, %v6247
      %v6249 = vpop.f32.mrb[0].mxu0
      %6250 = vmatprep.mubr.f32.mxu0 0.0
      %6251 = vmatmul.mubr.f32.gmra.mrb[0].mxu0 %v6098
      %v6252 = vpop.f32.mrb[0].mxu0
      %v6253 = vadd.f32 0.0, %v6252
      %v6254 = vpop.f32.mrb[0].mxu0
      %6255 = vmatprep.mubr.f32.mxu0 0.0
      %6256 = vmatmul.mubr.f32.gmra.mrb[0].mxu0 %v6101
      %v6257 = vpop.f32.mrb[0].mxu0
      %v6258 = vpop.f32.mrb[0].mxu0
      %6259 = vmatprep.mubr.f32.mxu0 0.0
      %6260 = vmatmul.mubr.f32.gmra.mrb[0].mxu0 %v6104
      %v6261 = vpop.f32.mrb[0].mxu0
      %v6262 = vadd.f32 0.0, %v6261
      %v6263 = vpop.f32.mrb[0].mxu0
      %6264 = vmatprep.mubr.f32.mxu0 0.0
      %6265 = vmatmul.mubr.f32.gmra.mrb[0].mxu0 %v6107
      %v6266 = vpop.f32.mrb[0].mxu0
      %v6267 = vadd.f32 0.0, %v6266
      %v6268 = vpop.f32.mrb[0].mxu0
      %6269 = vmatprep.mubr.f32.mxu0 0.0
      %6270 = vmatmul.mubr.f32.gmra.mrb[0].mxu0 %v6110
      %v6271 = vpop.f32.mrb[0].mxu0
      %v6272 = vpop.f32.mrb[0].mxu0
      %6273 = vmatprep.mubr.f32.mxu0 0.0
      %6274 = vmatmul.mubr.f32.gmra.mrb[0].mxu0 %v6113
      %v6275 = vpop.f32.mrb[0].mxu0
      %v6276 = vadd.f32 0.0, %v6275
      %v6277 = vpop.f32.mrb[0].mxu0
      %6278 = vmatprep.mubr.f32.mxu0 0.0
      %6279 = vmatmul.mubr.f32.gmra.mrb[0].mxu0 %v6116
      %v6280 = vpop.f32.mrb[0].mxu0
      %v6281 = vadd.f32 0.0, %v6280
      %v6282 = vpop.f32.mrb[0].mxu0
      %6283 = vmatprep.mubr.f32.mxu0 0.0
      %6284 = vmatmul.mubr.f32.gmra.mrb[0].mxu0 %v6119
      %v6285 = vpop.f32.mrb[0].mxu0
      %v6286 = vpop.f32.mrb[0].mxu0
      %6287 = vmatprep.mubr.f32.mxu0 0.0
      %6288 = vmatmul.mubr.f32.gmra.mrb[0].mxu0 %v6122
      %v6289 = vpop.f32.mrb[0].mxu0
      %v6290 = vadd.f32 0.0, %v6289
      %v6291 = vpop.f32.mrb[0].mxu0
      %6292 = vmatprep.mubr.f32.mxu0 0.0
      %6293 = vmatmul.mubr.f32.gmra.mrb[0].mxu0 %v6125
      %v6294 = vpop.f32.mrb[0].mxu0
      %v6295 = vadd.f32 0.0, %v6294
      %v6296 = vpop.f32.mrb[0].mxu0
      %6297 = vmatprep.mubr.f32.mxu0 0.0
      %6298 = vmatmul.mubr.f32.gmra.mrb[0].mxu0 %v6128
      %v6299 = vpop.f32.mrb[0].mxu0
      %v6300 = vpop.f32.mrb[0].mxu0
      %6301 = vmatprep.mubr.f32.mxu0 0.0
      %6302 = vmatmul.mubr.f32.gmra.mrb[0].mxu0 %v6131
      %v6303 = vpop.f32.mrb[0].mxu0
      %v6304 = vadd.f32 0.0, %v6303
      %v6305 = vpop.f32.mrb[0].mxu0
      %6306 = vmatprep.mubr.f32.mxu0 0.0
      %6307 = vmatmul.mubr.f32.gmra.mrb[0].mxu0 %v6134
      %v6308 = vpop.f32.mrb[0].mxu0
      %v6309 = vadd.f32 0.0, %v6308
      %v6310 = vpop.f32.mrb[0].mxu0
      %6311 = vmatprep.mubr.f32.mxu0 0.0
      %6312 = vmatmul.mubr.f32.gmra.mrb[0].mxu0 %v6137
      %v6313 = vpop.f32.mrb[0].mxu0
      %v6314 = vpop.f32.mrb[0].mxu0
      %6315 = vdwg.mxu0
      %v6316 = vadd.f32 %v6025, %v6206
      %v6317 = vadd.f32 %v6026, %v6211
      %v6318 = vadd.f32 %v6027, %v6220
      %v6319 = vadd.f32 %v6028, %v6225
      %v6320 = vadd.f32 %v6029, %v6234
      %v6321 = vadd.f32 %v6030, %v6239
      %v6322 = vadd.f32 %v6031, %v6248
      %v6323 = vadd.f32 %v6032, %v6253
      %v6324 = vadd.f32 %v6033, %v6262
      %v6325 = vadd.f32 %v6034, %v6267
      %v6326 = vadd.f32 %v6035, %v6276
      %v6327 = vadd.f32 %v6036, %v6281
      %v6328 = vadd.f32 %v6037, %v6290
      %v6329 = vadd.f32 %v6038, %v6295
      %v6330 = vadd.f32 %v6039, %v6304
      %v6331 = vadd.f32 %v6040, %v6309
      %v6332 = vld [vmem:[#allocation2 + $0x38] sm:$0xff]
      %v6333 = vld [vmem:[#allocation2 + $0x40] sm:$0xff]
      %v6334 = vld [vmem:[#allocation2 + $0x50] sm:$0xff]
      %v6335 = vld [vmem:[#allocation2 + $0x58] sm:$0xff]
      %v6336 = vld [vmem:[#allocation2 + $0x68] sm:$0xff]
      %v6337 = vld [vmem:[#allocation2 + $0x70] sm:$0xff]
      %v6338 = vld [vmem:[#allocation2 + $0x80] sm:$0xff]
      %v6339 = vld [vmem:[#allocation2 + $0x88] sm:$0xff]
      %v6340 = vld [vmem:[#allocation2 + $0x98] sm:$0xff]
      %v6341 = vld [vmem:[#allocation2 + $0xa0] sm:$0xff]
      %v6342 = vld [vmem:[#allocation2 + $0xb0] sm:$0xff]
      %v6343 = vld [vmem:[#allocation2 + $0xb8] sm:$0xff]
      %v6344 = vld [vmem:[#allocation2 + $0xc8] sm:$0xff]
      %v6345 = vld [vmem:[#allocation2 + $0xd0] sm:$0xff]
      %v6346 = vld [vmem:[#allocation2 + $0xe0] sm:$0xff]
      %v6347 = vld [vmem:[#allocation2 + $0xe8] sm:$0xff]
      %v6348 = vld [vmem:[%s4] sm:$0x1]
      %v6350 = vlaneseq
      %v6351 = vshrl.u32 %v6350, 7
      %v6352 = vsub.s32 0, %v6351
      %v6353 = vrot.slane %v6348, %v6352
      %v6355 = vadd.f32 %v6316, %v6353
      %v6356 = vadd.f32 %v6317, %v6353
      %v6357 = vadd.f32 %v6318, %v6353
      %v6358 = vadd.f32 %v6319, %v6353
      %v6359 = vadd.f32 %v6320, %v6353
      %v6360 = vadd.f32 %v6321, %v6353
      %v6361 = vadd.f32 %v6322, %v6353
      %v6362 = vadd.f32 %v6323, %v6353
      %v6363 = vadd.f32 %v6324, %v6353
      %v6364 = vadd.f32 %v6325, %v6353
      %v6365 = vadd.f32 %v6326, %v6353
      %v6366 = vadd.f32 %v6327, %v6353
      %v6367 = vadd.f32 %v6328, %v6353
      %v6368 = vadd.f32 %v6329, %v6353
      %v6369 = vadd.f32 %v6330, %v6353
      %v6370 = vadd.f32 %v6331, %v6353
      %v6371 = vadd.f32 %v6355, %v6332
      %v6372 = vadd.f32 %v6356, %v6333
      %v6373 = vadd.f32 %v6357, %v6334
      %v6374 = vadd.f32 %v6358, %v6335
      %v6375 = vadd.f32 %v6359, %v6336
      %v6376 = vadd.f32 %v6360, %v6337
      %v6377 = vadd.f32 %v6361, %v6338
      %v6378 = vadd.f32 %v6362, %v6339
      %v6379 = vadd.f32 %v6363, %v6340
      %v6380 = vadd.f32 %v6364, %v6341
      %v6381 = vadd.f32 %v6365, %v6342
      %v6382 = vadd.f32 %v6366, %v6343
      %v6383 = vadd.f32 %v6367, %v6344
      %v6384 = vadd.f32 %v6368, %v6345
      %v6385 = vadd.f32 %v6369, %v6346
      %v6386 = vadd.f32 %v6370, %v6347
      %v6387 = vmax.f32 %v6371, 0.0
      %v6388 = vmax.f32 %v6372, 0.0
      %v6389 = vmax.f32 %v6373, 0.0
      %v6390 = vmax.f32 %v6374, 0.0
      %v6391 = vmax.f32 %v6375, 0.0
      %v6392 = vmax.f32 %v6376, 0.0
      %v6393 = vmax.f32 %v6377, 0.0
      %v6394 = vmax.f32 %v6378, 0.0
      %v6395 = vmax.f32 %v6379, 0.0
      %v6396 = vmax.f32 %v6380, 0.0
      %v6397 = vmax.f32 %v6381, 0.0
      %v6398 = vmax.f32 %v6382, 0.0
      %v6399 = vmax.f32 %v6383, 0.0
      %v6400 = vmax.f32 %v6384, 0.0
      %v6401 = vmax.f32 %v6385, 0.0
      %v6402 = vmax.f32 %v6386, 0.0
      %6403 = vst.msk [vmem:[%s248] sm:$0xff] %vm251, %v6387
      %6404 = vst.msk [vmem:[%s248 + $0x8] sm:$0xff] %vm251, %v6388
      %s6405 = scalar_lea.vmem %s248, 16
      %6406 = vst.msk [vmem:[%s6405] sm:$0xff] %vm251, %v6389
      %6407 = vst.msk [vmem:[%s6405 + $0x8] sm:$0xff] %vm251, %v6390
      %s6408 = scalar_lea.vmem %s248, 32
      %6409 = vst.msk [vmem:[%s6408] sm:$0xff] %vm251, %v6391
      %6410 = vst.msk [vmem:[%s6408 + $0x8] sm:$0xff] %vm251, %v6392
      %s6411 = scalar_lea.vmem %s248, 48
      %6412 = vst.msk [vmem:[%s6411] sm:$0xff] %vm251, %v6393
      %6413 = vst.msk [vmem:[%s6411 + $0x8] sm:$0xff] %vm251, %v6394
      %s6414 = scalar_lea.vmem %s248, 64
      %6415 = vst.msk [vmem:[%s6414] sm:$0xff] %vm251, %v6395
      %6416 = vst.msk [vmem:[%s6414 + $0x8] sm:$0xff] %vm251, %v6396
      %s6417 = scalar_lea.vmem %s248, 80
      %6418 = vst.msk [vmem:[%s6417] sm:$0xff] %vm251, %v6397
      %6419 = vst.msk [vmem:[%s6417 + $0x8] sm:$0xff] %vm251, %v6398
      %s6420 = scalar_lea.vmem %s248, 96
      %6421 = vst.msk [vmem:[%s6420] sm:$0xff] %vm251, %v6399
      %6422 = vst.msk [vmem:[%s6420 + $0x8] sm:$0xff] %vm251, %v6400
      %s6423 = scalar_lea.vmem %s248, 112
      %6424 = vst.msk [vmem:[%s6423] sm:$0xff] %vm251, %v6401
      %6425 = vst.msk [vmem:[%s6423 + $0x8] sm:$0xff] %vm251, %v6402
      %s6426 = smul.u32 8, %s21
      %p6427 = scmp.lt.s32.totalorder %s20, 1
      %s6428 = scalar_select %p6427, %s20, 1
      %p6429 = scmp.lt.s32.totalorder %s6426, 15
      %s6430 = scalar_select %p6429, %s6426, 15
      %s6431 = smul.addr %s6430, 2
      %s6432 = smul.addr %s6428, 32
      %s6433 = sadd.s32 %s6431, %s6432
      %s6434 = smul.addr %s6433, 8
      %s6435 = scalar_lea.vmem %s5, %s6434
      // Predicated region
      $region81: #{basic_block.1} parent=39 // pred_check
        %p6436 = pneg %p158
      $region82: #{basic_block.1} parent=39 // pred_check_branch
        %6438 = sbr.rel (%p6436) target = $region84
      $region83: #{basic_block.1} parent=39 // pred_region
        %s6439 = smul.u32 8, %s21
      $region84: #{basic_block.1} parent=39 // pred_fallthru
        _
    $region40: #{basic_block.1} parent=5 // pred_fallthru
      _
    %p6440 = scmp.le.s32.totalorder 2, %s11
    // Predicated region
    $region85: #{basic_block.1} parent=5 // pred_check
      %p6441 = pneg %p6440
    $region86: #{basic_block.1} parent=5 // pred_check_branch
      %6443 = sbr.rel (%p6441) target = $region88
    $region87: #{basic_block.1} parent=5 // pred_region
      %s6444 = ssub.s32 %s11, 2
      // Predicated region
      $region89: #{basic_block.1} parent=87 // pred_check
        %p6445 = pneg %p164
      $region90: #{basic_block.1} parent=87 // pred_check_branch
        %6447 = sbr.rel (%p6445) target = $region92
      $region91: #{basic_block.1} parent=87 // pred_region
        %s6448 = smul.u32 8, %s23
        %p6449 = scmp.lt.s32.totalorder %s22, 1
        %s6450 = scalar_select %p6449, %s22, 1
        %p6451 = scmp.lt.s32.totalorder %s6448, 15
        %s6452 = scalar_select %p6451, %s6448, 15
        %s6453 = smul.addr %s6452, 2
        %s6454 = smul.addr %s6450, 32
        %s6455 = sadd.s32 %s6453, %s6454
        %s6456 = smul.addr %s6455, 8
        %s6457 = scalar_lea.vmem %s5, %s6456
      $region92: #{basic_block.1} parent=87 // pred_fallthru
        _
    $region88: #{basic_block.1} parent=5 // pred_fallthru
      _
  $region6: #{basic_block.1} parent=0 // loop_footer
    %s15 = sadd.s32 1, %s11
  $region7: #{basic_block.1} parent=0 // loop_footer_branch
    %10 = sbr.rel target = $region3
  $region8: #{basic_block.1} parent=0 // loop_exit
    _

</llo_original>
